<compile_context>
chip_gen: v5e
topology: v5e:2x2
jax: 0.10.0
libtpu: 0.0.40
codegen_flags: <defaults>
</compile_context>

<pallas_src>
import functools

import jax
import jax.numpy as jnp
from jax.experimental import pallas as pl
from jax.experimental.pallas import tpu as pltpu


LANE = 128  # lane width; all channel / latent dims are kept padded to this


def _round_up(x, m):
    return ((x + m - 1) // m) * m


def _pick_tile(dim, candidates):
    for t in candidates:
        if dim % t == 0:
            return t
    return dim  # full-extent block (legal even if not 8/128 aligned)


# ---------------------------------------------------------------------------
# Pallas kernels
# ---------------------------------------------------------------------------
def _matmul_bias_act_kernel(x_ref, w_ref, b_ref, o_ref, acc_ref, *, act):
    """Tiled matmul with K accumulation; bias + activation fused epilogue."""
    @pl.when(pl.program_id(2) == 0)
    def _():
        acc_ref[...] = jnp.zeros_like(acc_ref)

    acc_ref[...] += jnp.dot(x_ref[...], w_ref[...],
                            preferred_element_type=jnp.float32)

    @pl.when(pl.program_id(2) == pl.num_programs(2) - 1)
    def _():
        acc = acc_ref[...] + b_ref[...].astype(jnp.float32)
        if act == "leaky_relu":
            acc = jnp.where(acc > 0, acc, 0.01 * acc)  # nn.LeakyReLU default
        elif act == "tanh":
            acc = jnp.tanh(acc)
        o_ref[...] = acc.astype(o_ref.dtype)


def _fc_reparam_kernel(x_ref, w_ref, b_ref, eps_ref, mu_ref, lv_ref, z_ref, *, lp):
    """Fused fc_mu + fc_var (weights concatenated along N) + reparameterize."""
    acc = jnp.dot(x_ref[...], w_ref[...], preferred_element_type=jnp.float32)
    acc = acc + b_ref[...].astype(jnp.float32)
    mu = acc[:, :lp]
    lv = acc[:, lp:]
    mu_ref[...] = mu
    lv_ref[...] = lv
    z_ref[...] = eps_ref[...] * jnp.exp(0.5 * lv) + mu


# ---------------------------------------------------------------------------
# Kernel wrappers
# ---------------------------------------------------------------------------
def matmul_bias_act(x, w, b, act="none", out_dtype=jnp.float32):
    """y = act(x @ w + b).  x:(M,K) bf16, w:(K,N) bf16, b:(1,N) f32; K,N % 128 == 0."""
    M, K = x.shape
    Kw, N = w.shape
    assert K == Kw and K % LANE == 0 and N % LANE == 0
    tm = _pick_tile(M, (512, 256, 128, 64, 32, 16, 8))
    tn = _pick_tile(N, (512, 256, 128))
    tk = _pick_tile(K, (1024, 512, 384, 256, 128))
    grid = (M // tm, N // tn, K // tk)
    out_itemsize = jnp.dtype(out_dtype).itemsize
    cost = pl.CostEstimate(
        flops=2 * M * K * N,
        transcendentals=M * N if act == "tanh" else 0,
        bytes_accessed=(x.size * x.dtype.itemsize + w.size * w.dtype.itemsize
                        + b.size * b.dtype.itemsize + M * N * out_itemsize))
    return pl.pallas_call(
        functools.partial(_matmul_bias_act_kernel, act=act),
        out_shape=jax.ShapeDtypeStruct((M, N), out_dtype),
        grid=grid,
        in_specs=[
            pl.BlockSpec((tm, tk), lambda i, j, k: (i, k)),
            pl.BlockSpec((tk, tn), lambda i, j, k: (k, j)),
            pl.BlockSpec((1, tn), lambda i, j, k: (0, j)),
        ],
        out_specs=pl.BlockSpec((tm, tn), lambda i, j, k: (i, j)),
        scratch_shapes=[pltpu.VMEM((tm, tn), jnp.float32)],
        compiler_params=pltpu.CompilerParams(
            dimension_semantics=("parallel", "parallel", "arbitrary")),
        cost_estimate=cost,
    )(x, w, b)


def fc_reparam(hf, w, b, eps, lp):
    """(mu, log_var, z) = fused fc_mu/fc_var matmul + reparameterization."""
    M, K = hf.shape
    out_sd = jax.ShapeDtypeStruct((M, lp), jnp.float32)
    cost = pl.CostEstimate(
        flops=2 * M * K * w.shape[1] + 4 * M * lp,
        transcendentals=M * lp,
        bytes_accessed=(hf.size * hf.dtype.itemsize + w.size * w.dtype.itemsize
                        + b.size * b.dtype.itemsize + eps.size * 4 + 3 * M * lp * 4))
    return pl.pallas_call(
        functools.partial(_fc_reparam_kernel, lp=lp),
        out_shape=(out_sd, out_sd, out_sd),
        cost_estimate=cost,
    )(hf, w, b, eps)


# ---------------------------------------------------------------------------
# Conv / ConvTranspose as lane-dense im2col + Pallas matmul (NHWC, padded C)
# ---------------------------------------------------------------------------
def conv2d_nhwc(x, w, b, stride, pad, act, out_dtype):
    """3x3 conv.  x:(B,H,W,Cp) bf16; w:(9*Cp, Np) bf16 (row order ki,kj,c); b:(1,Np)."""
    B = x.shape[0]
    if pad:
        x = jnp.pad(x, ((0, 0), (pad, pad), (pad, pad), (0, 0)))
    Hp, Wp, C = x.shape[1], x.shape[2], x.shape[3]
    Ho = (Hp - 3) // stride + 1
    Wo = (Wp - 3) // stride + 1
    # lane-dense im2col: 9 strided slices concatenated on the channel axis
    slices = [x[:, i:i + stride * Ho:stride, j:j + stride * Wo:stride, :]
              for i in range(3) for j in range(3)]
    patches = jnp.concatenate(slices, axis=-1).reshape(B * Ho * Wo, 9 * C)
    out = matmul_bias_act(patches, w, b, act=act, out_dtype=out_dtype)
    return out.reshape(B, Ho, Wo, w.shape[1])


def conv_transpose2d_nhwc(x, w_sub, b_sub, act, out_dtype):
    """ConvTranspose2d(k=3, s=2, p=1, output_padding=1) via sub-pixel decomposition.

    x:(B,H,W,Cp) bf16; w_sub:(4*Cp, 4*Cop) bf16 (rows: di,dj,c; cols: a,b,o);
    output pixel (2i+a, 2j+b) = sum over 2x2 patch at (i+di, j+dj).  -> (B,2H,2W,Cop).
    """
    B, H, W, C = x.shape
    Cop = w_sub.shape[1] // 4
    xp = jnp.pad(x, ((0, 0), (0, 1), (0, 1), (0, 0)))
    slices = [xp[:, di:di + H, dj:dj + W, :]
              for di in range(2) for dj in range(2)]
    patches = jnp.concatenate(slices, axis=-1).reshape(B * H * W, 4 * C)
    out = matmul_bias_act(patches, w_sub, b_sub, act=act, out_dtype=out_dtype)
    out = out.reshape(B, H, W, 2, 2, Cop)
    out = out.transpose(0, 1, 3, 2, 4, 5).reshape(B, 2 * H, 2 * W, Cop)
    return out


# ---------------------------------------------------------------------------
# Parameters: logical (PyTorch-layout) init + one-time matmul-layout prepare
# ---------------------------------------------------------------------------
def init_params(key, img_size, in_channels, latent_dim, hidden_dims):
    """xavier_uniform_ weights, zero biases — as in VAE.initialize_weights()."""
    h0, h1 = hidden_dims
    feat = img_size // 4
    flat = h1 * feat * feat
    ks = jax.random.split(key, 8)

    def xavier(k, shape, fan_in, fan_out):
        bound = (6.0 / (fan_in + fan_out)) ** 0.5
        return jax.random.uniform(k, shape, jnp.float32, -bound, bound)

    return {
        "enc_conv1_w": xavier(ks[0], (h0, in_channels, 3, 3), in_channels * 9, h0 * 9),
        "enc_conv1_b": jnp.zeros((h0,), jnp.float32),
        "enc_conv2_w": xavier(ks[1], (h1, h0, 3, 3), h0 * 9, h1 * 9),
        "enc_conv2_b": jnp.zeros((h1,), jnp.float32),
        "fc_mu_w": xavier(ks[2], (latent_dim, flat), flat, latent_dim),
        "fc_mu_b": jnp.zeros((latent_dim,), jnp.float32),
        "fc_var_w": xavier(ks[3], (latent_dim, flat), flat, latent_dim),
        "fc_var_b": jnp.zeros((latent_dim,), jnp.float32),
        "dec_fc_w": xavier(ks[4], (flat, latent_dim), latent_dim, flat),
        "dec_fc_b": jnp.zeros((flat,), jnp.float32),
        "dec_deconv1_w": xavier(ks[5], (h1, h0, 3, 3), h0 * 9, h1 * 9),
        "dec_deconv1_b": jnp.zeros((h0,), jnp.float32),
        "dec_deconv2_w": xavier(ks[6], (h0, h0, 3, 3), h0 * 9, h0 * 9),
        "dec_deconv2_b": jnp.zeros((h0,), jnp.float32),
        "dec_final_w": xavier(ks[7], (in_channels, h0, 3, 3), h0 * 9, in_channels * 9),
        "dec_final_b": jnp.zeros((in_channels,), jnp.float32),
    }


def _prep_conv_w(w):
    # (Cout, Cin, 3, 3) -> (9*Cin_p, Cout_p) bf16, row order (ki, kj, c)
    cout, cin = w.shape[0], w.shape[1]
    cinp, coutp = _round_up(cin, LANE), _round_up(cout, LANE)
    w = jnp.transpose(w, (2, 3, 1, 0))
    w = jnp.pad(w, ((0, 0), (0, 0), (0, cinp - cin), (0, coutp - cout)))
    return w.reshape(9 * cinp, coutp).astype(jnp.bfloat16)


def _prep_deconv_w(wt):
    # PyTorch ConvTranspose2d weight (Cin, Cout, 3, 3) -> sub-pixel matmul
    # weight (4*Cin_p, 4*Cout_p).  Output phase (a,b) at patch offset (di,dj)
    # uses kernel tap (a+1-2*di, b+1-2*dj) when in range, else zero.
    cin, cout = wt.shape[0], wt.shape[1]
    cinp, coutp = _round_up(cin, LANE), _round_up(cout, LANE)
    w_sub = jnp.zeros((2, 2, cin, 2, 2, cout), wt.dtype)
    for di in range(2):
        for dj in range(2):
            for a in range(2):
                for bb in range(2):
                    ky = a + 1 - 2 * di
                    kx = bb + 1 - 2 * dj
                    if 0 <= ky <= 2 and 0 <= kx <= 2:
                        w_sub = w_sub.at[di, dj, :, a, bb, :].set(wt[:, :, ky, kx])
    w_sub = jnp.pad(w_sub, ((0, 0), (0, 0), (0, cinp - cin),
                            (0, 0), (0, 0), (0, coutp - cout)))
    return w_sub.reshape(4 * cinp, 4 * coutp).astype(jnp.bfloat16)


def _prep_bias(b, tile=1):
    n = b.shape[0]
    b = jnp.pad(b, (0, _round_up(n, LANE) - n))
    if tile > 1:
        b = jnp.tile(b, tile)
    return b.reshape(1, -1).astype(jnp.float32)


def prepare_params(params, img_size, in_channels, latent_dim, hidden_dims):
    """One-time layout transform (outside the hot path): matmul-ready,
    channel-padded, pre-transposed / pre-flipped, bf16 weights + f32 biases."""
    h0, h1 = hidden_dims
    feat = img_size // 4
    h1p = _round_up(h1, LANE)
    lp = _round_up(latent_dim, LANE)

    # encoder fc_mu / fc_var: rows reordered to the NHWC-padded flatten order,
    # then fused along N (mu columns first, log_var columns second).
    def enc_fc(w):  # logical (L, h1*feat*feat), NCHW flatten order
        w = w.reshape(latent_dim, h1, feat, feat)
        w = jnp.transpose(w, (2, 3, 1, 0))                    # (feat, feat, h1, L)
        w = jnp.pad(w, ((0, 0), (0, 0), (0, h1p - h1), (0, lp - latent_dim)))
        return w.reshape(feat * feat * h1p, lp)

    w_fc = jnp.concatenate([enc_fc(params["fc_mu_w"]),
                            enc_fc(params["fc_var_w"])], axis=1).astype(jnp.bfloat16)
    b_fc = jnp.concatenate([
        jnp.pad(params["fc_mu_b"], (0, lp - latent_dim)),
        jnp.pad(params["fc_var_b"], (0, lp - latent_dim))]).reshape(1, -1)

    # decoder fc: (flat, L) -> (Lp, feat*feat*h1p), columns in NHWC-padded order
    w_dfc = params["dec_fc_w"].reshape(h1, feat, feat, latent_dim)
    w_dfc = jnp.transpose(w_dfc, (3, 1, 2, 0))                # (L, feat, feat, h1)
    w_dfc = jnp.pad(w_dfc, ((0, lp - latent_dim), (0, 0), (0, 0), (0, h1p - h1)))
    w_dfc = w_dfc.reshape(lp, feat * feat * h1p).astype(jnp.bfloat16)
    b_dfc = jnp.transpose(params["dec_fc_b"].reshape(h1, feat, feat), (1, 2, 0))
    b_dfc = jnp.pad(b_dfc, ((0, 0), (0, 0), (0, h1p - h1))).reshape(1, -1)

    return {
        "enc_conv1_w": _prep_conv_w(params["enc_conv1_w"]),
        "enc_conv1_b": _prep_bias(params["enc_conv1_b"]),
        "enc_conv2_w": _prep_conv_w(params["enc_conv2_w"]),
        "enc_conv2_b": _prep_bias(params["enc_conv2_b"]),
        "fc_w": w_fc,
        "fc_b": b_fc.astype(jnp.float32),
        "dec_fc_w": w_dfc,
        "dec_fc_b": b_dfc.astype(jnp.float32),
        "dec_deconv1_w": _prep_deconv_w(params["dec_deconv1_w"]),
        "dec_deconv1_b": _prep_bias(params["dec_deconv1_b"], tile=4),
        "dec_deconv2_w": _prep_deconv_w(params["dec_deconv2_w"]),
        "dec_deconv2_b": _prep_bias(params["dec_deconv2_b"], tile=4),
        "dec_final_w": _prep_conv_w(params["dec_final_w"]),
        "dec_final_b": _prep_bias(params["dec_final_b"]),
    }


# ---------------------------------------------------------------------------
# VAE forward: returns (recons, input, mu, log_var)
# ---------------------------------------------------------------------------
def vae_forward(pp, x, eps, *, img_size, in_channels, latent_dim, hidden_dims):
    h0, h1 = hidden_dims
    feat = img_size // 4
    h1p = _round_up(h1, LANE)
    lp = _round_up(latent_dim, LANE)
    cinp = _round_up(in_channels, LANE)
    B = x.shape[0]

    # NCHW -> NHWC once, pad channels to the lane width, cast to bf16 for the MXU.
    xh = jnp.transpose(x, (0, 2, 3, 1))
    xh = jnp.pad(xh, ((0, 0), (0, 0), (0, 0), (0, cinp - in_channels)))
    xh = xh.astype(jnp.bfloat16)

    # ---- Encoder ----
    h = conv2d_nhwc(xh, pp["enc_conv1_w"], pp["enc_conv1_b"], 2, 1,
                    "leaky_relu", jnp.bfloat16)
    h = conv2d_nhwc(h, pp["enc_conv2_w"], pp["enc_conv2_b"], 2, 1,
                    "leaky_relu", jnp.bfloat16)
    hf = h.reshape(B, feat * feat * h1p)                      # lane-dense flatten

    # ---- fc_mu + fc_var + reparameterize (single fused pallas_call) ----
    eps_p = jnp.pad(eps, ((0, 0), (0, lp - latent_dim)))      # padded lanes stay 0
    mu_p, lv_p, z_p = fc_reparam(hf, pp["fc_w"], pp["fc_b"], eps_p, lp)

    # ---- Decoder ----
    d = matmul_bias_act(z_p.astype(jnp.bfloat16), pp["dec_fc_w"], pp["dec_fc_b"],
                        act="none", out_dtype=jnp.bfloat16)
    d = d.reshape(B, feat, feat, h1p)
    d = conv_transpose2d_nhwc(d, pp["dec_deconv1_w"], pp["dec_deconv1_b"],
                              "leaky_relu", jnp.bfloat16)
    d = conv_transpose2d_nhwc(d, pp["dec_deconv2_w"], pp["dec_deconv2_b"],
                              "leaky_relu", jnp.bfloat16)
    r = conv2d_nhwc(d, pp["dec_final_w"], pp["dec_final_b"], 1, 1,
                    "tanh", jnp.float32)

    # slice the padded channels / latent lanes exactly once, at the end
    recons = jnp.transpose(r[:, :, :, :in_channels], (0, 3, 1, 2))
    return recons, x, mu_p[:, :latent_dim], lv_p[:, :latent_dim]


# ---------------------------------------------------------------------------
if __name__ == "__main__":
    IMG, CIN, LATENT, B = 16, 4, 8, 2
    HIDDEN = (8, 16)

    key = jax.random.PRNGKey(0)
    k_param, k_x, k_eps = jax.random.split(key, 3)

    params = init_params(k_param, IMG, CIN, LATENT, HIDDEN)
    pp = prepare_params(params, IMG, CIN, LATENT, HIDDEN)     # one-time layout prep
    x = jax.random.normal(k_x, (B, CIN, IMG, IMG), jnp.float32)
    eps = jax.random.normal(k_eps, (B, LATENT), jnp.float32)  # reparam noise (explicit input)

    fwd = jax.jit(functools.partial(
        vae_forward, img_size=IMG, in_channels=CIN,
        latent_dim=LATENT, hidden_dims=HIDDEN))
    recons, inp, mu, log_var = fwd(pp, x, eps)
    jax.block_until_ready((recons, inp, mu, log_var))

    assert recons.shape == (B, CIN, IMG, IMG)
    assert inp.shape == (B, CIN, IMG, IMG)
    assert mu.shape == (B, LATENT)
    assert log_var.shape == (B, LATENT)
    assert jnp.all(jnp.isfinite(recons))
    assert jnp.all(jnp.isfinite(mu)) and jnp.all(jnp.isfinite(log_var))

    print("KERNEL_OK")
</pallas_src>

<mosaic_0001>
module attributes {stable_mosaic.version = 11 : i64} {
  func.func @_matmul_bias_act_kernel(%arg0: i32, %arg1: i32, %arg2: i32, %arg3: memref<128x384xbf16, #tpu.memory_space<vmem>>, %arg4: memref<384x128xbf16, #tpu.memory_space<vmem>>, %arg5: memref<1x128xf32, #tpu.memory_space<vmem>>, %arg6: memref<128x128xbf16, #tpu.memory_space<vmem>>, %arg7: memref<128x128xf32, #tpu.memory_space<vmem>>) attributes {dimension_semantics = [#tpu.dimension_semantics<parallel>, #tpu.dimension_semantics<parallel>, #tpu.dimension_semantics<arbitrary>], iteration_bounds = array<i64: 1, 1, 3>, scalar_prefetch = 0 : i64, scratch_operands = 1 : i64, tpu.core_type = #tpu.core_type<tc>, window_params = [{transform_indices = @transform_0, window_bounds = array<i64: 128, 384>}, {transform_indices = @transform_1, window_bounds = array<i64: 384, 128>}, {transform_indices = @transform_2, window_bounds = array<i64: 1, 128>}, {transform_indices = @transform_3, window_bounds = array<i64: 128, 128>}]} {
    %c0_i32 = arith.constant 0 : i32
    %0 = arith.cmpi eq, %arg2, %c0_i32 : i32
    %1 = arith.extui %0 : i1 to i32
    %c0_i32_0 = arith.constant 0 : i32
    %2 = arith.cmpi ne, %1, %c0_i32_0 : i32
    scf.if %2 {
      %cst_9 = arith.constant 0.000000e+00 : f32
      %12 = vector.broadcast %cst_9 : f32 to vector<128x128xf32>
      %c0_10 = arith.constant 0 : index
      %c0_11 = arith.constant 0 : index
      %13 = vector.load %arg7[%c0_10, %c0_11] : memref<128x128xf32, #tpu.memory_space<vmem>>, vector<128x128xf32>
      tpu.vector_store %arg7[%c0_10, %c0_11], %12 {strides = array<i32>} : memref<128x128xf32, #tpu.memory_space<vmem>>, vector<128x128xf32>,
    } else {
    }
    %c0 = arith.constant 0 : index
    %c0_1 = arith.constant 0 : index
    %3 = vector.load %arg7[%c0, %c0_1] : memref<128x128xf32, #tpu.memory_space<vmem>>, vector<128x128xf32>
    %c0_2 = arith.constant 0 : index
    %c0_3 = arith.constant 0 : index
    %4 = vector.load %arg3[%c0_2, %c0_3] : memref<128x384xbf16, #tpu.memory_space<vmem>>, vector<128x384xbf16>
    %c0_4 = arith.constant 0 : index
    %c0_5 = arith.constant 0 : index
    %5 = vector.load %arg4[%c0_4, %c0_5] : memref<384x128xbf16, #tpu.memory_space<vmem>>, vector<384x128xbf16>
    %cst = arith.constant dense<0.000000e+00> : vector<128x128xf32>
    %6 = tpu.matmul %4, %5, %cst {dimension_numbers = #tpu.dot_dimension_numbers<[1], [0], [0], [1], [0, 0, 1, 1], [], []>} : vector<128x384xbf16>, vector<384x128xbf16>, vector<128x128xf32> -> vector<128x128xf32>
    %7 = arith.addf %3, %6 : vector<128x128xf32>
    %c0_6 = arith.constant 0 : index
    %c0_7 = arith.constant 0 : index
    %8 = vector.load %arg7[%c0_6, %c0_7] : memref<128x128xf32, #tpu.memory_space<vmem>>, vector<128x128xf32>
    tpu.vector_store %arg7[%c0_6, %c0_7], %7 {strides = array<i32>} : memref<128x128xf32, #tpu.memory_space<vmem>>, vector<128x128xf32>,
    %c2_i32 = arith.constant 2 : i32
    %9 = arith.cmpi eq, %arg2, %c2_i32 : i32
    %10 = arith.extui %9 : i1 to i32
    %c0_i32_8 = arith.constant 0 : i32
    %11 = arith.cmpi ne, %10, %c0_i32_8 : i32
    scf.if %11 {
      %c0_9 = arith.constant 0 : index
      %c0_10 = arith.constant 0 : index
      %12 = vector.load %arg7[%c0_9, %c0_10] : memref<128x128xf32, #tpu.memory_space<vmem>>, vector<128x128xf32>
      %c0_11 = arith.constant 0 : index
      %c0_12 = arith.constant 0 : index
      %13 = vector.load %arg5[%c0_11, %c0_12] : memref<1x128xf32, #tpu.memory_space<vmem>>, vector<1x128xf32>
      %14 = vector.broadcast %13 : vector<1x128xf32> to vector<128x128xf32>
      %15 = arith.addf %12, %14 : vector<128x128xf32>
      %cst_13 = arith.constant 0.000000e+00 : f32
      %16 = vector.broadcast %cst_13 : f32 to vector<128x128xf32>
      %17 = arith.cmpf ogt, %15, %16 : vector<128x128xf32>
      %cst_14 = arith.constant 0.00999999977 : f32
      %18 = vector.broadcast %cst_14 : f32 to vector<128x128xf32>
      %19 = arith.mulf %18, %15 : vector<128x128xf32>
      %20 = arith.select %17, %15, %19 : vector<128x128xi1>, vector<128x128xf32>
      %21 = arith.truncf %20 : vector<128x128xf32> to vector<128x128xbf16>
      %c0_15 = arith.constant 0 : index
      %c0_16 = arith.constant 0 : index
      %22 = vector.load %arg6[%c0_15, %c0_16] : memref<128x128xbf16, #tpu.memory_space<vmem>>, vector<128x128xbf16>
      tpu.vector_store %arg6[%c0_15, %c0_16], %21 {strides = array<i32>} : memref<128x128xbf16, #tpu.memory_space<vmem>>, vector<128x128xbf16>,
    } else {
    }
    return
  }
  func.func @transform_0(%arg0: i32, %arg1: i32, %arg2: i32) -> (i32, i32) {
    %c0_i32 = arith.constant 0 : i32
    return %arg0, %arg2 : i32, i32
  }
  func.func @transform_1(%arg0: i32, %arg1: i32, %arg2: i32) -> (i32, i32) {
    %c0_i32 = arith.constant 0 : i32
    return %arg2, %arg1 : i32, i32
  }
  func.func @transform_2(%arg0: i32, %arg1: i32, %arg2: i32) -> (i32, i32) {
    %c0_i32 = arith.constant 0 : i32
    %c0_i32_0 = arith.constant 0 : i32
    return %c0_i32, %arg1 : i32, i32
  }
  func.func @transform_3(%arg0: i32, %arg1: i32, %arg2: i32) -> (i32, i32) {
    %c0_i32 = arith.constant 0 : i32
    return %arg0, %arg1 : i32, i32
  }
}

module attributes {stable_mosaic.version = 11 : i64} {
  func.func @_matmul_bias_act_kernel(%arg0: i32, %arg1: i32, %arg2: i32, %arg3: memref<32x384xbf16, #tpu.memory_space<vmem>>, %arg4: memref<384x128xbf16, #tpu.memory_space<vmem>>, %arg5: memref<1x128xf32, #tpu.memory_space<vmem>>, %arg6: memref<32x128xbf16, #tpu.memory_space<vmem>>, %arg7: memref<32x128xf32, #tpu.memory_space<vmem>>) attributes {dimension_semantics = [#tpu.dimension_semantics<parallel>, #tpu.dimension_semantics<parallel>, #tpu.dimension_semantics<arbitrary>], iteration_bounds = array<i64: 1, 1, 3>, scalar_prefetch = 0 : i64, scratch_operands = 1 : i64, tpu.core_type = #tpu.core_type<tc>, window_params = [{transform_indices = @transform_0, window_bounds = array<i64: 32, 384>}, {transform_indices = @transform_1, window_bounds = array<i64: 384, 128>}, {transform_indices = @transform_2, window_bounds = array<i64: 1, 128>}, {transform_indices = @transform_3, window_bounds = array<i64: 32, 128>}]} {
    %c0_i32 = arith.constant 0 : i32
    %0 = arith.cmpi eq, %arg2, %c0_i32 : i32
    %1 = arith.extui %0 : i1 to i32
    %c0_i32_0 = arith.constant 0 : i32
    %2 = arith.cmpi ne, %1, %c0_i32_0 : i32
    scf.if %2 {
      %cst_9 = arith.constant 0.000000e+00 : f32
      %12 = vector.broadcast %cst_9 : f32 to vector<32x128xf32>
      %c0_10 = arith.constant 0 : index
      %c0_11 = arith.constant 0 : index
      %13 = vector.load %arg7[%c0_10, %c0_11] : memref<32x128xf32, #tpu.memory_space<vmem>>, vector<32x128xf32>
      tpu.vector_store %arg7[%c0_10, %c0_11], %12 {strides = array<i32>} : memref<32x128xf32, #tpu.memory_space<vmem>>, vector<32x128xf32>,
    } else {
    }
    %c0 = arith.constant 0 : index
    %c0_1 = arith.constant 0 : index
    %3 = vector.load %arg7[%c0, %c0_1] : memref<32x128xf32, #tpu.memory_space<vmem>>, vector<32x128xf32>
    %c0_2 = arith.constant 0 : index
    %c0_3 = arith.constant 0 : index
    %4 = vector.load %arg3[%c0_2, %c0_3] : memref<32x384xbf16, #tpu.memory_space<vmem>>, vector<32x384xbf16>
    %c0_4 = arith.constant 0 : index
    %c0_5 = arith.constant 0 : index
    %5 = vector.load %arg4[%c0_4, %c0_5] : memref<384x128xbf16, #tpu.memory_space<vmem>>, vector<384x128xbf16>
    %cst = arith.constant dense<0.000000e+00> : vector<32x128xf32>
    %6 = tpu.matmul %4, %5, %cst {dimension_numbers = #tpu.dot_dimension_numbers<[1], [0], [0], [1], [0, 0, 1, 1], [], []>} : vector<32x384xbf16>, vector<384x128xbf16>, vector<32x128xf32> -> vector<32x128xf32>
    %7 = arith.addf %3, %6 : vector<32x128xf32>
    %c0_6 = arith.constant 0 : index
    %c0_7 = arith.constant 0 : index
    %8 = vector.load %arg7[%c0_6, %c0_7] : memref<32x128xf32, #tpu.memory_space<vmem>>, vector<32x128xf32>
    tpu.vector_store %arg7[%c0_6, %c0_7], %7 {strides = array<i32>} : memref<32x128xf32, #tpu.memory_space<vmem>>, vector<32x128xf32>,
    %c2_i32 = arith.constant 2 : i32
    %9 = arith.cmpi eq, %arg2, %c2_i32 : i32
    %10 = arith.extui %9 : i1 to i32
    %c0_i32_8 = arith.constant 0 : i32
    %11 = arith.cmpi ne, %10, %c0_i32_8 : i32
    scf.if %11 {
      %c0_9 = arith.constant 0 : index
      %c0_10 = arith.constant 0 : index
      %12 = vector.load %arg7[%c0_9, %c0_10] : memref<32x128xf32, #tpu.memory_space<vmem>>, vector<32x128xf32>
      %c0_11 = arith.constant 0 : index
      %c0_12 = arith.constant 0 : index
      %13 = vector.load %arg5[%c0_11, %c0_12] : memref<1x128xf32, #tpu.memory_space<vmem>>, vector<1x128xf32>
      %14 = vector.broadcast %13 : vector<1x128xf32> to vector<32x128xf32>
      %15 = arith.addf %12, %14 : vector<32x128xf32>
      %cst_13 = arith.constant 0.000000e+00 : f32
      %16 = vector.broadcast %cst_13 : f32 to vector<32x128xf32>
      %17 = arith.cmpf ogt, %15, %16 : vector<32x128xf32>
      %cst_14 = arith.constant 0.00999999977 : f32
      %18 = vector.broadcast %cst_14 : f32 to vector<32x128xf32>
      %19 = arith.mulf %18, %15 : vector<32x128xf32>
      %20 = arith.select %17, %15, %19 : vector<32x128xi1>, vector<32x128xf32>
      %21 = arith.truncf %20 : vector<32x128xf32> to vector<32x128xbf16>
      %c0_15 = arith.constant 0 : index
      %c0_16 = arith.constant 0 : index
      %22 = vector.load %arg6[%c0_15, %c0_16] : memref<32x128xbf16, #tpu.memory_space<vmem>>, vector<32x128xbf16>
      tpu.vector_store %arg6[%c0_15, %c0_16], %21 {strides = array<i32>} : memref<32x128xbf16, #tpu.memory_space<vmem>>, vector<32x128xbf16>,
    } else {
    }
    return
  }
  func.func @transform_0(%arg0: i32, %arg1: i32, %arg2: i32) -> (i32, i32) {
    %c0_i32 = arith.constant 0 : i32
    return %arg0, %arg2 : i32, i32
  }
  func.func @transform_1(%arg0: i32, %arg1: i32, %arg2: i32) -> (i32, i32) {
    %c0_i32 = arith.constant 0 : i32
    return %arg2, %arg1 : i32, i32
  }
  func.func @transform_2(%arg0: i32, %arg1: i32, %arg2: i32) -> (i32, i32) {
    %c0_i32 = arith.constant 0 : i32
    %c0_i32_0 = arith.constant 0 : i32
    return %c0_i32, %arg1 : i32, i32
  }
  func.func @transform_3(%arg0: i32, %arg1: i32, %arg2: i32) -> (i32, i32) {
    %c0_i32 = arith.constant 0 : i32
    return %arg0, %arg1 : i32, i32
  }
}

module attributes {stable_mosaic.version = 11 : i64} {
  func.func @_fc_reparam_kernel(%arg0: memref<2x2048xbf16, #tpu.memory_space<vmem>>, %arg1: memref<2048x256xbf16, #tpu.memory_space<vmem>>, %arg2: memref<1x256xf32, #tpu.memory_space<vmem>>, %arg3: memref<2x128xf32, #tpu.memory_space<vmem>>, %arg4: memref<2x128xf32, #tpu.memory_space<vmem>>, %arg5: memref<2x128xf32, #tpu.memory_space<vmem>>, %arg6: memref<2x128xf32, #tpu.memory_space<vmem>>) attributes {dimension_semantics = [], scalar_prefetch = 0 : i64, scratch_operands = 0 : i64, tpu.core_type = #tpu.core_type<tc>} {
    %c0 = arith.constant 0 : index
    %c0_0 = arith.constant 0 : index
    %0 = vector.load %arg0[%c0, %c0_0] : memref<2x2048xbf16, #tpu.memory_space<vmem>>, vector<2x2048xbf16>
    %c0_1 = arith.constant 0 : index
    %c0_2 = arith.constant 0 : index
    %1 = vector.load %arg1[%c0_1, %c0_2] : memref<2048x256xbf16, #tpu.memory_space<vmem>>, vector<2048x256xbf16>
    %cst = arith.constant dense<0.000000e+00> : vector<2x256xf32>
    %2 = tpu.matmul %0, %1, %cst {dimension_numbers = #tpu.dot_dimension_numbers<[1], [0], [0], [1], [0, 0, 1, 1], [], []>} : vector<2x2048xbf16>, vector<2048x256xbf16>, vector<2x256xf32> -> vector<2x256xf32>
    %c0_3 = arith.constant 0 : index
    %c0_4 = arith.constant 0 : index
    %3 = vector.load %arg2[%c0_3, %c0_4] : memref<1x256xf32, #tpu.memory_space<vmem>>, vector<1x256xf32>
    %4 = vector.broadcast %3 : vector<1x256xf32> to vector<2x256xf32>
    %5 = arith.addf %2, %4 : vector<2x256xf32>
    %6 = vector.extract_strided_slice %5 {offsets = [0, 0], sizes = [2, 128], strides = [1, 1]} : vector<2x256xf32> to vector<2x128xf32>
    %7 = vector.extract_strided_slice %5 {offsets = [0, 128], sizes = [2, 128], strides = [1, 1]} : vector<2x256xf32> to vector<2x128xf32>
    %c0_5 = arith.constant 0 : index
    %c0_6 = arith.constant 0 : index
    %8 = vector.load %arg4[%c0_5, %c0_6] : memref<2x128xf32, #tpu.memory_space<vmem>>, vector<2x128xf32>
    tpu.vector_store %arg4[%c0_5, %c0_6], %6 {strides = array<i32>} : memref<2x128xf32, #tpu.memory_space<vmem>>, vector<2x128xf32>,
    %c0_7 = arith.constant 0 : index
    %c0_8 = arith.constant 0 : index
    %9 = vector.load %arg5[%c0_7, %c0_8] : memref<2x128xf32, #tpu.memory_space<vmem>>, vector<2x128xf32>
    tpu.vector_store %arg5[%c0_7, %c0_8], %7 {strides = array<i32>} : memref<2x128xf32, #tpu.memory_space<vmem>>, vector<2x128xf32>,
    %c0_9 = arith.constant 0 : index
    %c0_10 = arith.constant 0 : index
    %10 = vector.load %arg3[%c0_9, %c0_10] : memref<2x128xf32, #tpu.memory_space<vmem>>, vector<2x128xf32>
    %cst_11 = arith.constant 5.000000e-01 : f32
    %11 = vector.broadcast %cst_11 : f32 to vector<2x128xf32>
    %12 = arith.mulf %11, %7 : vector<2x128xf32>
    %13 = math.exp %12 : vector<2x128xf32>
    %14 = arith.mulf %10, %13 : vector<2x128xf32>
    %15 = arith.addf %14, %6 : vector<2x128xf32>
    %c0_12 = arith.constant 0 : index
    %c0_13 = arith.constant 0 : index
    %16 = vector.load %arg6[%c0_12, %c0_13] : memref<2x128xf32, #tpu.memory_space<vmem>>, vector<2x128xf32>
    tpu.vector_store %arg6[%c0_12, %c0_13], %15 {strides = array<i32>} : memref<2x128xf32, #tpu.memory_space<vmem>>, vector<2x128xf32>,
    return
  }
}

module attributes {stable_mosaic.version = 11 : i64} {
  func.func @_matmul_bias_act_kernel(%arg0: i32, %arg1: i32, %arg2: i32, %arg3: memref<2x128xbf16, #tpu.memory_space<vmem>>, %arg4: memref<128x512xbf16, #tpu.memory_space<vmem>>, %arg5: memref<1x512xf32, #tpu.memory_space<vmem>>, %arg6: memref<2x512xbf16, #tpu.memory_space<vmem>>, %arg7: memref<2x512xf32, #tpu.memory_space<vmem>>) attributes {dimension_semantics = [#tpu.dimension_semantics<parallel>, #tpu.dimension_semantics<parallel>, #tpu.dimension_semantics<arbitrary>], iteration_bounds = array<i64: 1, 4, 1>, scalar_prefetch = 0 : i64, scratch_operands = 1 : i64, tpu.core_type = #tpu.core_type<tc>, window_params = [{transform_indices = @transform_0, window_bounds = array<i64: 2, 128>}, {transform_indices = @transform_1, window_bounds = array<i64: 128, 512>}, {transform_indices = @transform_2, window_bounds = array<i64: 1, 512>}, {transform_indices = @transform_3, window_bounds = array<i64: 2, 512>}]} {
    %c0_i32 = arith.constant 0 : i32
    %0 = arith.cmpi eq, %arg2, %c0_i32 : i32
    %1 = arith.extui %0 : i1 to i32
    %c0_i32_0 = arith.constant 0 : i32
    %2 = arith.cmpi ne, %1, %c0_i32_0 : i32
    scf.if %2 {
      %cst_10 = arith.constant 0.000000e+00 : f32
      %12 = vector.broadcast %cst_10 : f32 to vector<2x512xf32>
      %c0_11 = arith.constant 0 : index
      %c0_12 = arith.constant 0 : index
      %13 = vector.load %arg7[%c0_11, %c0_12] : memref<2x512xf32, #tpu.memory_space<vmem>>, vector<2x512xf32>
      tpu.vector_store %arg7[%c0_11, %c0_12], %12 {strides = array<i32>} : memref<2x512xf32, #tpu.memory_space<vmem>>, vector<2x512xf32>,
    } else {
    }
    %c0 = arith.constant 0 : index
    %c0_1 = arith.constant 0 : index
    %3 = vector.load %arg7[%c0, %c0_1] : memref<2x512xf32, #tpu.memory_space<vmem>>, vector<2x512xf32>
    %c0_2 = arith.constant 0 : index
    %c0_3 = arith.constant 0 : index
    %4 = vector.load %arg3[%c0_2, %c0_3] : memref<2x128xbf16, #tpu.memory_space<vmem>>, vector<2x128xbf16>
    %c0_4 = arith.constant 0 : index
    %c0_5 = arith.constant 0 : index
    %5 = vector.load %arg4[%c0_4, %c0_5] : memref<128x512xbf16, #tpu.memory_space<vmem>>, vector<128x512xbf16>
    %cst = arith.constant dense<0.000000e+00> : vector<2x512xf32>
    %6 = tpu.matmul %4, %5, %cst {dimension_numbers = #tpu.dot_dimension_numbers<[1], [0], [0], [1], [0, 0, 1, 1], [], []>} : vector<2x128xbf16>, vector<128x512xbf16>, vector<2x512xf32> -> vector<2x512xf32>
    %7 = arith.addf %3, %6 : vector<2x512xf32>
    %c0_6 = arith.constant 0 : index
    %c0_7 = arith.constant 0 : index
    %8 = vector.load %arg7[%c0_6, %c0_7] : memref<2x512xf32, #tpu.memory_space<vmem>>, vector<2x512xf32>
    tpu.vector_store %arg7[%c0_6, %c0_7], %7 {strides = array<i32>} : memref<2x512xf32, #tpu.memory_space<vmem>>, vector<2x512xf32>,
    %c0_i32_8 = arith.constant 0 : i32
    %9 = arith.cmpi eq, %arg2, %c0_i32_8 : i32
    %10 = arith.extui %9 : i1 to i32
    %c0_i32_9 = arith.constant 0 : i32
    %11 = arith.cmpi ne, %10, %c0_i32_9 : i32
    scf.if %11 {
      %c0_10 = arith.constant 0 : index
      %c0_11 = arith.constant 0 : index
      %12 = vector.load %arg7[%c0_10, %c0_11] : memref<2x512xf32, #tpu.memory_space<vmem>>, vector<2x512xf32>
      %c0_12 = arith.constant 0 : index
      %c0_13 = arith.constant 0 : index
      %13 = vector.load %arg5[%c0_12, %c0_13] : memref<1x512xf32, #tpu.memory_space<vmem>>, vector<1x512xf32>
      %14 = vector.broadcast %13 : vector<1x512xf32> to vector<2x512xf32>
      %15 = arith.addf %12, %14 : vector<2x512xf32>
      %16 = arith.truncf %15 : vector<2x512xf32> to vector<2x512xbf16>
      %c0_14 = arith.constant 0 : index
      %c0_15 = arith.constant 0 : index
      %17 = vector.load %arg6[%c0_14, %c0_15] : memref<2x512xbf16, #tpu.memory_space<vmem>>, vector<2x512xbf16>
      tpu.vector_store %arg6[%c0_14, %c0_15], %16 {strides = array<i32>} : memref<2x512xbf16, #tpu.memory_space<vmem>>, vector<2x512xbf16>,
    } else {
    }
    return
  }
  func.func @transform_0(%arg0: i32, %arg1: i32, %arg2: i32) -> (i32, i32) {
    %c0_i32 = arith.constant 0 : i32
    return %arg0, %arg2 : i32, i32
  }
  func.func @transform_1(%arg0: i32, %arg1: i32, %arg2: i32) -> (i32, i32) {
    %c0_i32 = arith.constant 0 : i32
    return %arg2, %arg1 : i32, i32
  }
  func.func @transform_2(%arg0: i32, %arg1: i32, %arg2: i32) -> (i32, i32) {
    %c0_i32 = arith.constant 0 : i32
    %c0_i32_0 = arith.constant 0 : i32
    return %c0_i32, %arg1 : i32, i32
  }
  func.func @transform_3(%arg0: i32, %arg1: i32, %arg2: i32) -> (i32, i32) {
    %c0_i32 = arith.constant 0 : i32
    return %arg0, %arg1 : i32, i32
  }
}

module attributes {stable_mosaic.version = 11 : i64} {
  func.func @_matmul_bias_act_kernel(%arg0: i32, %arg1: i32, %arg2: i32, %arg3: memref<32x512xbf16, #tpu.memory_space<vmem>>, %arg4: memref<512x512xbf16, #tpu.memory_space<vmem>>, %arg5: memref<1x512xf32, #tpu.memory_space<vmem>>, %arg6: memref<32x512xbf16, #tpu.memory_space<vmem>>, %arg7: memref<32x512xf32, #tpu.memory_space<vmem>>) attributes {dimension_semantics = [#tpu.dimension_semantics<parallel>, #tpu.dimension_semantics<parallel>, #tpu.dimension_semantics<arbitrary>], iteration_bounds = array<i64: 1, 1, 1>, scalar_prefetch = 0 : i64, scratch_operands = 1 : i64, tpu.core_type = #tpu.core_type<tc>, window_params = [{transform_indices = @transform_0, window_bounds = array<i64: 32, 512>}, {transform_indices = @transform_1, window_bounds = array<i64: 512, 512>}, {transform_indices = @transform_2, window_bounds = array<i64: 1, 512>}, {transform_indices = @transform_3, window_bounds = array<i64: 32, 512>}]} {
    %c0_i32 = arith.constant 0 : i32
    %0 = arith.cmpi eq, %arg2, %c0_i32 : i32
    %1 = arith.extui %0 : i1 to i32
    %c0_i32_0 = arith.constant 0 : i32
    %2 = arith.cmpi ne, %1, %c0_i32_0 : i32
    scf.if %2 {
      %cst_10 = arith.constant 0.000000e+00 : f32
      %12 = vector.broadcast %cst_10 : f32 to vector<32x512xf32>
      %c0_11 = arith.constant 0 : index
      %c0_12 = arith.constant 0 : index
      %13 = vector.load %arg7[%c0_11, %c0_12] : memref<32x512xf32, #tpu.memory_space<vmem>>, vector<32x512xf32>
      tpu.vector_store %arg7[%c0_11, %c0_12], %12 {strides = array<i32>} : memref<32x512xf32, #tpu.memory_space<vmem>>, vector<32x512xf32>,
    } else {
    }
    %c0 = arith.constant 0 : index
    %c0_1 = arith.constant 0 : index
    %3 = vector.load %arg7[%c0, %c0_1] : memref<32x512xf32, #tpu.memory_space<vmem>>, vector<32x512xf32>
    %c0_2 = arith.constant 0 : index
    %c0_3 = arith.constant 0 : index
    %4 = vector.load %arg3[%c0_2, %c0_3] : memref<32x512xbf16, #tpu.memory_space<vmem>>, vector<32x512xbf16>
    %c0_4 = arith.constant 0 : index
    %c0_5 = arith.constant 0 : index
    %5 = vector.load %arg4[%c0_4, %c0_5] : memref<512x512xbf16, #tpu.memory_space<vmem>>, vector<512x512xbf16>
    %cst = arith.constant dense<0.000000e+00> : vector<32x512xf32>
    %6 = tpu.matmul %4, %5, %cst {dimension_numbers = #tpu.dot_dimension_numbers<[1], [0], [0], [1], [0, 0, 1, 1], [], []>} : vector<32x512xbf16>, vector<512x512xbf16>, vector<32x512xf32> -> vector<32x512xf32>
    %7 = arith.addf %3, %6 : vector<32x512xf32>
    %c0_6 = arith.constant 0 : index
    %c0_7 = arith.constant 0 : index
    %8 = vector.load %arg7[%c0_6, %c0_7] : memref<32x512xf32, #tpu.memory_space<vmem>>, vector<32x512xf32>
    tpu.vector_store %arg7[%c0_6, %c0_7], %7 {strides = array<i32>} : memref<32x512xf32, #tpu.memory_space<vmem>>, vector<32x512xf32>,
    %c0_i32_8 = arith.constant 0 : i32
    %9 = arith.cmpi eq, %arg2, %c0_i32_8 : i32
    %10 = arith.extui %9 : i1 to i32
    %c0_i32_9 = arith.constant 0 : i32
    %11 = arith.cmpi ne, %10, %c0_i32_9 : i32
    scf.if %11 {
      %c0_10 = arith.constant 0 : index
      %c0_11 = arith.constant 0 : index
      %12 = vector.load %arg7[%c0_10, %c0_11] : memref<32x512xf32, #tpu.memory_space<vmem>>, vector<32x512xf32>
      %c0_12 = arith.constant 0 : index
      %c0_13 = arith.constant 0 : index
      %13 = vector.load %arg5[%c0_12, %c0_13] : memref<1x512xf32, #tpu.memory_space<vmem>>, vector<1x512xf32>
      %14 = vector.broadcast %13 : vector<1x512xf32> to vector<32x512xf32>
      %15 = arith.addf %12, %14 : vector<32x512xf32>
      %cst_14 = arith.constant 0.000000e+00 : f32
      %16 = vector.broadcast %cst_14 : f32 to vector<32x512xf32>
      %17 = arith.cmpf ogt, %15, %16 : vector<32x512xf32>
      %cst_15 = arith.constant 0.00999999977 : f32
      %18 = vector.broadcast %cst_15 : f32 to vector<32x512xf32>
      %19 = arith.mulf %18, %15 : vector<32x512xf32>
      %20 = arith.select %17, %15, %19 : vector<32x512xi1>, vector<32x512xf32>
      %21 = arith.truncf %20 : vector<32x512xf32> to vector<32x512xbf16>
      %c0_16 = arith.constant 0 : index
      %c0_17 = arith.constant 0 : index
      %22 = vector.load %arg6[%c0_16, %c0_17] : memref<32x512xbf16, #tpu.memory_space<vmem>>, vector<32x512xbf16>
      tpu.vector_store %arg6[%c0_16, %c0_17], %21 {strides = array<i32>} : memref<32x512xbf16, #tpu.memory_space<vmem>>, vector<32x512xbf16>,
    } else {
    }
    return
  }
  func.func @transform_0(%arg0: i32, %arg1: i32, %arg2: i32) -> (i32, i32) {
    %c0_i32 = arith.constant 0 : i32
    return %arg0, %arg2 : i32, i32
  }
  func.func @transform_1(%arg0: i32, %arg1: i32, %arg2: i32) -> (i32, i32) {
    %c0_i32 = arith.constant 0 : i32
    return %arg2, %arg1 : i32, i32
  }
  func.func @transform_2(%arg0: i32, %arg1: i32, %arg2: i32) -> (i32, i32) {
    %c0_i32 = arith.constant 0 : i32
    %c0_i32_0 = arith.constant 0 : i32
    return %c0_i32, %arg1 : i32, i32
  }
  func.func @transform_3(%arg0: i32, %arg1: i32, %arg2: i32) -> (i32, i32) {
    %c0_i32 = arith.constant 0 : i32
    return %arg0, %arg1 : i32, i32
  }
}

module attributes {stable_mosaic.version = 11 : i64} {
  func.func @_matmul_bias_act_kernel(%arg0: i32, %arg1: i32, %arg2: i32, %arg3: memref<128x512xbf16, #tpu.memory_space<vmem>>, %arg4: memref<512x512xbf16, #tpu.memory_space<vmem>>, %arg5: memref<1x512xf32, #tpu.memory_space<vmem>>, %arg6: memref<128x512xbf16, #tpu.memory_space<vmem>>, %arg7: memref<128x512xf32, #tpu.memory_space<vmem>>) attributes {dimension_semantics = [#tpu.dimension_semantics<parallel>, #tpu.dimension_semantics<parallel>, #tpu.dimension_semantics<arbitrary>], iteration_bounds = array<i64: 1, 1, 1>, scalar_prefetch = 0 : i64, scratch_operands = 1 : i64, tpu.core_type = #tpu.core_type<tc>, window_params = [{transform_indices = @transform_0, window_bounds = array<i64: 128, 512>}, {transform_indices = @transform_1, window_bounds = array<i64: 512, 512>}, {transform_indices = @transform_2, window_bounds = array<i64: 1, 512>}, {transform_indices = @transform_3, window_bounds = array<i64: 128, 512>}]} {
    %c0_i32 = arith.constant 0 : i32
    %0 = arith.cmpi eq, %arg2, %c0_i32 : i32
    %1 = arith.extui %0 : i1 to i32
    %c0_i32_0 = arith.constant 0 : i32
    %2 = arith.cmpi ne, %1, %c0_i32_0 : i32
    scf.if %2 {
      %cst_10 = arith.constant 0.000000e+00 : f32
      %12 = vector.broadcast %cst_10 : f32 to vector<128x512xf32>
      %c0_11 = arith.constant 0 : index
      %c0_12 = arith.constant 0 : index
      %13 = vector.load %arg7[%c0_11, %c0_12] : memref<128x512xf32, #tpu.memory_space<vmem>>, vector<128x512xf32>
      tpu.vector_store %arg7[%c0_11, %c0_12], %12 {strides = array<i32>} : memref<128x512xf32, #tpu.memory_space<vmem>>, vector<128x512xf32>,
    } else {
    }
    %c0 = arith.constant 0 : index
    %c0_1 = arith.constant 0 : index
    %3 = vector.load %arg7[%c0, %c0_1] : memref<128x512xf32, #tpu.memory_space<vmem>>, vector<128x512xf32>
    %c0_2 = arith.constant 0 : index
    %c0_3 = arith.constant 0 : index
    %4 = vector.load %arg3[%c0_2, %c0_3] : memref<128x512xbf16, #tpu.memory_space<vmem>>, vector<128x512xbf16>
    %c0_4 = arith.constant 0 : index
    %c0_5 = arith.constant 0 : index
    %5 = vector.load %arg4[%c0_4, %c0_5] : memref<512x512xbf16, #tpu.memory_space<vmem>>, vector<512x512xbf16>
    %cst = arith.constant dense<0.000000e+00> : vector<128x512xf32>
    %6 = tpu.matmul %4, %5, %cst {dimension_numbers = #tpu.dot_dimension_numbers<[1], [0], [0], [1], [0, 0, 1, 1], [], []>} : vector<128x512xbf16>, vector<512x512xbf16>, vector<128x512xf32> -> vector<128x512xf32>
    %7 = arith.addf %3, %6 : vector<128x512xf32>
    %c0_6 = arith.constant 0 : index
    %c0_7 = arith.constant 0 : index
    %8 = vector.load %arg7[%c0_6, %c0_7] : memref<128x512xf32, #tpu.memory_space<vmem>>, vector<128x512xf32>
    tpu.vector_store %arg7[%c0_6, %c0_7], %7 {strides = array<i32>} : memref<128x512xf32, #tpu.memory_space<vmem>>, vector<128x512xf32>,
    %c0_i32_8 = arith.constant 0 : i32
    %9 = arith.cmpi eq, %arg2, %c0_i32_8 : i32
    %10 = arith.extui %9 : i1 to i32
    %c0_i32_9 = arith.constant 0 : i32
    %11 = arith.cmpi ne, %10, %c0_i32_9 : i32
    scf.if %11 {
      %c0_10 = arith.constant 0 : index
      %c0_11 = arith.constant 0 : index
      %12 = vector.load %arg7[%c0_10, %c0_11] : memref<128x512xf32, #tpu.memory_space<vmem>>, vector<128x512xf32>
      %c0_12 = arith.constant 0 : index
      %c0_13 = arith.constant 0 : index
      %13 = vector.load %arg5[%c0_12, %c0_13] : memref<1x512xf32, #tpu.memory_space<vmem>>, vector<1x512xf32>
      %14 = vector.broadcast %13 : vector<1x512xf32> to vector<128x512xf32>
      %15 = arith.addf %12, %14 : vector<128x512xf32>
      %cst_14 = arith.constant 0.000000e+00 : f32
      %16 = vector.broadcast %cst_14 : f32 to vector<128x512xf32>
      %17 = arith.cmpf ogt, %15, %16 : vector<128x512xf32>
      %cst_15 = arith.constant 0.00999999977 : f32
      %18 = vector.broadcast %cst_15 : f32 to vector<128x512xf32>
      %19 = arith.mulf %18, %15 : vector<128x512xf32>
      %20 = arith.select %17, %15, %19 : vector<128x512xi1>, vector<128x512xf32>
      %21 = arith.truncf %20 : vector<128x512xf32> to vector<128x512xbf16>
      %c0_16 = arith.constant 0 : index
      %c0_17 = arith.constant 0 : index
      %22 = vector.load %arg6[%c0_16, %c0_17] : memref<128x512xbf16, #tpu.memory_space<vmem>>, vector<128x512xbf16>
      tpu.vector_store %arg6[%c0_16, %c0_17], %21 {strides = array<i32>} : memref<128x512xbf16, #tpu.memory_space<vmem>>, vector<128x512xbf16>,
    } else {
    }
    return
  }
  func.func @transform_0(%arg0: i32, %arg1: i32, %arg2: i32) -> (i32, i32) {
    %c0_i32 = arith.constant 0 : i32
    return %arg0, %arg2 : i32, i32
  }
  func.func @transform_1(%arg0: i32, %arg1: i32, %arg2: i32) -> (i32, i32) {
    %c0_i32 = arith.constant 0 : i32
    return %arg2, %arg1 : i32, i32
  }
  func.func @transform_2(%arg0: i32, %arg1: i32, %arg2: i32) -> (i32, i32) {
    %c0_i32 = arith.constant 0 : i32
    %c0_i32_0 = arith.constant 0 : i32
    return %c0_i32, %arg1 : i32, i32
  }
  func.func @transform_3(%arg0: i32, %arg1: i32, %arg2: i32) -> (i32, i32) {
    %c0_i32 = arith.constant 0 : i32
    return %arg0, %arg1 : i32, i32
  }
}

module attributes {stable_mosaic.version = 11 : i64} {
  func.func @_matmul_bias_act_kernel(%arg0: i32, %arg1: i32, %arg2: i32, %arg3: memref<512x384xbf16, #tpu.memory_space<vmem>>, %arg4: memref<384x128xbf16, #tpu.memory_space<vmem>>, %arg5: memref<1x128xf32, #tpu.memory_space<vmem>>, %arg6: memref<512x128xf32, #tpu.memory_space<vmem>>, %arg7: memref<512x128xf32, #tpu.memory_space<vmem>>) attributes {dimension_semantics = [#tpu.dimension_semantics<parallel>, #tpu.dimension_semantics<parallel>, #tpu.dimension_semantics<arbitrary>], iteration_bounds = array<i64: 1, 1, 3>, scalar_prefetch = 0 : i64, scratch_operands = 1 : i64, tpu.core_type = #tpu.core_type<tc>, window_params = [{transform_indices = @transform_0, window_bounds = array<i64: 512, 384>}, {transform_indices = @transform_1, window_bounds = array<i64: 384, 128>}, {transform_indices = @transform_2, window_bounds = array<i64: 1, 128>}, {transform_indices = @transform_3, window_bounds = array<i64: 512, 128>}]} {
    %c0_i32 = arith.constant 0 : i32
    %0 = arith.cmpi eq, %arg2, %c0_i32 : i32
    %1 = arith.extui %0 : i1 to i32
    %c0_i32_0 = arith.constant 0 : i32
    %2 = arith.cmpi ne, %1, %c0_i32_0 : i32
    scf.if %2 {
      %cst_9 = arith.constant 0.000000e+00 : f32
      %12 = vector.broadcast %cst_9 : f32 to vector<512x128xf32>
      %c0_10 = arith.constant 0 : index
      %c0_11 = arith.constant 0 : index
      %13 = vector.load %arg7[%c0_10, %c0_11] : memref<512x128xf32, #tpu.memory_space<vmem>>, vector<512x128xf32>
      tpu.vector_store %arg7[%c0_10, %c0_11], %12 {strides = array<i32>} : memref<512x128xf32, #tpu.memory_space<vmem>>, vector<512x128xf32>,
    } else {
    }
    %c0 = arith.constant 0 : index
    %c0_1 = arith.constant 0 : index
    %3 = vector.load %arg7[%c0, %c0_1] : memref<512x128xf32, #tpu.memory_space<vmem>>, vector<512x128xf32>
    %c0_2 = arith.constant 0 : index
    %c0_3 = arith.constant 0 : index
    %4 = vector.load %arg3[%c0_2, %c0_3] : memref<512x384xbf16, #tpu.memory_space<vmem>>, vector<512x384xbf16>
    %c0_4 = arith.constant 0 : index
    %c0_5 = arith.constant 0 : index
    %5 = vector.load %arg4[%c0_4, %c0_5] : memref<384x128xbf16, #tpu.memory_space<vmem>>, vector<384x128xbf16>
    %cst = arith.constant dense<0.000000e+00> : vector<512x128xf32>
    %6 = tpu.matmul %4, %5, %cst {dimension_numbers = #tpu.dot_dimension_numbers<[1], [0], [0], [1], [0, 0, 1, 1], [], []>} : vector<512x384xbf16>, vector<384x128xbf16>, vector<512x128xf32> -> vector<512x128xf32>
    %7 = arith.addf %3, %6 : vector<512x128xf32>
    %c0_6 = arith.constant 0 : index
    %c0_7 = arith.constant 0 : index
    %8 = vector.load %arg7[%c0_6, %c0_7] : memref<512x128xf32, #tpu.memory_space<vmem>>, vector<512x128xf32>
    tpu.vector_store %arg7[%c0_6, %c0_7], %7 {strides = array<i32>} : memref<512x128xf32, #tpu.memory_space<vmem>>, vector<512x128xf32>,
    %c2_i32 = arith.constant 2 : i32
    %9 = arith.cmpi eq, %arg2, %c2_i32 : i32
    %10 = arith.extui %9 : i1 to i32
    %c0_i32_8 = arith.constant 0 : i32
    %11 = arith.cmpi ne, %10, %c0_i32_8 : i32
    scf.if %11 {
      %c0_9 = arith.constant 0 : index
      %c0_10 = arith.constant 0 : index
      %12 = vector.load %arg7[%c0_9, %c0_10] : memref<512x128xf32, #tpu.memory_space<vmem>>, vector<512x128xf32>
      %c0_11 = arith.constant 0 : index
      %c0_12 = arith.constant 0 : index
      %13 = vector.load %arg5[%c0_11, %c0_12] : memref<1x128xf32, #tpu.memory_space<vmem>>, vector<1x128xf32>
      %14 = vector.broadcast %13 : vector<1x128xf32> to vector<512x128xf32>
      %15 = arith.addf %12, %14 : vector<512x128xf32>
      %16 = math.tanh %15 : vector<512x128xf32>
      %c0_13 = arith.constant 0 : index
      %c0_14 = arith.constant 0 : index
      %17 = vector.load %arg6[%c0_13, %c0_14] : memref<512x128xf32, #tpu.memory_space<vmem>>, vector<512x128xf32>
      tpu.vector_store %arg6[%c0_13, %c0_14], %16 {strides = array<i32>} : memref<512x128xf32, #tpu.memory_space<vmem>>, vector<512x128xf32>,
    } else {
    }
    return
  }
  func.func @transform_0(%arg0: i32, %arg1: i32, %arg2: i32) -> (i32, i32) {
    %c0_i32 = arith.constant 0 : i32
    return %arg0, %arg2 : i32, i32
  }
  func.func @transform_1(%arg0: i32, %arg1: i32, %arg2: i32) -> (i32, i32) {
    %c0_i32 = arith.constant 0 : i32
    return %arg2, %arg1 : i32, i32
  }
  func.func @transform_2(%arg0: i32, %arg1: i32, %arg2: i32) -> (i32, i32) {
    %c0_i32 = arith.constant 0 : i32
    %c0_i32_0 = arith.constant 0 : i32
    return %c0_i32, %arg1 : i32, i32
  }
  func.func @transform_3(%arg0: i32, %arg1: i32, %arg2: i32) -> (i32, i32) {
    %c0_i32 = arith.constant 0 : i32
    return %arg0, %arg1 : i32, i32
  }
}

</mosaic_0001>

<llo_original>
// kernel: vae_forward.7
$region0: #{vae_forward.7}
  #allocation0 [shape = 'u32[]', space=smem, size = 0x4, offset = 0x4, fixed_abs, tag = 'smem constant byte address 0x4 - core index']
  #allocation1 [shape = 'u32[72,128]{1,0:T(1,128)}', space=vmem, size = 0x9000, scoped, tag = 'internal scratch']
  #allocation2 [shape = 'f32[128,128]{1,0:T(8,128)}', space=vmem, size = 0x10000, scoped, tag = 'scratch operand']
  %s0 = inlined_call_operand.vmem [shape: bf16[128,1152], index: 0, kind: input, shape index: {}]
  %s1 = inlined_call_operand.vmem [shape: bf16[1152,128], index: 1, kind: input, shape index: {}]
  %s2 = inlined_call_operand.vmem [shape: f32[1,128], index: 2, kind: input, shape index: {}]
  %s3 = inlined_call_operand.vmem [shape: bf16[128,128], index: 3, kind: output, shape index: {}]
  %s4 = sld [smem:[#allocation0]]
  $region79: #{vae_forward.7} parent=0
    _
  %s6 = ssub.s32 1, %s4
  %s7 = scalar_select 0, %s6, %s4
  $region1: #{vae_forward.7} parent=0
    #allocation3 [shape = 'u8[196608]{0}', space=vmem, size = 0x30000, scoped, tag = 'input window, operand 0']
    loop: start=0, step=1, limit=5
    $region2: #{vae_forward.7} parent=1 // loop_pre_header
      _
    $region3: #{vae_forward.7} parent=1 // loop_header
      %s9 = sphi 0, %s13
      %p10 = scmp.ge.s32.totalorder %s9, 5
      %s16 = sphi 0, %s35
      %s17 = sphi 0, %s31
      %s18 = sphi 0, %s27
      %s19 = sphi 0, %s16
      %s20 = sphi 0, %s17
      %s21 = sphi 0, %s18
      %s22 = sphi 0, %s19
      %s23 = sphi 0, %s20
      %s24 = sphi 0, %s21
      %s40 = sphi 0, %s42
      %s43 = sphi 0, %s40
      %s44 = sphi 0, %s43
      %s60 = sphi 0, %s44
      %s68 = sphi 0, %s70
      %s71 = sphi 0, %s68
      %s72 = sphi 0, %s71
      %s88 = sphi 0, %s72
      %s94 = sphi 0, %s96
      %s97 = sphi 0, %s94
      %s98 = sphi 0, %s97
      %s114 = sphi 0, %s98
      %s122 = sphi 0, %s124
      %s125 = sphi 0, %s122
      %s126 = sphi 0, %s125
      %s142 = sphi 0, %s126
    $region4: #{vae_forward.7} parent=1 // loop_header_branch
      %12 = sbr.rel (%p10) target = $region8
    $region5: #{vae_forward.7} parent=1 // loop_body
      %s14 = ssub.s32 %s9, 1
      %s15 = ssub.s32 %s9, 2
      %s25 = sadd.s32 1, %s18
      %p26 = scmp.ge.s32.totalorder %s25, 3
      %s27 = scalar_select %p26, 0, %s25
      %s28 = sadd.s32 1, %s17
      %s29 = scalar_select %p26, %s28, %s17
      %p30 = scmp.ge.s32.totalorder %s29, 1
      %s31 = scalar_select %p30, 0, %s29
      %s32 = sadd.s32 1, %s16
      %s33 = scalar_select %p30, %s32, %s16
      %p34 = scmp.ge.s32.totalorder %s33, 1
      %s35 = scalar_select %p34, 0, %s33
      %s36 = ssub.s32 %s16, %s35
      %s37 = ssub.s32 %s18, %s27
      %s38 = sor.u32 %s36, %s37
      %p39 = scmp.eq.s32.totalorder %s38, 0
      %s41 = sadd.s32 %s40, 1
      %s42 = scalar_select %p39, %s40, %s41
      %p45 = pneg %p39
      %p46 = scmp.eq.s32.totalorder %s9, 2
      %p47 = por %p45, %p46
      %p48 = scmp.ne.s32.totalorder %s40, %s43
      %p49 = scmp.eq.s32.totalorder %s9, 0
      %p50 = por %p48, %p49
      %p51 = scmp.ne.s32.totalorder %s40, %s43
      %p52 = scmp.eq.s32.totalorder %s14, 2
      %p53 = por %p51, %p52
      %p54 = scmp.ne.s32.totalorder %s43, %s44
      %p55 = scmp.eq.s32.totalorder %s14, 0
      %p56 = por %p54, %p55
      %p57 = scmp.ne.s32.totalorder %s43, %s44
      %p58 = scmp.eq.s32.totalorder %s15, 2
      %p59 = por %p57, %p58
      %p61 = scmp.ne.s32.totalorder %s44, %s60
      %p62 = scmp.eq.s32.totalorder %s15, 0
      %p63 = por %p61, %p62
      %s64 = ssub.s32 %s18, %s27
      %s65 = ssub.s32 %s17, %s31
      %s66 = sor.u32 %s64, %s65
      %p67 = scmp.eq.s32.totalorder %s66, 0
      %s69 = sadd.s32 %s68, 1
      %s70 = scalar_select %p67, %s68, %s69
      %p73 = pneg %p67
      %p74 = scmp.eq.s32.totalorder %s9, 2
      %p75 = por %p73, %p74
      %p76 = scmp.ne.s32.totalorder %s68, %s71
      %p77 = scmp.eq.s32.totalorder %s9, 0
      %p78 = por %p76, %p77
      %p79 = scmp.ne.s32.totalorder %s68, %s71
      %p80 = scmp.eq.s32.totalorder %s14, 2
      %p81 = por %p79, %p80
      %p82 = scmp.ne.s32.totalorder %s71, %s72
      %p83 = scmp.eq.s32.totalorder %s14, 0
      %p84 = por %p82, %p83
      %p85 = scmp.ne.s32.totalorder %s71, %s72
      %p86 = scmp.eq.s32.totalorder %s15, 2
      %p87 = por %p85, %p86
      %p89 = scmp.ne.s32.totalorder %s72, %s88
      %p90 = scmp.eq.s32.totalorder %s15, 0
      %p91 = por %p89, %p90
      %s92 = ssub.s32 %s17, %s31
      %p93 = scmp.eq.s32.totalorder %s92, 0
      %s95 = sadd.s32 %s94, 1
      %s96 = scalar_select %p93, %s94, %s95
      %p99 = pneg %p93
      %p100 = scmp.eq.s32.totalorder %s9, 2
      %p101 = por %p99, %p100
      %p102 = scmp.ne.s32.totalorder %s94, %s97
      %p103 = scmp.eq.s32.totalorder %s9, 0
      %p104 = por %p102, %p103
      %p105 = scmp.ne.s32.totalorder %s94, %s97
      %p106 = scmp.eq.s32.totalorder %s14, 2
      %p107 = por %p105, %p106
      %p108 = scmp.ne.s32.totalorder %s97, %s98
      %p109 = scmp.eq.s32.totalorder %s14, 0
      %p110 = por %p108, %p109
      %p111 = scmp.ne.s32.totalorder %s97, %s98
      %p112 = scmp.eq.s32.totalorder %s15, 2
      %p113 = por %p111, %p112
      %p115 = scmp.ne.s32.totalorder %s98, %s114
      %p116 = scmp.eq.s32.totalorder %s15, 0
      %p117 = por %p115, %p116
      %s118 = ssub.s32 %s16, %s35
      %s119 = ssub.s32 %s17, %s31
      %s120 = sor.u32 %s118, %s119
      %p121 = scmp.eq.s32.totalorder %s120, 0
      %s123 = sadd.s32 %s122, 1
      %s124 = scalar_select %p121, %s122, %s123
      %p127 = pneg %p121
      %p128 = scmp.eq.s32.totalorder %s9, 2
      %p129 = por %p127, %p128
      %p130 = scmp.ne.s32.totalorder %s122, %s125
      %p131 = scmp.eq.s32.totalorder %s9, 0
      %p132 = por %p130, %p131
      %p133 = scmp.ne.s32.totalorder %s122, %s125
      %p134 = scmp.eq.s32.totalorder %s14, 2
      %p135 = por %p133, %p134
      %p136 = scmp.ne.s32.totalorder %s125, %s126
      %p137 = scmp.eq.s32.totalorder %s14, 0
      %p138 = por %p136, %p137
      %p139 = scmp.ne.s32.totalorder %s125, %s126
      %p140 = scmp.eq.s32.totalorder %s15, 2
      %p141 = por %p139, %p140
      %p143 = scmp.ne.s32.totalorder %s126, %s142
      %p144 = scmp.eq.s32.totalorder %s15, 0
      %p145 = por %p143, %p144
      %p146 = scmp.le.s32.totalorder 1, %s9
      %p147 = scmp.lt.s32.totalorder %s9, 4
      %p148 = pnand %p146, %p147
      %p149 = pneg %p148
      // Predicated region
      $region9: #{vae_forward.7} parent=5 // pred_check
        _
      $region10: #{vae_forward.7} parent=5 // pred_check_branch
        %151 = sbr.rel (%p148) target = $region12
      $region11: #{vae_forward.7} parent=5 // pred_region
        %s152 = ssub.s32 %s9, 1
        // Predicated region
        $region13: #{vae_forward.7} parent=11 // pred_check
          %p153 = pneg %p110
        $region14: #{vae_forward.7} parent=11 // pred_check_branch
          %155 = sbr.rel (%p153) target = $region16
        $region15: #{vae_forward.7} parent=11 // pred_region
          %p156 = scmp.lt.s32.totalorder %s20, 0
          %s157 = scalar_select %p156, %s20, 0
          %s158 = scalar_lea.vmem %s2, %s157
        $region16: #{vae_forward.7} parent=11 // pred_fallthru
          _
      $region12: #{vae_forward.7} parent=5 // pred_fallthru
        _
      %p159 = scmp.lt.s32.totalorder %s9, 3
      // Predicated region
      $region17: #{vae_forward.7} parent=5 // pred_check
        %p160 = pneg %p159
      $region18: #{vae_forward.7} parent=5 // pred_check_branch
        %162 = sbr.rel (%p160) target = $region20
      $region19: #{vae_forward.7} parent=5 // pred_region
        // Predicated region
        $region21: #{vae_forward.7} parent=19 // pred_check
          %p163 = pneg %p50
        $region22: #{vae_forward.7} parent=19 // pred_check_branch
          %165 = sbr.rel (%p163) target = $region24
        $region23: #{vae_forward.7} parent=19 // pred_region
          %s166 = sand.u32 %s40, 1
          %s167 = sand.u32 %s40, 1
          %s168 = smul.addr %s167, 192
          %s169 = scalar_lea.vmem [#allocation3], %s168
          %s170 = smul.u32 16, %s16
          %s171 = smul.u32 3, %s18
          %s172 = smul.addr %s170, 9
          %s173 = sadd.s32 %s171, %s172
          %s174 = smul.addr %s173, 4
          %s175 = scalar_lea.vmem %s0, %s174
          // Predicated region
          $region25: #{vae_forward.7} parent=23 // pred_check
            _
          $region26: #{vae_forward.7} parent=23 // pred_check_branch
            %177 = sbr.rel (0) target = $region28
          $region27: #{vae_forward.7} parent=23 // pred_region
            // Predicated region
            $region29: #{vae_forward.7} parent=27 // pred_check
              _
            $region30: #{vae_forward.7} parent=27 // pred_check_branch
              %179 = sbr.rel (0) target = $region32
            $region31: #{vae_forward.7} parent=27 // pred_region
              %s180 = scalar_lea.vmem %s175, 8
              %s181 = scalar_lea.vmem %s169, 8 [#allocation3]
              loop: start=0, step=1, limit=1
              $region33: #{vae_forward.7} parent=31 // loop_pre_header
                _
              $region34: #{vae_forward.7} parent=31 // loop_header
                %s183 = sphi 0, %s187
                %p184 = scmp.ge.s32.totalorder %s183, 1
                %s188 = sphi %s175, %s175
                %s189 = sphi %s169, %s169
              $region35: #{vae_forward.7} parent=31 // loop_header_branch
                %186 = sbr.rel (%p184) target = $region39
              $region36: #{vae_forward.7} parent=31 // loop_body
                %v190 = vld [vmem:[%s188] sm:$0xff]
                %191 = vst [vmem:[%s189] sm:$0xff] %v190
                %v192 = vld [vmem:[%s188 + $0x24] sm:$0xff]
                %193 = vst [vmem:[%s189 + $0xc] sm:$0xff] %v192
                %v194 = vld [vmem:[%s188 + $0x48] sm:$0xff]
                %195 = vst [vmem:[%s189 + $0x18] sm:$0xff] %v194
                %v196 = vld [vmem:[%s188 + $0x6c] sm:$0xff]
                %197 = vst [vmem:[%s189 + $0x24] sm:$0xff] %v196
                %v198 = vld [vmem:[%s188 + $0x90] sm:$0xff]
                %199 = vst [vmem:[%s189 + $0x30] sm:$0xff] %v198
                %v200 = vld [vmem:[%s188 + $0xb4] sm:$0xff]
                %201 = vst [vmem:[%s189 + $0x3c] sm:$0xff] %v200
                %v202 = vld [vmem:[%s188 + $0xd8] sm:$0xff]
                %203 = vst [vmem:[%s189 + $0x48] sm:$0xff] %v202
                %v204 = vld [vmem:[%s188 + $0xfc] sm:$0xff]
                %205 = vst [vmem:[%s189 + $0x54] sm:$0xff] %v204
                %v206 = vld [vmem:[%s188 + $0x120] sm:$0xff]
                %207 = vst [vmem:[%s189 + $0x60] sm:$0xff] %v206
                %v208 = vld [vmem:[%s188 + $0x144] sm:$0xff]
                %209 = vst [vmem:[%s189 + $0x6c] sm:$0xff] %v208
                %v210 = vld [vmem:[%s188 + $0x168] sm:$0xff]
                %211 = vst [vmem:[%s189 + $0x78] sm:$0xff] %v210
                %v212 = vld [vmem:[%s188 + $0x18c] sm:$0xff]
                %213 = vst [vmem:[%s189 + $0x84] sm:$0xff] %v212
                %v214 = vld [vmem:[%s188 + $0x1b0] sm:$0xff]
                %215 = vst [vmem:[%s189 + $0x90] sm:$0xff] %v214
                %v216 = vld [vmem:[%s188 + $0x1d4] sm:$0xff]
                %217 = vst [vmem:[%s189 + $0x9c] sm:$0xff] %v216
                %v218 = vld [vmem:[%s188 + $0x1f8] sm:$0xff]
                %219 = vst [vmem:[%s189 + $0xa8] sm:$0xff] %v218
                %v220 = vld [vmem:[%s188 + $0x21c] sm:$0xff]
                %221 = vst [vmem:[%s189 + $0xb4] sm:$0xff] %v220
              $region37: #{vae_forward.7} parent=31 // loop_footer
                %s187 = sadd.s32 1, %s183
              $region38: #{vae_forward.7} parent=31 // loop_footer_branch
                %182 = sbr.rel target = $region34
              $region39: #{vae_forward.7} parent=31 // loop_exit
                _
              %s223 = ssub.s32 16, 1
              loop: start=0, step=1, limit=1
              $region40: #{vae_forward.7} parent=31 // loop_pre_header
                _
              $region41: #{vae_forward.7} parent=31 // loop_header
                %s225 = sphi 0, %s229
                %p226 = scmp.ge.s32.totalorder %s225, 1
                %s230 = sphi %s180, %s180
                %s231 = sphi %s181, %s181
              $region42: #{vae_forward.7} parent=31 // loop_header_branch
                %228 = sbr.rel (%p226) target = $region46
              $region43: #{vae_forward.7} parent=31 // loop_body
                %v232 = vld [vmem:[%s230] sm:%s223]
                %233 = vst [vmem:[%s231] sm:%s223] %v232
                %v234 = vld [vmem:[%s230 + $0x24] sm:%s223]
                %235 = vst [vmem:[%s231 + $0xc] sm:%s223] %v234
                %v236 = vld [vmem:[%s230 + $0x48] sm:%s223]
                %237 = vst [vmem:[%s231 + $0x18] sm:%s223] %v236
                %v238 = vld [vmem:[%s230 + $0x6c] sm:%s223]
                %239 = vst [vmem:[%s231 + $0x24] sm:%s223] %v238
                %v240 = vld [vmem:[%s230 + $0x90] sm:%s223]
                %241 = vst [vmem:[%s231 + $0x30] sm:%s223] %v240
                %v242 = vld [vmem:[%s230 + $0xb4] sm:%s223]
                %243 = vst [vmem:[%s231 + $0x3c] sm:%s223] %v242
                %v244 = vld [vmem:[%s230 + $0xd8] sm:%s223]
                %245 = vst [vmem:[%s231 + $0x48] sm:%s223] %v244
                %v246 = vld [vmem:[%s230 + $0xfc] sm:%s223]
                %247 = vst [vmem:[%s231 + $0x54] sm:%s223] %v246
                %v248 = vld [vmem:[%s230 + $0x120] sm:%s223]
                %249 = vst [vmem:[%s231 + $0x60] sm:%s223] %v248
                %v250 = vld [vmem:[%s230 + $0x144] sm:%s223]
                %251 = vst [vmem:[%s231 + $0x6c] sm:%s223] %v250
                %v252 = vld [vmem:[%s230 + $0x168] sm:%s223]
                %253 = vst [vmem:[%s231 + $0x78] sm:%s223] %v252
                %v254 = vld [vmem:[%s230 + $0x18c] sm:%s223]
                %255 = vst [vmem:[%s231 + $0x84] sm:%s223] %v254
                %v256 = vld [vmem:[%s230 + $0x1b0] sm:%s223]
                %257 = vst [vmem:[%s231 + $0x90] sm:%s223] %v256
                %v258 = vld [vmem:[%s230 + $0x1d4] sm:%s223]
                %259 = vst [vmem:[%s231 + $0x9c] sm:%s223] %v258
                %v260 = vld [vmem:[%s230 + $0x1f8] sm:%s223]
                %261 = vst [vmem:[%s231 + $0xa8] sm:%s223] %v260
                %v262 = vld [vmem:[%s230 + $0x21c] sm:%s223]
                %263 = vst [vmem:[%s231 + $0xb4] sm:%s223] %v262
              $region44: #{vae_forward.7} parent=31 // loop_footer
                %s229 = sadd.s32 1, %s225
              $region45: #{vae_forward.7} parent=31 // loop_footer_branch
                %224 = sbr.rel target = $region41
              $region46: #{vae_forward.7} parent=31 // loop_exit
                _
            $region32: #{vae_forward.7} parent=27 // pred_fallthru
              _
          $region28: #{vae_forward.7} parent=23 // pred_fallthru
            _
          %264 = vnop
        $region24: #{vae_forward.7} parent=19 // pred_fallthru
          _
        // Predicated region
        $region47: #{vae_forward.7} parent=19 // pred_check
          %p265 = pneg %p78
        $region48: #{vae_forward.7} parent=19 // pred_check_branch
          %267 = sbr.rel (%p265) target = $region50
        $region49: #{vae_forward.7} parent=19 // pred_region
          %s268 = smul.u32 48, %s18
          %p269 = scmp.lt.s32.totalorder %s268, 143
          %s270 = scalar_select %p269, %s268, 143
          %p271 = scmp.lt.s32.totalorder %s17, 0
          %s272 = scalar_select %p271, %s17, 0
          %s273 = sadd.s32 %s272, %s270
          %s274 = smul.addr %s273, 4
          %s275 = scalar_lea.vmem %s1, %s274
          %s276 = smul.u32 48, %s18
        $region50: #{vae_forward.7} parent=19 // pred_fallthru
          _
      $region20: #{vae_forward.7} parent=5 // pred_fallthru
        _
      %p277 = scmp.le.s32.totalorder 1, %s9
      %p278 = scmp.lt.s32.totalorder %s9, 4
      %p279 = pnand %p277, %p278
      %p280 = pneg %p279
      // Predicated region
      $region51: #{vae_forward.7} parent=5 // pred_check
        _
      $region52: #{vae_forward.7} parent=5 // pred_check_branch
        %282 = sbr.rel (%p279) target = $region54
      $region53: #{vae_forward.7} parent=5 // pred_region
        %s283 = ssub.s32 %s9, 1
        %s284 = sand.u32 %s43, 1
        %s285 = sand.u32 %s43, 1
        %s286 = smul.addr %s285, 192
        %s287 = scalar_lea.vmem [#allocation3], %s286
        // Predicated region
        $region55: #{vae_forward.7} parent=53 // pred_check
          %p288 = pneg %p56
        $region56: #{vae_forward.7} parent=53 // pred_check_branch
          %290 = sbr.rel (%p288) target = $region58
        $region57: #{vae_forward.7} parent=53 // pred_region
          _
        $region58: #{vae_forward.7} parent=53 // pred_fallthru
          _
        %s291 = sand.u32 %s43, 1
        %s292 = sand.u32 %s43, 1
        %s293 = smul.addr %s292, 192
        %s294 = scalar_lea.vmem [#allocation3], %s293
        %p295 = pneg %p56
        %p296 = pneg %p53
        %s297 = smul.u32 48, %s21
        %p298 = scmp.lt.s32.totalorder %s297, 143
        %s299 = scalar_select %p298, %s297, 143
        %p300 = scmp.lt.s32.totalorder %s20, 0
        %s301 = scalar_select %p300, %s20, 0
        %s302 = sadd.s32 %s301, %s299
        %s303 = smul.addr %s302, 4
        %s304 = scalar_lea.vmem %s1, %s303
        %p305 = pneg %p84
        %p306 = pneg %p81
        %p307 = scmp.lt.s32.totalorder %s20, 0
        %s308 = scalar_select %p307, %s20, 0
        %s309 = scalar_lea.vmem %s2, %s308
        %p310 = pneg %p110
        %p311 = pneg %p107
        %p312 = pneg %p138
        %p313 = pneg %p135
        %s314 = smul.u32 16, %s19
        %p315 = scmp.lt.s32.totalorder %s314, 15
        %s316 = scalar_select %p315, %s314, 15
        %p317 = scmp.lt.s32.totalorder %s20, 0
        %s318 = scalar_select %p317, %s20, 0
        %s319 = sadd.s32 %s318, %s316
        %s320 = smul.addr %s319, 4
        %s321 = scalar_lea.vmem %s3, %s320
        %s322 = smul.u32 16, %s19
        %s323 = smul.u32 3, %s21
        %s324 = smul.u32 48, %s21
        %p325 = scmp.lt.s32.totalorder %s324, 143
        %s326 = scalar_select %p325, %s324, 143
        %p327 = scmp.lt.s32.totalorder %s20, 0
        %s328 = scalar_select %p327, %s20, 0
        %s329 = sadd.s32 %s328, %s326
        %s330 = smul.addr %s329, 4
        %s331 = scalar_lea.vmem %s1, %s330
        %s332 = smul.u32 48, %s21
        %p333 = scmp.lt.s32.totalorder %s20, 0
        %s334 = scalar_select %p333, %s20, 0
        %s335 = scalar_lea.vmem %s2, %s334
        %s336 = smul.u32 16, %s19
        %p337 = scmp.lt.s32.totalorder %s336, 15
        %s338 = scalar_select %p337, %s336, 15
        %p339 = scmp.lt.s32.totalorder %s20, 0
        %s340 = scalar_select %p339, %s20, 0
        %s341 = sadd.s32 %s340, %s338
        %s342 = smul.addr %s341, 4
        %s343 = scalar_lea.vmem %s3, %s342
        %s344 = smul.u32 16, %s19
        %p345 = scmp.eq.s32.totalorder %s21, 0
        // Predicated region
        $region59: #{vae_forward.7} parent=53 // pred_check
          %p346 = pneg %p345
        $region60: #{vae_forward.7} parent=53 // pred_check_branch
          %348 = sbr.rel (%p346) target = $region62
        $region61: #{vae_forward.7} parent=53 // pred_region
          %349 = vst [vmem:[#allocation2] sm:$0xff] 0.0
          %350 = vst [vmem:[#allocation2 + $0x8] sm:$0xff] 0.0
          %351 = vst [vmem:[#allocation2 + $0x10] sm:$0xff] 0.0
          %352 = vst [vmem:[#allocation2 + $0x18] sm:$0xff] 0.0
          %353 = vst [vmem:[#allocation2 + $0x20] sm:$0xff] 0.0
          %354 = vst [vmem:[#allocation2 + $0x28] sm:$0xff] 0.0
          %355 = vst [vmem:[#allocation2 + $0x30] sm:$0xff] 0.0
          %356 = vst [vmem:[#allocation2 + $0x38] sm:$0xff] 0.0
          %357 = vst [vmem:[#allocation2 + $0x40] sm:$0xff] 0.0
          %358 = vst [vmem:[#allocation2 + $0x48] sm:$0xff] 0.0
          %359 = vst [vmem:[#allocation2 + $0x50] sm:$0xff] 0.0
          %360 = vst [vmem:[#allocation2 + $0x58] sm:$0xff] 0.0
          %361 = vst [vmem:[#allocation2 + $0x60] sm:$0xff] 0.0
          %362 = vst [vmem:[#allocation2 + $0x68] sm:$0xff] 0.0
          %363 = vst [vmem:[#allocation2 + $0x70] sm:$0xff] 0.0
          %364 = vst [vmem:[#allocation2 + $0x78] sm:$0xff] 0.0
        $region62: #{vae_forward.7} parent=53 // pred_fallthru
          _
        %v365 = vld [vmem:[#allocation2] sm:$0xff]
        %v366 = vld [vmem:[#allocation2 + $0x8] sm:$0xff]
        %v367 = vld [vmem:[#allocation2 + $0x10] sm:$0xff]
        %v368 = vld [vmem:[#allocation2 + $0x18] sm:$0xff]
        %v369 = vld [vmem:[#allocation2 + $0x20] sm:$0xff]
        %v370 = vld [vmem:[#allocation2 + $0x28] sm:$0xff]
        %v371 = vld [vmem:[#allocation2 + $0x30] sm:$0xff]
        %v372 = vld [vmem:[#allocation2 + $0x38] sm:$0xff]
        %v373 = vld [vmem:[#allocation2 + $0x40] sm:$0xff]
        %v374 = vld [vmem:[#allocation2 + $0x48] sm:$0xff]
        %v375 = vld [vmem:[#allocation2 + $0x50] sm:$0xff]
        %v376 = vld [vmem:[#allocation2 + $0x58] sm:$0xff]
        %v377 = vld [vmem:[#allocation2 + $0x60] sm:$0xff]
        %v378 = vld [vmem:[#allocation2 + $0x68] sm:$0xff]
        %v379 = vld [vmem:[#allocation2 + $0x70] sm:$0xff]
        %v380 = vld [vmem:[#allocation2 + $0x78] sm:$0xff]
        %v381 = vld [vmem:[%s287] sm:$0xff]
        %v382 = vld [vmem:[%s287 + $0x8] sm:$0xf]
        %v383 = vld [vmem:[%s287 + $0xc] sm:$0xff]
        %v384 = vld [vmem:[%s287 + $0x14] sm:$0xf]
        %v385 = vld [vmem:[%s287 + $0x18] sm:$0xff]
        %v386 = vld [vmem:[%s287 + $0x20] sm:$0xf]
        %v387 = vld [vmem:[%s287 + $0x24] sm:$0xff]
        %v388 = vld [vmem:[%s287 + $0x2c] sm:$0xf]
        %v389 = vld [vmem:[%s287 + $0x30] sm:$0xff]
        %v390 = vld [vmem:[%s287 + $0x38] sm:$0xf]
        %v391 = vld [vmem:[%s287 + $0x3c] sm:$0xff]
        %v392 = vld [vmem:[%s287 + $0x44] sm:$0xf]
        %v393 = vld [vmem:[%s287 + $0x48] sm:$0xff]
        %v394 = vld [vmem:[%s287 + $0x50] sm:$0xf]
        %v395 = vld [vmem:[%s287 + $0x54] sm:$0xff]
        %v396 = vld [vmem:[%s287 + $0x5c] sm:$0xf]
        %v397 = vld [vmem:[%s287 + $0x60] sm:$0xff]
        %v398 = vld [vmem:[%s287 + $0x68] sm:$0xf]
        %v399 = vld [vmem:[%s287 + $0x6c] sm:$0xff]
        %v400 = vld [vmem:[%s287 + $0x74] sm:$0xf]
        %v401 = vld [vmem:[%s287 + $0x78] sm:$0xff]
        %v402 = vld [vmem:[%s287 + $0x80] sm:$0xf]
        %v403 = vld [vmem:[%s287 + $0x84] sm:$0xff]
        %v404 = vld [vmem:[%s287 + $0x8c] sm:$0xf]
        %v405 = vld [vmem:[%s287 + $0x90] sm:$0xff]
        %v406 = vld [vmem:[%s287 + $0x98] sm:$0xf]
        %v407 = vld [vmem:[%s287 + $0x9c] sm:$0xff]
        %v408 = vld [vmem:[%s287 + $0xa4] sm:$0xf]
        %v409 = vld [vmem:[%s287 + $0xa8] sm:$0xff]
        %v410 = vld [vmem:[%s287 + $0xb0] sm:$0xf]
        %v411 = vld [vmem:[%s287 + $0xb4] sm:$0xff]
        %v412 = vld [vmem:[%s287 + $0xbc] sm:$0xf]
        %v413 = vld [vmem:[%s331] sm:$0xf]
        %v414 = vld [vmem:[%s331 + $0x4] sm:$0xf]
        %v415 = vld [vmem:[%s331 + $0x8] sm:$0xf]
        %v416 = vld [vmem:[%s331 + $0xc] sm:$0xf]
        %v417 = vld [vmem:[%s331 + $0x10] sm:$0xf]
        %v418 = vld [vmem:[%s331 + $0x14] sm:$0xf]
        %v419 = vld [vmem:[%s331 + $0x18] sm:$0xf]
        %v420 = vld [vmem:[%s331 + $0x1c] sm:$0xf]
        %v421 = vld [vmem:[%s331 + $0x20] sm:$0xf]
        %v422 = vld [vmem:[%s331 + $0x24] sm:$0xf]
        %v423 = vld [vmem:[%s331 + $0x28] sm:$0xf]
        %v424 = vld [vmem:[%s331 + $0x2c] sm:$0xf]
        %v425 = vld [vmem:[%s331 + $0x30] sm:$0xf]
        %v426 = vld [vmem:[%s331 + $0x34] sm:$0xf]
        %v427 = vld [vmem:[%s331 + $0x38] sm:$0xf]
        %v428 = vld [vmem:[%s331 + $0x3c] sm:$0xf]
        %v429 = vld [vmem:[%s331 + $0x40] sm:$0xf]
        %v430 = vld [vmem:[%s331 + $0x44] sm:$0xf]
        %v431 = vld [vmem:[%s331 + $0x48] sm:$0xf]
        %v432 = vld [vmem:[%s331 + $0x4c] sm:$0xf]
        %v433 = vld [vmem:[%s331 + $0x50] sm:$0xf]
        %v434 = vld [vmem:[%s331 + $0x54] sm:$0xf]
        %v435 = vld [vmem:[%s331 + $0x58] sm:$0xf]
        %v436 = vld [vmem:[%s331 + $0x5c] sm:$0xf]
        %v437 = vld [vmem:[%s331 + $0x60] sm:$0xf]
        %v438 = vld [vmem:[%s331 + $0x64] sm:$0xf]
        %v439 = vld [vmem:[%s331 + $0x68] sm:$0xf]
        %v440 = vld [vmem:[%s331 + $0x6c] sm:$0xf]
        %v441 = vld [vmem:[%s331 + $0x70] sm:$0xf]
        %v442 = vld [vmem:[%s331 + $0x74] sm:$0xf]
        %v443 = vld [vmem:[%s331 + $0x78] sm:$0xf]
        %v444 = vld [vmem:[%s331 + $0x7c] sm:$0xf]
        %v445 = vld [vmem:[%s331 + $0x80] sm:$0xf]
        %v446 = vld [vmem:[%s331 + $0x84] sm:$0xf]
        %v447 = vld [vmem:[%s331 + $0x88] sm:$0xf]
        %v448 = vld [vmem:[%s331 + $0x8c] sm:$0xf]
        %v449 = vld [vmem:[%s331 + $0x90] sm:$0xf]
        %v450 = vld [vmem:[%s331 + $0x94] sm:$0xf]
        %v451 = vld [vmem:[%s331 + $0x98] sm:$0xf]
        %v452 = vld [vmem:[%s331 + $0x9c] sm:$0xf]
        %v453 = vld [vmem:[%s331 + $0xa0] sm:$0xf]
        %v454 = vld [vmem:[%s331 + $0xa4] sm:$0xf]
        %v455 = vld [vmem:[%s331 + $0xa8] sm:$0xf]
        %v456 = vld [vmem:[%s331 + $0xac] sm:$0xf]
        %v457 = vld [vmem:[%s331 + $0xb0] sm:$0xf]
        %v458 = vld [vmem:[%s331 + $0xb4] sm:$0xf]
        %v459 = vld [vmem:[%s331 + $0xb8] sm:$0xf]
        %v460 = vld [vmem:[%s331 + $0xbc] sm:$0xf]
        %v493 = vunpack.c.l.b16 %v381
        %v494 = vunpack.c.h.b16 %v381
        %v495 = vunpack.c.l.b16 %v382
        %v496 = vunpack.c.l.b16 %v383
        %v497 = vunpack.c.h.b16 %v383
        %v498 = vunpack.c.l.b16 %v384
        %v499 = vunpack.c.l.b16 %v385
        %v500 = vunpack.c.h.b16 %v385
        %v501 = vunpack.c.l.b16 %v386
        %v502 = vunpack.c.l.b16 %v387
        %v503 = vunpack.c.h.b16 %v387
        %v504 = vunpack.c.l.b16 %v388
        %v505 = vunpack.c.l.b16 %v389
        %v506 = vunpack.c.h.b16 %v389
        %v507 = vunpack.c.l.b16 %v390
        %v508 = vunpack.c.l.b16 %v391
        %v509 = vunpack.c.h.b16 %v391
        %v510 = vunpack.c.l.b16 %v392
        %v511 = vunpack.c.l.b16 %v393
        %v512 = vunpack.c.h.b16 %v393
        %v513 = vunpack.c.l.b16 %v394
        %v514 = vunpack.c.l.b16 %v395
        %v515 = vunpack.c.h.b16 %v395
        %v516 = vunpack.c.l.b16 %v396
        %v517 = vunpack.c.l.b16 %v397
        %v518 = vunpack.c.h.b16 %v397
        %v519 = vunpack.c.l.b16 %v398
        %v520 = vunpack.c.l.b16 %v399
        %v521 = vunpack.c.h.b16 %v399
        %v522 = vunpack.c.l.b16 %v400
        %v523 = vunpack.c.l.b16 %v401
        %v524 = vunpack.c.h.b16 %v401
        %v525 = vunpack.c.l.b16 %v402
        %v526 = vunpack.c.l.b16 %v403
        %v527 = vunpack.c.h.b16 %v403
        %v528 = vunpack.c.l.b16 %v404
        %v529 = vunpack.c.l.b16 %v405
        %v530 = vunpack.c.h.b16 %v405
        %v531 = vunpack.c.l.b16 %v406
        %v532 = vunpack.c.l.b16 %v407
        %v533 = vunpack.c.h.b16 %v407
        %v534 = vunpack.c.l.b16 %v408
        %v535 = vunpack.c.l.b16 %v409
        %v536 = vunpack.c.h.b16 %v409
        %v537 = vunpack.c.l.b16 %v410
        %v538 = vunpack.c.l.b16 %v411
        %v539 = vunpack.c.h.b16 %v411
        %v540 = vunpack.c.l.b16 %v412
        %v541 = vpack.c.b16 %v496, %v493
        %v542 = vpack.c.b16 %v497, %v494
        %v543 = vpack.c.b16 %v498, %v495
        %v544 = vpack.c.b16 %v502, %v499
        %v545 = vpack.c.b16 %v503, %v500
        %v546 = vpack.c.b16 %v504, %v501
        %v547 = vpack.c.b16 %v508, %v505
        %v548 = vpack.c.b16 %v509, %v506
        %v549 = vpack.c.b16 %v510, %v507
        %v550 = vpack.c.b16 %v514, %v511
        %v551 = vpack.c.b16 %v515, %v512
        %v552 = vpack.c.b16 %v516, %v513
        %v553 = vpack.c.b16 %v520, %v517
        %v554 = vpack.c.b16 %v521, %v518
        %v555 = vpack.c.b16 %v522, %v519
        %v556 = vpack.c.b16 %v526, %v523
        %v557 = vpack.c.b16 %v527, %v524
        %v558 = vpack.c.b16 %v528, %v525
        %v559 = vpack.c.b16 %v532, %v529
        %v560 = vpack.c.b16 %v533, %v530
        %v561 = vpack.c.b16 %v534, %v531
        %v562 = vpack.c.b16 %v538, %v535
        %v563 = vpack.c.b16 %v539, %v536
        %v564 = vpack.c.b16 %v540, %v537
        %v637 = vunpack.c.l.b16 %v413
        %v638 = vunpack.c.l.b16 %v414
        %v639 = vunpack.c.l.b16 %v415
        %v640 = vunpack.c.l.b16 %v416
        %v641 = vunpack.c.l.b16 %v417
        %v642 = vunpack.c.l.b16 %v418
        %v643 = vunpack.c.l.b16 %v419
        %v644 = vunpack.c.l.b16 %v420
        %v645 = vunpack.c.l.b16 %v421
        %v646 = vunpack.c.l.b16 %v422
        %v647 = vunpack.c.l.b16 %v423
        %v648 = vunpack.c.l.b16 %v424
        %v649 = vunpack.c.l.b16 %v425
        %v650 = vunpack.c.l.b16 %v426
        %v651 = vunpack.c.l.b16 %v427
        %v652 = vunpack.c.l.b16 %v428
        %v653 = vunpack.c.l.b16 %v429
        %v654 = vunpack.c.l.b16 %v430
        %v655 = vunpack.c.l.b16 %v431
        %v656 = vunpack.c.l.b16 %v432
        %v657 = vunpack.c.l.b16 %v433
        %v658 = vunpack.c.l.b16 %v434
        %v659 = vunpack.c.l.b16 %v435
        %v660 = vunpack.c.l.b16 %v436
        %v661 = vunpack.c.l.b16 %v437
        %v662 = vunpack.c.l.b16 %v438
        %v663 = vunpack.c.l.b16 %v439
        %v664 = vunpack.c.l.b16 %v440
        %v665 = vunpack.c.l.b16 %v441
        %v666 = vunpack.c.l.b16 %v442
        %v667 = vunpack.c.l.b16 %v443
        %v668 = vunpack.c.l.b16 %v444
        %v669 = vunpack.c.l.b16 %v445
        %v670 = vunpack.c.l.b16 %v446
        %v671 = vunpack.c.l.b16 %v447
        %v672 = vunpack.c.l.b16 %v448
        %v673 = vunpack.c.l.b16 %v449
        %v674 = vunpack.c.l.b16 %v450
        %v675 = vunpack.c.l.b16 %v451
        %v676 = vunpack.c.l.b16 %v452
        %v677 = vunpack.c.l.b16 %v453
        %v678 = vunpack.c.l.b16 %v454
        %v679 = vunpack.c.l.b16 %v455
        %v680 = vunpack.c.l.b16 %v456
        %v681 = vunpack.c.l.b16 %v457
        %v682 = vunpack.c.l.b16 %v458
        %v683 = vunpack.c.l.b16 %v459
        %v684 = vunpack.c.l.b16 %v460
        %v685 = vpack.c.b16 %v638, %v637
        %v686 = vpack.c.b16 %v640, %v639
        %v687 = vpack.c.b16 %v642, %v641
        %v688 = vpack.c.b16 %v644, %v643
        %v689 = vpack.c.b16 %v646, %v645
        %v690 = vpack.c.b16 %v648, %v647
        %v691 = vpack.c.b16 %v650, %v649
        %v692 = vpack.c.b16 %v652, %v651
        %v693 = vpack.c.b16 %v654, %v653
        %v694 = vpack.c.b16 %v656, %v655
        %v695 = vpack.c.b16 %v658, %v657
        %v696 = vpack.c.b16 %v660, %v659
        %v697 = vpack.c.b16 %v662, %v661
        %v698 = vpack.c.b16 %v664, %v663
        %v699 = vpack.c.b16 %v666, %v665
        %v700 = vpack.c.b16 %v668, %v667
        %v701 = vpack.c.b16 %v670, %v669
        %v702 = vpack.c.b16 %v672, %v671
        %v703 = vpack.c.b16 %v674, %v673
        %v704 = vpack.c.b16 %v676, %v675
        %v705 = vpack.c.b16 %v678, %v677
        %v706 = vpack.c.b16 %v680, %v679
        %v707 = vpack.c.b16 %v682, %v681
        %v708 = vpack.c.b16 %v684, %v683
        %733 = vmatpush.bf16.msra.mxu0 %v692
        %734 = vmatpush.bf16.msra.mxu0 %v691
        %735 = vmatpush.bf16.msra.mxu0 %v690
        %736 = vmatpush.bf16.msra.mxu0 %v689
        %737 = vmatpush.bf16.msra.mxu0 %v688
        %738 = vmatpush.bf16.msra.mxu0 %v687
        %739 = vmatpush.bf16.msra.mxu0 %v686
        %740 = vmatpush.bf16.msra.mxu0 %v685
        %741 = vmatmul.bf16.gmra.mxu0 %v541
        %v742 = vpop.f32.mrf.mxu0
        %v743 = vadd.f32 0.0, %v742
        %v744 = vpop.f32.mrf.mxu0
        %v745 = vadd.f32 0.0, %v744
        %746 = vmatmul.bf16.gmra.mxu0 %v544
        %v747 = vpop.f32.mrf.mxu0
        %v748 = vadd.f32 0.0, %v747
        %v749 = vpop.f32.mrf.mxu0
        %v750 = vadd.f32 0.0, %v749
        %751 = vmatmul.bf16.gmra.mxu0 %v547
        %v752 = vpop.f32.mrf.mxu0
        %v753 = vadd.f32 0.0, %v752
        %v754 = vpop.f32.mrf.mxu0
        %v755 = vadd.f32 0.0, %v754
        %756 = vmatmul.bf16.gmra.mxu0 %v550
        %v757 = vpop.f32.mrf.mxu0
        %v758 = vadd.f32 0.0, %v757
        %v759 = vpop.f32.mrf.mxu0
        %v760 = vadd.f32 0.0, %v759
        %761 = vmatmul.bf16.gmra.mxu0 %v553
        %v762 = vpop.f32.mrf.mxu0
        %v763 = vadd.f32 0.0, %v762
        %v764 = vpop.f32.mrf.mxu0
        %v765 = vadd.f32 0.0, %v764
        %766 = vmatmul.bf16.gmra.mxu0 %v556
        %v767 = vpop.f32.mrf.mxu0
        %v768 = vadd.f32 0.0, %v767
        %v769 = vpop.f32.mrf.mxu0
        %v770 = vadd.f32 0.0, %v769
        %771 = vmatmul.bf16.gmra.mxu0 %v559
        %v772 = vpop.f32.mrf.mxu0
        %v773 = vadd.f32 0.0, %v772
        %v774 = vpop.f32.mrf.mxu0
        %v775 = vadd.f32 0.0, %v774
        %776 = vmatmul.bf16.gmra.mxu0 %v562
        %v777 = vpop.f32.mrf.mxu0
        %v778 = vadd.f32 0.0, %v777
        %v779 = vpop.f32.mrf.mxu0
        %v780 = vadd.f32 0.0, %v779
        %781 = vdwg.mxu0
        %782 = vmatpush.bf16.msra.mxu0 %v700
        %783 = vmatpush.bf16.msra.mxu0 %v699
        %784 = vmatpush.bf16.msra.mxu0 %v698
        %785 = vmatpush.bf16.msra.mxu0 %v697
        %786 = vmatpush.bf16.msra.mxu0 %v696
        %787 = vmatpush.bf16.msra.mxu0 %v695
        %788 = vmatpush.bf16.msra.mxu0 %v694
        %789 = vmatpush.bf16.msra.mxu0 %v693
        %790 = vmatmul.bf16.gmra.mxu0 %v542
        %v791 = vpop.f32.mrf.mxu0
        %v792 = vadd.f32 %v743, %v791
        %v793 = vpop.f32.mrf.mxu0
        %v794 = vadd.f32 %v745, %v793
        %795 = vmatmul.bf16.gmra.mxu0 %v545
        %v796 = vpop.f32.mrf.mxu0
        %v797 = vadd.f32 %v748, %v796
        %v798 = vpop.f32.mrf.mxu0
        %v799 = vadd.f32 %v750, %v798
        %800 = vmatmul.bf16.gmra.mxu0 %v548
        %v801 = vpop.f32.mrf.mxu0
        %v802 = vadd.f32 %v753, %v801
        %v803 = vpop.f32.mrf.mxu0
        %v804 = vadd.f32 %v755, %v803
        %805 = vmatmul.bf16.gmra.mxu0 %v551
        %v806 = vpop.f32.mrf.mxu0
        %v807 = vadd.f32 %v758, %v806
        %v808 = vpop.f32.mrf.mxu0
        %v809 = vadd.f32 %v760, %v808
        %810 = vmatmul.bf16.gmra.mxu0 %v554
        %v811 = vpop.f32.mrf.mxu0
        %v812 = vadd.f32 %v763, %v811
        %v813 = vpop.f32.mrf.mxu0
        %v814 = vadd.f32 %v765, %v813
        %815 = vmatmul.bf16.gmra.mxu0 %v557
        %v816 = vpop.f32.mrf.mxu0
        %v817 = vadd.f32 %v768, %v816
        %v818 = vpop.f32.mrf.mxu0
        %v819 = vadd.f32 %v770, %v818
        %820 = vmatmul.bf16.gmra.mxu0 %v560
        %v821 = vpop.f32.mrf.mxu0
        %v822 = vadd.f32 %v773, %v821
        %v823 = vpop.f32.mrf.mxu0
        %v824 = vadd.f32 %v775, %v823
        %825 = vmatmul.bf16.gmra.mxu0 %v563
        %v826 = vpop.f32.mrf.mxu0
        %v827 = vadd.f32 %v778, %v826
        %v828 = vpop.f32.mrf.mxu0
        %v829 = vadd.f32 %v780, %v828
        %830 = vdwg.mxu0
        %831 = vmatpush.bf16.msra.mxu0 %v708
        %832 = vmatpush.bf16.msra.mxu0 %v707
        %833 = vmatpush.bf16.msra.mxu0 %v706
        %834 = vmatpush.bf16.msra.mxu0 %v705
        %835 = vmatpush.bf16.msra.mxu0 %v704
        %836 = vmatpush.bf16.msra.mxu0 %v703
        %837 = vmatpush.bf16.msra.mxu0 %v702
        %838 = vmatpush.bf16.msra.mxu0 %v701
        %839 = vmatmul.bf16.gmra.mxu0 %v543
        %v840 = vpop.f32.mrf.mxu0
        %v841 = vadd.f32 %v792, %v840
        %v842 = vpop.f32.mrf.mxu0
        %v843 = vadd.f32 %v794, %v842
        %844 = vmatmul.bf16.gmra.mxu0 %v546
        %v845 = vpop.f32.mrf.mxu0
        %v846 = vadd.f32 %v797, %v845
        %v847 = vpop.f32.mrf.mxu0
        %v848 = vadd.f32 %v799, %v847
        %849 = vmatmul.bf16.gmra.mxu0 %v549
        %v850 = vpop.f32.mrf.mxu0
        %v851 = vadd.f32 %v802, %v850
        %v852 = vpop.f32.mrf.mxu0
        %v853 = vadd.f32 %v804, %v852
        %854 = vmatmul.bf16.gmra.mxu0 %v552
        %v855 = vpop.f32.mrf.mxu0
        %v856 = vadd.f32 %v807, %v855
        %v857 = vpop.f32.mrf.mxu0
        %v858 = vadd.f32 %v809, %v857
        %859 = vmatmul.bf16.gmra.mxu0 %v555
        %v860 = vpop.f32.mrf.mxu0
        %v861 = vadd.f32 %v812, %v860
        %v862 = vpop.f32.mrf.mxu0
        %v863 = vadd.f32 %v814, %v862
        %864 = vmatmul.bf16.gmra.mxu0 %v558
        %v865 = vpop.f32.mrf.mxu0
        %v866 = vadd.f32 %v817, %v865
        %v867 = vpop.f32.mrf.mxu0
        %v868 = vadd.f32 %v819, %v867
        %869 = vmatmul.bf16.gmra.mxu0 %v561
        %v870 = vpop.f32.mrf.mxu0
        %v871 = vadd.f32 %v822, %v870
        %v872 = vpop.f32.mrf.mxu0
        %v873 = vadd.f32 %v824, %v872
        %874 = vmatmul.bf16.gmra.mxu0 %v564
        %v875 = vpop.f32.mrf.mxu0
        %v876 = vadd.f32 %v827, %v875
        %v877 = vpop.f32.mrf.mxu0
        %v878 = vadd.f32 %v829, %v877
        %879 = vdwg.mxu0
        %v880 = vadd.f32 %v365, %v841
        %v881 = vadd.f32 %v366, %v843
        %v882 = vadd.f32 %v367, %v846
        %v883 = vadd.f32 %v368, %v848
        %v884 = vadd.f32 %v369, %v851
        %v885 = vadd.f32 %v370, %v853
        %v886 = vadd.f32 %v371, %v856
        %v887 = vadd.f32 %v372, %v858
        %v888 = vadd.f32 %v373, %v861
        %v889 = vadd.f32 %v374, %v863
        %v890 = vadd.f32 %v375, %v866
        %v891 = vadd.f32 %v376, %v868
        %v892 = vadd.f32 %v377, %v871
        %v893 = vadd.f32 %v378, %v873
        %v894 = vadd.f32 %v379, %v876
        %v895 = vadd.f32 %v380, %v878
        %896 = vst [vmem:[#allocation2] sm:$0xff] %v880
        %897 = vst [vmem:[#allocation2 + $0x8] sm:$0xff] %v881
        %898 = vst [vmem:[#allocation2 + $0x10] sm:$0xff] %v882
        %899 = vst [vmem:[#allocation2 + $0x18] sm:$0xff] %v883
        %900 = vst [vmem:[#allocation2 + $0x20] sm:$0xff] %v884
        %901 = vst [vmem:[#allocation2 + $0x28] sm:$0xff] %v885
        %902 = vst [vmem:[#allocation2 + $0x30] sm:$0xff] %v886
        %903 = vst [vmem:[#allocation2 + $0x38] sm:$0xff] %v887
        %904 = vst [vmem:[#allocation2 + $0x40] sm:$0xff] %v888
        %905 = vst [vmem:[#allocation2 + $0x48] sm:$0xff] %v889
        %906 = vst [vmem:[#allocation2 + $0x50] sm:$0xff] %v890
        %907 = vst [vmem:[#allocation2 + $0x58] sm:$0xff] %v891
        %908 = vst [vmem:[#allocation2 + $0x60] sm:$0xff] %v892
        %909 = vst [vmem:[#allocation2 + $0x68] sm:$0xff] %v893
        %910 = vst [vmem:[#allocation2 + $0x70] sm:$0xff] %v894
        %911 = vst [vmem:[#allocation2 + $0x78] sm:$0xff] %v895
        %p912 = scmp.eq.s32.totalorder %s21, 2
        // Predicated region
        $region63: #{vae_forward.7} parent=53 // pred_check
          %p913 = pneg %p912
        $region64: #{vae_forward.7} parent=53 // pred_check_branch
          %915 = sbr.rel (%p913) target = $region66
        $region65: #{vae_forward.7} parent=53 // pred_region
          %v916 = vld [vmem:[#allocation2] sm:$0xff]
          %v917 = vld [vmem:[#allocation2 + $0x8] sm:$0xff]
          %v918 = vld [vmem:[#allocation2 + $0x10] sm:$0xff]
          %v919 = vld [vmem:[#allocation2 + $0x18] sm:$0xff]
          %v920 = vld [vmem:[#allocation2 + $0x20] sm:$0xff]
          %v921 = vld [vmem:[#allocation2 + $0x28] sm:$0xff]
          %v922 = vld [vmem:[#allocation2 + $0x30] sm:$0xff]
          %v923 = vld [vmem:[#allocation2 + $0x38] sm:$0xff]
          %v924 = vld [vmem:[#allocation2 + $0x40] sm:$0xff]
          %v925 = vld [vmem:[#allocation2 + $0x48] sm:$0xff]
          %v926 = vld [vmem:[#allocation2 + $0x50] sm:$0xff]
          %v927 = vld [vmem:[#allocation2 + $0x58] sm:$0xff]
          %v928 = vld [vmem:[#allocation2 + $0x60] sm:$0xff]
          %v929 = vld [vmem:[#allocation2 + $0x68] sm:$0xff]
          %v930 = vld [vmem:[#allocation2 + $0x70] sm:$0xff]
          %v931 = vld [vmem:[#allocation2 + $0x78] sm:$0xff]
          %v932 = vld [vmem:[%s335] sm:$0x1]
          %v934 = vperm.slane %v932, 0
          %v936 = vadd.f32 %v916, %v934
          %v937 = vadd.f32 %v917, %v934
          %v938 = vadd.f32 %v918, %v934
          %v939 = vadd.f32 %v919, %v934
          %v940 = vadd.f32 %v920, %v934
          %v941 = vadd.f32 %v921, %v934
          %v942 = vadd.f32 %v922, %v934
          %v943 = vadd.f32 %v923, %v934
          %v944 = vadd.f32 %v924, %v934
          %v945 = vadd.f32 %v925, %v934
          %v946 = vadd.f32 %v926, %v934
          %v947 = vadd.f32 %v927, %v934
          %v948 = vadd.f32 %v928, %v934
          %v949 = vadd.f32 %v929, %v934
          %v950 = vadd.f32 %v930, %v934
          %v951 = vadd.f32 %v931, %v934
          %vm952 = vcmp.gt.f32.partialorder %v936, 0.0
          %vm953 = vcmp.gt.f32.partialorder %v937, 0.0
          %vm954 = vcmp.gt.f32.partialorder %v938, 0.0
          %vm955 = vcmp.gt.f32.partialorder %v939, 0.0
          %vm956 = vcmp.gt.f32.partialorder %v940, 0.0
          %vm957 = vcmp.gt.f32.partialorder %v941, 0.0
          %vm958 = vcmp.gt.f32.partialorder %v942, 0.0
          %vm959 = vcmp.gt.f32.partialorder %v943, 0.0
          %vm960 = vcmp.gt.f32.partialorder %v944, 0.0
          %vm961 = vcmp.gt.f32.partialorder %v945, 0.0
          %vm962 = vcmp.gt.f32.partialorder %v946, 0.0
          %vm963 = vcmp.gt.f32.partialorder %v947, 0.0
          %vm964 = vcmp.gt.f32.partialorder %v948, 0.0
          %vm965 = vcmp.gt.f32.partialorder %v949, 0.0
          %vm966 = vcmp.gt.f32.partialorder %v950, 0.0
          %vm967 = vcmp.gt.f32.partialorder %v951, 0.0
          %v968 = vmul.f32 %v936, 0.01
          %v969 = vmul.f32 %v937, 0.01
          %v970 = vmul.f32 %v938, 0.01
          %v971 = vmul.f32 %v939, 0.01
          %v972 = vmul.f32 %v940, 0.01
          %v973 = vmul.f32 %v941, 0.01
          %v974 = vmul.f32 %v942, 0.01
          %v975 = vmul.f32 %v943, 0.01
          %v976 = vmul.f32 %v944, 0.01
          %v977 = vmul.f32 %v945, 0.01
          %v978 = vmul.f32 %v946, 0.01
          %v979 = vmul.f32 %v947, 0.01
          %v980 = vmul.f32 %v948, 0.01
          %v981 = vmul.f32 %v949, 0.01
          %v982 = vmul.f32 %v950, 0.01
          %v983 = vmul.f32 %v951, 0.01
          %v984 = vsel %vm952, %v936, %v968
          %v985 = vsel %vm953, %v937, %v969
          %v986 = vsel %vm954, %v938, %v970
          %v987 = vsel %vm955, %v939, %v971
          %v988 = vsel %vm956, %v940, %v972
          %v989 = vsel %vm957, %v941, %v973
          %v990 = vsel %vm958, %v942, %v974
          %v991 = vsel %vm959, %v943, %v975
          %v992 = vsel %vm960, %v944, %v976
          %v993 = vsel %vm961, %v945, %v977
          %v994 = vsel %vm962, %v946, %v978
          %v995 = vsel %vm963, %v947, %v979
          %v996 = vsel %vm964, %v948, %v980
          %v997 = vsel %vm965, %v949, %v981
          %v998 = vsel %vm966, %v950, %v982
          %v999 = vsel %vm967, %v951, %v983
          %v1000 = vpack.c.bf16 %v984, %v984
          %v1001 = vpack.c.bf16 %v985, %v985
          %v1002 = vpack.c.bf16 %v986, %v986
          %v1003 = vpack.c.bf16 %v987, %v987
          %v1004 = vpack.c.bf16 %v988, %v988
          %v1005 = vpack.c.bf16 %v989, %v989
          %v1006 = vpack.c.bf16 %v990, %v990
          %v1007 = vpack.c.bf16 %v991, %v991
          %v1008 = vpack.c.bf16 %v992, %v992
          %v1009 = vpack.c.bf16 %v993, %v993
          %v1010 = vpack.c.bf16 %v994, %v994
          %v1011 = vpack.c.bf16 %v995, %v995
          %v1012 = vpack.c.bf16 %v996, %v996
          %v1013 = vpack.c.bf16 %v997, %v997
          %v1014 = vpack.c.bf16 %v998, %v998
          %v1015 = vpack.c.bf16 %v999, %v999
          %1016 = vst [vmem:[%s343] sm:$0xf] %v1000
          %1017 = vst [vmem:[%s343 + $0x4] sm:$0xf] %v1001
          %1018 = vst [vmem:[%s343 + $0x8] sm:$0xf] %v1002
          %1019 = vst [vmem:[%s343 + $0xc] sm:$0xf] %v1003
          %1020 = vst [vmem:[%s343 + $0x10] sm:$0xf] %v1004
          %1021 = vst [vmem:[%s343 + $0x14] sm:$0xf] %v1005
          %1022 = vst [vmem:[%s343 + $0x18] sm:$0xf] %v1006
          %1023 = vst [vmem:[%s343 + $0x1c] sm:$0xf] %v1007
          %1024 = vst [vmem:[%s343 + $0x20] sm:$0xf] %v1008
          %1025 = vst [vmem:[%s343 + $0x24] sm:$0xf] %v1009
          %1026 = vst [vmem:[%s343 + $0x28] sm:$0xf] %v1010
          %1027 = vst [vmem:[%s343 + $0x2c] sm:$0xf] %v1011
          %1028 = vst [vmem:[%s343 + $0x30] sm:$0xf] %v1012
          %1029 = vst [vmem:[%s343 + $0x34] sm:$0xf] %v1013
          %1030 = vst [vmem:[%s343 + $0x38] sm:$0xf] %v1014
          %1031 = vst [vmem:[%s343 + $0x3c] sm:$0xf] %v1015
        $region66: #{vae_forward.7} parent=53 // pred_fallthru
          _
        %s1032 = smul.u32 16, %s19
        %p1033 = scmp.lt.s32.totalorder %s1032, 15
        %s1034 = scalar_select %p1033, %s1032, 15
        %p1035 = scmp.lt.s32.totalorder %s20, 0
        %s1036 = scalar_select %p1035, %s20, 0
        %s1037 = sadd.s32 %s1036, %s1034
        %s1038 = smul.addr %s1037, 4
        %s1039 = scalar_lea.vmem %s3, %s1038
        // Predicated region
        $region67: #{vae_forward.7} parent=53 // pred_check
          %p1040 = pneg %p135
        $region68: #{vae_forward.7} parent=53 // pred_check_branch
          %1042 = sbr.rel (%p1040) target = $region70
        $region69: #{vae_forward.7} parent=53 // pred_region
          %s1043 = smul.u32 16, %s19
        $region70: #{vae_forward.7} parent=53 // pred_fallthru
          _
        // Predicated region
        $region71: #{vae_forward.7} parent=53 // pred_check
          %p1044 = pneg %p135
        $region72: #{vae_forward.7} parent=53 // pred_check_branch
          %1046 = sbr.rel (%p1044) target = $region74
        $region73: #{vae_forward.7} parent=53 // pred_region
          %s1047 = smul.u32 16, %s19
          %p1048 = scmp.lt.s32.totalorder %s1047, 15
          %s1049 = scalar_select %p1048, %s1047, 15
          %p1050 = scmp.lt.s32.totalorder %s20, 0
          %s1051 = scalar_select %p1050, %s20, 0
          %s1052 = sadd.s32 %s1051, %s1049
          %s1053 = smul.addr %s1052, 4
          %s1054 = scalar_lea.vmem %s3, %s1053
        $region74: #{vae_forward.7} parent=53 // pred_fallthru
          _
      $region54: #{vae_forward.7} parent=5 // pred_fallthru
        _
      %p1055 = scmp.le.s32.totalorder 2, %s9
      // Predicated region
      $region75: #{vae_forward.7} parent=5 // pred_check
        %p1056 = pneg %p1055
      $region76: #{vae_forward.7} parent=5 // pred_check_branch
        %1058 = sbr.rel (%p1056) target = $region78
      $region77: #{vae_forward.7} parent=5 // pred_region
        %s1059 = ssub.s32 %s9, 2
      $region78: #{vae_forward.7} parent=5 // pred_fallthru
        _
    $region6: #{vae_forward.7} parent=1 // loop_footer
      %s13 = sadd.s32 1, %s9
    $region7: #{vae_forward.7} parent=1 // loop_footer_branch
      %8 = sbr.rel target = $region3
    $region8: #{vae_forward.7} parent=1 // loop_exit
      _

// kernel: vae_forward.8
$region0: #{vae_forward.8}
  #allocation0 [shape = 'u32[]', space=smem, size = 0x4, offset = 0x4, fixed_abs, tag = 'smem constant byte address 0x4 - core index']
  #allocation1 [shape = 'u32[72,128]{1,0:T(1,128)}', space=vmem, size = 0x9000, scoped, tag = 'internal scratch']
  #allocation2 [shape = 'f32[32,128]{1,0:T(8,128)}', space=vmem, size = 0x4000, scoped, tag = 'scratch operand']
  %s0 = inlined_call_operand.vmem [shape: bf16[32,1152], index: 0, kind: input, shape index: {}]
  %s1 = inlined_call_operand.vmem [shape: bf16[1152,128], index: 1, kind: input, shape index: {}]
  %s2 = inlined_call_operand.vmem [shape: f32[1,128], index: 2, kind: input, shape index: {}]
  %s3 = inlined_call_operand.vmem [shape: bf16[32,128], index: 3, kind: output, shape index: {}]
  %s4 = sld [smem:[#allocation0]]
  $region79: #{vae_forward.8} parent=0
    _
  %s6 = ssub.s32 1, %s4
  %s7 = scalar_select 0, %s6, %s4
  $region1: #{vae_forward.8} parent=0
    #allocation3 [shape = 'u8[49152]{0}', space=vmem, size = 0xc000, scoped, tag = 'input window, operand 0']
    loop: start=0, step=1, limit=5
    $region2: #{vae_forward.8} parent=1 // loop_pre_header
      _
    $region3: #{vae_forward.8} parent=1 // loop_header
      %s9 = sphi 0, %s13
      %p10 = scmp.ge.s32.totalorder %s9, 5
      %s16 = sphi 0, %s35
      %s17 = sphi 0, %s31
      %s18 = sphi 0, %s27
      %s19 = sphi 0, %s16
      %s20 = sphi 0, %s17
      %s21 = sphi 0, %s18
      %s22 = sphi 0, %s19
      %s23 = sphi 0, %s20
      %s24 = sphi 0, %s21
      %s40 = sphi 0, %s42
      %s43 = sphi 0, %s40
      %s44 = sphi 0, %s43
      %s60 = sphi 0, %s44
      %s68 = sphi 0, %s70
      %s71 = sphi 0, %s68
      %s72 = sphi 0, %s71
      %s88 = sphi 0, %s72
      %s94 = sphi 0, %s96
      %s97 = sphi 0, %s94
      %s98 = sphi 0, %s97
      %s114 = sphi 0, %s98
      %s122 = sphi 0, %s124
      %s125 = sphi 0, %s122
      %s126 = sphi 0, %s125
      %s142 = sphi 0, %s126
    $region4: #{vae_forward.8} parent=1 // loop_header_branch
      %12 = sbr.rel (%p10) target = $region8
    $region5: #{vae_forward.8} parent=1 // loop_body
      %s14 = ssub.s32 %s9, 1
      %s15 = ssub.s32 %s9, 2
      %s25 = sadd.s32 1, %s18
      %p26 = scmp.ge.s32.totalorder %s25, 3
      %s27 = scalar_select %p26, 0, %s25
      %s28 = sadd.s32 1, %s17
      %s29 = scalar_select %p26, %s28, %s17
      %p30 = scmp.ge.s32.totalorder %s29, 1
      %s31 = scalar_select %p30, 0, %s29
      %s32 = sadd.s32 1, %s16
      %s33 = scalar_select %p30, %s32, %s16
      %p34 = scmp.ge.s32.totalorder %s33, 1
      %s35 = scalar_select %p34, 0, %s33
      %s36 = ssub.s32 %s16, %s35
      %s37 = ssub.s32 %s18, %s27
      %s38 = sor.u32 %s36, %s37
      %p39 = scmp.eq.s32.totalorder %s38, 0
      %s41 = sadd.s32 %s40, 1
      %s42 = scalar_select %p39, %s40, %s41
      %p45 = pneg %p39
      %p46 = scmp.eq.s32.totalorder %s9, 2
      %p47 = por %p45, %p46
      %p48 = scmp.ne.s32.totalorder %s40, %s43
      %p49 = scmp.eq.s32.totalorder %s9, 0
      %p50 = por %p48, %p49
      %p51 = scmp.ne.s32.totalorder %s40, %s43
      %p52 = scmp.eq.s32.totalorder %s14, 2
      %p53 = por %p51, %p52
      %p54 = scmp.ne.s32.totalorder %s43, %s44
      %p55 = scmp.eq.s32.totalorder %s14, 0
      %p56 = por %p54, %p55
      %p57 = scmp.ne.s32.totalorder %s43, %s44
      %p58 = scmp.eq.s32.totalorder %s15, 2
      %p59 = por %p57, %p58
      %p61 = scmp.ne.s32.totalorder %s44, %s60
      %p62 = scmp.eq.s32.totalorder %s15, 0
      %p63 = por %p61, %p62
      %s64 = ssub.s32 %s18, %s27
      %s65 = ssub.s32 %s17, %s31
      %s66 = sor.u32 %s64, %s65
      %p67 = scmp.eq.s32.totalorder %s66, 0
      %s69 = sadd.s32 %s68, 1
      %s70 = scalar_select %p67, %s68, %s69
      %p73 = pneg %p67
      %p74 = scmp.eq.s32.totalorder %s9, 2
      %p75 = por %p73, %p74
      %p76 = scmp.ne.s32.totalorder %s68, %s71
      %p77 = scmp.eq.s32.totalorder %s9, 0
      %p78 = por %p76, %p77
      %p79 = scmp.ne.s32.totalorder %s68, %s71
      %p80 = scmp.eq.s32.totalorder %s14, 2
      %p81 = por %p79, %p80
      %p82 = scmp.ne.s32.totalorder %s71, %s72
      %p83 = scmp.eq.s32.totalorder %s14, 0
      %p84 = por %p82, %p83
      %p85 = scmp.ne.s32.totalorder %s71, %s72
      %p86 = scmp.eq.s32.totalorder %s15, 2
      %p87 = por %p85, %p86
      %p89 = scmp.ne.s32.totalorder %s72, %s88
      %p90 = scmp.eq.s32.totalorder %s15, 0
      %p91 = por %p89, %p90
      %s92 = ssub.s32 %s17, %s31
      %p93 = scmp.eq.s32.totalorder %s92, 0
      %s95 = sadd.s32 %s94, 1
      %s96 = scalar_select %p93, %s94, %s95
      %p99 = pneg %p93
      %p100 = scmp.eq.s32.totalorder %s9, 2
      %p101 = por %p99, %p100
      %p102 = scmp.ne.s32.totalorder %s94, %s97
      %p103 = scmp.eq.s32.totalorder %s9, 0
      %p104 = por %p102, %p103
      %p105 = scmp.ne.s32.totalorder %s94, %s97
      %p106 = scmp.eq.s32.totalorder %s14, 2
      %p107 = por %p105, %p106
      %p108 = scmp.ne.s32.totalorder %s97, %s98
      %p109 = scmp.eq.s32.totalorder %s14, 0
      %p110 = por %p108, %p109
      %p111 = scmp.ne.s32.totalorder %s97, %s98
      %p112 = scmp.eq.s32.totalorder %s15, 2
      %p113 = por %p111, %p112
      %p115 = scmp.ne.s32.totalorder %s98, %s114
      %p116 = scmp.eq.s32.totalorder %s15, 0
      %p117 = por %p115, %p116
      %s118 = ssub.s32 %s16, %s35
      %s119 = ssub.s32 %s17, %s31
      %s120 = sor.u32 %s118, %s119
      %p121 = scmp.eq.s32.totalorder %s120, 0
      %s123 = sadd.s32 %s122, 1
      %s124 = scalar_select %p121, %s122, %s123
      %p127 = pneg %p121
      %p128 = scmp.eq.s32.totalorder %s9, 2
      %p129 = por %p127, %p128
      %p130 = scmp.ne.s32.totalorder %s122, %s125
      %p131 = scmp.eq.s32.totalorder %s9, 0
      %p132 = por %p130, %p131
      %p133 = scmp.ne.s32.totalorder %s122, %s125
      %p134 = scmp.eq.s32.totalorder %s14, 2
      %p135 = por %p133, %p134
      %p136 = scmp.ne.s32.totalorder %s125, %s126
      %p137 = scmp.eq.s32.totalorder %s14, 0
      %p138 = por %p136, %p137
      %p139 = scmp.ne.s32.totalorder %s125, %s126
      %p140 = scmp.eq.s32.totalorder %s15, 2
      %p141 = por %p139, %p140
      %p143 = scmp.ne.s32.totalorder %s126, %s142
      %p144 = scmp.eq.s32.totalorder %s15, 0
      %p145 = por %p143, %p144
      %p146 = scmp.le.s32.totalorder 1, %s9
      %p147 = scmp.lt.s32.totalorder %s9, 4
      %p148 = pnand %p146, %p147
      %p149 = pneg %p148
      // Predicated region
      $region9: #{vae_forward.8} parent=5 // pred_check
        _
      $region10: #{vae_forward.8} parent=5 // pred_check_branch
        %151 = sbr.rel (%p148) target = $region12
      $region11: #{vae_forward.8} parent=5 // pred_region
        %s152 = ssub.s32 %s9, 1
        // Predicated region
        $region13: #{vae_forward.8} parent=11 // pred_check
          %p153 = pneg %p110
        $region14: #{vae_forward.8} parent=11 // pred_check_branch
          %155 = sbr.rel (%p153) target = $region16
        $region15: #{vae_forward.8} parent=11 // pred_region
          %p156 = scmp.lt.s32.totalorder %s20, 0
          %s157 = scalar_select %p156, %s20, 0
          %s158 = scalar_lea.vmem %s2, %s157
        $region16: #{vae_forward.8} parent=11 // pred_fallthru
          _
      $region12: #{vae_forward.8} parent=5 // pred_fallthru
        _
      %p159 = scmp.lt.s32.totalorder %s9, 3
      // Predicated region
      $region17: #{vae_forward.8} parent=5 // pred_check
        %p160 = pneg %p159
      $region18: #{vae_forward.8} parent=5 // pred_check_branch
        %162 = sbr.rel (%p160) target = $region20
      $region19: #{vae_forward.8} parent=5 // pred_region
        // Predicated region
        $region21: #{vae_forward.8} parent=19 // pred_check
          %p163 = pneg %p50
        $region22: #{vae_forward.8} parent=19 // pred_check_branch
          %165 = sbr.rel (%p163) target = $region24
        $region23: #{vae_forward.8} parent=19 // pred_region
          %s166 = sand.u32 %s40, 1
          %s167 = sand.u32 %s40, 1
          %s168 = smul.addr %s167, 48
          %s169 = scalar_lea.vmem [#allocation3], %s168
          %s170 = smul.u32 4, %s16
          %s171 = smul.u32 3, %s18
          %s172 = smul.addr %s170, 9
          %s173 = sadd.s32 %s171, %s172
          %s174 = smul.addr %s173, 4
          %s175 = scalar_lea.vmem %s0, %s174
          // Predicated region
          $region25: #{vae_forward.8} parent=23 // pred_check
            _
          $region26: #{vae_forward.8} parent=23 // pred_check_branch
            %177 = sbr.rel (0) target = $region28
          $region27: #{vae_forward.8} parent=23 // pred_region
            // Predicated region
            $region29: #{vae_forward.8} parent=27 // pred_check
              _
            $region30: #{vae_forward.8} parent=27 // pred_check_branch
              %179 = sbr.rel (0) target = $region32
            $region31: #{vae_forward.8} parent=27 // pred_region
              %s180 = scalar_lea.vmem %s175, 8
              %s181 = scalar_lea.vmem %s169, 8 [#allocation3]
              loop: start=0, step=1, limit=1
              $region33: #{vae_forward.8} parent=31 // loop_pre_header
                _
              $region34: #{vae_forward.8} parent=31 // loop_header
                %s183 = sphi 0, %s187
                %p184 = scmp.ge.s32.totalorder %s183, 1
                %s188 = sphi %s175, %s175
                %s189 = sphi %s169, %s169
              $region35: #{vae_forward.8} parent=31 // loop_header_branch
                %186 = sbr.rel (%p184) target = $region39
              $region36: #{vae_forward.8} parent=31 // loop_body
                %v190 = vld [vmem:[%s188] sm:$0xff]
                %191 = vst [vmem:[%s189] sm:$0xff] %v190
                %v192 = vld [vmem:[%s188 + $0x24] sm:$0xff]
                %193 = vst [vmem:[%s189 + $0xc] sm:$0xff] %v192
                %v194 = vld [vmem:[%s188 + $0x48] sm:$0xff]
                %195 = vst [vmem:[%s189 + $0x18] sm:$0xff] %v194
                %v196 = vld [vmem:[%s188 + $0x6c] sm:$0xff]
                %197 = vst [vmem:[%s189 + $0x24] sm:$0xff] %v196
              $region37: #{vae_forward.8} parent=31 // loop_footer
                %s187 = sadd.s32 1, %s183
              $region38: #{vae_forward.8} parent=31 // loop_footer_branch
                %182 = sbr.rel target = $region34
              $region39: #{vae_forward.8} parent=31 // loop_exit
                _
              %s199 = ssub.s32 16, 1
              loop: start=0, step=1, limit=1
              $region40: #{vae_forward.8} parent=31 // loop_pre_header
                _
              $region41: #{vae_forward.8} parent=31 // loop_header
                %s201 = sphi 0, %s205
                %p202 = scmp.ge.s32.totalorder %s201, 1
                %s206 = sphi %s180, %s180
                %s207 = sphi %s181, %s181
              $region42: #{vae_forward.8} parent=31 // loop_header_branch
                %204 = sbr.rel (%p202) target = $region46
              $region43: #{vae_forward.8} parent=31 // loop_body
                %v208 = vld [vmem:[%s206] sm:%s199]
                %209 = vst [vmem:[%s207] sm:%s199] %v208
                %v210 = vld [vmem:[%s206 + $0x24] sm:%s199]
                %211 = vst [vmem:[%s207 + $0xc] sm:%s199] %v210
                %v212 = vld [vmem:[%s206 + $0x48] sm:%s199]
                %213 = vst [vmem:[%s207 + $0x18] sm:%s199] %v212
                %v214 = vld [vmem:[%s206 + $0x6c] sm:%s199]
                %215 = vst [vmem:[%s207 + $0x24] sm:%s199] %v214
              $region44: #{vae_forward.8} parent=31 // loop_footer
                %s205 = sadd.s32 1, %s201
              $region45: #{vae_forward.8} parent=31 // loop_footer_branch
                %200 = sbr.rel target = $region41
              $region46: #{vae_forward.8} parent=31 // loop_exit
                _
            $region32: #{vae_forward.8} parent=27 // pred_fallthru
              _
          $region28: #{vae_forward.8} parent=23 // pred_fallthru
            _
          %216 = vnop
        $region24: #{vae_forward.8} parent=19 // pred_fallthru
          _
        // Predicated region
        $region47: #{vae_forward.8} parent=19 // pred_check
          %p217 = pneg %p78
        $region48: #{vae_forward.8} parent=19 // pred_check_branch
          %219 = sbr.rel (%p217) target = $region50
        $region49: #{vae_forward.8} parent=19 // pred_region
          %s220 = smul.u32 48, %s18
          %p221 = scmp.lt.s32.totalorder %s220, 143
          %s222 = scalar_select %p221, %s220, 143
          %p223 = scmp.lt.s32.totalorder %s17, 0
          %s224 = scalar_select %p223, %s17, 0
          %s225 = sadd.s32 %s224, %s222
          %s226 = smul.addr %s225, 4
          %s227 = scalar_lea.vmem %s1, %s226
          %s228 = smul.u32 48, %s18
        $region50: #{vae_forward.8} parent=19 // pred_fallthru
          _
      $region20: #{vae_forward.8} parent=5 // pred_fallthru
        _
      %p229 = scmp.le.s32.totalorder 1, %s9
      %p230 = scmp.lt.s32.totalorder %s9, 4
      %p231 = pnand %p229, %p230
      %p232 = pneg %p231
      // Predicated region
      $region51: #{vae_forward.8} parent=5 // pred_check
        _
      $region52: #{vae_forward.8} parent=5 // pred_check_branch
        %234 = sbr.rel (%p231) target = $region54
      $region53: #{vae_forward.8} parent=5 // pred_region
        %s235 = ssub.s32 %s9, 1
        %s236 = sand.u32 %s43, 1
        %s237 = sand.u32 %s43, 1
        %s238 = smul.addr %s237, 48
        %s239 = scalar_lea.vmem [#allocation3], %s238
        // Predicated region
        $region55: #{vae_forward.8} parent=53 // pred_check
          %p240 = pneg %p56
        $region56: #{vae_forward.8} parent=53 // pred_check_branch
          %242 = sbr.rel (%p240) target = $region58
        $region57: #{vae_forward.8} parent=53 // pred_region
          _
        $region58: #{vae_forward.8} parent=53 // pred_fallthru
          _
        %s243 = sand.u32 %s43, 1
        %s244 = sand.u32 %s43, 1
        %s245 = smul.addr %s244, 48
        %s246 = scalar_lea.vmem [#allocation3], %s245
        %p247 = pneg %p56
        %p248 = pneg %p53
        %s249 = smul.u32 48, %s21
        %p250 = scmp.lt.s32.totalorder %s249, 143
        %s251 = scalar_select %p250, %s249, 143
        %p252 = scmp.lt.s32.totalorder %s20, 0
        %s253 = scalar_select %p252, %s20, 0
        %s254 = sadd.s32 %s253, %s251
        %s255 = smul.addr %s254, 4
        %s256 = scalar_lea.vmem %s1, %s255
        %p257 = pneg %p84
        %p258 = pneg %p81
        %p259 = scmp.lt.s32.totalorder %s20, 0
        %s260 = scalar_select %p259, %s20, 0
        %s261 = scalar_lea.vmem %s2, %s260
        %p262 = pneg %p110
        %p263 = pneg %p107
        %p264 = pneg %p138
        %p265 = pneg %p135
        %s266 = smul.u32 4, %s19
        %p267 = scmp.lt.s32.totalorder %s266, 3
        %s268 = scalar_select %p267, %s266, 3
        %p269 = scmp.lt.s32.totalorder %s20, 0
        %s270 = scalar_select %p269, %s20, 0
        %s271 = sadd.s32 %s270, %s268
        %s272 = smul.addr %s271, 4
        %s273 = scalar_lea.vmem %s3, %s272
        %s274 = smul.u32 4, %s19
        %s275 = smul.u32 3, %s21
        %s276 = smul.u32 48, %s21
        %p277 = scmp.lt.s32.totalorder %s276, 143
        %s278 = scalar_select %p277, %s276, 143
        %p279 = scmp.lt.s32.totalorder %s20, 0
        %s280 = scalar_select %p279, %s20, 0
        %s281 = sadd.s32 %s280, %s278
        %s282 = smul.addr %s281, 4
        %s283 = scalar_lea.vmem %s1, %s282
        %s284 = smul.u32 48, %s21
        %p285 = scmp.lt.s32.totalorder %s20, 0
        %s286 = scalar_select %p285, %s20, 0
        %s287 = scalar_lea.vmem %s2, %s286
        %s288 = smul.u32 4, %s19
        %p289 = scmp.lt.s32.totalorder %s288, 3
        %s290 = scalar_select %p289, %s288, 3
        %p291 = scmp.lt.s32.totalorder %s20, 0
        %s292 = scalar_select %p291, %s20, 0
        %s293 = sadd.s32 %s292, %s290
        %s294 = smul.addr %s293, 4
        %s295 = scalar_lea.vmem %s3, %s294
        %s296 = smul.u32 4, %s19
        %p297 = scmp.eq.s32.totalorder %s21, 0
        // Predicated region
        $region59: #{vae_forward.8} parent=53 // pred_check
          %p298 = pneg %p297
        $region60: #{vae_forward.8} parent=53 // pred_check_branch
          %300 = sbr.rel (%p298) target = $region62
        $region61: #{vae_forward.8} parent=53 // pred_region
          %301 = vst [vmem:[#allocation2] sm:$0xff] 0.0
          %302 = vst [vmem:[#allocation2 + $0x8] sm:$0xff] 0.0
          %303 = vst [vmem:[#allocation2 + $0x10] sm:$0xff] 0.0
          %304 = vst [vmem:[#allocation2 + $0x18] sm:$0xff] 0.0
        $region62: #{vae_forward.8} parent=53 // pred_fallthru
          _
        %v305 = vld [vmem:[#allocation2] sm:$0xff]
        %v306 = vld [vmem:[#allocation2 + $0x8] sm:$0xff]
        %v307 = vld [vmem:[#allocation2 + $0x10] sm:$0xff]
        %v308 = vld [vmem:[#allocation2 + $0x18] sm:$0xff]
        %v309 = vld [vmem:[%s239] sm:$0xff]
        %v310 = vld [vmem:[%s239 + $0x8] sm:$0xf]
        %v311 = vld [vmem:[%s239 + $0xc] sm:$0xff]
        %v312 = vld [vmem:[%s239 + $0x14] sm:$0xf]
        %v313 = vld [vmem:[%s239 + $0x18] sm:$0xff]
        %v314 = vld [vmem:[%s239 + $0x20] sm:$0xf]
        %v315 = vld [vmem:[%s239 + $0x24] sm:$0xff]
        %v316 = vld [vmem:[%s239 + $0x2c] sm:$0xf]
        %v317 = vld [vmem:[%s283] sm:$0xf]
        %v318 = vld [vmem:[%s283 + $0x4] sm:$0xf]
        %v319 = vld [vmem:[%s283 + $0x8] sm:$0xf]
        %v320 = vld [vmem:[%s283 + $0xc] sm:$0xf]
        %v321 = vld [vmem:[%s283 + $0x10] sm:$0xf]
        %v322 = vld [vmem:[%s283 + $0x14] sm:$0xf]
        %v323 = vld [vmem:[%s283 + $0x18] sm:$0xf]
        %v324 = vld [vmem:[%s283 + $0x1c] sm:$0xf]
        %v325 = vld [vmem:[%s283 + $0x20] sm:$0xf]
        %v326 = vld [vmem:[%s283 + $0x24] sm:$0xf]
        %v327 = vld [vmem:[%s283 + $0x28] sm:$0xf]
        %v328 = vld [vmem:[%s283 + $0x2c] sm:$0xf]
        %v329 = vld [vmem:[%s283 + $0x30] sm:$0xf]
        %v330 = vld [vmem:[%s283 + $0x34] sm:$0xf]
        %v331 = vld [vmem:[%s283 + $0x38] sm:$0xf]
        %v332 = vld [vmem:[%s283 + $0x3c] sm:$0xf]
        %v333 = vld [vmem:[%s283 + $0x40] sm:$0xf]
        %v334 = vld [vmem:[%s283 + $0x44] sm:$0xf]
        %v335 = vld [vmem:[%s283 + $0x48] sm:$0xf]
        %v336 = vld [vmem:[%s283 + $0x4c] sm:$0xf]
        %v337 = vld [vmem:[%s283 + $0x50] sm:$0xf]
        %v338 = vld [vmem:[%s283 + $0x54] sm:$0xf]
        %v339 = vld [vmem:[%s283 + $0x58] sm:$0xf]
        %v340 = vld [vmem:[%s283 + $0x5c] sm:$0xf]
        %v341 = vld [vmem:[%s283 + $0x60] sm:$0xf]
        %v342 = vld [vmem:[%s283 + $0x64] sm:$0xf]
        %v343 = vld [vmem:[%s283 + $0x68] sm:$0xf]
        %v344 = vld [vmem:[%s283 + $0x6c] sm:$0xf]
        %v345 = vld [vmem:[%s283 + $0x70] sm:$0xf]
        %v346 = vld [vmem:[%s283 + $0x74] sm:$0xf]
        %v347 = vld [vmem:[%s283 + $0x78] sm:$0xf]
        %v348 = vld [vmem:[%s283 + $0x7c] sm:$0xf]
        %v349 = vld [vmem:[%s283 + $0x80] sm:$0xf]
        %v350 = vld [vmem:[%s283 + $0x84] sm:$0xf]
        %v351 = vld [vmem:[%s283 + $0x88] sm:$0xf]
        %v352 = vld [vmem:[%s283 + $0x8c] sm:$0xf]
        %v353 = vld [vmem:[%s283 + $0x90] sm:$0xf]
        %v354 = vld [vmem:[%s283 + $0x94] sm:$0xf]
        %v355 = vld [vmem:[%s283 + $0x98] sm:$0xf]
        %v356 = vld [vmem:[%s283 + $0x9c] sm:$0xf]
        %v357 = vld [vmem:[%s283 + $0xa0] sm:$0xf]
        %v358 = vld [vmem:[%s283 + $0xa4] sm:$0xf]
        %v359 = vld [vmem:[%s283 + $0xa8] sm:$0xf]
        %v360 = vld [vmem:[%s283 + $0xac] sm:$0xf]
        %v361 = vld [vmem:[%s283 + $0xb0] sm:$0xf]
        %v362 = vld [vmem:[%s283 + $0xb4] sm:$0xf]
        %v363 = vld [vmem:[%s283 + $0xb8] sm:$0xf]
        %v364 = vld [vmem:[%s283 + $0xbc] sm:$0xf]
        %v373 = vunpack.c.l.b16 %v309
        %v374 = vunpack.c.h.b16 %v309
        %v375 = vunpack.c.l.b16 %v310
        %v376 = vunpack.c.l.b16 %v311
        %v377 = vunpack.c.h.b16 %v311
        %v378 = vunpack.c.l.b16 %v312
        %v379 = vunpack.c.l.b16 %v313
        %v380 = vunpack.c.h.b16 %v313
        %v381 = vunpack.c.l.b16 %v314
        %v382 = vunpack.c.l.b16 %v315
        %v383 = vunpack.c.h.b16 %v315
        %v384 = vunpack.c.l.b16 %v316
        %v385 = vpack.c.b16 %v376, %v373
        %v386 = vpack.c.b16 %v377, %v374
        %v387 = vpack.c.b16 %v378, %v375
        %v388 = vpack.c.b16 %v382, %v379
        %v389 = vpack.c.b16 %v383, %v380
        %v390 = vpack.c.b16 %v384, %v381
        %v445 = vunpack.c.l.b16 %v317
        %v446 = vunpack.c.l.b16 %v318
        %v447 = vunpack.c.l.b16 %v319
        %v448 = vunpack.c.l.b16 %v320
        %v449 = vunpack.c.l.b16 %v321
        %v450 = vunpack.c.l.b16 %v322
        %v451 = vunpack.c.l.b16 %v323
        %v452 = vunpack.c.l.b16 %v324
        %v453 = vunpack.c.l.b16 %v325
        %v454 = vunpack.c.l.b16 %v326
        %v455 = vunpack.c.l.b16 %v327
        %v456 = vunpack.c.l.b16 %v328
        %v457 = vunpack.c.l.b16 %v329
        %v458 = vunpack.c.l.b16 %v330
        %v459 = vunpack.c.l.b16 %v331
        %v460 = vunpack.c.l.b16 %v332
        %v461 = vunpack.c.l.b16 %v333
        %v462 = vunpack.c.l.b16 %v334
        %v463 = vunpack.c.l.b16 %v335
        %v464 = vunpack.c.l.b16 %v336
        %v465 = vunpack.c.l.b16 %v337
        %v466 = vunpack.c.l.b16 %v338
        %v467 = vunpack.c.l.b16 %v339
        %v468 = vunpack.c.l.b16 %v340
        %v469 = vunpack.c.l.b16 %v341
        %v470 = vunpack.c.l.b16 %v342
        %v471 = vunpack.c.l.b16 %v343
        %v472 = vunpack.c.l.b16 %v344
        %v473 = vunpack.c.l.b16 %v345
        %v474 = vunpack.c.l.b16 %v346
        %v475 = vunpack.c.l.b16 %v347
        %v476 = vunpack.c.l.b16 %v348
        %v477 = vunpack.c.l.b16 %v349
        %v478 = vunpack.c.l.b16 %v350
        %v479 = vunpack.c.l.b16 %v351
        %v480 = vunpack.c.l.b16 %v352
        %v481 = vunpack.c.l.b16 %v353
        %v482 = vunpack.c.l.b16 %v354
        %v483 = vunpack.c.l.b16 %v355
        %v484 = vunpack.c.l.b16 %v356
        %v485 = vunpack.c.l.b16 %v357
        %v486 = vunpack.c.l.b16 %v358
        %v487 = vunpack.c.l.b16 %v359
        %v488 = vunpack.c.l.b16 %v360
        %v489 = vunpack.c.l.b16 %v361
        %v490 = vunpack.c.l.b16 %v362
        %v491 = vunpack.c.l.b16 %v363
        %v492 = vunpack.c.l.b16 %v364
        %v493 = vpack.c.b16 %v446, %v445
        %v494 = vpack.c.b16 %v448, %v447
        %v495 = vpack.c.b16 %v450, %v449
        %v496 = vpack.c.b16 %v452, %v451
        %v497 = vpack.c.b16 %v454, %v453
        %v498 = vpack.c.b16 %v456, %v455
        %v499 = vpack.c.b16 %v458, %v457
        %v500 = vpack.c.b16 %v460, %v459
        %v501 = vpack.c.b16 %v462, %v461
        %v502 = vpack.c.b16 %v464, %v463
        %v503 = vpack.c.b16 %v466, %v465
        %v504 = vpack.c.b16 %v468, %v467
        %v505 = vpack.c.b16 %v470, %v469
        %v506 = vpack.c.b16 %v472, %v471
        %v507 = vpack.c.b16 %v474, %v473
        %v508 = vpack.c.b16 %v476, %v475
        %v509 = vpack.c.b16 %v478, %v477
        %v510 = vpack.c.b16 %v480, %v479
        %v511 = vpack.c.b16 %v482, %v481
        %v512 = vpack.c.b16 %v484, %v483
        %v513 = vpack.c.b16 %v486, %v485
        %v514 = vpack.c.b16 %v488, %v487
        %v515 = vpack.c.b16 %v490, %v489
        %v516 = vpack.c.b16 %v492, %v491
        %541 = vmatpush.bf16.msra.mxu0 %v500
        %542 = vmatpush.bf16.msra.mxu0 %v499
        %543 = vmatpush.bf16.msra.mxu0 %v498
        %544 = vmatpush.bf16.msra.mxu0 %v497
        %545 = vmatpush.bf16.msra.mxu0 %v496
        %546 = vmatpush.bf16.msra.mxu0 %v495
        %547 = vmatpush.bf16.msra.mxu0 %v494
        %548 = vmatpush.bf16.msra.mxu0 %v493
        %549 = vmatmul.bf16.gmra.mxu0 %v385
        %v550 = vpop.f32.mrf.mxu0
        %v551 = vadd.f32 0.0, %v550
        %v552 = vpop.f32.mrf.mxu0
        %v553 = vadd.f32 0.0, %v552
        %554 = vmatmul.bf16.gmra.mxu0 %v388
        %v555 = vpop.f32.mrf.mxu0
        %v556 = vadd.f32 0.0, %v555
        %v557 = vpop.f32.mrf.mxu0
        %v558 = vadd.f32 0.0, %v557
        %559 = vdwg.mxu0
        %560 = vmatpush.bf16.msra.mxu0 %v508
        %561 = vmatpush.bf16.msra.mxu0 %v507
        %562 = vmatpush.bf16.msra.mxu0 %v506
        %563 = vmatpush.bf16.msra.mxu0 %v505
        %564 = vmatpush.bf16.msra.mxu0 %v504
        %565 = vmatpush.bf16.msra.mxu0 %v503
        %566 = vmatpush.bf16.msra.mxu0 %v502
        %567 = vmatpush.bf16.msra.mxu0 %v501
        %568 = vmatmul.bf16.gmra.mxu0 %v386
        %v569 = vpop.f32.mrf.mxu0
        %v570 = vadd.f32 %v551, %v569
        %v571 = vpop.f32.mrf.mxu0
        %v572 = vadd.f32 %v553, %v571
        %573 = vmatmul.bf16.gmra.mxu0 %v389
        %v574 = vpop.f32.mrf.mxu0
        %v575 = vadd.f32 %v556, %v574
        %v576 = vpop.f32.mrf.mxu0
        %v577 = vadd.f32 %v558, %v576
        %578 = vdwg.mxu0
        %579 = vmatpush.bf16.msra.mxu0 %v516
        %580 = vmatpush.bf16.msra.mxu0 %v515
        %581 = vmatpush.bf16.msra.mxu0 %v514
        %582 = vmatpush.bf16.msra.mxu0 %v513
        %583 = vmatpush.bf16.msra.mxu0 %v512
        %584 = vmatpush.bf16.msra.mxu0 %v511
        %585 = vmatpush.bf16.msra.mxu0 %v510
        %586 = vmatpush.bf16.msra.mxu0 %v509
        %587 = vmatmul.bf16.gmra.mxu0 %v387
        %v588 = vpop.f32.mrf.mxu0
        %v589 = vadd.f32 %v570, %v588
        %v590 = vpop.f32.mrf.mxu0
        %v591 = vadd.f32 %v572, %v590
        %592 = vmatmul.bf16.gmra.mxu0 %v390
        %v593 = vpop.f32.mrf.mxu0
        %v594 = vadd.f32 %v575, %v593
        %v595 = vpop.f32.mrf.mxu0
        %v596 = vadd.f32 %v577, %v595
        %597 = vdwg.mxu0
        %v598 = vadd.f32 %v305, %v589
        %v599 = vadd.f32 %v306, %v591
        %v600 = vadd.f32 %v307, %v594
        %v601 = vadd.f32 %v308, %v596
        %602 = vst [vmem:[#allocation2] sm:$0xff] %v598
        %603 = vst [vmem:[#allocation2 + $0x8] sm:$0xff] %v599
        %604 = vst [vmem:[#allocation2 + $0x10] sm:$0xff] %v600
        %605 = vst [vmem:[#allocation2 + $0x18] sm:$0xff] %v601
        %p606 = scmp.eq.s32.totalorder %s21, 2
        // Predicated region
        $region63: #{vae_forward.8} parent=53 // pred_check
          %p607 = pneg %p606
        $region64: #{vae_forward.8} parent=53 // pred_check_branch
          %609 = sbr.rel (%p607) target = $region66
        $region65: #{vae_forward.8} parent=53 // pred_region
          %v610 = vld [vmem:[#allocation2] sm:$0xff]
          %v611 = vld [vmem:[#allocation2 + $0x8] sm:$0xff]
          %v612 = vld [vmem:[#allocation2 + $0x10] sm:$0xff]
          %v613 = vld [vmem:[#allocation2 + $0x18] sm:$0xff]
          %v614 = vld [vmem:[%s287] sm:$0x1]
          %v616 = vperm.slane %v614, 0
          %v618 = vadd.f32 %v610, %v616
          %v619 = vadd.f32 %v611, %v616
          %v620 = vadd.f32 %v612, %v616
          %v621 = vadd.f32 %v613, %v616
          %vm622 = vcmp.gt.f32.partialorder %v618, 0.0
          %vm623 = vcmp.gt.f32.partialorder %v619, 0.0
          %vm624 = vcmp.gt.f32.partialorder %v620, 0.0
          %vm625 = vcmp.gt.f32.partialorder %v621, 0.0
          %v626 = vmul.f32 %v618, 0.01
          %v627 = vmul.f32 %v619, 0.01
          %v628 = vmul.f32 %v620, 0.01
          %v629 = vmul.f32 %v621, 0.01
          %v630 = vsel %vm622, %v618, %v626
          %v631 = vsel %vm623, %v619, %v627
          %v632 = vsel %vm624, %v620, %v628
          %v633 = vsel %vm625, %v621, %v629
          %v634 = vpack.c.bf16 %v630, %v630
          %v635 = vpack.c.bf16 %v631, %v631
          %v636 = vpack.c.bf16 %v632, %v632
          %v637 = vpack.c.bf16 %v633, %v633
          %638 = vst [vmem:[%s295] sm:$0xf] %v634
          %639 = vst [vmem:[%s295 + $0x4] sm:$0xf] %v635
          %640 = vst [vmem:[%s295 + $0x8] sm:$0xf] %v636
          %641 = vst [vmem:[%s295 + $0xc] sm:$0xf] %v637
        $region66: #{vae_forward.8} parent=53 // pred_fallthru
          _
        %s642 = smul.u32 4, %s19
        %p643 = scmp.lt.s32.totalorder %s642, 3
        %s644 = scalar_select %p643, %s642, 3
        %p645 = scmp.lt.s32.totalorder %s20, 0
        %s646 = scalar_select %p645, %s20, 0
        %s647 = sadd.s32 %s646, %s644
        %s648 = smul.addr %s647, 4
        %s649 = scalar_lea.vmem %s3, %s648
        // Predicated region
        $region67: #{vae_forward.8} parent=53 // pred_check
          %p650 = pneg %p135
        $region68: #{vae_forward.8} parent=53 // pred_check_branch
          %652 = sbr.rel (%p650) target = $region70
        $region69: #{vae_forward.8} parent=53 // pred_region
          %s653 = smul.u32 4, %s19
        $region70: #{vae_forward.8} parent=53 // pred_fallthru
          _
        // Predicated region
        $region71: #{vae_forward.8} parent=53 // pred_check
          %p654 = pneg %p135
        $region72: #{vae_forward.8} parent=53 // pred_check_branch
          %656 = sbr.rel (%p654) target = $region74
        $region73: #{vae_forward.8} parent=53 // pred_region
          %s657 = smul.u32 4, %s19
          %p658 = scmp.lt.s32.totalorder %s657, 3
          %s659 = scalar_select %p658, %s657, 3
          %p660 = scmp.lt.s32.totalorder %s20, 0
          %s661 = scalar_select %p660, %s20, 0
          %s662 = sadd.s32 %s661, %s659
          %s663 = smul.addr %s662, 4
          %s664 = scalar_lea.vmem %s3, %s663
        $region74: #{vae_forward.8} parent=53 // pred_fallthru
          _
      $region54: #{vae_forward.8} parent=5 // pred_fallthru
        _
      %p665 = scmp.le.s32.totalorder 2, %s9
      // Predicated region
      $region75: #{vae_forward.8} parent=5 // pred_check
        %p666 = pneg %p665
      $region76: #{vae_forward.8} parent=5 // pred_check_branch
        %668 = sbr.rel (%p666) target = $region78
      $region77: #{vae_forward.8} parent=5 // pred_region
        %s669 = ssub.s32 %s9, 2
      $region78: #{vae_forward.8} parent=5 // pred_fallthru
        _
    $region6: #{vae_forward.8} parent=1 // loop_footer
      %s13 = sadd.s32 1, %s9
    $region7: #{vae_forward.8} parent=1 // loop_footer_branch
      %8 = sbr.rel target = $region3
    $region8: #{vae_forward.8} parent=1 // loop_exit
      _

// kernel: vae_forward.10
$region0: #{vae_forward.10}
  #allocation0 [shape = 'u32[]', space=smem, size = 0x4, offset = 0x4, fixed_abs, tag = 'smem constant byte address 0x4 - core index']
  #allocation1 [shape = 'u32[72,128]{1,0:T(1,128)}', space=vmem, size = 0x9000, scoped, tag = 'internal scratch']
  #allocation2 [shape = 'f32[2,512]{1,0:T(2,128)}', space=vmem, size = 0x1000, scoped, tag = 'scratch operand']
  %s0 = inlined_call_operand.vmem [shape: bf16[2,128], index: 0, kind: input, shape index: {}]
  %s1 = inlined_call_operand.vmem [shape: bf16[128,2048], index: 1, kind: input, shape index: {}]
  %s2 = inlined_call_operand.vmem [shape: f32[1,2048], index: 2, kind: input, shape index: {}]
  %s3 = inlined_call_operand.vmem [shape: bf16[2,2048], index: 3, kind: output, shape index: {}]
  %s4 = sld [smem:[#allocation0]]
  $region76: #{vae_forward.10} parent=0
    _
  %s6 = ssub.s32 1, %s4
  %s7 = scalar_select 0, %s6, %s4
  $region1: #{vae_forward.10} parent=0
    #allocation3 [shape = 'u8[262144]{0}', space=vmem, size = 0x40000, scoped, tag = 'input window, operand 1']
    loop: start=0, step=1, limit=6
    $region2: #{vae_forward.10} parent=1 // loop_pre_header
      _
    $region3: #{vae_forward.10} parent=1 // loop_header
      %s9 = sphi 0, %s13
      %p10 = scmp.ge.s32.totalorder %s9, 6
      %s16 = sphi 0, %s35
      %s17 = sphi 0, %s31
      %s18 = sphi 0, %s27
      %s19 = sphi 0, %s16
      %s20 = sphi 0, %s17
      %s21 = sphi 0, %s18
      %s22 = sphi 0, %s19
      %s23 = sphi 0, %s20
      %s24 = sphi 0, %s21
      %s40 = sphi 0, %s42
      %s43 = sphi 0, %s40
      %s44 = sphi 0, %s43
      %s60 = sphi 0, %s44
      %s68 = sphi 0, %s70
      %s71 = sphi 0, %s68
      %s72 = sphi 0, %s71
      %s88 = sphi 0, %s72
      %s94 = sphi 0, %s96
      %s97 = sphi 0, %s94
      %s98 = sphi 0, %s97
      %s114 = sphi 0, %s98
      %s122 = sphi 0, %s124
      %s125 = sphi 0, %s122
      %s126 = sphi 0, %s125
      %s142 = sphi 0, %s126
    $region4: #{vae_forward.10} parent=1 // loop_header_branch
      %12 = sbr.rel (%p10) target = $region8
    $region5: #{vae_forward.10} parent=1 // loop_body
      %s14 = ssub.s32 %s9, 1
      %s15 = ssub.s32 %s9, 2
      %s25 = sadd.s32 1, %s18
      %p26 = scmp.ge.s32.totalorder %s25, 1
      %s27 = scalar_select %p26, 0, %s25
      %s28 = sadd.s32 1, %s17
      %s29 = scalar_select %p26, %s28, %s17
      %p30 = scmp.ge.s32.totalorder %s29, 4
      %s31 = scalar_select %p30, 0, %s29
      %s32 = sadd.s32 1, %s16
      %s33 = scalar_select %p30, %s32, %s16
      %p34 = scmp.ge.s32.totalorder %s33, 1
      %s35 = scalar_select %p34, 0, %s33
      %s36 = ssub.s32 %s16, %s35
      %s37 = ssub.s32 %s18, %s27
      %s38 = sor.u32 %s36, %s37
      %p39 = scmp.eq.s32.totalorder %s38, 0
      %s41 = sadd.s32 %s40, 1
      %s42 = scalar_select %p39, %s40, %s41
      %p45 = pneg %p39
      %p46 = scmp.eq.s32.totalorder %s9, 3
      %p47 = por %p45, %p46
      %p48 = scmp.ne.s32.totalorder %s40, %s43
      %p49 = scmp.eq.s32.totalorder %s9, 0
      %p50 = por %p48, %p49
      %p51 = scmp.ne.s32.totalorder %s40, %s43
      %p52 = scmp.eq.s32.totalorder %s14, 3
      %p53 = por %p51, %p52
      %p54 = scmp.ne.s32.totalorder %s43, %s44
      %p55 = scmp.eq.s32.totalorder %s14, 0
      %p56 = por %p54, %p55
      %p57 = scmp.ne.s32.totalorder %s43, %s44
      %p58 = scmp.eq.s32.totalorder %s15, 3
      %p59 = por %p57, %p58
      %p61 = scmp.ne.s32.totalorder %s44, %s60
      %p62 = scmp.eq.s32.totalorder %s15, 0
      %p63 = por %p61, %p62
      %s64 = ssub.s32 %s18, %s27
      %s65 = ssub.s32 %s17, %s31
      %s66 = sor.u32 %s64, %s65
      %p67 = scmp.eq.s32.totalorder %s66, 0
      %s69 = sadd.s32 %s68, 1
      %s70 = scalar_select %p67, %s68, %s69
      %p73 = pneg %p67
      %p74 = scmp.eq.s32.totalorder %s9, 3
      %p75 = por %p73, %p74
      %p76 = scmp.ne.s32.totalorder %s68, %s71
      %p77 = scmp.eq.s32.totalorder %s9, 0
      %p78 = por %p76, %p77
      %p79 = scmp.ne.s32.totalorder %s68, %s71
      %p80 = scmp.eq.s32.totalorder %s14, 3
      %p81 = por %p79, %p80
      %p82 = scmp.ne.s32.totalorder %s71, %s72
      %p83 = scmp.eq.s32.totalorder %s14, 0
      %p84 = por %p82, %p83
      %p85 = scmp.ne.s32.totalorder %s71, %s72
      %p86 = scmp.eq.s32.totalorder %s15, 3
      %p87 = por %p85, %p86
      %p89 = scmp.ne.s32.totalorder %s72, %s88
      %p90 = scmp.eq.s32.totalorder %s15, 0
      %p91 = por %p89, %p90
      %s92 = ssub.s32 %s17, %s31
      %p93 = scmp.eq.s32.totalorder %s92, 0
      %s95 = sadd.s32 %s94, 1
      %s96 = scalar_select %p93, %s94, %s95
      %p99 = pneg %p93
      %p100 = scmp.eq.s32.totalorder %s9, 3
      %p101 = por %p99, %p100
      %p102 = scmp.ne.s32.totalorder %s94, %s97
      %p103 = scmp.eq.s32.totalorder %s9, 0
      %p104 = por %p102, %p103
      %p105 = scmp.ne.s32.totalorder %s94, %s97
      %p106 = scmp.eq.s32.totalorder %s14, 3
      %p107 = por %p105, %p106
      %p108 = scmp.ne.s32.totalorder %s97, %s98
      %p109 = scmp.eq.s32.totalorder %s14, 0
      %p110 = por %p108, %p109
      %p111 = scmp.ne.s32.totalorder %s97, %s98
      %p112 = scmp.eq.s32.totalorder %s15, 3
      %p113 = por %p111, %p112
      %p115 = scmp.ne.s32.totalorder %s98, %s114
      %p116 = scmp.eq.s32.totalorder %s15, 0
      %p117 = por %p115, %p116
      %s118 = ssub.s32 %s16, %s35
      %s119 = ssub.s32 %s17, %s31
      %s120 = sor.u32 %s118, %s119
      %p121 = scmp.eq.s32.totalorder %s120, 0
      %s123 = sadd.s32 %s122, 1
      %s124 = scalar_select %p121, %s122, %s123
      %p127 = pneg %p121
      %p128 = scmp.eq.s32.totalorder %s9, 3
      %p129 = por %p127, %p128
      %p130 = scmp.ne.s32.totalorder %s122, %s125
      %p131 = scmp.eq.s32.totalorder %s9, 0
      %p132 = por %p130, %p131
      %p133 = scmp.ne.s32.totalorder %s122, %s125
      %p134 = scmp.eq.s32.totalorder %s14, 3
      %p135 = por %p133, %p134
      %p136 = scmp.ne.s32.totalorder %s125, %s126
      %p137 = scmp.eq.s32.totalorder %s14, 0
      %p138 = por %p136, %p137
      %p139 = scmp.ne.s32.totalorder %s125, %s126
      %p140 = scmp.eq.s32.totalorder %s15, 3
      %p141 = por %p139, %p140
      %p143 = scmp.ne.s32.totalorder %s126, %s142
      %p144 = scmp.eq.s32.totalorder %s15, 0
      %p145 = por %p143, %p144
      %p146 = scmp.le.s32.totalorder 1, %s9
      %p147 = scmp.lt.s32.totalorder %s9, 5
      %p148 = pnand %p146, %p147
      %p149 = pneg %p148
      // Predicated region
      $region9: #{vae_forward.10} parent=5 // pred_check
        _
      $region10: #{vae_forward.10} parent=5 // pred_check_branch
        %151 = sbr.rel (%p148) target = $region12
      $region11: #{vae_forward.10} parent=5 // pred_region
        %s152 = ssub.s32 %s9, 1
        // Predicated region
        $region13: #{vae_forward.10} parent=11 // pred_check
          %p153 = pneg %p56
        $region14: #{vae_forward.10} parent=11 // pred_check_branch
          %155 = sbr.rel (%p153) target = $region16
        $region15: #{vae_forward.10} parent=11 // pred_region
          %p156 = scmp.lt.s32.totalorder %s19, 0
          %s157 = scalar_select %p156, %s19, 0
          %p158 = scmp.lt.s32.totalorder %s21, 0
          %s159 = scalar_select %p158, %s21, 0
          %s160 = sadd.s32 %s159, %s157
          %s161 = scalar_lea.vmem %s0, %s160
        $region16: #{vae_forward.10} parent=11 // pred_fallthru
          _
      $region12: #{vae_forward.10} parent=5 // pred_fallthru
        _
      %p162 = scmp.lt.s32.totalorder %s9, 4
      // Predicated region
      $region17: #{vae_forward.10} parent=5 // pred_check
        %p163 = pneg %p162
      $region18: #{vae_forward.10} parent=5 // pred_check_branch
        %165 = sbr.rel (%p163) target = $region20
      $region19: #{vae_forward.10} parent=5 // pred_region
        // Predicated region
        $region21: #{vae_forward.10} parent=19 // pred_check
          %p166 = pneg %p78
        $region22: #{vae_forward.10} parent=19 // pred_check_branch
          %168 = sbr.rel (%p166) target = $region24
        $region23: #{vae_forward.10} parent=19 // pred_region
          %s169 = sand.u32 %s68, 1
          %s170 = sand.u32 %s68, 1
          %s171 = smul.addr %s170, 256
          %s172 = scalar_lea.vmem [#allocation3], %s171
          %s173 = smul.u32 16, %s18
          %s174 = smul.u32 4, %s17
          %s175 = smul.addr %s173, 16
          %s176 = sadd.s32 %s174, %s175
          %s177 = smul.addr %s176, 4
          %s178 = scalar_lea.vmem %s1, %s177
          // Predicated region
          $region25: #{vae_forward.10} parent=23 // pred_check
            _
          $region26: #{vae_forward.10} parent=23 // pred_check_branch
            %180 = sbr.rel (0) target = $region28
          $region27: #{vae_forward.10} parent=23 // pred_region
            // Predicated region
            $region29: #{vae_forward.10} parent=27 // pred_check
              _
            $region30: #{vae_forward.10} parent=27 // pred_check_branch
              %182 = sbr.rel (0) target = $region32
            $region31: #{vae_forward.10} parent=27 // pred_region
              loop: start=0, step=1, limit=1
              $region33: #{vae_forward.10} parent=31 // loop_pre_header
                _
              $region34: #{vae_forward.10} parent=31 // loop_header
                %s184 = sphi 0, %s188
                %p185 = scmp.ge.s32.totalorder %s184, 1
                %s189 = sphi %s178, %s178
                %s190 = sphi %s172, %s172
              $region35: #{vae_forward.10} parent=31 // loop_header_branch
                %187 = sbr.rel (%p185) target = $region39
              $region36: #{vae_forward.10} parent=31 // loop_body
                %v191 = vld [vmem:[%s189] sm:$0xff]
                %192 = vst [vmem:[%s190] sm:$0xff] %v191
                %v193 = vld [vmem:[%s189 + $0x8] sm:$0xff]
                %194 = vst [vmem:[%s190 + $0x8] sm:$0xff] %v193
                %v195 = vld [vmem:[%s189 + $0x40] sm:$0xff]
                %196 = vst [vmem:[%s190 + $0x10] sm:$0xff] %v195
                %v197 = vld [vmem:[%s189 + $0x48] sm:$0xff]
                %198 = vst [vmem:[%s190 + $0x18] sm:$0xff] %v197
                %v199 = vld [vmem:[%s189 + $0x80] sm:$0xff]
                %200 = vst [vmem:[%s190 + $0x20] sm:$0xff] %v199
                %v201 = vld [vmem:[%s189 + $0x88] sm:$0xff]
                %202 = vst [vmem:[%s190 + $0x28] sm:$0xff] %v201
                %v203 = vld [vmem:[%s189 + $0xc0] sm:$0xff]
                %204 = vst [vmem:[%s190 + $0x30] sm:$0xff] %v203
                %v205 = vld [vmem:[%s189 + $0xc8] sm:$0xff]
                %206 = vst [vmem:[%s190 + $0x38] sm:$0xff] %v205
                %v207 = vld [vmem:[%s189 + $0x100] sm:$0xff]
                %208 = vst [vmem:[%s190 + $0x40] sm:$0xff] %v207
                %v209 = vld [vmem:[%s189 + $0x108] sm:$0xff]
                %210 = vst [vmem:[%s190 + $0x48] sm:$0xff] %v209
                %v211 = vld [vmem:[%s189 + $0x140] sm:$0xff]
                %212 = vst [vmem:[%s190 + $0x50] sm:$0xff] %v211
                %v213 = vld [vmem:[%s189 + $0x148] sm:$0xff]
                %214 = vst [vmem:[%s190 + $0x58] sm:$0xff] %v213
                %v215 = vld [vmem:[%s189 + $0x180] sm:$0xff]
                %216 = vst [vmem:[%s190 + $0x60] sm:$0xff] %v215
                %v217 = vld [vmem:[%s189 + $0x188] sm:$0xff]
                %218 = vst [vmem:[%s190 + $0x68] sm:$0xff] %v217
                %v219 = vld [vmem:[%s189 + $0x1c0] sm:$0xff]
                %220 = vst [vmem:[%s190 + $0x70] sm:$0xff] %v219
                %v221 = vld [vmem:[%s189 + $0x1c8] sm:$0xff]
                %222 = vst [vmem:[%s190 + $0x78] sm:$0xff] %v221
                %v223 = vld [vmem:[%s189 + $0x200] sm:$0xff]
                %224 = vst [vmem:[%s190 + $0x80] sm:$0xff] %v223
                %v225 = vld [vmem:[%s189 + $0x208] sm:$0xff]
                %226 = vst [vmem:[%s190 + $0x88] sm:$0xff] %v225
                %v227 = vld [vmem:[%s189 + $0x240] sm:$0xff]
                %228 = vst [vmem:[%s190 + $0x90] sm:$0xff] %v227
                %v229 = vld [vmem:[%s189 + $0x248] sm:$0xff]
                %230 = vst [vmem:[%s190 + $0x98] sm:$0xff] %v229
                %v231 = vld [vmem:[%s189 + $0x280] sm:$0xff]
                %232 = vst [vmem:[%s190 + $0xa0] sm:$0xff] %v231
                %v233 = vld [vmem:[%s189 + $0x288] sm:$0xff]
                %234 = vst [vmem:[%s190 + $0xa8] sm:$0xff] %v233
                %v235 = vld [vmem:[%s189 + $0x2c0] sm:$0xff]
                %236 = vst [vmem:[%s190 + $0xb0] sm:$0xff] %v235
                %v237 = vld [vmem:[%s189 + $0x2c8] sm:$0xff]
                %238 = vst [vmem:[%s190 + $0xb8] sm:$0xff] %v237
                %v239 = vld [vmem:[%s189 + $0x300] sm:$0xff]
                %240 = vst [vmem:[%s190 + $0xc0] sm:$0xff] %v239
                %v241 = vld [vmem:[%s189 + $0x308] sm:$0xff]
                %242 = vst [vmem:[%s190 + $0xc8] sm:$0xff] %v241
                %v243 = vld [vmem:[%s189 + $0x340] sm:$0xff]
                %244 = vst [vmem:[%s190 + $0xd0] sm:$0xff] %v243
                %v245 = vld [vmem:[%s189 + $0x348] sm:$0xff]
                %246 = vst [vmem:[%s190 + $0xd8] sm:$0xff] %v245
                %v247 = vld [vmem:[%s189 + $0x380] sm:$0xff]
                %248 = vst [vmem:[%s190 + $0xe0] sm:$0xff] %v247
                %v249 = vld [vmem:[%s189 + $0x388] sm:$0xff]
                %250 = vst [vmem:[%s190 + $0xe8] sm:$0xff] %v249
                %v251 = vld [vmem:[%s189 + $0x3c0] sm:$0xff]
                %252 = vst [vmem:[%s190 + $0xf0] sm:$0xff] %v251
                %v253 = vld [vmem:[%s189 + $0x3c8] sm:$0xff]
                %254 = vst [vmem:[%s190 + $0xf8] sm:$0xff] %v253
              $region37: #{vae_forward.10} parent=31 // loop_footer
                %s188 = sadd.s32 1, %s184
              $region38: #{vae_forward.10} parent=31 // loop_footer_branch
                %183 = sbr.rel target = $region34
              $region39: #{vae_forward.10} parent=31 // loop_exit
                _
            $region32: #{vae_forward.10} parent=27 // pred_fallthru
              _
            // Predicated region
            $region40: #{vae_forward.10} parent=27 // pred_check
              _
            $region41: #{vae_forward.10} parent=27 // pred_check_branch
              %256 = sbr.rel target = $region43
            $region42: #{vae_forward.10} parent=27 // pred_region
              _
            $region43: #{vae_forward.10} parent=27 // pred_fallthru
              _
          $region28: #{vae_forward.10} parent=23 // pred_fallthru
            _
          %257 = vnop
        $region24: #{vae_forward.10} parent=19 // pred_fallthru
          _
        // Predicated region
        $region44: #{vae_forward.10} parent=19 // pred_check
          %p258 = pneg %p104
        $region45: #{vae_forward.10} parent=19 // pred_check_branch
          %260 = sbr.rel (%p258) target = $region47
        $region46: #{vae_forward.10} parent=19 // pred_region
          %s261 = smul.u32 4, %s17
          %p262 = scmp.lt.s32.totalorder %s261, 15
          %s263 = scalar_select %p262, %s261, 15
          %s264 = scalar_lea.vmem %s2, %s263
          %s265 = smul.u32 4, %s17
        $region47: #{vae_forward.10} parent=19 // pred_fallthru
          _
      $region20: #{vae_forward.10} parent=5 // pred_fallthru
        _
      %p266 = scmp.le.s32.totalorder 1, %s9
      %p267 = scmp.lt.s32.totalorder %s9, 5
      %p268 = pnand %p266, %p267
      %p269 = pneg %p268
      // Predicated region
      $region48: #{vae_forward.10} parent=5 // pred_check
        _
      $region49: #{vae_forward.10} parent=5 // pred_check_branch
        %271 = sbr.rel (%p268) target = $region51
      $region50: #{vae_forward.10} parent=5 // pred_region
        %s272 = ssub.s32 %s9, 1
        %s273 = sand.u32 %s71, 1
        %s274 = sand.u32 %s71, 1
        %s275 = smul.addr %s274, 256
        %s276 = scalar_lea.vmem [#allocation3], %s275
        // Predicated region
        $region52: #{vae_forward.10} parent=50 // pred_check
          %p277 = pneg %p84
        $region53: #{vae_forward.10} parent=50 // pred_check_branch
          %279 = sbr.rel (%p277) target = $region55
        $region54: #{vae_forward.10} parent=50 // pred_region
          _
        $region55: #{vae_forward.10} parent=50 // pred_fallthru
          _
        %p280 = scmp.lt.s32.totalorder %s19, 0
        %s281 = scalar_select %p280, %s19, 0
        %p282 = scmp.lt.s32.totalorder %s21, 0
        %s283 = scalar_select %p282, %s21, 0
        %s284 = sadd.s32 %s283, %s281
        %s285 = scalar_lea.vmem %s0, %s284
        %p286 = pneg %p56
        %p287 = pneg %p53
        %s288 = sand.u32 %s71, 1
        %s289 = sand.u32 %s71, 1
        %s290 = smul.addr %s289, 256
        %s291 = scalar_lea.vmem [#allocation3], %s290
        %p292 = pneg %p84
        %p293 = pneg %p81
        %s294 = smul.u32 4, %s20
        %p295 = scmp.lt.s32.totalorder %s294, 15
        %s296 = scalar_select %p295, %s294, 15
        %s297 = scalar_lea.vmem %s2, %s296
        %p298 = pneg %p110
        %p299 = pneg %p107
        %p300 = pneg %p138
        %p301 = pneg %p135
        %s302 = smul.u32 4, %s20
        %p303 = scmp.lt.s32.totalorder %s19, 0
        %s304 = scalar_select %p303, %s19, 0
        %p305 = scmp.lt.s32.totalorder %s302, 15
        %s306 = scalar_select %p305, %s302, 15
        %s307 = smul.addr %s304, 16
        %s308 = sadd.s32 %s306, %s307
        %s309 = scalar_lea.vmem %s3, %s308
        %p310 = scmp.lt.s32.totalorder %s19, 0
        %s311 = scalar_select %p310, %s19, 0
        %p312 = scmp.lt.s32.totalorder %s21, 0
        %s313 = scalar_select %p312, %s21, 0
        %s314 = sadd.s32 %s313, %s311
        %s315 = scalar_lea.vmem %s0, %s314
        %s316 = smul.u32 16, %s21
        %s317 = smul.u32 4, %s20
        %s318 = smul.u32 4, %s20
        %p319 = scmp.lt.s32.totalorder %s318, 15
        %s320 = scalar_select %p319, %s318, 15
        %s321 = scalar_lea.vmem %s2, %s320
        %s322 = smul.u32 4, %s20
        %s323 = smul.u32 4, %s20
        %p324 = scmp.lt.s32.totalorder %s19, 0
        %s325 = scalar_select %p324, %s19, 0
        %p326 = scmp.lt.s32.totalorder %s323, 15
        %s327 = scalar_select %p326, %s323, 15
        %s328 = smul.addr %s325, 16
        %s329 = sadd.s32 %s327, %s328
        %s330 = scalar_lea.vmem %s3, %s329
        %s331 = smul.u32 4, %s20
        %p332 = scmp.eq.s32.totalorder %s21, 0
        // Predicated region
        $region56: #{vae_forward.10} parent=50 // pred_check
          %p333 = pneg %p332
        $region57: #{vae_forward.10} parent=50 // pred_check_branch
          %335 = sbr.rel (%p333) target = $region59
        $region58: #{vae_forward.10} parent=50 // pred_region
          %336 = vst [vmem:[#allocation2] sm:$0xff] 0.0
        $region59: #{vae_forward.10} parent=50 // pred_fallthru
          _
        %v337 = vld [vmem:[#allocation2] sm:$0xff]
        %v338 = vld [vmem:[%s315] sm:$0x1]
        %v339 = vld [vmem:[%s276] sm:$0xff]
        %v340 = vld [vmem:[%s276 + $0x8] sm:$0xff]
        %v341 = vld [vmem:[%s276 + $0x10] sm:$0xff]
        %v342 = vld [vmem:[%s276 + $0x18] sm:$0xff]
        %v343 = vld [vmem:[%s276 + $0x20] sm:$0xff]
        %v344 = vld [vmem:[%s276 + $0x28] sm:$0xff]
        %v345 = vld [vmem:[%s276 + $0x30] sm:$0xff]
        %v346 = vld [vmem:[%s276 + $0x38] sm:$0xff]
        %v347 = vld [vmem:[%s276 + $0x40] sm:$0xff]
        %v348 = vld [vmem:[%s276 + $0x48] sm:$0xff]
        %v349 = vld [vmem:[%s276 + $0x50] sm:$0xff]
        %v350 = vld [vmem:[%s276 + $0x58] sm:$0xff]
        %v351 = vld [vmem:[%s276 + $0x60] sm:$0xff]
        %v352 = vld [vmem:[%s276 + $0x68] sm:$0xff]
        %v353 = vld [vmem:[%s276 + $0x70] sm:$0xff]
        %v354 = vld [vmem:[%s276 + $0x78] sm:$0xff]
        %v355 = vld [vmem:[%s276 + $0x80] sm:$0xff]
        %v356 = vld [vmem:[%s276 + $0x88] sm:$0xff]
        %v357 = vld [vmem:[%s276 + $0x90] sm:$0xff]
        %v358 = vld [vmem:[%s276 + $0x98] sm:$0xff]
        %v359 = vld [vmem:[%s276 + $0xa0] sm:$0xff]
        %v360 = vld [vmem:[%s276 + $0xa8] sm:$0xff]
        %v361 = vld [vmem:[%s276 + $0xb0] sm:$0xff]
        %v362 = vld [vmem:[%s276 + $0xb8] sm:$0xff]
        %v363 = vld [vmem:[%s276 + $0xc0] sm:$0xff]
        %v364 = vld [vmem:[%s276 + $0xc8] sm:$0xff]
        %v365 = vld [vmem:[%s276 + $0xd0] sm:$0xff]
        %v366 = vld [vmem:[%s276 + $0xd8] sm:$0xff]
        %v367 = vld [vmem:[%s276 + $0xe0] sm:$0xff]
        %v368 = vld [vmem:[%s276 + $0xe8] sm:$0xff]
        %v369 = vld [vmem:[%s276 + $0xf0] sm:$0xff]
        %v370 = vld [vmem:[%s276 + $0xf8] sm:$0xff]
        %v403 = vunpack.c.l.b16 %v339
        %v404 = vunpack.c.h.b16 %v339
        %v405 = vunpack.c.l.b16 %v340
        %v406 = vunpack.c.h.b16 %v340
        %v407 = vunpack.c.l.b16 %v341
        %v408 = vunpack.c.h.b16 %v341
        %v409 = vunpack.c.l.b16 %v342
        %v410 = vunpack.c.h.b16 %v342
        %v411 = vunpack.c.l.b16 %v343
        %v412 = vunpack.c.h.b16 %v343
        %v413 = vunpack.c.l.b16 %v344
        %v414 = vunpack.c.h.b16 %v344
        %v415 = vunpack.c.l.b16 %v345
        %v416 = vunpack.c.h.b16 %v345
        %v417 = vunpack.c.l.b16 %v346
        %v418 = vunpack.c.h.b16 %v346
        %v419 = vunpack.c.l.b16 %v347
        %v420 = vunpack.c.h.b16 %v347
        %v421 = vunpack.c.l.b16 %v348
        %v422 = vunpack.c.h.b16 %v348
        %v423 = vunpack.c.l.b16 %v349
        %v424 = vunpack.c.h.b16 %v349
        %v425 = vunpack.c.l.b16 %v350
        %v426 = vunpack.c.h.b16 %v350
        %v427 = vunpack.c.l.b16 %v351
        %v428 = vunpack.c.h.b16 %v351
        %v429 = vunpack.c.l.b16 %v352
        %v430 = vunpack.c.h.b16 %v352
        %v431 = vunpack.c.l.b16 %v353
        %v432 = vunpack.c.h.b16 %v353
        %v433 = vunpack.c.l.b16 %v354
        %v434 = vunpack.c.h.b16 %v354
        %v435 = vunpack.c.l.b16 %v355
        %v436 = vunpack.c.h.b16 %v355
        %v437 = vunpack.c.l.b16 %v356
        %v438 = vunpack.c.h.b16 %v356
        %v439 = vunpack.c.l.b16 %v357
        %v440 = vunpack.c.h.b16 %v357
        %v441 = vunpack.c.l.b16 %v358
        %v442 = vunpack.c.h.b16 %v358
        %v443 = vunpack.c.l.b16 %v359
        %v444 = vunpack.c.h.b16 %v359
        %v445 = vunpack.c.l.b16 %v360
        %v446 = vunpack.c.h.b16 %v360
        %v447 = vunpack.c.l.b16 %v361
        %v448 = vunpack.c.h.b16 %v361
        %v449 = vunpack.c.l.b16 %v362
        %v450 = vunpack.c.h.b16 %v362
        %v451 = vunpack.c.l.b16 %v363
        %v452 = vunpack.c.h.b16 %v363
        %v453 = vunpack.c.l.b16 %v364
        %v454 = vunpack.c.h.b16 %v364
        %v455 = vunpack.c.l.b16 %v365
        %v456 = vunpack.c.h.b16 %v365
        %v457 = vunpack.c.l.b16 %v366
        %v458 = vunpack.c.h.b16 %v366
        %v459 = vunpack.c.l.b16 %v367
        %v460 = vunpack.c.h.b16 %v367
        %v461 = vunpack.c.l.b16 %v368
        %v462 = vunpack.c.h.b16 %v368
        %v463 = vunpack.c.l.b16 %v369
        %v464 = vunpack.c.h.b16 %v369
        %v465 = vunpack.c.l.b16 %v370
        %v466 = vunpack.c.h.b16 %v370
        %v467 = vpack.c.b16 %v407, %v403
        %v468 = vpack.c.b16 %v408, %v404
        %v469 = vpack.c.b16 %v409, %v405
        %v470 = vpack.c.b16 %v410, %v406
        %v471 = vpack.c.b16 %v415, %v411
        %v472 = vpack.c.b16 %v416, %v412
        %v473 = vpack.c.b16 %v417, %v413
        %v474 = vpack.c.b16 %v418, %v414
        %v475 = vpack.c.b16 %v423, %v419
        %v476 = vpack.c.b16 %v424, %v420
        %v477 = vpack.c.b16 %v425, %v421
        %v478 = vpack.c.b16 %v426, %v422
        %v479 = vpack.c.b16 %v431, %v427
        %v480 = vpack.c.b16 %v432, %v428
        %v481 = vpack.c.b16 %v433, %v429
        %v482 = vpack.c.b16 %v434, %v430
        %v483 = vpack.c.b16 %v439, %v435
        %v484 = vpack.c.b16 %v440, %v436
        %v485 = vpack.c.b16 %v441, %v437
        %v486 = vpack.c.b16 %v442, %v438
        %v487 = vpack.c.b16 %v447, %v443
        %v488 = vpack.c.b16 %v448, %v444
        %v489 = vpack.c.b16 %v449, %v445
        %v490 = vpack.c.b16 %v450, %v446
        %v491 = vpack.c.b16 %v455, %v451
        %v492 = vpack.c.b16 %v456, %v452
        %v493 = vpack.c.b16 %v457, %v453
        %v494 = vpack.c.b16 %v458, %v454
        %v495 = vpack.c.b16 %v463, %v459
        %v496 = vpack.c.b16 %v464, %v460
        %v497 = vpack.c.b16 %v465, %v461
        %v498 = vpack.c.b16 %v466, %v462
        %531 = vmatpush.bf16.msra.mxu0 %v495
        %532 = vmatpush.bf16.msra.mxu0 %v491
        %533 = vmatpush.bf16.msra.mxu0 %v487
        %534 = vmatpush.bf16.msra.mxu0 %v483
        %535 = vmatpush.bf16.msra.mxu0 %v479
        %536 = vmatpush.bf16.msra.mxu0 %v475
        %537 = vmatpush.bf16.msra.mxu0 %v471
        %538 = vmatpush.bf16.msra.mxu0 %v467
        %539 = vmatmul.bf16.gmra.mxu0 %v338
        %v540 = vpop.f32.mrf.mxu0
        %v541 = vadd.f32 0.0, %v540
        %v542 = vpop.f32.mrf.mxu0
        %543 = vdwg.mxu0
        %544 = vmatpush.bf16.msra.mxu0 %v496
        %545 = vmatpush.bf16.msra.mxu0 %v492
        %546 = vmatpush.bf16.msra.mxu0 %v488
        %547 = vmatpush.bf16.msra.mxu0 %v484
        %548 = vmatpush.bf16.msra.mxu0 %v480
        %549 = vmatpush.bf16.msra.mxu0 %v476
        %550 = vmatpush.bf16.msra.mxu0 %v472
        %551 = vmatpush.bf16.msra.mxu0 %v468
        %552 = vmatmul.bf16.gmra.mxu0 %v338
        %v553 = vpop.f32.mrf.mxu0
        %v554 = vadd.f32 0.0, %v553
        %v555 = vpop.f32.mrf.mxu0
        %556 = vdwg.mxu0
        %557 = vmatpush.bf16.msra.mxu0 %v497
        %558 = vmatpush.bf16.msra.mxu0 %v493
        %559 = vmatpush.bf16.msra.mxu0 %v489
        %560 = vmatpush.bf16.msra.mxu0 %v485
        %561 = vmatpush.bf16.msra.mxu0 %v481
        %562 = vmatpush.bf16.msra.mxu0 %v477
        %563 = vmatpush.bf16.msra.mxu0 %v473
        %564 = vmatpush.bf16.msra.mxu0 %v469
        %565 = vmatmul.bf16.gmra.mxu0 %v338
        %v566 = vpop.f32.mrf.mxu0
        %v567 = vadd.f32 0.0, %v566
        %v568 = vpop.f32.mrf.mxu0
        %569 = vdwg.mxu0
        %570 = vmatpush.bf16.msra.mxu0 %v498
        %571 = vmatpush.bf16.msra.mxu0 %v494
        %572 = vmatpush.bf16.msra.mxu0 %v490
        %573 = vmatpush.bf16.msra.mxu0 %v486
        %574 = vmatpush.bf16.msra.mxu0 %v482
        %575 = vmatpush.bf16.msra.mxu0 %v478
        %576 = vmatpush.bf16.msra.mxu0 %v474
        %577 = vmatpush.bf16.msra.mxu0 %v470
        %578 = vmatmul.bf16.gmra.mxu0 %v338
        %v579 = vpop.f32.mrf.mxu0
        %v580 = vadd.f32 0.0, %v579
        %v581 = vpop.f32.mrf.mxu0
        %582 = vdwg.mxu0
        %v587 = vrot.slane %v554, 6
        %v588 = vrot.slane %v567, 4
        %v589 = vrot.slane %v580, 2
        %vm590 = vcmask 1041408
        %v591 = vsel %vm590, %v541, %v587
        %vm592 = vcmask 1045508
        %v593 = vsel %vm592, %v588, %v589
        %vm594 = vcmask 1043456
        %v595 = vsel %vm594, %v591, %v593
        %v597 = vadd.f32 %v337, %v595
        %598 = vst [vmem:[#allocation2] sm:$0xff] %v597
        // Predicated region
        $region60: #{vae_forward.10} parent=50 // pred_check
          %p599 = pneg %p332
        $region61: #{vae_forward.10} parent=50 // pred_check_branch
          %601 = sbr.rel (%p599) target = $region63
        $region62: #{vae_forward.10} parent=50 // pred_region
          %v602 = vld [vmem:[#allocation2] sm:$0xff]
          %v603 = vld [vmem:[%s321] sm:$0xf]
          %v605 = vperm.slane %v603, 0
          %v606 = vperm.slane %v603, 1
          %v607 = vperm.slane %v603, 2
          %v608 = vperm.slane %v603, 3
          %v609 = vrot.slane %v606, 6
          %v610 = vrot.slane %v607, 4
          %v611 = vrot.slane %v608, 2
          %v612 = vsel %vm590, %v605, %v609
          %v613 = vsel %vm592, %v610, %v611
          %v614 = vsel %vm594, %v612, %v613
          %v616 = vadd.f32 %v602, %v614
          %618 = vst [vmem:[#allocation1] ss:$4 sm:$0xff] %v616
          %v619 = vld.sshfl [vmem:[#allocation1] sm:$0xff pattern:$0x73625140]
          %v620 = vld.sshfl [vmem:[#allocation1 + $0x8] sm:$0xff pattern:$0x73625140]
          %v621 = vld.sshfl [vmem:[#allocation1 + $0x10] sm:$0xff pattern:$0x73625140]
          %v622 = vld.sshfl [vmem:[#allocation1 + $0x18] sm:$0xff pattern:$0x73625140]
          %v627 = vpack.c.bf16 %v620, %v619
          %v628 = vpack.c.bf16 %v622, %v621
          %v631 = vrot.slane %v627, 3
          %v632 = vrot.slane %v628, 6
          %v633 = vrot.slane %v628, 1
          %vm634 = vcmask 1040384
          %v637 = vsel %vm634, %v627, %v631
          %vm638 = vcmask 1042434
          %v641 = vsel %vm638, %v632, %v633
          %v642 = vsel %vm590, %v637, %v641
          %644 = vst [vmem:[%s330] sm:$0xf] %v642
        $region63: #{vae_forward.10} parent=50 // pred_fallthru
          _
        %s645 = smul.u32 4, %s20
        %p646 = scmp.lt.s32.totalorder %s19, 0
        %s647 = scalar_select %p646, %s19, 0
        %p648 = scmp.lt.s32.totalorder %s645, 15
        %s649 = scalar_select %p648, %s645, 15
        %s650 = smul.addr %s647, 16
        %s651 = sadd.s32 %s649, %s650
        %s652 = scalar_lea.vmem %s3, %s651
        // Predicated region
        $region64: #{vae_forward.10} parent=50 // pred_check
          %p653 = pneg %p135
        $region65: #{vae_forward.10} parent=50 // pred_check_branch
          %655 = sbr.rel (%p653) target = $region67
        $region66: #{vae_forward.10} parent=50 // pred_region
          %s656 = smul.u32 4, %s20
        $region67: #{vae_forward.10} parent=50 // pred_fallthru
          _
      $region51: #{vae_forward.10} parent=5 // pred_fallthru
        _
      %p657 = scmp.le.s32.totalorder 2, %s9
      // Predicated region
      $region68: #{vae_forward.10} parent=5 // pred_check
        %p658 = pneg %p657
      $region69: #{vae_forward.10} parent=5 // pred_check_branch
        %660 = sbr.rel (%p658) target = $region71
      $region70: #{vae_forward.10} parent=5 // pred_region
        %s661 = ssub.s32 %s9, 2
        // Predicated region
        $region72: #{vae_forward.10} parent=70 // pred_check
          %p662 = pneg %p141
        $region73: #{vae_forward.10} parent=70 // pred_check_branch
          %664 = sbr.rel (%p662) target = $region75
        $region74: #{vae_forward.10} parent=70 // pred_region
          %s665 = smul.u32 4, %s23
          %p666 = scmp.lt.s32.totalorder %s22, 0
          %s667 = scalar_select %p666, %s22, 0
          %p668 = scmp.lt.s32.totalorder %s665, 15
          %s669 = scalar_select %p668, %s665, 15
          %s670 = smul.addr %s667, 16
          %s671 = sadd.s32 %s669, %s670
          %s672 = scalar_lea.vmem %s3, %s671
        $region75: #{vae_forward.10} parent=70 // pred_fallthru
          _
      $region71: #{vae_forward.10} parent=5 // pred_fallthru
        _
    $region6: #{vae_forward.10} parent=1 // loop_footer
      %s13 = sadd.s32 1, %s9
    $region7: #{vae_forward.10} parent=1 // loop_footer_branch
      %8 = sbr.rel target = $region3
    $region8: #{vae_forward.10} parent=1 // loop_exit
      _

// kernel: vae_forward.9
$region0: #{vae_forward.9}
  #allocation0 [shape = 'u32[]', space=smem, size = 0x4, offset = 0x4, fixed_abs, tag = 'smem constant byte address 0x4 - core index']
  #allocation1 [shape = 'u32[72,128]{1,0:T(1,128)}', space=vmem, size = 0x9000, scoped, tag = 'internal scratch']
  %s0 = inlined_call_operand.vmem [shape: bf16[2,2048], index: 0, kind: input, shape index: {}]
  %s1 = inlined_call_operand.vmem [shape: bf16[2048,256], index: 1, kind: input, shape index: {}]
  %s2 = inlined_call_operand.vmem [shape: f32[1,256], index: 2, kind: input, shape index: {}]
  %s3 = inlined_call_operand.vmem [shape: f32[2,128], index: 3, kind: input, shape index: {}]
  %s4 = inlined_call_operand.hbm [shape: f32[2,128], index: 4, kind: output, shape index: {0}]
  %s5 = inlined_call_operand.hbm [shape: f32[2,128], index: 5, kind: output, shape index: {1}]
  %s6 = inlined_call_operand.vmem [shape: f32[2,128], index: 6, kind: output, shape index: {2}]
  %7 = xla_tuple %s4, %s5, %s6
  %s8 = sld [smem:[#allocation0]]
  $region42: #{vae_forward.9} parent=0
    _
  %s10 = ssub.s32 1, %s8
  %s11 = scalar_select 0, %s10, %s8
  $region1: #{vae_forward.9} parent=0
    #allocation2 [shape = 'u8[1024]{0}', space=vmem, size = 0x400, scoped, tag = 'output window, operand 0, single buffered']
    #allocation3 [shape = 's32[1]{0}', space=sflag, size = 0x4, scoped, tag = 'scoped memory for vae_forward.9']
    #allocation4 [shape = 'u8[1024]{0}', space=vmem, size = 0x400, scoped, tag = 'output window, operand 1, single buffered']
    #allocation5 [shape = 's32[1]{0}', space=sflag, size = 0x4, scoped, tag = 'scoped memory for vae_forward.9']
    %12 = vsyncpa [#allocation3], 0
    %13 = vsyncpa [#allocation5], 0
    // Predicated region
    $region2: #{vae_forward.9} parent=1 // pred_check
      _
    $region3: #{vae_forward.9} parent=1 // pred_check_branch
      %15 = sbr.rel (0) target = $region5
    $region4: #{vae_forward.9} parent=1 // pred_region
      _
    $region5: #{vae_forward.9} parent=1 // pred_fallthru
      _
    // Predicated region
    $region6: #{vae_forward.9} parent=1 // pred_check
      _
    $region7: #{vae_forward.9} parent=1 // pred_check_branch
      %17 = sbr.rel (0) target = $region9
    $region8: #{vae_forward.9} parent=1 // pred_region
      _
    $region9: #{vae_forward.9} parent=1 // pred_fallthru
      _
    // Predicated region
    $region10: #{vae_forward.9} parent=1 // pred_check
      _
    $region11: #{vae_forward.9} parent=1 // pred_check_branch
      %19 = sbr.rel (0) target = $region13
    $region12: #{vae_forward.9} parent=1 // pred_region
      _
    $region13: #{vae_forward.9} parent=1 // pred_fallthru
      _
    // Predicated region
    $region14: #{vae_forward.9} parent=1 // pred_check
      _
    $region15: #{vae_forward.9} parent=1 // pred_check_branch
      %21 = sbr.rel (0) target = $region17
    $region16: #{vae_forward.9} parent=1 // pred_region
      _
    $region17: #{vae_forward.9} parent=1 // pred_fallthru
      _
    %v22 = vld [vmem:[%s0] sm:$0xff]
    %v23 = vld [vmem:[%s0 + $0x8] sm:$0xff]
    %v24 = vld [vmem:[%s1] sm:$0xff]
    %v25 = vld [vmem:[%s1 + $0x8] sm:$0xff]
    %v26 = vld [vmem:[%s1 + $0x10] sm:$0xff]
    %v27 = vld [vmem:[%s1 + $0x18] sm:$0xff]
    %v28 = vld [vmem:[%s1 + $0x20] sm:$0xff]
    %v29 = vld [vmem:[%s1 + $0x28] sm:$0xff]
    %v30 = vld [vmem:[%s1 + $0x30] sm:$0xff]
    %v31 = vld [vmem:[%s1 + $0x38] sm:$0xff]
    %v32 = vld [vmem:[%s1 + $0x40] sm:$0xff]
    %v33 = vld [vmem:[%s1 + $0x48] sm:$0xff]
    %v34 = vld [vmem:[%s1 + $0x50] sm:$0xff]
    %v35 = vld [vmem:[%s1 + $0x58] sm:$0xff]
    %v36 = vld [vmem:[%s1 + $0x60] sm:$0xff]
    %v37 = vld [vmem:[%s1 + $0x68] sm:$0xff]
    %v38 = vld [vmem:[%s1 + $0x70] sm:$0xff]
    %v39 = vld [vmem:[%s1 + $0x78] sm:$0xff]
    %v40 = vld [vmem:[%s1 + $0x80] sm:$0xff]
    %v41 = vld [vmem:[%s1 + $0x88] sm:$0xff]
    %v42 = vld [vmem:[%s1 + $0x90] sm:$0xff]
    %v43 = vld [vmem:[%s1 + $0x98] sm:$0xff]
    %v44 = vld [vmem:[%s1 + $0xa0] sm:$0xff]
    %v45 = vld [vmem:[%s1 + $0xa8] sm:$0xff]
    %v46 = vld [vmem:[%s1 + $0xb0] sm:$0xff]
    %v47 = vld [vmem:[%s1 + $0xb8] sm:$0xff]
    %v48 = vld [vmem:[%s1 + $0xc0] sm:$0xff]
    %v49 = vld [vmem:[%s1 + $0xc8] sm:$0xff]
    %v50 = vld [vmem:[%s1 + $0xd0] sm:$0xff]
    %v51 = vld [vmem:[%s1 + $0xd8] sm:$0xff]
    %v52 = vld [vmem:[%s1 + $0xe0] sm:$0xff]
    %v53 = vld [vmem:[%s1 + $0xe8] sm:$0xff]
    %v54 = vld [vmem:[%s1 + $0xf0] sm:$0xff]
    %v55 = vld [vmem:[%s1 + $0xf8] sm:$0xff]
    %v56 = vld [vmem:[%s1 + $0x100] sm:$0xff]
    %v57 = vld [vmem:[%s1 + $0x108] sm:$0xff]
    %v58 = vld [vmem:[%s1 + $0x110] sm:$0xff]
    %v59 = vld [vmem:[%s1 + $0x118] sm:$0xff]
    %v60 = vld [vmem:[%s1 + $0x120] sm:$0xff]
    %v61 = vld [vmem:[%s1 + $0x128] sm:$0xff]
    %v62 = vld [vmem:[%s1 + $0x130] sm:$0xff]
    %v63 = vld [vmem:[%s1 + $0x138] sm:$0xff]
    %v64 = vld [vmem:[%s1 + $0x140] sm:$0xff]
    %v65 = vld [vmem:[%s1 + $0x148] sm:$0xff]
    %v66 = vld [vmem:[%s1 + $0x150] sm:$0xff]
    %v67 = vld [vmem:[%s1 + $0x158] sm:$0xff]
    %v68 = vld [vmem:[%s1 + $0x160] sm:$0xff]
    %v69 = vld [vmem:[%s1 + $0x168] sm:$0xff]
    %v70 = vld [vmem:[%s1 + $0x170] sm:$0xff]
    %v71 = vld [vmem:[%s1 + $0x178] sm:$0xff]
    %v72 = vld [vmem:[%s1 + $0x180] sm:$0xff]
    %v73 = vld [vmem:[%s1 + $0x188] sm:$0xff]
    %v74 = vld [vmem:[%s1 + $0x190] sm:$0xff]
    %v75 = vld [vmem:[%s1 + $0x198] sm:$0xff]
    %v76 = vld [vmem:[%s1 + $0x1a0] sm:$0xff]
    %v77 = vld [vmem:[%s1 + $0x1a8] sm:$0xff]
    %v78 = vld [vmem:[%s1 + $0x1b0] sm:$0xff]
    %v79 = vld [vmem:[%s1 + $0x1b8] sm:$0xff]
    %v80 = vld [vmem:[%s1 + $0x1c0] sm:$0xff]
    %v81 = vld [vmem:[%s1 + $0x1c8] sm:$0xff]
    %v82 = vld [vmem:[%s1 + $0x1d0] sm:$0xff]
    %v83 = vld [vmem:[%s1 + $0x1d8] sm:$0xff]
    %v84 = vld [vmem:[%s1 + $0x1e0] sm:$0xff]
    %v85 = vld [vmem:[%s1 + $0x1e8] sm:$0xff]
    %v86 = vld [vmem:[%s1 + $0x1f0] sm:$0xff]
    %v87 = vld [vmem:[%s1 + $0x1f8] sm:$0xff]
    %v88 = vld [vmem:[%s1 + $0x200] sm:$0xff]
    %v89 = vld [vmem:[%s1 + $0x208] sm:$0xff]
    %v90 = vld [vmem:[%s1 + $0x210] sm:$0xff]
    %v91 = vld [vmem:[%s1 + $0x218] sm:$0xff]
    %v92 = vld [vmem:[%s1 + $0x220] sm:$0xff]
    %v93 = vld [vmem:[%s1 + $0x228] sm:$0xff]
    %v94 = vld [vmem:[%s1 + $0x230] sm:$0xff]
    %v95 = vld [vmem:[%s1 + $0x238] sm:$0xff]
    %v96 = vld [vmem:[%s1 + $0x240] sm:$0xff]
    %v97 = vld [vmem:[%s1 + $0x248] sm:$0xff]
    %v98 = vld [vmem:[%s1 + $0x250] sm:$0xff]
    %v99 = vld [vmem:[%s1 + $0x258] sm:$0xff]
    %v100 = vld [vmem:[%s1 + $0x260] sm:$0xff]
    %v101 = vld [vmem:[%s1 + $0x268] sm:$0xff]
    %v102 = vld [vmem:[%s1 + $0x270] sm:$0xff]
    %v103 = vld [vmem:[%s1 + $0x278] sm:$0xff]
    %v104 = vld [vmem:[%s1 + $0x280] sm:$0xff]
    %v105 = vld [vmem:[%s1 + $0x288] sm:$0xff]
    %v106 = vld [vmem:[%s1 + $0x290] sm:$0xff]
    %v107 = vld [vmem:[%s1 + $0x298] sm:$0xff]
    %v108 = vld [vmem:[%s1 + $0x2a0] sm:$0xff]
    %v109 = vld [vmem:[%s1 + $0x2a8] sm:$0xff]
    %v110 = vld [vmem:[%s1 + $0x2b0] sm:$0xff]
    %v111 = vld [vmem:[%s1 + $0x2b8] sm:$0xff]
    %v112 = vld [vmem:[%s1 + $0x2c0] sm:$0xff]
    %v113 = vld [vmem:[%s1 + $0x2c8] sm:$0xff]
    %v114 = vld [vmem:[%s1 + $0x2d0] sm:$0xff]
    %v115 = vld [vmem:[%s1 + $0x2d8] sm:$0xff]
    %v116 = vld [vmem:[%s1 + $0x2e0] sm:$0xff]
    %v117 = vld [vmem:[%s1 + $0x2e8] sm:$0xff]
    %v118 = vld [vmem:[%s1 + $0x2f0] sm:$0xff]
    %v119 = vld [vmem:[%s1 + $0x2f8] sm:$0xff]
    %v120 = vld [vmem:[%s1 + $0x300] sm:$0xff]
    %v121 = vld [vmem:[%s1 + $0x308] sm:$0xff]
    %v122 = vld [vmem:[%s1 + $0x310] sm:$0xff]
    %v123 = vld [vmem:[%s1 + $0x318] sm:$0xff]
    %v124 = vld [vmem:[%s1 + $0x320] sm:$0xff]
    %v125 = vld [vmem:[%s1 + $0x328] sm:$0xff]
    %v126 = vld [vmem:[%s1 + $0x330] sm:$0xff]
    %v127 = vld [vmem:[%s1 + $0x338] sm:$0xff]
    %v128 = vld [vmem:[%s1 + $0x340] sm:$0xff]
    %v129 = vld [vmem:[%s1 + $0x348] sm:$0xff]
    %v130 = vld [vmem:[%s1 + $0x350] sm:$0xff]
    %v131 = vld [vmem:[%s1 + $0x358] sm:$0xff]
    %v132 = vld [vmem:[%s1 + $0x360] sm:$0xff]
    %v133 = vld [vmem:[%s1 + $0x368] sm:$0xff]
    %v134 = vld [vmem:[%s1 + $0x370] sm:$0xff]
    %v135 = vld [vmem:[%s1 + $0x378] sm:$0xff]
    %v136 = vld [vmem:[%s1 + $0x380] sm:$0xff]
    %v137 = vld [vmem:[%s1 + $0x388] sm:$0xff]
    %v138 = vld [vmem:[%s1 + $0x390] sm:$0xff]
    %v139 = vld [vmem:[%s1 + $0x398] sm:$0xff]
    %v140 = vld [vmem:[%s1 + $0x3a0] sm:$0xff]
    %v141 = vld [vmem:[%s1 + $0x3a8] sm:$0xff]
    %v142 = vld [vmem:[%s1 + $0x3b0] sm:$0xff]
    %v143 = vld [vmem:[%s1 + $0x3b8] sm:$0xff]
    %v144 = vld [vmem:[%s1 + $0x3c0] sm:$0xff]
    %v145 = vld [vmem:[%s1 + $0x3c8] sm:$0xff]
    %v146 = vld [vmem:[%s1 + $0x3d0] sm:$0xff]
    %v147 = vld [vmem:[%s1 + $0x3d8] sm:$0xff]
    %v148 = vld [vmem:[%s1 + $0x3e0] sm:$0xff]
    %v149 = vld [vmem:[%s1 + $0x3e8] sm:$0xff]
    %v150 = vld [vmem:[%s1 + $0x3f0] sm:$0xff]
    %v151 = vld [vmem:[%s1 + $0x3f8] sm:$0xff]
    %v152 = vld [vmem:[%s1 + $0x400] sm:$0xff]
    %v153 = vld [vmem:[%s1 + $0x408] sm:$0xff]
    %v154 = vld [vmem:[%s1 + $0x410] sm:$0xff]
    %v155 = vld [vmem:[%s1 + $0x418] sm:$0xff]
    %v156 = vld [vmem:[%s1 + $0x420] sm:$0xff]
    %v157 = vld [vmem:[%s1 + $0x428] sm:$0xff]
    %v158 = vld [vmem:[%s1 + $0x430] sm:$0xff]
    %v159 = vld [vmem:[%s1 + $0x438] sm:$0xff]
    %v160 = vld [vmem:[%s1 + $0x440] sm:$0xff]
    %v161 = vld [vmem:[%s1 + $0x448] sm:$0xff]
    %v162 = vld [vmem:[%s1 + $0x450] sm:$0xff]
    %v163 = vld [vmem:[%s1 + $0x458] sm:$0xff]
    %v164 = vld [vmem:[%s1 + $0x460] sm:$0xff]
    %v165 = vld [vmem:[%s1 + $0x468] sm:$0xff]
    %v166 = vld [vmem:[%s1 + $0x470] sm:$0xff]
    %v167 = vld [vmem:[%s1 + $0x478] sm:$0xff]
    %v168 = vld [vmem:[%s1 + $0x480] sm:$0xff]
    %v169 = vld [vmem:[%s1 + $0x488] sm:$0xff]
    %v170 = vld [vmem:[%s1 + $0x490] sm:$0xff]
    %v171 = vld [vmem:[%s1 + $0x498] sm:$0xff]
    %v172 = vld [vmem:[%s1 + $0x4a0] sm:$0xff]
    %v173 = vld [vmem:[%s1 + $0x4a8] sm:$0xff]
    %v174 = vld [vmem:[%s1 + $0x4b0] sm:$0xff]
    %v175 = vld [vmem:[%s1 + $0x4b8] sm:$0xff]
    %v176 = vld [vmem:[%s1 + $0x4c0] sm:$0xff]
    %v177 = vld [vmem:[%s1 + $0x4c8] sm:$0xff]
    %v178 = vld [vmem:[%s1 + $0x4d0] sm:$0xff]
    %v179 = vld [vmem:[%s1 + $0x4d8] sm:$0xff]
    %v180 = vld [vmem:[%s1 + $0x4e0] sm:$0xff]
    %v181 = vld [vmem:[%s1 + $0x4e8] sm:$0xff]
    %v182 = vld [vmem:[%s1 + $0x4f0] sm:$0xff]
    %v183 = vld [vmem:[%s1 + $0x4f8] sm:$0xff]
    %v184 = vld [vmem:[%s1 + $0x500] sm:$0xff]
    %v185 = vld [vmem:[%s1 + $0x508] sm:$0xff]
    %v186 = vld [vmem:[%s1 + $0x510] sm:$0xff]
    %v187 = vld [vmem:[%s1 + $0x518] sm:$0xff]
    %v188 = vld [vmem:[%s1 + $0x520] sm:$0xff]
    %v189 = vld [vmem:[%s1 + $0x528] sm:$0xff]
    %v190 = vld [vmem:[%s1 + $0x530] sm:$0xff]
    %v191 = vld [vmem:[%s1 + $0x538] sm:$0xff]
    %v192 = vld [vmem:[%s1 + $0x540] sm:$0xff]
    %v193 = vld [vmem:[%s1 + $0x548] sm:$0xff]
    %v194 = vld [vmem:[%s1 + $0x550] sm:$0xff]
    %v195 = vld [vmem:[%s1 + $0x558] sm:$0xff]
    %v196 = vld [vmem:[%s1 + $0x560] sm:$0xff]
    %v197 = vld [vmem:[%s1 + $0x568] sm:$0xff]
    %v198 = vld [vmem:[%s1 + $0x570] sm:$0xff]
    %v199 = vld [vmem:[%s1 + $0x578] sm:$0xff]
    %v200 = vld [vmem:[%s1 + $0x580] sm:$0xff]
    %v201 = vld [vmem:[%s1 + $0x588] sm:$0xff]
    %v202 = vld [vmem:[%s1 + $0x590] sm:$0xff]
    %v203 = vld [vmem:[%s1 + $0x598] sm:$0xff]
    %v204 = vld [vmem:[%s1 + $0x5a0] sm:$0xff]
    %v205 = vld [vmem:[%s1 + $0x5a8] sm:$0xff]
    %v206 = vld [vmem:[%s1 + $0x5b0] sm:$0xff]
    %v207 = vld [vmem:[%s1 + $0x5b8] sm:$0xff]
    %v208 = vld [vmem:[%s1 + $0x5c0] sm:$0xff]
    %v209 = vld [vmem:[%s1 + $0x5c8] sm:$0xff]
    %v210 = vld [vmem:[%s1 + $0x5d0] sm:$0xff]
    %v211 = vld [vmem:[%s1 + $0x5d8] sm:$0xff]
    %v212 = vld [vmem:[%s1 + $0x5e0] sm:$0xff]
    %v213 = vld [vmem:[%s1 + $0x5e8] sm:$0xff]
    %v214 = vld [vmem:[%s1 + $0x5f0] sm:$0xff]
    %v215 = vld [vmem:[%s1 + $0x5f8] sm:$0xff]
    %v216 = vld [vmem:[%s1 + $0x600] sm:$0xff]
    %v217 = vld [vmem:[%s1 + $0x608] sm:$0xff]
    %v218 = vld [vmem:[%s1 + $0x610] sm:$0xff]
    %v219 = vld [vmem:[%s1 + $0x618] sm:$0xff]
    %v220 = vld [vmem:[%s1 + $0x620] sm:$0xff]
    %v221 = vld [vmem:[%s1 + $0x628] sm:$0xff]
    %v222 = vld [vmem:[%s1 + $0x630] sm:$0xff]
    %v223 = vld [vmem:[%s1 + $0x638] sm:$0xff]
    %v224 = vld [vmem:[%s1 + $0x640] sm:$0xff]
    %v225 = vld [vmem:[%s1 + $0x648] sm:$0xff]
    %v226 = vld [vmem:[%s1 + $0x650] sm:$0xff]
    %v227 = vld [vmem:[%s1 + $0x658] sm:$0xff]
    %v228 = vld [vmem:[%s1 + $0x660] sm:$0xff]
    %v229 = vld [vmem:[%s1 + $0x668] sm:$0xff]
    %v230 = vld [vmem:[%s1 + $0x670] sm:$0xff]
    %v231 = vld [vmem:[%s1 + $0x678] sm:$0xff]
    %v232 = vld [vmem:[%s1 + $0x680] sm:$0xff]
    %v233 = vld [vmem:[%s1 + $0x688] sm:$0xff]
    %v234 = vld [vmem:[%s1 + $0x690] sm:$0xff]
    %v235 = vld [vmem:[%s1 + $0x698] sm:$0xff]
    %v236 = vld [vmem:[%s1 + $0x6a0] sm:$0xff]
    %v237 = vld [vmem:[%s1 + $0x6a8] sm:$0xff]
    %v238 = vld [vmem:[%s1 + $0x6b0] sm:$0xff]
    %v239 = vld [vmem:[%s1 + $0x6b8] sm:$0xff]
    %v240 = vld [vmem:[%s1 + $0x6c0] sm:$0xff]
    %v241 = vld [vmem:[%s1 + $0x6c8] sm:$0xff]
    %v242 = vld [vmem:[%s1 + $0x6d0] sm:$0xff]
    %v243 = vld [vmem:[%s1 + $0x6d8] sm:$0xff]
    %v244 = vld [vmem:[%s1 + $0x6e0] sm:$0xff]
    %v245 = vld [vmem:[%s1 + $0x6e8] sm:$0xff]
    %v246 = vld [vmem:[%s1 + $0x6f0] sm:$0xff]
    %v247 = vld [vmem:[%s1 + $0x6f8] sm:$0xff]
    %v248 = vld [vmem:[%s1 + $0x700] sm:$0xff]
    %v249 = vld [vmem:[%s1 + $0x708] sm:$0xff]
    %v250 = vld [vmem:[%s1 + $0x710] sm:$0xff]
    %v251 = vld [vmem:[%s1 + $0x718] sm:$0xff]
    %v252 = vld [vmem:[%s1 + $0x720] sm:$0xff]
    %v253 = vld [vmem:[%s1 + $0x728] sm:$0xff]
    %v254 = vld [vmem:[%s1 + $0x730] sm:$0xff]
    %v255 = vld [vmem:[%s1 + $0x738] sm:$0xff]
    %v256 = vld [vmem:[%s1 + $0x740] sm:$0xff]
    %v257 = vld [vmem:[%s1 + $0x748] sm:$0xff]
    %v258 = vld [vmem:[%s1 + $0x750] sm:$0xff]
    %v259 = vld [vmem:[%s1 + $0x758] sm:$0xff]
    %v260 = vld [vmem:[%s1 + $0x760] sm:$0xff]
    %v261 = vld [vmem:[%s1 + $0x768] sm:$0xff]
    %v262 = vld [vmem:[%s1 + $0x770] sm:$0xff]
    %v263 = vld [vmem:[%s1 + $0x778] sm:$0xff]
    %v264 = vld [vmem:[%s1 + $0x780] sm:$0xff]
    %v265 = vld [vmem:[%s1 + $0x788] sm:$0xff]
    %v266 = vld [vmem:[%s1 + $0x790] sm:$0xff]
    %v267 = vld [vmem:[%s1 + $0x798] sm:$0xff]
    %v268 = vld [vmem:[%s1 + $0x7a0] sm:$0xff]
    %v269 = vld [vmem:[%s1 + $0x7a8] sm:$0xff]
    %v270 = vld [vmem:[%s1 + $0x7b0] sm:$0xff]
    %v271 = vld [vmem:[%s1 + $0x7b8] sm:$0xff]
    %v272 = vld [vmem:[%s1 + $0x7c0] sm:$0xff]
    %v273 = vld [vmem:[%s1 + $0x7c8] sm:$0xff]
    %v274 = vld [vmem:[%s1 + $0x7d0] sm:$0xff]
    %v275 = vld [vmem:[%s1 + $0x7d8] sm:$0xff]
    %v276 = vld [vmem:[%s1 + $0x7e0] sm:$0xff]
    %v277 = vld [vmem:[%s1 + $0x7e8] sm:$0xff]
    %v278 = vld [vmem:[%s1 + $0x7f0] sm:$0xff]
    %v279 = vld [vmem:[%s1 + $0x7f8] sm:$0xff]
    %v280 = vld [vmem:[%s2] sm:$0x3]
    %v282 = vperm.slane %v280, 0
    %v283 = vperm.slane %v280, 1
    %287 = vst [vmem:[#allocation1] ss:$9 sm:$0xff] %v22
    %v288 = vld [vmem:[#allocation1] sm:$0xff]
    %v289 = vld [vmem:[#allocation1 + $0x9] sm:$0xff]
    %v290 = vld [vmem:[#allocation1 + $0x12] sm:$0xff]
    %v291 = vld [vmem:[#allocation1 + $0x1b] sm:$0xff]
    %v292 = vld [vmem:[#allocation1 + $0x24] sm:$0xff]
    %v293 = vld [vmem:[#allocation1 + $0x2d] sm:$0xff]
    %v294 = vld [vmem:[#allocation1 + $0x36] sm:$0xff]
    %v295 = vld [vmem:[#allocation1 + $0x3f] sm:$0xff]
    %297 = vst [vmem:[#allocation1] ss:$9 sm:$0xff] %v23
    %v298 = vld [vmem:[#allocation1] sm:$0xff]
    %v299 = vld [vmem:[#allocation1 + $0x9] sm:$0xff]
    %v300 = vld [vmem:[#allocation1 + $0x12] sm:$0xff]
    %v301 = vld [vmem:[#allocation1 + $0x1b] sm:$0xff]
    %v302 = vld [vmem:[#allocation1 + $0x24] sm:$0xff]
    %v303 = vld [vmem:[#allocation1 + $0x2d] sm:$0xff]
    %v304 = vld [vmem:[#allocation1 + $0x36] sm:$0xff]
    %v305 = vld [vmem:[#allocation1 + $0x3f] sm:$0xff]
    %v578 = vunpack.c.l.b16 %v24
    %v579 = vunpack.c.h.b16 %v24
    %v580 = vunpack.c.l.b16 %v25
    %v581 = vunpack.c.h.b16 %v25
    %v582 = vunpack.c.l.b16 %v26
    %v583 = vunpack.c.h.b16 %v26
    %v584 = vunpack.c.l.b16 %v27
    %v585 = vunpack.c.h.b16 %v27
    %v586 = vunpack.c.l.b16 %v28
    %v587 = vunpack.c.h.b16 %v28
    %v588 = vunpack.c.l.b16 %v29
    %v589 = vunpack.c.h.b16 %v29
    %v590 = vunpack.c.l.b16 %v30
    %v591 = vunpack.c.h.b16 %v30
    %v592 = vunpack.c.l.b16 %v31
    %v593 = vunpack.c.h.b16 %v31
    %v594 = vunpack.c.l.b16 %v32
    %v595 = vunpack.c.h.b16 %v32
    %v596 = vunpack.c.l.b16 %v33
    %v597 = vunpack.c.h.b16 %v33
    %v598 = vunpack.c.l.b16 %v34
    %v599 = vunpack.c.h.b16 %v34
    %v600 = vunpack.c.l.b16 %v35
    %v601 = vunpack.c.h.b16 %v35
    %v602 = vunpack.c.l.b16 %v36
    %v603 = vunpack.c.h.b16 %v36
    %v604 = vunpack.c.l.b16 %v37
    %v605 = vunpack.c.h.b16 %v37
    %v606 = vunpack.c.l.b16 %v38
    %v607 = vunpack.c.h.b16 %v38
    %v608 = vunpack.c.l.b16 %v39
    %v609 = vunpack.c.h.b16 %v39
    %v610 = vunpack.c.l.b16 %v40
    %v611 = vunpack.c.h.b16 %v40
    %v612 = vunpack.c.l.b16 %v41
    %v613 = vunpack.c.h.b16 %v41
    %v614 = vunpack.c.l.b16 %v42
    %v615 = vunpack.c.h.b16 %v42
    %v616 = vunpack.c.l.b16 %v43
    %v617 = vunpack.c.h.b16 %v43
    %v618 = vunpack.c.l.b16 %v44
    %v619 = vunpack.c.h.b16 %v44
    %v620 = vunpack.c.l.b16 %v45
    %v621 = vunpack.c.h.b16 %v45
    %v622 = vunpack.c.l.b16 %v46
    %v623 = vunpack.c.h.b16 %v46
    %v624 = vunpack.c.l.b16 %v47
    %v625 = vunpack.c.h.b16 %v47
    %v626 = vunpack.c.l.b16 %v48
    %v627 = vunpack.c.h.b16 %v48
    %v628 = vunpack.c.l.b16 %v49
    %v629 = vunpack.c.h.b16 %v49
    %v630 = vunpack.c.l.b16 %v50
    %v631 = vunpack.c.h.b16 %v50
    %v632 = vunpack.c.l.b16 %v51
    %v633 = vunpack.c.h.b16 %v51
    %v634 = vunpack.c.l.b16 %v52
    %v635 = vunpack.c.h.b16 %v52
    %v636 = vunpack.c.l.b16 %v53
    %v637 = vunpack.c.h.b16 %v53
    %v638 = vunpack.c.l.b16 %v54
    %v639 = vunpack.c.h.b16 %v54
    %v640 = vunpack.c.l.b16 %v55
    %v641 = vunpack.c.h.b16 %v55
    %v642 = vunpack.c.l.b16 %v56
    %v643 = vunpack.c.h.b16 %v56
    %v644 = vunpack.c.l.b16 %v57
    %v645 = vunpack.c.h.b16 %v57
    %v646 = vunpack.c.l.b16 %v58
    %v647 = vunpack.c.h.b16 %v58
    %v648 = vunpack.c.l.b16 %v59
    %v649 = vunpack.c.h.b16 %v59
    %v650 = vunpack.c.l.b16 %v60
    %v651 = vunpack.c.h.b16 %v60
    %v652 = vunpack.c.l.b16 %v61
    %v653 = vunpack.c.h.b16 %v61
    %v654 = vunpack.c.l.b16 %v62
    %v655 = vunpack.c.h.b16 %v62
    %v656 = vunpack.c.l.b16 %v63
    %v657 = vunpack.c.h.b16 %v63
    %v658 = vunpack.c.l.b16 %v64
    %v659 = vunpack.c.h.b16 %v64
    %v660 = vunpack.c.l.b16 %v65
    %v661 = vunpack.c.h.b16 %v65
    %v662 = vunpack.c.l.b16 %v66
    %v663 = vunpack.c.h.b16 %v66
    %v664 = vunpack.c.l.b16 %v67
    %v665 = vunpack.c.h.b16 %v67
    %v666 = vunpack.c.l.b16 %v68
    %v667 = vunpack.c.h.b16 %v68
    %v668 = vunpack.c.l.b16 %v69
    %v669 = vunpack.c.h.b16 %v69
    %v670 = vunpack.c.l.b16 %v70
    %v671 = vunpack.c.h.b16 %v70
    %v672 = vunpack.c.l.b16 %v71
    %v673 = vunpack.c.h.b16 %v71
    %v674 = vunpack.c.l.b16 %v72
    %v675 = vunpack.c.h.b16 %v72
    %v676 = vunpack.c.l.b16 %v73
    %v677 = vunpack.c.h.b16 %v73
    %v678 = vunpack.c.l.b16 %v74
    %v679 = vunpack.c.h.b16 %v74
    %v680 = vunpack.c.l.b16 %v75
    %v681 = vunpack.c.h.b16 %v75
    %v682 = vunpack.c.l.b16 %v76
    %v683 = vunpack.c.h.b16 %v76
    %v684 = vunpack.c.l.b16 %v77
    %v685 = vunpack.c.h.b16 %v77
    %v686 = vunpack.c.l.b16 %v78
    %v687 = vunpack.c.h.b16 %v78
    %v688 = vunpack.c.l.b16 %v79
    %v689 = vunpack.c.h.b16 %v79
    %v690 = vunpack.c.l.b16 %v80
    %v691 = vunpack.c.h.b16 %v80
    %v692 = vunpack.c.l.b16 %v81
    %v693 = vunpack.c.h.b16 %v81
    %v694 = vunpack.c.l.b16 %v82
    %v695 = vunpack.c.h.b16 %v82
    %v696 = vunpack.c.l.b16 %v83
    %v697 = vunpack.c.h.b16 %v83
    %v698 = vunpack.c.l.b16 %v84
    %v699 = vunpack.c.h.b16 %v84
    %v700 = vunpack.c.l.b16 %v85
    %v701 = vunpack.c.h.b16 %v85
    %v702 = vunpack.c.l.b16 %v86
    %v703 = vunpack.c.h.b16 %v86
    %v704 = vunpack.c.l.b16 %v87
    %v705 = vunpack.c.h.b16 %v87
    %v706 = vunpack.c.l.b16 %v88
    %v707 = vunpack.c.h.b16 %v88
    %v708 = vunpack.c.l.b16 %v89
    %v709 = vunpack.c.h.b16 %v89
    %v710 = vunpack.c.l.b16 %v90
    %v711 = vunpack.c.h.b16 %v90
    %v712 = vunpack.c.l.b16 %v91
    %v713 = vunpack.c.h.b16 %v91
    %v714 = vunpack.c.l.b16 %v92
    %v715 = vunpack.c.h.b16 %v92
    %v716 = vunpack.c.l.b16 %v93
    %v717 = vunpack.c.h.b16 %v93
    %v718 = vunpack.c.l.b16 %v94
    %v719 = vunpack.c.h.b16 %v94
    %v720 = vunpack.c.l.b16 %v95
    %v721 = vunpack.c.h.b16 %v95
    %v722 = vunpack.c.l.b16 %v96
    %v723 = vunpack.c.h.b16 %v96
    %v724 = vunpack.c.l.b16 %v97
    %v725 = vunpack.c.h.b16 %v97
    %v726 = vunpack.c.l.b16 %v98
    %v727 = vunpack.c.h.b16 %v98
    %v728 = vunpack.c.l.b16 %v99
    %v729 = vunpack.c.h.b16 %v99
    %v730 = vunpack.c.l.b16 %v100
    %v731 = vunpack.c.h.b16 %v100
    %v732 = vunpack.c.l.b16 %v101
    %v733 = vunpack.c.h.b16 %v101
    %v734 = vunpack.c.l.b16 %v102
    %v735 = vunpack.c.h.b16 %v102
    %v736 = vunpack.c.l.b16 %v103
    %v737 = vunpack.c.h.b16 %v103
    %v738 = vunpack.c.l.b16 %v104
    %v739 = vunpack.c.h.b16 %v104
    %v740 = vunpack.c.l.b16 %v105
    %v741 = vunpack.c.h.b16 %v105
    %v742 = vunpack.c.l.b16 %v106
    %v743 = vunpack.c.h.b16 %v106
    %v744 = vunpack.c.l.b16 %v107
    %v745 = vunpack.c.h.b16 %v107
    %v746 = vunpack.c.l.b16 %v108
    %v747 = vunpack.c.h.b16 %v108
    %v748 = vunpack.c.l.b16 %v109
    %v749 = vunpack.c.h.b16 %v109
    %v750 = vunpack.c.l.b16 %v110
    %v751 = vunpack.c.h.b16 %v110
    %v752 = vunpack.c.l.b16 %v111
    %v753 = vunpack.c.h.b16 %v111
    %v754 = vunpack.c.l.b16 %v112
    %v755 = vunpack.c.h.b16 %v112
    %v756 = vunpack.c.l.b16 %v113
    %v757 = vunpack.c.h.b16 %v113
    %v758 = vunpack.c.l.b16 %v114
    %v759 = vunpack.c.h.b16 %v114
    %v760 = vunpack.c.l.b16 %v115
    %v761 = vunpack.c.h.b16 %v115
    %v762 = vunpack.c.l.b16 %v116
    %v763 = vunpack.c.h.b16 %v116
    %v764 = vunpack.c.l.b16 %v117
    %v765 = vunpack.c.h.b16 %v117
    %v766 = vunpack.c.l.b16 %v118
    %v767 = vunpack.c.h.b16 %v118
    %v768 = vunpack.c.l.b16 %v119
    %v769 = vunpack.c.h.b16 %v119
    %v770 = vunpack.c.l.b16 %v120
    %v771 = vunpack.c.h.b16 %v120
    %v772 = vunpack.c.l.b16 %v121
    %v773 = vunpack.c.h.b16 %v121
    %v774 = vunpack.c.l.b16 %v122
    %v775 = vunpack.c.h.b16 %v122
    %v776 = vunpack.c.l.b16 %v123
    %v777 = vunpack.c.h.b16 %v123
    %v778 = vunpack.c.l.b16 %v124
    %v779 = vunpack.c.h.b16 %v124
    %v780 = vunpack.c.l.b16 %v125
    %v781 = vunpack.c.h.b16 %v125
    %v782 = vunpack.c.l.b16 %v126
    %v783 = vunpack.c.h.b16 %v126
    %v784 = vunpack.c.l.b16 %v127
    %v785 = vunpack.c.h.b16 %v127
    %v786 = vunpack.c.l.b16 %v128
    %v787 = vunpack.c.h.b16 %v128
    %v788 = vunpack.c.l.b16 %v129
    %v789 = vunpack.c.h.b16 %v129
    %v790 = vunpack.c.l.b16 %v130
    %v791 = vunpack.c.h.b16 %v130
    %v792 = vunpack.c.l.b16 %v131
    %v793 = vunpack.c.h.b16 %v131
    %v794 = vunpack.c.l.b16 %v132
    %v795 = vunpack.c.h.b16 %v132
    %v796 = vunpack.c.l.b16 %v133
    %v797 = vunpack.c.h.b16 %v133
    %v798 = vunpack.c.l.b16 %v134
    %v799 = vunpack.c.h.b16 %v134
    %v800 = vunpack.c.l.b16 %v135
    %v801 = vunpack.c.h.b16 %v135
    %v802 = vunpack.c.l.b16 %v136
    %v803 = vunpack.c.h.b16 %v136
    %v804 = vunpack.c.l.b16 %v137
    %v805 = vunpack.c.h.b16 %v137
    %v806 = vunpack.c.l.b16 %v138
    %v807 = vunpack.c.h.b16 %v138
    %v808 = vunpack.c.l.b16 %v139
    %v809 = vunpack.c.h.b16 %v139
    %v810 = vunpack.c.l.b16 %v140
    %v811 = vunpack.c.h.b16 %v140
    %v812 = vunpack.c.l.b16 %v141
    %v813 = vunpack.c.h.b16 %v141
    %v814 = vunpack.c.l.b16 %v142
    %v815 = vunpack.c.h.b16 %v142
    %v816 = vunpack.c.l.b16 %v143
    %v817 = vunpack.c.h.b16 %v143
    %v818 = vunpack.c.l.b16 %v144
    %v819 = vunpack.c.h.b16 %v144
    %v820 = vunpack.c.l.b16 %v145
    %v821 = vunpack.c.h.b16 %v145
    %v822 = vunpack.c.l.b16 %v146
    %v823 = vunpack.c.h.b16 %v146
    %v824 = vunpack.c.l.b16 %v147
    %v825 = vunpack.c.h.b16 %v147
    %v826 = vunpack.c.l.b16 %v148
    %v827 = vunpack.c.h.b16 %v148
    %v828 = vunpack.c.l.b16 %v149
    %v829 = vunpack.c.h.b16 %v149
    %v830 = vunpack.c.l.b16 %v150
    %v831 = vunpack.c.h.b16 %v150
    %v832 = vunpack.c.l.b16 %v151
    %v833 = vunpack.c.h.b16 %v151
    %v834 = vunpack.c.l.b16 %v152
    %v835 = vunpack.c.h.b16 %v152
    %v836 = vunpack.c.l.b16 %v153
    %v837 = vunpack.c.h.b16 %v153
    %v838 = vunpack.c.l.b16 %v154
    %v839 = vunpack.c.h.b16 %v154
    %v840 = vunpack.c.l.b16 %v155
    %v841 = vunpack.c.h.b16 %v155
    %v842 = vunpack.c.l.b16 %v156
    %v843 = vunpack.c.h.b16 %v156
    %v844 = vunpack.c.l.b16 %v157
    %v845 = vunpack.c.h.b16 %v157
    %v846 = vunpack.c.l.b16 %v158
    %v847 = vunpack.c.h.b16 %v158
    %v848 = vunpack.c.l.b16 %v159
    %v849 = vunpack.c.h.b16 %v159
    %v850 = vunpack.c.l.b16 %v160
    %v851 = vunpack.c.h.b16 %v160
    %v852 = vunpack.c.l.b16 %v161
    %v853 = vunpack.c.h.b16 %v161
    %v854 = vunpack.c.l.b16 %v162
    %v855 = vunpack.c.h.b16 %v162
    %v856 = vunpack.c.l.b16 %v163
    %v857 = vunpack.c.h.b16 %v163
    %v858 = vunpack.c.l.b16 %v164
    %v859 = vunpack.c.h.b16 %v164
    %v860 = vunpack.c.l.b16 %v165
    %v861 = vunpack.c.h.b16 %v165
    %v862 = vunpack.c.l.b16 %v166
    %v863 = vunpack.c.h.b16 %v166
    %v864 = vunpack.c.l.b16 %v167
    %v865 = vunpack.c.h.b16 %v167
    %v866 = vunpack.c.l.b16 %v168
    %v867 = vunpack.c.h.b16 %v168
    %v868 = vunpack.c.l.b16 %v169
    %v869 = vunpack.c.h.b16 %v169
    %v870 = vunpack.c.l.b16 %v170
    %v871 = vunpack.c.h.b16 %v170
    %v872 = vunpack.c.l.b16 %v171
    %v873 = vunpack.c.h.b16 %v171
    %v874 = vunpack.c.l.b16 %v172
    %v875 = vunpack.c.h.b16 %v172
    %v876 = vunpack.c.l.b16 %v173
    %v877 = vunpack.c.h.b16 %v173
    %v878 = vunpack.c.l.b16 %v174
    %v879 = vunpack.c.h.b16 %v174
    %v880 = vunpack.c.l.b16 %v175
    %v881 = vunpack.c.h.b16 %v175
    %v882 = vunpack.c.l.b16 %v176
    %v883 = vunpack.c.h.b16 %v176
    %v884 = vunpack.c.l.b16 %v177
    %v885 = vunpack.c.h.b16 %v177
    %v886 = vunpack.c.l.b16 %v178
    %v887 = vunpack.c.h.b16 %v178
    %v888 = vunpack.c.l.b16 %v179
    %v889 = vunpack.c.h.b16 %v179
    %v890 = vunpack.c.l.b16 %v180
    %v891 = vunpack.c.h.b16 %v180
    %v892 = vunpack.c.l.b16 %v181
    %v893 = vunpack.c.h.b16 %v181
    %v894 = vunpack.c.l.b16 %v182
    %v895 = vunpack.c.h.b16 %v182
    %v896 = vunpack.c.l.b16 %v183
    %v897 = vunpack.c.h.b16 %v183
    %v898 = vunpack.c.l.b16 %v184
    %v899 = vunpack.c.h.b16 %v184
    %v900 = vunpack.c.l.b16 %v185
    %v901 = vunpack.c.h.b16 %v185
    %v902 = vunpack.c.l.b16 %v186
    %v903 = vunpack.c.h.b16 %v186
    %v904 = vunpack.c.l.b16 %v187
    %v905 = vunpack.c.h.b16 %v187
    %v906 = vunpack.c.l.b16 %v188
    %v907 = vunpack.c.h.b16 %v188
    %v908 = vunpack.c.l.b16 %v189
    %v909 = vunpack.c.h.b16 %v189
    %v910 = vunpack.c.l.b16 %v190
    %v911 = vunpack.c.h.b16 %v190
    %v912 = vunpack.c.l.b16 %v191
    %v913 = vunpack.c.h.b16 %v191
    %v914 = vunpack.c.l.b16 %v192
    %v915 = vunpack.c.h.b16 %v192
    %v916 = vunpack.c.l.b16 %v193
    %v917 = vunpack.c.h.b16 %v193
    %v918 = vunpack.c.l.b16 %v194
    %v919 = vunpack.c.h.b16 %v194
    %v920 = vunpack.c.l.b16 %v195
    %v921 = vunpack.c.h.b16 %v195
    %v922 = vunpack.c.l.b16 %v196
    %v923 = vunpack.c.h.b16 %v196
    %v924 = vunpack.c.l.b16 %v197
    %v925 = vunpack.c.h.b16 %v197
    %v926 = vunpack.c.l.b16 %v198
    %v927 = vunpack.c.h.b16 %v198
    %v928 = vunpack.c.l.b16 %v199
    %v929 = vunpack.c.h.b16 %v199
    %v930 = vunpack.c.l.b16 %v200
    %v931 = vunpack.c.h.b16 %v200
    %v932 = vunpack.c.l.b16 %v201
    %v933 = vunpack.c.h.b16 %v201
    %v934 = vunpack.c.l.b16 %v202
    %v935 = vunpack.c.h.b16 %v202
    %v936 = vunpack.c.l.b16 %v203
    %v937 = vunpack.c.h.b16 %v203
    %v938 = vunpack.c.l.b16 %v204
    %v939 = vunpack.c.h.b16 %v204
    %v940 = vunpack.c.l.b16 %v205
    %v941 = vunpack.c.h.b16 %v205
    %v942 = vunpack.c.l.b16 %v206
    %v943 = vunpack.c.h.b16 %v206
    %v944 = vunpack.c.l.b16 %v207
    %v945 = vunpack.c.h.b16 %v207
    %v946 = vunpack.c.l.b16 %v208
    %v947 = vunpack.c.h.b16 %v208
    %v948 = vunpack.c.l.b16 %v209
    %v949 = vunpack.c.h.b16 %v209
    %v950 = vunpack.c.l.b16 %v210
    %v951 = vunpack.c.h.b16 %v210
    %v952 = vunpack.c.l.b16 %v211
    %v953 = vunpack.c.h.b16 %v211
    %v954 = vunpack.c.l.b16 %v212
    %v955 = vunpack.c.h.b16 %v212
    %v956 = vunpack.c.l.b16 %v213
    %v957 = vunpack.c.h.b16 %v213
    %v958 = vunpack.c.l.b16 %v214
    %v959 = vunpack.c.h.b16 %v214
    %v960 = vunpack.c.l.b16 %v215
    %v961 = vunpack.c.h.b16 %v215
    %v962 = vunpack.c.l.b16 %v216
    %v963 = vunpack.c.h.b16 %v216
    %v964 = vunpack.c.l.b16 %v217
    %v965 = vunpack.c.h.b16 %v217
    %v966 = vunpack.c.l.b16 %v218
    %v967 = vunpack.c.h.b16 %v218
    %v968 = vunpack.c.l.b16 %v219
    %v969 = vunpack.c.h.b16 %v219
    %v970 = vunpack.c.l.b16 %v220
    %v971 = vunpack.c.h.b16 %v220
    %v972 = vunpack.c.l.b16 %v221
    %v973 = vunpack.c.h.b16 %v221
    %v974 = vunpack.c.l.b16 %v222
    %v975 = vunpack.c.h.b16 %v222
    %v976 = vunpack.c.l.b16 %v223
    %v977 = vunpack.c.h.b16 %v223
    %v978 = vunpack.c.l.b16 %v224
    %v979 = vunpack.c.h.b16 %v224
    %v980 = vunpack.c.l.b16 %v225
    %v981 = vunpack.c.h.b16 %v225
    %v982 = vunpack.c.l.b16 %v226
    %v983 = vunpack.c.h.b16 %v226
    %v984 = vunpack.c.l.b16 %v227
    %v985 = vunpack.c.h.b16 %v227
    %v986 = vunpack.c.l.b16 %v228
    %v987 = vunpack.c.h.b16 %v228
    %v988 = vunpack.c.l.b16 %v229
    %v989 = vunpack.c.h.b16 %v229
    %v990 = vunpack.c.l.b16 %v230
    %v991 = vunpack.c.h.b16 %v230
    %v992 = vunpack.c.l.b16 %v231
    %v993 = vunpack.c.h.b16 %v231
    %v994 = vunpack.c.l.b16 %v232
    %v995 = vunpack.c.h.b16 %v232
    %v996 = vunpack.c.l.b16 %v233
    %v997 = vunpack.c.h.b16 %v233
    %v998 = vunpack.c.l.b16 %v234
    %v999 = vunpack.c.h.b16 %v234
    %v1000 = vunpack.c.l.b16 %v235
    %v1001 = vunpack.c.h.b16 %v235
    %v1002 = vunpack.c.l.b16 %v236
    %v1003 = vunpack.c.h.b16 %v236
    %v1004 = vunpack.c.l.b16 %v237
    %v1005 = vunpack.c.h.b16 %v237
    %v1006 = vunpack.c.l.b16 %v238
    %v1007 = vunpack.c.h.b16 %v238
    %v1008 = vunpack.c.l.b16 %v239
    %v1009 = vunpack.c.h.b16 %v239
    %v1010 = vunpack.c.l.b16 %v240
    %v1011 = vunpack.c.h.b16 %v240
    %v1012 = vunpack.c.l.b16 %v241
    %v1013 = vunpack.c.h.b16 %v241
    %v1014 = vunpack.c.l.b16 %v242
    %v1015 = vunpack.c.h.b16 %v242
    %v1016 = vunpack.c.l.b16 %v243
    %v1017 = vunpack.c.h.b16 %v243
    %v1018 = vunpack.c.l.b16 %v244
    %v1019 = vunpack.c.h.b16 %v244
    %v1020 = vunpack.c.l.b16 %v245
    %v1021 = vunpack.c.h.b16 %v245
    %v1022 = vunpack.c.l.b16 %v246
    %v1023 = vunpack.c.h.b16 %v246
    %v1024 = vunpack.c.l.b16 %v247
    %v1025 = vunpack.c.h.b16 %v247
    %v1026 = vunpack.c.l.b16 %v248
    %v1027 = vunpack.c.h.b16 %v248
    %v1028 = vunpack.c.l.b16 %v249
    %v1029 = vunpack.c.h.b16 %v249
    %v1030 = vunpack.c.l.b16 %v250
    %v1031 = vunpack.c.h.b16 %v250
    %v1032 = vunpack.c.l.b16 %v251
    %v1033 = vunpack.c.h.b16 %v251
    %v1034 = vunpack.c.l.b16 %v252
    %v1035 = vunpack.c.h.b16 %v252
    %v1036 = vunpack.c.l.b16 %v253
    %v1037 = vunpack.c.h.b16 %v253
    %v1038 = vunpack.c.l.b16 %v254
    %v1039 = vunpack.c.h.b16 %v254
    %v1040 = vunpack.c.l.b16 %v255
    %v1041 = vunpack.c.h.b16 %v255
    %v1042 = vunpack.c.l.b16 %v256
    %v1043 = vunpack.c.h.b16 %v256
    %v1044 = vunpack.c.l.b16 %v257
    %v1045 = vunpack.c.h.b16 %v257
    %v1046 = vunpack.c.l.b16 %v258
    %v1047 = vunpack.c.h.b16 %v258
    %v1048 = vunpack.c.l.b16 %v259
    %v1049 = vunpack.c.h.b16 %v259
    %v1050 = vunpack.c.l.b16 %v260
    %v1051 = vunpack.c.h.b16 %v260
    %v1052 = vunpack.c.l.b16 %v261
    %v1053 = vunpack.c.h.b16 %v261
    %v1054 = vunpack.c.l.b16 %v262
    %v1055 = vunpack.c.h.b16 %v262
    %v1056 = vunpack.c.l.b16 %v263
    %v1057 = vunpack.c.h.b16 %v263
    %v1058 = vunpack.c.l.b16 %v264
    %v1059 = vunpack.c.h.b16 %v264
    %v1060 = vunpack.c.l.b16 %v265
    %v1061 = vunpack.c.h.b16 %v265
    %v1062 = vunpack.c.l.b16 %v266
    %v1063 = vunpack.c.h.b16 %v266
    %v1064 = vunpack.c.l.b16 %v267
    %v1065 = vunpack.c.h.b16 %v267
    %v1066 = vunpack.c.l.b16 %v268
    %v1067 = vunpack.c.h.b16 %v268
    %v1068 = vunpack.c.l.b16 %v269
    %v1069 = vunpack.c.h.b16 %v269
    %v1070 = vunpack.c.l.b16 %v270
    %v1071 = vunpack.c.h.b16 %v270
    %v1072 = vunpack.c.l.b16 %v271
    %v1073 = vunpack.c.h.b16 %v271
    %v1074 = vunpack.c.l.b16 %v272
    %v1075 = vunpack.c.h.b16 %v272
    %v1076 = vunpack.c.l.b16 %v273
    %v1077 = vunpack.c.h.b16 %v273
    %v1078 = vunpack.c.l.b16 %v274
    %v1079 = vunpack.c.h.b16 %v274
    %v1080 = vunpack.c.l.b16 %v275
    %v1081 = vunpack.c.h.b16 %v275
    %v1082 = vunpack.c.l.b16 %v276
    %v1083 = vunpack.c.h.b16 %v276
    %v1084 = vunpack.c.l.b16 %v277
    %v1085 = vunpack.c.h.b16 %v277
    %v1086 = vunpack.c.l.b16 %v278
    %v1087 = vunpack.c.h.b16 %v278
    %v1088 = vunpack.c.l.b16 %v279
    %v1089 = vunpack.c.h.b16 %v279
    %v1090 = vpack.c.b16 %v580, %v578
    %v1091 = vpack.c.b16 %v581, %v579
    %v1092 = vpack.c.b16 %v584, %v582
    %v1093 = vpack.c.b16 %v585, %v583
    %v1094 = vpack.c.b16 %v588, %v586
    %v1095 = vpack.c.b16 %v589, %v587
    %v1096 = vpack.c.b16 %v592, %v590
    %v1097 = vpack.c.b16 %v593, %v591
    %v1098 = vpack.c.b16 %v596, %v594
    %v1099 = vpack.c.b16 %v597, %v595
    %v1100 = vpack.c.b16 %v600, %v598
    %v1101 = vpack.c.b16 %v601, %v599
    %v1102 = vpack.c.b16 %v604, %v602
    %v1103 = vpack.c.b16 %v605, %v603
    %v1104 = vpack.c.b16 %v608, %v606
    %v1105 = vpack.c.b16 %v609, %v607
    %v1106 = vpack.c.b16 %v612, %v610
    %v1107 = vpack.c.b16 %v613, %v611
    %v1108 = vpack.c.b16 %v616, %v614
    %v1109 = vpack.c.b16 %v617, %v615
    %v1110 = vpack.c.b16 %v620, %v618
    %v1111 = vpack.c.b16 %v621, %v619
    %v1112 = vpack.c.b16 %v624, %v622
    %v1113 = vpack.c.b16 %v625, %v623
    %v1114 = vpack.c.b16 %v628, %v626
    %v1115 = vpack.c.b16 %v629, %v627
    %v1116 = vpack.c.b16 %v632, %v630
    %v1117 = vpack.c.b16 %v633, %v631
    %v1118 = vpack.c.b16 %v636, %v634
    %v1119 = vpack.c.b16 %v637, %v635
    %v1120 = vpack.c.b16 %v640, %v638
    %v1121 = vpack.c.b16 %v641, %v639
    %v1122 = vpack.c.b16 %v644, %v642
    %v1123 = vpack.c.b16 %v645, %v643
    %v1124 = vpack.c.b16 %v648, %v646
    %v1125 = vpack.c.b16 %v649, %v647
    %v1126 = vpack.c.b16 %v652, %v650
    %v1127 = vpack.c.b16 %v653, %v651
    %v1128 = vpack.c.b16 %v656, %v654
    %v1129 = vpack.c.b16 %v657, %v655
    %v1130 = vpack.c.b16 %v660, %v658
    %v1131 = vpack.c.b16 %v661, %v659
    %v1132 = vpack.c.b16 %v664, %v662
    %v1133 = vpack.c.b16 %v665, %v663
    %v1134 = vpack.c.b16 %v668, %v666
    %v1135 = vpack.c.b16 %v669, %v667
    %v1136 = vpack.c.b16 %v672, %v670
    %v1137 = vpack.c.b16 %v673, %v671
    %v1138 = vpack.c.b16 %v676, %v674
    %v1139 = vpack.c.b16 %v677, %v675
    %v1140 = vpack.c.b16 %v680, %v678
    %v1141 = vpack.c.b16 %v681, %v679
    %v1142 = vpack.c.b16 %v684, %v682
    %v1143 = vpack.c.b16 %v685, %v683
    %v1144 = vpack.c.b16 %v688, %v686
    %v1145 = vpack.c.b16 %v689, %v687
    %v1146 = vpack.c.b16 %v692, %v690
    %v1147 = vpack.c.b16 %v693, %v691
    %v1148 = vpack.c.b16 %v696, %v694
    %v1149 = vpack.c.b16 %v697, %v695
    %v1150 = vpack.c.b16 %v700, %v698
    %v1151 = vpack.c.b16 %v701, %v699
    %v1152 = vpack.c.b16 %v704, %v702
    %v1153 = vpack.c.b16 %v705, %v703
    %v1154 = vpack.c.b16 %v708, %v706
    %v1155 = vpack.c.b16 %v709, %v707
    %v1156 = vpack.c.b16 %v712, %v710
    %v1157 = vpack.c.b16 %v713, %v711
    %v1158 = vpack.c.b16 %v716, %v714
    %v1159 = vpack.c.b16 %v717, %v715
    %v1160 = vpack.c.b16 %v720, %v718
    %v1161 = vpack.c.b16 %v721, %v719
    %v1162 = vpack.c.b16 %v724, %v722
    %v1163 = vpack.c.b16 %v725, %v723
    %v1164 = vpack.c.b16 %v728, %v726
    %v1165 = vpack.c.b16 %v729, %v727
    %v1166 = vpack.c.b16 %v732, %v730
    %v1167 = vpack.c.b16 %v733, %v731
    %v1168 = vpack.c.b16 %v736, %v734
    %v1169 = vpack.c.b16 %v737, %v735
    %v1170 = vpack.c.b16 %v740, %v738
    %v1171 = vpack.c.b16 %v741, %v739
    %v1172 = vpack.c.b16 %v744, %v742
    %v1173 = vpack.c.b16 %v745, %v743
    %v1174 = vpack.c.b16 %v748, %v746
    %v1175 = vpack.c.b16 %v749, %v747
    %v1176 = vpack.c.b16 %v752, %v750
    %v1177 = vpack.c.b16 %v753, %v751
    %v1178 = vpack.c.b16 %v756, %v754
    %v1179 = vpack.c.b16 %v757, %v755
    %v1180 = vpack.c.b16 %v760, %v758
    %v1181 = vpack.c.b16 %v761, %v759
    %v1182 = vpack.c.b16 %v764, %v762
    %v1183 = vpack.c.b16 %v765, %v763
    %v1184 = vpack.c.b16 %v768, %v766
    %v1185 = vpack.c.b16 %v769, %v767
    %v1186 = vpack.c.b16 %v772, %v770
    %v1187 = vpack.c.b16 %v773, %v771
    %v1188 = vpack.c.b16 %v776, %v774
    %v1189 = vpack.c.b16 %v777, %v775
    %v1190 = vpack.c.b16 %v780, %v778
    %v1191 = vpack.c.b16 %v781, %v779
    %v1192 = vpack.c.b16 %v784, %v782
    %v1193 = vpack.c.b16 %v785, %v783
    %v1194 = vpack.c.b16 %v788, %v786
    %v1195 = vpack.c.b16 %v789, %v787
    %v1196 = vpack.c.b16 %v792, %v790
    %v1197 = vpack.c.b16 %v793, %v791
    %v1198 = vpack.c.b16 %v796, %v794
    %v1199 = vpack.c.b16 %v797, %v795
    %v1200 = vpack.c.b16 %v800, %v798
    %v1201 = vpack.c.b16 %v801, %v799
    %v1202 = vpack.c.b16 %v804, %v802
    %v1203 = vpack.c.b16 %v805, %v803
    %v1204 = vpack.c.b16 %v808, %v806
    %v1205 = vpack.c.b16 %v809, %v807
    %v1206 = vpack.c.b16 %v812, %v810
    %v1207 = vpack.c.b16 %v813, %v811
    %v1208 = vpack.c.b16 %v816, %v814
    %v1209 = vpack.c.b16 %v817, %v815
    %v1210 = vpack.c.b16 %v820, %v818
    %v1211 = vpack.c.b16 %v821, %v819
    %v1212 = vpack.c.b16 %v824, %v822
    %v1213 = vpack.c.b16 %v825, %v823
    %v1214 = vpack.c.b16 %v828, %v826
    %v1215 = vpack.c.b16 %v829, %v827
    %v1216 = vpack.c.b16 %v832, %v830
    %v1217 = vpack.c.b16 %v833, %v831
    %v1218 = vpack.c.b16 %v836, %v834
    %v1219 = vpack.c.b16 %v837, %v835
    %v1220 = vpack.c.b16 %v840, %v838
    %v1221 = vpack.c.b16 %v841, %v839
    %v1222 = vpack.c.b16 %v844, %v842
    %v1223 = vpack.c.b16 %v845, %v843
    %v1224 = vpack.c.b16 %v848, %v846
    %v1225 = vpack.c.b16 %v849, %v847
    %v1226 = vpack.c.b16 %v852, %v850
    %v1227 = vpack.c.b16 %v853, %v851
    %v1228 = vpack.c.b16 %v856, %v854
    %v1229 = vpack.c.b16 %v857, %v855
    %v1230 = vpack.c.b16 %v860, %v858
    %v1231 = vpack.c.b16 %v861, %v859
    %v1232 = vpack.c.b16 %v864, %v862
    %v1233 = vpack.c.b16 %v865, %v863
    %v1234 = vpack.c.b16 %v868, %v866
    %v1235 = vpack.c.b16 %v869, %v867
    %v1236 = vpack.c.b16 %v872, %v870
    %v1237 = vpack.c.b16 %v873, %v871
    %v1238 = vpack.c.b16 %v876, %v874
    %v1239 = vpack.c.b16 %v877, %v875
    %v1240 = vpack.c.b16 %v880, %v878
    %v1241 = vpack.c.b16 %v881, %v879
    %v1242 = vpack.c.b16 %v884, %v882
    %v1243 = vpack.c.b16 %v885, %v883
    %v1244 = vpack.c.b16 %v888, %v886
    %v1245 = vpack.c.b16 %v889, %v887
    %v1246 = vpack.c.b16 %v892, %v890
    %v1247 = vpack.c.b16 %v893, %v891
    %v1248 = vpack.c.b16 %v896, %v894
    %v1249 = vpack.c.b16 %v897, %v895
    %v1250 = vpack.c.b16 %v900, %v898
    %v1251 = vpack.c.b16 %v901, %v899
    %v1252 = vpack.c.b16 %v904, %v902
    %v1253 = vpack.c.b16 %v905, %v903
    %v1254 = vpack.c.b16 %v908, %v906
    %v1255 = vpack.c.b16 %v909, %v907
    %v1256 = vpack.c.b16 %v912, %v910
    %v1257 = vpack.c.b16 %v913, %v911
    %v1258 = vpack.c.b16 %v916, %v914
    %v1259 = vpack.c.b16 %v917, %v915
    %v1260 = vpack.c.b16 %v920, %v918
    %v1261 = vpack.c.b16 %v921, %v919
    %v1262 = vpack.c.b16 %v924, %v922
    %v1263 = vpack.c.b16 %v925, %v923
    %v1264 = vpack.c.b16 %v928, %v926
    %v1265 = vpack.c.b16 %v929, %v927
    %v1266 = vpack.c.b16 %v932, %v930
    %v1267 = vpack.c.b16 %v933, %v931
    %v1268 = vpack.c.b16 %v936, %v934
    %v1269 = vpack.c.b16 %v937, %v935
    %v1270 = vpack.c.b16 %v940, %v938
    %v1271 = vpack.c.b16 %v941, %v939
    %v1272 = vpack.c.b16 %v944, %v942
    %v1273 = vpack.c.b16 %v945, %v943
    %v1274 = vpack.c.b16 %v948, %v946
    %v1275 = vpack.c.b16 %v949, %v947
    %v1276 = vpack.c.b16 %v952, %v950
    %v1277 = vpack.c.b16 %v953, %v951
    %v1278 = vpack.c.b16 %v956, %v954
    %v1279 = vpack.c.b16 %v957, %v955
    %v1280 = vpack.c.b16 %v960, %v958
    %v1281 = vpack.c.b16 %v961, %v959
    %v1282 = vpack.c.b16 %v964, %v962
    %v1283 = vpack.c.b16 %v965, %v963
    %v1284 = vpack.c.b16 %v968, %v966
    %v1285 = vpack.c.b16 %v969, %v967
    %v1286 = vpack.c.b16 %v972, %v970
    %v1287 = vpack.c.b16 %v973, %v971
    %v1288 = vpack.c.b16 %v976, %v974
    %v1289 = vpack.c.b16 %v977, %v975
    %v1290 = vpack.c.b16 %v980, %v978
    %v1291 = vpack.c.b16 %v981, %v979
    %v1292 = vpack.c.b16 %v984, %v982
    %v1293 = vpack.c.b16 %v985, %v983
    %v1294 = vpack.c.b16 %v988, %v986
    %v1295 = vpack.c.b16 %v989, %v987
    %v1296 = vpack.c.b16 %v992, %v990
    %v1297 = vpack.c.b16 %v993, %v991
    %v1298 = vpack.c.b16 %v996, %v994
    %v1299 = vpack.c.b16 %v997, %v995
    %v1300 = vpack.c.b16 %v1000, %v998
    %v1301 = vpack.c.b16 %v1001, %v999
    %v1302 = vpack.c.b16 %v1004, %v1002
    %v1303 = vpack.c.b16 %v1005, %v1003
    %v1304 = vpack.c.b16 %v1008, %v1006
    %v1305 = vpack.c.b16 %v1009, %v1007
    %v1306 = vpack.c.b16 %v1012, %v1010
    %v1307 = vpack.c.b16 %v1013, %v1011
    %v1308 = vpack.c.b16 %v1016, %v1014
    %v1309 = vpack.c.b16 %v1017, %v1015
    %v1310 = vpack.c.b16 %v1020, %v1018
    %v1311 = vpack.c.b16 %v1021, %v1019
    %v1312 = vpack.c.b16 %v1024, %v1022
    %v1313 = vpack.c.b16 %v1025, %v1023
    %v1314 = vpack.c.b16 %v1028, %v1026
    %v1315 = vpack.c.b16 %v1029, %v1027
    %v1316 = vpack.c.b16 %v1032, %v1030
    %v1317 = vpack.c.b16 %v1033, %v1031
    %v1318 = vpack.c.b16 %v1036, %v1034
    %v1319 = vpack.c.b16 %v1037, %v1035
    %v1320 = vpack.c.b16 %v1040, %v1038
    %v1321 = vpack.c.b16 %v1041, %v1039
    %v1322 = vpack.c.b16 %v1044, %v1042
    %v1323 = vpack.c.b16 %v1045, %v1043
    %v1324 = vpack.c.b16 %v1048, %v1046
    %v1325 = vpack.c.b16 %v1049, %v1047
    %v1326 = vpack.c.b16 %v1052, %v1050
    %v1327 = vpack.c.b16 %v1053, %v1051
    %v1328 = vpack.c.b16 %v1056, %v1054
    %v1329 = vpack.c.b16 %v1057, %v1055
    %v1330 = vpack.c.b16 %v1060, %v1058
    %v1331 = vpack.c.b16 %v1061, %v1059
    %v1332 = vpack.c.b16 %v1064, %v1062
    %v1333 = vpack.c.b16 %v1065, %v1063
    %v1334 = vpack.c.b16 %v1068, %v1066
    %v1335 = vpack.c.b16 %v1069, %v1067
    %v1336 = vpack.c.b16 %v1072, %v1070
    %v1337 = vpack.c.b16 %v1073, %v1071
    %v1338 = vpack.c.b16 %v1076, %v1074
    %v1339 = vpack.c.b16 %v1077, %v1075
    %v1340 = vpack.c.b16 %v1080, %v1078
    %v1341 = vpack.c.b16 %v1081, %v1079
    %v1342 = vpack.c.b16 %v1084, %v1082
    %v1343 = vpack.c.b16 %v1085, %v1083
    %v1344 = vpack.c.b16 %v1088, %v1086
    %v1345 = vpack.c.b16 %v1089, %v1087
    %1602 = vmatpush.bf16.msra.mxu0 %v1104
    %1603 = vmatpush.bf16.msra.mxu0 %v1102
    %1604 = vmatpush.bf16.msra.mxu0 %v1100
    %1605 = vmatpush.bf16.msra.mxu0 %v1098
    %1606 = vmatpush.bf16.msra.mxu0 %v1096
    %1607 = vmatpush.bf16.msra.mxu0 %v1094
    %1608 = vmatpush.bf16.msra.mxu0 %v1092
    %1609 = vmatpush.bf16.msra.mxu0 %v1090
    %1610 = vmatmul.bf16.gmra.mxu0 %v288
    %v1611 = vpop.f32.mrf.mxu0
    %v1612 = vadd.f32 %v282, %v1611
    %v1613 = vpop.f32.mrf.mxu0
    %1614 = vdwg.mxu0
    %1615 = vmatpush.bf16.msra.mxu0 %v1120
    %1616 = vmatpush.bf16.msra.mxu0 %v1118
    %1617 = vmatpush.bf16.msra.mxu0 %v1116
    %1618 = vmatpush.bf16.msra.mxu0 %v1114
    %1619 = vmatpush.bf16.msra.mxu0 %v1112
    %1620 = vmatpush.bf16.msra.mxu0 %v1110
    %1621 = vmatpush.bf16.msra.mxu0 %v1108
    %1622 = vmatpush.bf16.msra.mxu0 %v1106
    %1623 = vmatmul.bf16.gmra.mxu0 %v289
    %v1624 = vpop.f32.mrf.mxu0
    %v1625 = vadd.f32 %v1612, %v1624
    %v1626 = vpop.f32.mrf.mxu0
    %1627 = vdwg.mxu0
    %1628 = vmatpush.bf16.msra.mxu0 %v1136
    %1629 = vmatpush.bf16.msra.mxu0 %v1134
    %1630 = vmatpush.bf16.msra.mxu0 %v1132
    %1631 = vmatpush.bf16.msra.mxu0 %v1130
    %1632 = vmatpush.bf16.msra.mxu0 %v1128
    %1633 = vmatpush.bf16.msra.mxu0 %v1126
    %1634 = vmatpush.bf16.msra.mxu0 %v1124
    %1635 = vmatpush.bf16.msra.mxu0 %v1122
    %1636 = vmatmul.bf16.gmra.mxu0 %v290
    %v1637 = vpop.f32.mrf.mxu0
    %v1638 = vadd.f32 %v1625, %v1637
    %v1639 = vpop.f32.mrf.mxu0
    %1640 = vdwg.mxu0
    %1641 = vmatpush.bf16.msra.mxu0 %v1152
    %1642 = vmatpush.bf16.msra.mxu0 %v1150
    %1643 = vmatpush.bf16.msra.mxu0 %v1148
    %1644 = vmatpush.bf16.msra.mxu0 %v1146
    %1645 = vmatpush.bf16.msra.mxu0 %v1144
    %1646 = vmatpush.bf16.msra.mxu0 %v1142
    %1647 = vmatpush.bf16.msra.mxu0 %v1140
    %1648 = vmatpush.bf16.msra.mxu0 %v1138
    %1649 = vmatmul.bf16.gmra.mxu0 %v291
    %v1650 = vpop.f32.mrf.mxu0
    %v1651 = vadd.f32 %v1638, %v1650
    %v1652 = vpop.f32.mrf.mxu0
    %1653 = vdwg.mxu0
    %1654 = vmatpush.bf16.msra.mxu0 %v1168
    %1655 = vmatpush.bf16.msra.mxu0 %v1166
    %1656 = vmatpush.bf16.msra.mxu0 %v1164
    %1657 = vmatpush.bf16.msra.mxu0 %v1162
    %1658 = vmatpush.bf16.msra.mxu0 %v1160
    %1659 = vmatpush.bf16.msra.mxu0 %v1158
    %1660 = vmatpush.bf16.msra.mxu0 %v1156
    %1661 = vmatpush.bf16.msra.mxu0 %v1154
    %1662 = vmatmul.bf16.gmra.mxu0 %v292
    %v1663 = vpop.f32.mrf.mxu0
    %v1664 = vadd.f32 %v1651, %v1663
    %v1665 = vpop.f32.mrf.mxu0
    %1666 = vdwg.mxu0
    %1667 = vmatpush.bf16.msra.mxu0 %v1184
    %1668 = vmatpush.bf16.msra.mxu0 %v1182
    %1669 = vmatpush.bf16.msra.mxu0 %v1180
    %1670 = vmatpush.bf16.msra.mxu0 %v1178
    %1671 = vmatpush.bf16.msra.mxu0 %v1176
    %1672 = vmatpush.bf16.msra.mxu0 %v1174
    %1673 = vmatpush.bf16.msra.mxu0 %v1172
    %1674 = vmatpush.bf16.msra.mxu0 %v1170
    %1675 = vmatmul.bf16.gmra.mxu0 %v293
    %v1676 = vpop.f32.mrf.mxu0
    %v1677 = vadd.f32 %v1664, %v1676
    %v1678 = vpop.f32.mrf.mxu0
    %1679 = vdwg.mxu0
    %1680 = vmatpush.bf16.msra.mxu0 %v1200
    %1681 = vmatpush.bf16.msra.mxu0 %v1198
    %1682 = vmatpush.bf16.msra.mxu0 %v1196
    %1683 = vmatpush.bf16.msra.mxu0 %v1194
    %1684 = vmatpush.bf16.msra.mxu0 %v1192
    %1685 = vmatpush.bf16.msra.mxu0 %v1190
    %1686 = vmatpush.bf16.msra.mxu0 %v1188
    %1687 = vmatpush.bf16.msra.mxu0 %v1186
    %1688 = vmatmul.bf16.gmra.mxu0 %v294
    %v1689 = vpop.f32.mrf.mxu0
    %v1690 = vadd.f32 %v1677, %v1689
    %v1691 = vpop.f32.mrf.mxu0
    %1692 = vdwg.mxu0
    %1693 = vmatpush.bf16.msra.mxu0 %v1216
    %1694 = vmatpush.bf16.msra.mxu0 %v1214
    %1695 = vmatpush.bf16.msra.mxu0 %v1212
    %1696 = vmatpush.bf16.msra.mxu0 %v1210
    %1697 = vmatpush.bf16.msra.mxu0 %v1208
    %1698 = vmatpush.bf16.msra.mxu0 %v1206
    %1699 = vmatpush.bf16.msra.mxu0 %v1204
    %1700 = vmatpush.bf16.msra.mxu0 %v1202
    %1701 = vmatmul.bf16.gmra.mxu0 %v295
    %v1702 = vpop.f32.mrf.mxu0
    %v1703 = vadd.f32 %v1690, %v1702
    %v1704 = vpop.f32.mrf.mxu0
    %1705 = vdwg.mxu0
    %1706 = vmatpush.bf16.msra.mxu0 %v1232
    %1707 = vmatpush.bf16.msra.mxu0 %v1230
    %1708 = vmatpush.bf16.msra.mxu0 %v1228
    %1709 = vmatpush.bf16.msra.mxu0 %v1226
    %1710 = vmatpush.bf16.msra.mxu0 %v1224
    %1711 = vmatpush.bf16.msra.mxu0 %v1222
    %1712 = vmatpush.bf16.msra.mxu0 %v1220
    %1713 = vmatpush.bf16.msra.mxu0 %v1218
    %1714 = vmatmul.bf16.gmra.mxu0 %v298
    %v1715 = vpop.f32.mrf.mxu0
    %v1716 = vadd.f32 %v1703, %v1715
    %v1717 = vpop.f32.mrf.mxu0
    %1718 = vdwg.mxu0
    %1719 = vmatpush.bf16.msra.mxu0 %v1248
    %1720 = vmatpush.bf16.msra.mxu0 %v1246
    %1721 = vmatpush.bf16.msra.mxu0 %v1244
    %1722 = vmatpush.bf16.msra.mxu0 %v1242
    %1723 = vmatpush.bf16.msra.mxu0 %v1240
    %1724 = vmatpush.bf16.msra.mxu0 %v1238
    %1725 = vmatpush.bf16.msra.mxu0 %v1236
    %1726 = vmatpush.bf16.msra.mxu0 %v1234
    %1727 = vmatmul.bf16.gmra.mxu0 %v299
    %v1728 = vpop.f32.mrf.mxu0
    %v1729 = vadd.f32 %v1716, %v1728
    %v1730 = vpop.f32.mrf.mxu0
    %1731 = vdwg.mxu0
    %1732 = vmatpush.bf16.msra.mxu0 %v1264
    %1733 = vmatpush.bf16.msra.mxu0 %v1262
    %1734 = vmatpush.bf16.msra.mxu0 %v1260
    %1735 = vmatpush.bf16.msra.mxu0 %v1258
    %1736 = vmatpush.bf16.msra.mxu0 %v1256
    %1737 = vmatpush.bf16.msra.mxu0 %v1254
    %1738 = vmatpush.bf16.msra.mxu0 %v1252
    %1739 = vmatpush.bf16.msra.mxu0 %v1250
    %1740 = vmatmul.bf16.gmra.mxu0 %v300
    %v1741 = vpop.f32.mrf.mxu0
    %v1742 = vadd.f32 %v1729, %v1741
    %v1743 = vpop.f32.mrf.mxu0
    %1744 = vdwg.mxu0
    %1745 = vmatpush.bf16.msra.mxu0 %v1280
    %1746 = vmatpush.bf16.msra.mxu0 %v1278
    %1747 = vmatpush.bf16.msra.mxu0 %v1276
    %1748 = vmatpush.bf16.msra.mxu0 %v1274
    %1749 = vmatpush.bf16.msra.mxu0 %v1272
    %1750 = vmatpush.bf16.msra.mxu0 %v1270
    %1751 = vmatpush.bf16.msra.mxu0 %v1268
    %1752 = vmatpush.bf16.msra.mxu0 %v1266
    %1753 = vmatmul.bf16.gmra.mxu0 %v301
    %v1754 = vpop.f32.mrf.mxu0
    %v1755 = vadd.f32 %v1742, %v1754
    %v1756 = vpop.f32.mrf.mxu0
    %1757 = vdwg.mxu0
    %1758 = vmatpush.bf16.msra.mxu0 %v1296
    %1759 = vmatpush.bf16.msra.mxu0 %v1294
    %1760 = vmatpush.bf16.msra.mxu0 %v1292
    %1761 = vmatpush.bf16.msra.mxu0 %v1290
    %1762 = vmatpush.bf16.msra.mxu0 %v1288
    %1763 = vmatpush.bf16.msra.mxu0 %v1286
    %1764 = vmatpush.bf16.msra.mxu0 %v1284
    %1765 = vmatpush.bf16.msra.mxu0 %v1282
    %1766 = vmatmul.bf16.gmra.mxu0 %v302
    %v1767 = vpop.f32.mrf.mxu0
    %v1768 = vadd.f32 %v1755, %v1767
    %v1769 = vpop.f32.mrf.mxu0
    %1770 = vdwg.mxu0
    %1771 = vmatpush.bf16.msra.mxu0 %v1312
    %1772 = vmatpush.bf16.msra.mxu0 %v1310
    %1773 = vmatpush.bf16.msra.mxu0 %v1308
    %1774 = vmatpush.bf16.msra.mxu0 %v1306
    %1775 = vmatpush.bf16.msra.mxu0 %v1304
    %1776 = vmatpush.bf16.msra.mxu0 %v1302
    %1777 = vmatpush.bf16.msra.mxu0 %v1300
    %1778 = vmatpush.bf16.msra.mxu0 %v1298
    %1779 = vmatmul.bf16.gmra.mxu0 %v303
    %v1780 = vpop.f32.mrf.mxu0
    %v1781 = vadd.f32 %v1768, %v1780
    %v1782 = vpop.f32.mrf.mxu0
    %1783 = vdwg.mxu0
    %1784 = vmatpush.bf16.msra.mxu0 %v1328
    %1785 = vmatpush.bf16.msra.mxu0 %v1326
    %1786 = vmatpush.bf16.msra.mxu0 %v1324
    %1787 = vmatpush.bf16.msra.mxu0 %v1322
    %1788 = vmatpush.bf16.msra.mxu0 %v1320
    %1789 = vmatpush.bf16.msra.mxu0 %v1318
    %1790 = vmatpush.bf16.msra.mxu0 %v1316
    %1791 = vmatpush.bf16.msra.mxu0 %v1314
    %1792 = vmatmul.bf16.gmra.mxu0 %v304
    %v1793 = vpop.f32.mrf.mxu0
    %v1794 = vadd.f32 %v1781, %v1793
    %v1795 = vpop.f32.mrf.mxu0
    %1796 = vdwg.mxu0
    %1797 = vmatpush.bf16.msra.mxu0 %v1344
    %1798 = vmatpush.bf16.msra.mxu0 %v1342
    %1799 = vmatpush.bf16.msra.mxu0 %v1340
    %1800 = vmatpush.bf16.msra.mxu0 %v1338
    %1801 = vmatpush.bf16.msra.mxu0 %v1336
    %1802 = vmatpush.bf16.msra.mxu0 %v1334
    %1803 = vmatpush.bf16.msra.mxu0 %v1332
    %1804 = vmatpush.bf16.msra.mxu0 %v1330
    %1805 = vmatmul.bf16.gmra.mxu0 %v305
    %v1806 = vpop.f32.mrf.mxu0
    %v1807 = vadd.f32 %v1794, %v1806
    %v1808 = vpop.f32.mrf.mxu0
    %1809 = vdwg.mxu0
    %1810 = vmatpush.bf16.msra.mxu0 %v1105
    %1811 = vmatpush.bf16.msra.mxu0 %v1103
    %1812 = vmatpush.bf16.msra.mxu0 %v1101
    %1813 = vmatpush.bf16.msra.mxu0 %v1099
    %1814 = vmatpush.bf16.msra.mxu0 %v1097
    %1815 = vmatpush.bf16.msra.mxu0 %v1095
    %1816 = vmatpush.bf16.msra.mxu0 %v1093
    %1817 = vmatpush.bf16.msra.mxu0 %v1091
    %1818 = vmatmul.bf16.gmra.mxu0 %v288
    %v1819 = vpop.f32.mrf.mxu0
    %v1820 = vadd.f32 %v283, %v1819
    %v1821 = vpop.f32.mrf.mxu0
    %1822 = vdwg.mxu0
    %1823 = vmatpush.bf16.msra.mxu0 %v1121
    %1824 = vmatpush.bf16.msra.mxu0 %v1119
    %1825 = vmatpush.bf16.msra.mxu0 %v1117
    %1826 = vmatpush.bf16.msra.mxu0 %v1115
    %1827 = vmatpush.bf16.msra.mxu0 %v1113
    %1828 = vmatpush.bf16.msra.mxu0 %v1111
    %1829 = vmatpush.bf16.msra.mxu0 %v1109
    %1830 = vmatpush.bf16.msra.mxu0 %v1107
    %1831 = vmatmul.bf16.gmra.mxu0 %v289
    %v1832 = vpop.f32.mrf.mxu0
    %v1833 = vadd.f32 %v1820, %v1832
    %v1834 = vpop.f32.mrf.mxu0
    %1835 = vdwg.mxu0
    %1836 = vmatpush.bf16.msra.mxu0 %v1137
    %1837 = vmatpush.bf16.msra.mxu0 %v1135
    %1838 = vmatpush.bf16.msra.mxu0 %v1133
    %1839 = vmatpush.bf16.msra.mxu0 %v1131
    %1840 = vmatpush.bf16.msra.mxu0 %v1129
    %1841 = vmatpush.bf16.msra.mxu0 %v1127
    %1842 = vmatpush.bf16.msra.mxu0 %v1125
    %1843 = vmatpush.bf16.msra.mxu0 %v1123
    %1844 = vmatmul.bf16.gmra.mxu0 %v290
    %v1845 = vpop.f32.mrf.mxu0
    %v1846 = vadd.f32 %v1833, %v1845
    %v1847 = vpop.f32.mrf.mxu0
    %1848 = vdwg.mxu0
    %1849 = vmatpush.bf16.msra.mxu0 %v1153
    %1850 = vmatpush.bf16.msra.mxu0 %v1151
    %1851 = vmatpush.bf16.msra.mxu0 %v1149
    %1852 = vmatpush.bf16.msra.mxu0 %v1147
    %1853 = vmatpush.bf16.msra.mxu0 %v1145
    %1854 = vmatpush.bf16.msra.mxu0 %v1143
    %1855 = vmatpush.bf16.msra.mxu0 %v1141
    %1856 = vmatpush.bf16.msra.mxu0 %v1139
    %1857 = vmatmul.bf16.gmra.mxu0 %v291
    %v1858 = vpop.f32.mrf.mxu0
    %v1859 = vadd.f32 %v1846, %v1858
    %v1860 = vpop.f32.mrf.mxu0
    %1861 = vdwg.mxu0
    %1862 = vmatpush.bf16.msra.mxu0 %v1169
    %1863 = vmatpush.bf16.msra.mxu0 %v1167
    %1864 = vmatpush.bf16.msra.mxu0 %v1165
    %1865 = vmatpush.bf16.msra.mxu0 %v1163
    %1866 = vmatpush.bf16.msra.mxu0 %v1161
    %1867 = vmatpush.bf16.msra.mxu0 %v1159
    %1868 = vmatpush.bf16.msra.mxu0 %v1157
    %1869 = vmatpush.bf16.msra.mxu0 %v1155
    %1870 = vmatmul.bf16.gmra.mxu0 %v292
    %v1871 = vpop.f32.mrf.mxu0
    %v1872 = vadd.f32 %v1859, %v1871
    %v1873 = vpop.f32.mrf.mxu0
    %1874 = vdwg.mxu0
    %1875 = vmatpush.bf16.msra.mxu0 %v1185
    %1876 = vmatpush.bf16.msra.mxu0 %v1183
    %1877 = vmatpush.bf16.msra.mxu0 %v1181
    %1878 = vmatpush.bf16.msra.mxu0 %v1179
    %1879 = vmatpush.bf16.msra.mxu0 %v1177
    %1880 = vmatpush.bf16.msra.mxu0 %v1175
    %1881 = vmatpush.bf16.msra.mxu0 %v1173
    %1882 = vmatpush.bf16.msra.mxu0 %v1171
    %1883 = vmatmul.bf16.gmra.mxu0 %v293
    %v1884 = vpop.f32.mrf.mxu0
    %v1885 = vadd.f32 %v1872, %v1884
    %v1886 = vpop.f32.mrf.mxu0
    %1887 = vdwg.mxu0
    %1888 = vmatpush.bf16.msra.mxu0 %v1201
    %1889 = vmatpush.bf16.msra.mxu0 %v1199
    %1890 = vmatpush.bf16.msra.mxu0 %v1197
    %1891 = vmatpush.bf16.msra.mxu0 %v1195
    %1892 = vmatpush.bf16.msra.mxu0 %v1193
    %1893 = vmatpush.bf16.msra.mxu0 %v1191
    %1894 = vmatpush.bf16.msra.mxu0 %v1189
    %1895 = vmatpush.bf16.msra.mxu0 %v1187
    %1896 = vmatmul.bf16.gmra.mxu0 %v294
    %v1897 = vpop.f32.mrf.mxu0
    %v1898 = vadd.f32 %v1885, %v1897
    %v1899 = vpop.f32.mrf.mxu0
    %1900 = vdwg.mxu0
    %1901 = vmatpush.bf16.msra.mxu0 %v1217
    %1902 = vmatpush.bf16.msra.mxu0 %v1215
    %1903 = vmatpush.bf16.msra.mxu0 %v1213
    %1904 = vmatpush.bf16.msra.mxu0 %v1211
    %1905 = vmatpush.bf16.msra.mxu0 %v1209
    %1906 = vmatpush.bf16.msra.mxu0 %v1207
    %1907 = vmatpush.bf16.msra.mxu0 %v1205
    %1908 = vmatpush.bf16.msra.mxu0 %v1203
    %1909 = vmatmul.bf16.gmra.mxu0 %v295
    %v1910 = vpop.f32.mrf.mxu0
    %v1911 = vadd.f32 %v1898, %v1910
    %v1912 = vpop.f32.mrf.mxu0
    %1913 = vdwg.mxu0
    %1914 = vmatpush.bf16.msra.mxu0 %v1233
    %1915 = vmatpush.bf16.msra.mxu0 %v1231
    %1916 = vmatpush.bf16.msra.mxu0 %v1229
    %1917 = vmatpush.bf16.msra.mxu0 %v1227
    %1918 = vmatpush.bf16.msra.mxu0 %v1225
    %1919 = vmatpush.bf16.msra.mxu0 %v1223
    %1920 = vmatpush.bf16.msra.mxu0 %v1221
    %1921 = vmatpush.bf16.msra.mxu0 %v1219
    %1922 = vmatmul.bf16.gmra.mxu0 %v298
    %v1923 = vpop.f32.mrf.mxu0
    %v1924 = vadd.f32 %v1911, %v1923
    %v1925 = vpop.f32.mrf.mxu0
    %1926 = vdwg.mxu0
    %1927 = vmatpush.bf16.msra.mxu0 %v1249
    %1928 = vmatpush.bf16.msra.mxu0 %v1247
    %1929 = vmatpush.bf16.msra.mxu0 %v1245
    %1930 = vmatpush.bf16.msra.mxu0 %v1243
    %1931 = vmatpush.bf16.msra.mxu0 %v1241
    %1932 = vmatpush.bf16.msra.mxu0 %v1239
    %1933 = vmatpush.bf16.msra.mxu0 %v1237
    %1934 = vmatpush.bf16.msra.mxu0 %v1235
    %1935 = vmatmul.bf16.gmra.mxu0 %v299
    %v1936 = vpop.f32.mrf.mxu0
    %v1937 = vadd.f32 %v1924, %v1936
    %v1938 = vpop.f32.mrf.mxu0
    %1939 = vdwg.mxu0
    %1940 = vmatpush.bf16.msra.mxu0 %v1265
    %1941 = vmatpush.bf16.msra.mxu0 %v1263
    %1942 = vmatpush.bf16.msra.mxu0 %v1261
    %1943 = vmatpush.bf16.msra.mxu0 %v1259
    %1944 = vmatpush.bf16.msra.mxu0 %v1257
    %1945 = vmatpush.bf16.msra.mxu0 %v1255
    %1946 = vmatpush.bf16.msra.mxu0 %v1253
    %1947 = vmatpush.bf16.msra.mxu0 %v1251
    %1948 = vmatmul.bf16.gmra.mxu0 %v300
    %v1949 = vpop.f32.mrf.mxu0
    %v1950 = vadd.f32 %v1937, %v1949
    %v1951 = vpop.f32.mrf.mxu0
    %1952 = vdwg.mxu0
    %1953 = vmatpush.bf16.msra.mxu0 %v1281
    %1954 = vmatpush.bf16.msra.mxu0 %v1279
    %1955 = vmatpush.bf16.msra.mxu0 %v1277
    %1956 = vmatpush.bf16.msra.mxu0 %v1275
    %1957 = vmatpush.bf16.msra.mxu0 %v1273
    %1958 = vmatpush.bf16.msra.mxu0 %v1271
    %1959 = vmatpush.bf16.msra.mxu0 %v1269
    %1960 = vmatpush.bf16.msra.mxu0 %v1267
    %1961 = vmatmul.bf16.gmra.mxu0 %v301
    %v1962 = vpop.f32.mrf.mxu0
    %v1963 = vadd.f32 %v1950, %v1962
    %v1964 = vpop.f32.mrf.mxu0
    %1965 = vdwg.mxu0
    %1966 = vmatpush.bf16.msra.mxu0 %v1297
    %1967 = vmatpush.bf16.msra.mxu0 %v1295
    %1968 = vmatpush.bf16.msra.mxu0 %v1293
    %1969 = vmatpush.bf16.msra.mxu0 %v1291
    %1970 = vmatpush.bf16.msra.mxu0 %v1289
    %1971 = vmatpush.bf16.msra.mxu0 %v1287
    %1972 = vmatpush.bf16.msra.mxu0 %v1285
    %1973 = vmatpush.bf16.msra.mxu0 %v1283
    %1974 = vmatmul.bf16.gmra.mxu0 %v302
    %v1975 = vpop.f32.mrf.mxu0
    %v1976 = vadd.f32 %v1963, %v1975
    %v1977 = vpop.f32.mrf.mxu0
    %1978 = vdwg.mxu0
    %1979 = vmatpush.bf16.msra.mxu0 %v1313
    %1980 = vmatpush.bf16.msra.mxu0 %v1311
    %1981 = vmatpush.bf16.msra.mxu0 %v1309
    %1982 = vmatpush.bf16.msra.mxu0 %v1307
    %1983 = vmatpush.bf16.msra.mxu0 %v1305
    %1984 = vmatpush.bf16.msra.mxu0 %v1303
    %1985 = vmatpush.bf16.msra.mxu0 %v1301
    %1986 = vmatpush.bf16.msra.mxu0 %v1299
    %1987 = vmatmul.bf16.gmra.mxu0 %v303
    %v1988 = vpop.f32.mrf.mxu0
    %v1989 = vadd.f32 %v1976, %v1988
    %v1990 = vpop.f32.mrf.mxu0
    %1991 = vdwg.mxu0
    %1992 = vmatpush.bf16.msra.mxu0 %v1329
    %1993 = vmatpush.bf16.msra.mxu0 %v1327
    %1994 = vmatpush.bf16.msra.mxu0 %v1325
    %1995 = vmatpush.bf16.msra.mxu0 %v1323
    %1996 = vmatpush.bf16.msra.mxu0 %v1321
    %1997 = vmatpush.bf16.msra.mxu0 %v1319
    %1998 = vmatpush.bf16.msra.mxu0 %v1317
    %1999 = vmatpush.bf16.msra.mxu0 %v1315
    %2000 = vmatmul.bf16.gmra.mxu0 %v304
    %v2001 = vpop.f32.mrf.mxu0
    %v2002 = vadd.f32 %v1989, %v2001
    %v2003 = vpop.f32.mrf.mxu0
    %2004 = vdwg.mxu0
    %2005 = vmatpush.bf16.msra.mxu0 %v1345
    %2006 = vmatpush.bf16.msra.mxu0 %v1343
    %2007 = vmatpush.bf16.msra.mxu0 %v1341
    %2008 = vmatpush.bf16.msra.mxu0 %v1339
    %2009 = vmatpush.bf16.msra.mxu0 %v1337
    %2010 = vmatpush.bf16.msra.mxu0 %v1335
    %2011 = vmatpush.bf16.msra.mxu0 %v1333
    %2012 = vmatpush.bf16.msra.mxu0 %v1331
    %2013 = vmatmul.bf16.gmra.mxu0 %v305
    %v2014 = vpop.f32.mrf.mxu0
    %v2015 = vadd.f32 %v2002, %v2014
    %v2016 = vpop.f32.mrf.mxu0
    %2017 = vdwg.mxu0
    %2018 = vst [vmem:[#allocation2] sm:$0x3] %v1807
    %2019 = vst [vmem:[#allocation4] sm:$0x3] %v2015
    %v2020 = vld [vmem:[%s3] sm:$0x3]
    %v2021 = vmul.f32 %v2015, 0.5
    %v2022 = vmul.f32 %v2021, 1.442695
    %v2023 = vpow.pop %v2022
    %v2024 = vmul.f32 %v2020, %v2023
    %v2025 = vadd.f32 %v2024, %v1807
    %2026 = vst [vmem:[%s6] sm:$0x3] %v2025
    // Predicated region
    $region18: #{vae_forward.9} parent=1 // pred_check
      _
    $region19: #{vae_forward.9} parent=1 // pred_check_branch
      %2028 = sbr.rel (0) target = $region21
    $region20: #{vae_forward.9} parent=1 // pred_region
      %2030 = vsyncadd [#allocation3], 0
      %s2032 = sshll.u32 [#allocation2], 4
      %s2033 = int_to_ptr.vmem [resolvable:$true] %s2032
      %s2034 = sshll.u32 %s4, 4
      %s2035 = int_to_ptr.hbm [resolvable:$true] %s2034
      %2037 = dma.vmem_to_hbm [thread:$0]  %s2033, 32, %s2035, [#allocation3]
    $region21: #{vae_forward.9} parent=1 // pred_fallthru
      _
    // Predicated region
    $region22: #{vae_forward.9} parent=1 // pred_check
      _
    $region23: #{vae_forward.9} parent=1 // pred_check_branch
      %2039 = sbr.rel (0) target = $region25
    $region24: #{vae_forward.9} parent=1 // pred_region
      %2041 = vsyncadd [#allocation5], 0
      %s2043 = sshll.u32 [#allocation4], 4
      %s2044 = int_to_ptr.vmem [resolvable:$true] %s2043
      %s2045 = sshll.u32 %s5, 4
      %s2046 = int_to_ptr.hbm [resolvable:$true] %s2045
      %2048 = dma.vmem_to_hbm [thread:$0]  %s2044, 32, %s2046, [#allocation5]
    $region25: #{vae_forward.9} parent=1 // pred_fallthru
      _
    // Predicated region
    $region26: #{vae_forward.9} parent=1 // pred_check
      _
    $region27: #{vae_forward.9} parent=1 // pred_check_branch
      %2050 = sbr.rel (0) target = $region29
    $region28: #{vae_forward.9} parent=1 // pred_region
      _
    $region29: #{vae_forward.9} parent=1 // pred_fallthru
      _
    // Predicated region
    $region30: #{vae_forward.9} parent=1 // pred_check
      _
    $region31: #{vae_forward.9} parent=1 // pred_check_branch
      %2052 = sbr.rel (0) target = $region33
    $region32: #{vae_forward.9} parent=1 // pred_region
      %2054 = dma.done [#allocation3], 32
    $region33: #{vae_forward.9} parent=1 // pred_fallthru
      _
    // Predicated region
    $region34: #{vae_forward.9} parent=1 // pred_check
      _
    $region35: #{vae_forward.9} parent=1 // pred_check_branch
      %2056 = sbr.rel (0) target = $region37
    $region36: #{vae_forward.9} parent=1 // pred_region
      %2058 = dma.done [#allocation5], 32
    $region37: #{vae_forward.9} parent=1 // pred_fallthru
      _
    // Predicated region
    $region38: #{vae_forward.9} parent=1 // pred_check
      _
    $region39: #{vae_forward.9} parent=1 // pred_check_branch
      %2060 = sbr.rel (0) target = $region41
    $region40: #{vae_forward.9} parent=1 // pred_region
      _
    $region41: #{vae_forward.9} parent=1 // pred_fallthru
      _
    %2061 = vsyncpa [#allocation3], 1
    %2062 = vsyncpa [#allocation5], 1

// kernel: vae_forward.11
$region0: #{vae_forward.11}
  #allocation0 [shape = 'u32[]', space=smem, size = 0x4, offset = 0x4, fixed_abs, tag = 'smem constant byte address 0x4 - core index']
  #allocation1 [shape = 'u32[72,128]{1,0:T(1,128)}', space=vmem, size = 0x9000, scoped, tag = 'internal scratch']
  #allocation2 [shape = 'f32[32,512]{1,0:T(8,128)}', space=vmem, size = 0x10000, scoped, tag = 'scratch operand']
  %s0 = inlined_call_operand.vmem [shape: bf16[32,512], index: 0, kind: input, shape index: {}]
  %s1 = inlined_call_operand.vmem [shape: bf16[512,512], index: 1, kind: input, shape index: {}]
  %s2 = inlined_call_operand.vmem [shape: f32[1,512], index: 2, kind: input, shape index: {}]
  %s3 = inlined_call_operand.vmem [shape: bf16[32,512], index: 3, kind: output, shape index: {}]
  %s4 = sld [smem:[#allocation0]]
  $region30: #{vae_forward.11} parent=0
    _
  %s6 = ssub.s32 1, %s4
  %s7 = scalar_select 0, %s6, %s4
  // Predicated region
  $region2: #{vae_forward.11} parent=0 // pred_check
    _
  $region3: #{vae_forward.11} parent=0 // pred_check_branch
    %9 = sbr.rel (0) target = $region5
  $region4: #{vae_forward.11} parent=0 // pred_region
    _
  $region5: #{vae_forward.11} parent=0 // pred_fallthru
    _
  // Predicated region
  $region6: #{vae_forward.11} parent=0 // pred_check
    _
  $region7: #{vae_forward.11} parent=0 // pred_check_branch
    %11 = sbr.rel (0) target = $region9
  $region8: #{vae_forward.11} parent=0 // pred_region
    _
  $region9: #{vae_forward.11} parent=0 // pred_fallthru
    _
  // Predicated region
  $region10: #{vae_forward.11} parent=0 // pred_check
    _
  $region11: #{vae_forward.11} parent=0 // pred_check_branch
    %13 = sbr.rel (0) target = $region13
  $region12: #{vae_forward.11} parent=0 // pred_region
    _
  $region13: #{vae_forward.11} parent=0 // pred_fallthru
    _
  %p14 = scmp.eq.s32.totalorder 0, 0
  // Predicated region
  $region14: #{vae_forward.11} parent=0 // pred_check
    %p15 = pneg %p14
  $region15: #{vae_forward.11} parent=0 // pred_check_branch
    %17 = sbr.rel (%p15) target = $region17
  $region16: #{vae_forward.11} parent=0 // pred_region
    %18 = vst [vmem:[#allocation2] sm:$0xff] 0.0
    %19 = vst [vmem:[#allocation2 + $0x8] sm:$0xff] 0.0
    %20 = vst [vmem:[#allocation2 + $0x10] sm:$0xff] 0.0
    %21 = vst [vmem:[#allocation2 + $0x18] sm:$0xff] 0.0
    %22 = vst [vmem:[#allocation2 + $0x20] sm:$0xff] 0.0
    %23 = vst [vmem:[#allocation2 + $0x28] sm:$0xff] 0.0
    %24 = vst [vmem:[#allocation2 + $0x30] sm:$0xff] 0.0
    %25 = vst [vmem:[#allocation2 + $0x38] sm:$0xff] 0.0
    %26 = vst [vmem:[#allocation2 + $0x40] sm:$0xff] 0.0
    %27 = vst [vmem:[#allocation2 + $0x48] sm:$0xff] 0.0
    %28 = vst [vmem:[#allocation2 + $0x50] sm:$0xff] 0.0
    %29 = vst [vmem:[#allocation2 + $0x58] sm:$0xff] 0.0
    %30 = vst [vmem:[#allocation2 + $0x60] sm:$0xff] 0.0
    %31 = vst [vmem:[#allocation2 + $0x68] sm:$0xff] 0.0
    %32 = vst [vmem:[#allocation2 + $0x70] sm:$0xff] 0.0
    %33 = vst [vmem:[#allocation2 + $0x78] sm:$0xff] 0.0
  $region17: #{vae_forward.11} parent=0 // pred_fallthru
    _
  %v34 = vld [vmem:[#allocation2] sm:$0xff]
  %v35 = vld [vmem:[#allocation2 + $0x8] sm:$0xff]
  %v36 = vld [vmem:[#allocation2 + $0x10] sm:$0xff]
  %v37 = vld [vmem:[#allocation2 + $0x18] sm:$0xff]
  %v38 = vld [vmem:[#allocation2 + $0x20] sm:$0xff]
  %v39 = vld [vmem:[#allocation2 + $0x28] sm:$0xff]
  %v40 = vld [vmem:[#allocation2 + $0x30] sm:$0xff]
  %v41 = vld [vmem:[#allocation2 + $0x38] sm:$0xff]
  %v42 = vld [vmem:[#allocation2 + $0x40] sm:$0xff]
  %v43 = vld [vmem:[#allocation2 + $0x48] sm:$0xff]
  %v44 = vld [vmem:[#allocation2 + $0x50] sm:$0xff]
  %v45 = vld [vmem:[#allocation2 + $0x58] sm:$0xff]
  %v46 = vld [vmem:[#allocation2 + $0x60] sm:$0xff]
  %v47 = vld [vmem:[#allocation2 + $0x68] sm:$0xff]
  %v48 = vld [vmem:[#allocation2 + $0x70] sm:$0xff]
  %v49 = vld [vmem:[#allocation2 + $0x78] sm:$0xff]
  %v50 = vld [vmem:[%s0] sm:$0xff]
  %v51 = vld [vmem:[%s0 + $0x8] sm:$0xff]
  %v52 = vld [vmem:[%s0 + $0x10] sm:$0xff]
  %v53 = vld [vmem:[%s0 + $0x18] sm:$0xff]
  %v54 = vld [vmem:[%s0 + $0x20] sm:$0xff]
  %v55 = vld [vmem:[%s0 + $0x28] sm:$0xff]
  %v56 = vld [vmem:[%s0 + $0x30] sm:$0xff]
  %v57 = vld [vmem:[%s0 + $0x38] sm:$0xff]
  %v58 = vld [vmem:[%s1] sm:$0xff]
  %v59 = vld [vmem:[%s1 + $0x8] sm:$0xff]
  %v60 = vld [vmem:[%s1 + $0x10] sm:$0xff]
  %v61 = vld [vmem:[%s1 + $0x18] sm:$0xff]
  %v62 = vld [vmem:[%s1 + $0x20] sm:$0xff]
  %v63 = vld [vmem:[%s1 + $0x28] sm:$0xff]
  %v64 = vld [vmem:[%s1 + $0x30] sm:$0xff]
  %v65 = vld [vmem:[%s1 + $0x38] sm:$0xff]
  %v66 = vld [vmem:[%s1 + $0x40] sm:$0xff]
  %v67 = vld [vmem:[%s1 + $0x48] sm:$0xff]
  %v68 = vld [vmem:[%s1 + $0x50] sm:$0xff]
  %v69 = vld [vmem:[%s1 + $0x58] sm:$0xff]
  %v70 = vld [vmem:[%s1 + $0x60] sm:$0xff]
  %v71 = vld [vmem:[%s1 + $0x68] sm:$0xff]
  %v72 = vld [vmem:[%s1 + $0x70] sm:$0xff]
  %v73 = vld [vmem:[%s1 + $0x78] sm:$0xff]
  %v74 = vld [vmem:[%s1 + $0x80] sm:$0xff]
  %v75 = vld [vmem:[%s1 + $0x88] sm:$0xff]
  %v76 = vld [vmem:[%s1 + $0x90] sm:$0xff]
  %v77 = vld [vmem:[%s1 + $0x98] sm:$0xff]
  %v78 = vld [vmem:[%s1 + $0xa0] sm:$0xff]
  %v79 = vld [vmem:[%s1 + $0xa8] sm:$0xff]
  %v80 = vld [vmem:[%s1 + $0xb0] sm:$0xff]
  %v81 = vld [vmem:[%s1 + $0xb8] sm:$0xff]
  %v82 = vld [vmem:[%s1 + $0xc0] sm:$0xff]
  %v83 = vld [vmem:[%s1 + $0xc8] sm:$0xff]
  %v84 = vld [vmem:[%s1 + $0xd0] sm:$0xff]
  %v85 = vld [vmem:[%s1 + $0xd8] sm:$0xff]
  %v86 = vld [vmem:[%s1 + $0xe0] sm:$0xff]
  %v87 = vld [vmem:[%s1 + $0xe8] sm:$0xff]
  %v88 = vld [vmem:[%s1 + $0xf0] sm:$0xff]
  %v89 = vld [vmem:[%s1 + $0xf8] sm:$0xff]
  %v90 = vld [vmem:[%s1 + $0x100] sm:$0xff]
  %v91 = vld [vmem:[%s1 + $0x108] sm:$0xff]
  %v92 = vld [vmem:[%s1 + $0x110] sm:$0xff]
  %v93 = vld [vmem:[%s1 + $0x118] sm:$0xff]
  %v94 = vld [vmem:[%s1 + $0x120] sm:$0xff]
  %v95 = vld [vmem:[%s1 + $0x128] sm:$0xff]
  %v96 = vld [vmem:[%s1 + $0x130] sm:$0xff]
  %v97 = vld [vmem:[%s1 + $0x138] sm:$0xff]
  %v98 = vld [vmem:[%s1 + $0x140] sm:$0xff]
  %v99 = vld [vmem:[%s1 + $0x148] sm:$0xff]
  %v100 = vld [vmem:[%s1 + $0x150] sm:$0xff]
  %v101 = vld [vmem:[%s1 + $0x158] sm:$0xff]
  %v102 = vld [vmem:[%s1 + $0x160] sm:$0xff]
  %v103 = vld [vmem:[%s1 + $0x168] sm:$0xff]
  %v104 = vld [vmem:[%s1 + $0x170] sm:$0xff]
  %v105 = vld [vmem:[%s1 + $0x178] sm:$0xff]
  %v106 = vld [vmem:[%s1 + $0x180] sm:$0xff]
  %v107 = vld [vmem:[%s1 + $0x188] sm:$0xff]
  %v108 = vld [vmem:[%s1 + $0x190] sm:$0xff]
  %v109 = vld [vmem:[%s1 + $0x198] sm:$0xff]
  %v110 = vld [vmem:[%s1 + $0x1a0] sm:$0xff]
  %v111 = vld [vmem:[%s1 + $0x1a8] sm:$0xff]
  %v112 = vld [vmem:[%s1 + $0x1b0] sm:$0xff]
  %v113 = vld [vmem:[%s1 + $0x1b8] sm:$0xff]
  %v114 = vld [vmem:[%s1 + $0x1c0] sm:$0xff]
  %v115 = vld [vmem:[%s1 + $0x1c8] sm:$0xff]
  %v116 = vld [vmem:[%s1 + $0x1d0] sm:$0xff]
  %v117 = vld [vmem:[%s1 + $0x1d8] sm:$0xff]
  %v118 = vld [vmem:[%s1 + $0x1e0] sm:$0xff]
  %v119 = vld [vmem:[%s1 + $0x1e8] sm:$0xff]
  %v120 = vld [vmem:[%s1 + $0x1f0] sm:$0xff]
  %v121 = vld [vmem:[%s1 + $0x1f8] sm:$0xff]
  %v122 = vld [vmem:[%s1 + $0x200] sm:$0xff]
  %v123 = vld [vmem:[%s1 + $0x208] sm:$0xff]
  %v124 = vld [vmem:[%s1 + $0x210] sm:$0xff]
  %v125 = vld [vmem:[%s1 + $0x218] sm:$0xff]
  %v126 = vld [vmem:[%s1 + $0x220] sm:$0xff]
  %v127 = vld [vmem:[%s1 + $0x228] sm:$0xff]
  %v128 = vld [vmem:[%s1 + $0x230] sm:$0xff]
  %v129 = vld [vmem:[%s1 + $0x238] sm:$0xff]
  %v130 = vld [vmem:[%s1 + $0x240] sm:$0xff]
  %v131 = vld [vmem:[%s1 + $0x248] sm:$0xff]
  %v132 = vld [vmem:[%s1 + $0x250] sm:$0xff]
  %v133 = vld [vmem:[%s1 + $0x258] sm:$0xff]
  %v134 = vld [vmem:[%s1 + $0x260] sm:$0xff]
  %v135 = vld [vmem:[%s1 + $0x268] sm:$0xff]
  %v136 = vld [vmem:[%s1 + $0x270] sm:$0xff]
  %v137 = vld [vmem:[%s1 + $0x278] sm:$0xff]
  %v138 = vld [vmem:[%s1 + $0x280] sm:$0xff]
  %v139 = vld [vmem:[%s1 + $0x288] sm:$0xff]
  %v140 = vld [vmem:[%s1 + $0x290] sm:$0xff]
  %v141 = vld [vmem:[%s1 + $0x298] sm:$0xff]
  %v142 = vld [vmem:[%s1 + $0x2a0] sm:$0xff]
  %v143 = vld [vmem:[%s1 + $0x2a8] sm:$0xff]
  %v144 = vld [vmem:[%s1 + $0x2b0] sm:$0xff]
  %v145 = vld [vmem:[%s1 + $0x2b8] sm:$0xff]
  %v146 = vld [vmem:[%s1 + $0x2c0] sm:$0xff]
  %v147 = vld [vmem:[%s1 + $0x2c8] sm:$0xff]
  %v148 = vld [vmem:[%s1 + $0x2d0] sm:$0xff]
  %v149 = vld [vmem:[%s1 + $0x2d8] sm:$0xff]
  %v150 = vld [vmem:[%s1 + $0x2e0] sm:$0xff]
  %v151 = vld [vmem:[%s1 + $0x2e8] sm:$0xff]
  %v152 = vld [vmem:[%s1 + $0x2f0] sm:$0xff]
  %v153 = vld [vmem:[%s1 + $0x2f8] sm:$0xff]
  %v154 = vld [vmem:[%s1 + $0x300] sm:$0xff]
  %v155 = vld [vmem:[%s1 + $0x308] sm:$0xff]
  %v156 = vld [vmem:[%s1 + $0x310] sm:$0xff]
  %v157 = vld [vmem:[%s1 + $0x318] sm:$0xff]
  %v158 = vld [vmem:[%s1 + $0x320] sm:$0xff]
  %v159 = vld [vmem:[%s1 + $0x328] sm:$0xff]
  %v160 = vld [vmem:[%s1 + $0x330] sm:$0xff]
  %v161 = vld [vmem:[%s1 + $0x338] sm:$0xff]
  %v162 = vld [vmem:[%s1 + $0x340] sm:$0xff]
  %v163 = vld [vmem:[%s1 + $0x348] sm:$0xff]
  %v164 = vld [vmem:[%s1 + $0x350] sm:$0xff]
  %v165 = vld [vmem:[%s1 + $0x358] sm:$0xff]
  %v166 = vld [vmem:[%s1 + $0x360] sm:$0xff]
  %v167 = vld [vmem:[%s1 + $0x368] sm:$0xff]
  %v168 = vld [vmem:[%s1 + $0x370] sm:$0xff]
  %v169 = vld [vmem:[%s1 + $0x378] sm:$0xff]
  %v170 = vld [vmem:[%s1 + $0x380] sm:$0xff]
  %v171 = vld [vmem:[%s1 + $0x388] sm:$0xff]
  %v172 = vld [vmem:[%s1 + $0x390] sm:$0xff]
  %v173 = vld [vmem:[%s1 + $0x398] sm:$0xff]
  %v174 = vld [vmem:[%s1 + $0x3a0] sm:$0xff]
  %v175 = vld [vmem:[%s1 + $0x3a8] sm:$0xff]
  %v176 = vld [vmem:[%s1 + $0x3b0] sm:$0xff]
  %v177 = vld [vmem:[%s1 + $0x3b8] sm:$0xff]
  %v178 = vld [vmem:[%s1 + $0x3c0] sm:$0xff]
  %v179 = vld [vmem:[%s1 + $0x3c8] sm:$0xff]
  %v180 = vld [vmem:[%s1 + $0x3d0] sm:$0xff]
  %v181 = vld [vmem:[%s1 + $0x3d8] sm:$0xff]
  %v182 = vld [vmem:[%s1 + $0x3e0] sm:$0xff]
  %v183 = vld [vmem:[%s1 + $0x3e8] sm:$0xff]
  %v184 = vld [vmem:[%s1 + $0x3f0] sm:$0xff]
  %v185 = vld [vmem:[%s1 + $0x3f8] sm:$0xff]
  %v194 = vunpack.c.l.b16 %v50
  %v195 = vunpack.c.h.b16 %v50
  %v196 = vunpack.c.l.b16 %v51
  %v197 = vunpack.c.h.b16 %v51
  %v198 = vunpack.c.l.b16 %v52
  %v199 = vunpack.c.h.b16 %v52
  %v200 = vunpack.c.l.b16 %v53
  %v201 = vunpack.c.h.b16 %v53
  %v202 = vunpack.c.l.b16 %v54
  %v203 = vunpack.c.h.b16 %v54
  %v204 = vunpack.c.l.b16 %v55
  %v205 = vunpack.c.h.b16 %v55
  %v206 = vunpack.c.l.b16 %v56
  %v207 = vunpack.c.h.b16 %v56
  %v208 = vunpack.c.l.b16 %v57
  %v209 = vunpack.c.h.b16 %v57
  %v210 = vpack.c.b16 %v198, %v194
  %v211 = vpack.c.b16 %v199, %v195
  %v212 = vpack.c.b16 %v200, %v196
  %v213 = vpack.c.b16 %v201, %v197
  %v214 = vpack.c.b16 %v206, %v202
  %v215 = vpack.c.b16 %v207, %v203
  %v216 = vpack.c.b16 %v208, %v204
  %v217 = vpack.c.b16 %v209, %v205
  %v354 = vunpack.c.l.b16 %v58
  %v355 = vunpack.c.h.b16 %v58
  %v356 = vunpack.c.l.b16 %v59
  %v357 = vunpack.c.h.b16 %v59
  %v358 = vunpack.c.l.b16 %v60
  %v359 = vunpack.c.h.b16 %v60
  %v360 = vunpack.c.l.b16 %v61
  %v361 = vunpack.c.h.b16 %v61
  %v362 = vunpack.c.l.b16 %v62
  %v363 = vunpack.c.h.b16 %v62
  %v364 = vunpack.c.l.b16 %v63
  %v365 = vunpack.c.h.b16 %v63
  %v366 = vunpack.c.l.b16 %v64
  %v367 = vunpack.c.h.b16 %v64
  %v368 = vunpack.c.l.b16 %v65
  %v369 = vunpack.c.h.b16 %v65
  %v370 = vunpack.c.l.b16 %v66
  %v371 = vunpack.c.h.b16 %v66
  %v372 = vunpack.c.l.b16 %v67
  %v373 = vunpack.c.h.b16 %v67
  %v374 = vunpack.c.l.b16 %v68
  %v375 = vunpack.c.h.b16 %v68
  %v376 = vunpack.c.l.b16 %v69
  %v377 = vunpack.c.h.b16 %v69
  %v378 = vunpack.c.l.b16 %v70
  %v379 = vunpack.c.h.b16 %v70
  %v380 = vunpack.c.l.b16 %v71
  %v381 = vunpack.c.h.b16 %v71
  %v382 = vunpack.c.l.b16 %v72
  %v383 = vunpack.c.h.b16 %v72
  %v384 = vunpack.c.l.b16 %v73
  %v385 = vunpack.c.h.b16 %v73
  %v386 = vunpack.c.l.b16 %v74
  %v387 = vunpack.c.h.b16 %v74
  %v388 = vunpack.c.l.b16 %v75
  %v389 = vunpack.c.h.b16 %v75
  %v390 = vunpack.c.l.b16 %v76
  %v391 = vunpack.c.h.b16 %v76
  %v392 = vunpack.c.l.b16 %v77
  %v393 = vunpack.c.h.b16 %v77
  %v394 = vunpack.c.l.b16 %v78
  %v395 = vunpack.c.h.b16 %v78
  %v396 = vunpack.c.l.b16 %v79
  %v397 = vunpack.c.h.b16 %v79
  %v398 = vunpack.c.l.b16 %v80
  %v399 = vunpack.c.h.b16 %v80
  %v400 = vunpack.c.l.b16 %v81
  %v401 = vunpack.c.h.b16 %v81
  %v402 = vunpack.c.l.b16 %v82
  %v403 = vunpack.c.h.b16 %v82
  %v404 = vunpack.c.l.b16 %v83
  %v405 = vunpack.c.h.b16 %v83
  %v406 = vunpack.c.l.b16 %v84
  %v407 = vunpack.c.h.b16 %v84
  %v408 = vunpack.c.l.b16 %v85
  %v409 = vunpack.c.h.b16 %v85
  %v410 = vunpack.c.l.b16 %v86
  %v411 = vunpack.c.h.b16 %v86
  %v412 = vunpack.c.l.b16 %v87
  %v413 = vunpack.c.h.b16 %v87
  %v414 = vunpack.c.l.b16 %v88
  %v415 = vunpack.c.h.b16 %v88
  %v416 = vunpack.c.l.b16 %v89
  %v417 = vunpack.c.h.b16 %v89
  %v418 = vunpack.c.l.b16 %v90
  %v419 = vunpack.c.h.b16 %v90
  %v420 = vunpack.c.l.b16 %v91
  %v421 = vunpack.c.h.b16 %v91
  %v422 = vunpack.c.l.b16 %v92
  %v423 = vunpack.c.h.b16 %v92
  %v424 = vunpack.c.l.b16 %v93
  %v425 = vunpack.c.h.b16 %v93
  %v426 = vunpack.c.l.b16 %v94
  %v427 = vunpack.c.h.b16 %v94
  %v428 = vunpack.c.l.b16 %v95
  %v429 = vunpack.c.h.b16 %v95
  %v430 = vunpack.c.l.b16 %v96
  %v431 = vunpack.c.h.b16 %v96
  %v432 = vunpack.c.l.b16 %v97
  %v433 = vunpack.c.h.b16 %v97
  %v434 = vunpack.c.l.b16 %v98
  %v435 = vunpack.c.h.b16 %v98
  %v436 = vunpack.c.l.b16 %v99
  %v437 = vunpack.c.h.b16 %v99
  %v438 = vunpack.c.l.b16 %v100
  %v439 = vunpack.c.h.b16 %v100
  %v440 = vunpack.c.l.b16 %v101
  %v441 = vunpack.c.h.b16 %v101
  %v442 = vunpack.c.l.b16 %v102
  %v443 = vunpack.c.h.b16 %v102
  %v444 = vunpack.c.l.b16 %v103
  %v445 = vunpack.c.h.b16 %v103
  %v446 = vunpack.c.l.b16 %v104
  %v447 = vunpack.c.h.b16 %v104
  %v448 = vunpack.c.l.b16 %v105
  %v449 = vunpack.c.h.b16 %v105
  %v450 = vunpack.c.l.b16 %v106
  %v451 = vunpack.c.h.b16 %v106
  %v452 = vunpack.c.l.b16 %v107
  %v453 = vunpack.c.h.b16 %v107
  %v454 = vunpack.c.l.b16 %v108
  %v455 = vunpack.c.h.b16 %v108
  %v456 = vunpack.c.l.b16 %v109
  %v457 = vunpack.c.h.b16 %v109
  %v458 = vunpack.c.l.b16 %v110
  %v459 = vunpack.c.h.b16 %v110
  %v460 = vunpack.c.l.b16 %v111
  %v461 = vunpack.c.h.b16 %v111
  %v462 = vunpack.c.l.b16 %v112
  %v463 = vunpack.c.h.b16 %v112
  %v464 = vunpack.c.l.b16 %v113
  %v465 = vunpack.c.h.b16 %v113
  %v466 = vunpack.c.l.b16 %v114
  %v467 = vunpack.c.h.b16 %v114
  %v468 = vunpack.c.l.b16 %v115
  %v469 = vunpack.c.h.b16 %v115
  %v470 = vunpack.c.l.b16 %v116
  %v471 = vunpack.c.h.b16 %v116
  %v472 = vunpack.c.l.b16 %v117
  %v473 = vunpack.c.h.b16 %v117
  %v474 = vunpack.c.l.b16 %v118
  %v475 = vunpack.c.h.b16 %v118
  %v476 = vunpack.c.l.b16 %v119
  %v477 = vunpack.c.h.b16 %v119
  %v478 = vunpack.c.l.b16 %v120
  %v479 = vunpack.c.h.b16 %v120
  %v480 = vunpack.c.l.b16 %v121
  %v481 = vunpack.c.h.b16 %v121
  %v482 = vunpack.c.l.b16 %v122
  %v483 = vunpack.c.h.b16 %v122
  %v484 = vunpack.c.l.b16 %v123
  %v485 = vunpack.c.h.b16 %v123
  %v486 = vunpack.c.l.b16 %v124
  %v487 = vunpack.c.h.b16 %v124
  %v488 = vunpack.c.l.b16 %v125
  %v489 = vunpack.c.h.b16 %v125
  %v490 = vunpack.c.l.b16 %v126
  %v491 = vunpack.c.h.b16 %v126
  %v492 = vunpack.c.l.b16 %v127
  %v493 = vunpack.c.h.b16 %v127
  %v494 = vunpack.c.l.b16 %v128
  %v495 = vunpack.c.h.b16 %v128
  %v496 = vunpack.c.l.b16 %v129
  %v497 = vunpack.c.h.b16 %v129
  %v498 = vunpack.c.l.b16 %v130
  %v499 = vunpack.c.h.b16 %v130
  %v500 = vunpack.c.l.b16 %v131
  %v501 = vunpack.c.h.b16 %v131
  %v502 = vunpack.c.l.b16 %v132
  %v503 = vunpack.c.h.b16 %v132
  %v504 = vunpack.c.l.b16 %v133
  %v505 = vunpack.c.h.b16 %v133
  %v506 = vunpack.c.l.b16 %v134
  %v507 = vunpack.c.h.b16 %v134
  %v508 = vunpack.c.l.b16 %v135
  %v509 = vunpack.c.h.b16 %v135
  %v510 = vunpack.c.l.b16 %v136
  %v511 = vunpack.c.h.b16 %v136
  %v512 = vunpack.c.l.b16 %v137
  %v513 = vunpack.c.h.b16 %v137
  %v514 = vunpack.c.l.b16 %v138
  %v515 = vunpack.c.h.b16 %v138
  %v516 = vunpack.c.l.b16 %v139
  %v517 = vunpack.c.h.b16 %v139
  %v518 = vunpack.c.l.b16 %v140
  %v519 = vunpack.c.h.b16 %v140
  %v520 = vunpack.c.l.b16 %v141
  %v521 = vunpack.c.h.b16 %v141
  %v522 = vunpack.c.l.b16 %v142
  %v523 = vunpack.c.h.b16 %v142
  %v524 = vunpack.c.l.b16 %v143
  %v525 = vunpack.c.h.b16 %v143
  %v526 = vunpack.c.l.b16 %v144
  %v527 = vunpack.c.h.b16 %v144
  %v528 = vunpack.c.l.b16 %v145
  %v529 = vunpack.c.h.b16 %v145
  %v530 = vunpack.c.l.b16 %v146
  %v531 = vunpack.c.h.b16 %v146
  %v532 = vunpack.c.l.b16 %v147
  %v533 = vunpack.c.h.b16 %v147
  %v534 = vunpack.c.l.b16 %v148
  %v535 = vunpack.c.h.b16 %v148
  %v536 = vunpack.c.l.b16 %v149
  %v537 = vunpack.c.h.b16 %v149
  %v538 = vunpack.c.l.b16 %v150
  %v539 = vunpack.c.h.b16 %v150
  %v540 = vunpack.c.l.b16 %v151
  %v541 = vunpack.c.h.b16 %v151
  %v542 = vunpack.c.l.b16 %v152
  %v543 = vunpack.c.h.b16 %v152
  %v544 = vunpack.c.l.b16 %v153
  %v545 = vunpack.c.h.b16 %v153
  %v546 = vunpack.c.l.b16 %v154
  %v547 = vunpack.c.h.b16 %v154
  %v548 = vunpack.c.l.b16 %v155
  %v549 = vunpack.c.h.b16 %v155
  %v550 = vunpack.c.l.b16 %v156
  %v551 = vunpack.c.h.b16 %v156
  %v552 = vunpack.c.l.b16 %v157
  %v553 = vunpack.c.h.b16 %v157
  %v554 = vunpack.c.l.b16 %v158
  %v555 = vunpack.c.h.b16 %v158
  %v556 = vunpack.c.l.b16 %v159
  %v557 = vunpack.c.h.b16 %v159
  %v558 = vunpack.c.l.b16 %v160
  %v559 = vunpack.c.h.b16 %v160
  %v560 = vunpack.c.l.b16 %v161
  %v561 = vunpack.c.h.b16 %v161
  %v562 = vunpack.c.l.b16 %v162
  %v563 = vunpack.c.h.b16 %v162
  %v564 = vunpack.c.l.b16 %v163
  %v565 = vunpack.c.h.b16 %v163
  %v566 = vunpack.c.l.b16 %v164
  %v567 = vunpack.c.h.b16 %v164
  %v568 = vunpack.c.l.b16 %v165
  %v569 = vunpack.c.h.b16 %v165
  %v570 = vunpack.c.l.b16 %v166
  %v571 = vunpack.c.h.b16 %v166
  %v572 = vunpack.c.l.b16 %v167
  %v573 = vunpack.c.h.b16 %v167
  %v574 = vunpack.c.l.b16 %v168
  %v575 = vunpack.c.h.b16 %v168
  %v576 = vunpack.c.l.b16 %v169
  %v577 = vunpack.c.h.b16 %v169
  %v578 = vunpack.c.l.b16 %v170
  %v579 = vunpack.c.h.b16 %v170
  %v580 = vunpack.c.l.b16 %v171
  %v581 = vunpack.c.h.b16 %v171
  %v582 = vunpack.c.l.b16 %v172
  %v583 = vunpack.c.h.b16 %v172
  %v584 = vunpack.c.l.b16 %v173
  %v585 = vunpack.c.h.b16 %v173
  %v586 = vunpack.c.l.b16 %v174
  %v587 = vunpack.c.h.b16 %v174
  %v588 = vunpack.c.l.b16 %v175
  %v589 = vunpack.c.h.b16 %v175
  %v590 = vunpack.c.l.b16 %v176
  %v591 = vunpack.c.h.b16 %v176
  %v592 = vunpack.c.l.b16 %v177
  %v593 = vunpack.c.h.b16 %v177
  %v594 = vunpack.c.l.b16 %v178
  %v595 = vunpack.c.h.b16 %v178
  %v596 = vunpack.c.l.b16 %v179
  %v597 = vunpack.c.h.b16 %v179
  %v598 = vunpack.c.l.b16 %v180
  %v599 = vunpack.c.h.b16 %v180
  %v600 = vunpack.c.l.b16 %v181
  %v601 = vunpack.c.h.b16 %v181
  %v602 = vunpack.c.l.b16 %v182
  %v603 = vunpack.c.h.b16 %v182
  %v604 = vunpack.c.l.b16 %v183
  %v605 = vunpack.c.h.b16 %v183
  %v606 = vunpack.c.l.b16 %v184
  %v607 = vunpack.c.h.b16 %v184
  %v608 = vunpack.c.l.b16 %v185
  %v609 = vunpack.c.h.b16 %v185
  %v610 = vpack.c.b16 %v358, %v354
  %v611 = vpack.c.b16 %v359, %v355
  %v612 = vpack.c.b16 %v360, %v356
  %v613 = vpack.c.b16 %v361, %v357
  %v614 = vpack.c.b16 %v366, %v362
  %v615 = vpack.c.b16 %v367, %v363
  %v616 = vpack.c.b16 %v368, %v364
  %v617 = vpack.c.b16 %v369, %v365
  %v618 = vpack.c.b16 %v374, %v370
  %v619 = vpack.c.b16 %v375, %v371
  %v620 = vpack.c.b16 %v376, %v372
  %v621 = vpack.c.b16 %v377, %v373
  %v622 = vpack.c.b16 %v382, %v378
  %v623 = vpack.c.b16 %v383, %v379
  %v624 = vpack.c.b16 %v384, %v380
  %v625 = vpack.c.b16 %v385, %v381
  %v626 = vpack.c.b16 %v390, %v386
  %v627 = vpack.c.b16 %v391, %v387
  %v628 = vpack.c.b16 %v392, %v388
  %v629 = vpack.c.b16 %v393, %v389
  %v630 = vpack.c.b16 %v398, %v394
  %v631 = vpack.c.b16 %v399, %v395
  %v632 = vpack.c.b16 %v400, %v396
  %v633 = vpack.c.b16 %v401, %v397
  %v634 = vpack.c.b16 %v406, %v402
  %v635 = vpack.c.b16 %v407, %v403
  %v636 = vpack.c.b16 %v408, %v404
  %v637 = vpack.c.b16 %v409, %v405
  %v638 = vpack.c.b16 %v414, %v410
  %v639 = vpack.c.b16 %v415, %v411
  %v640 = vpack.c.b16 %v416, %v412
  %v641 = vpack.c.b16 %v417, %v413
  %v642 = vpack.c.b16 %v422, %v418
  %v643 = vpack.c.b16 %v423, %v419
  %v644 = vpack.c.b16 %v424, %v420
  %v645 = vpack.c.b16 %v425, %v421
  %v646 = vpack.c.b16 %v430, %v426
  %v647 = vpack.c.b16 %v431, %v427
  %v648 = vpack.c.b16 %v432, %v428
  %v649 = vpack.c.b16 %v433, %v429
  %v650 = vpack.c.b16 %v438, %v434
  %v651 = vpack.c.b16 %v439, %v435
  %v652 = vpack.c.b16 %v440, %v436
  %v653 = vpack.c.b16 %v441, %v437
  %v654 = vpack.c.b16 %v446, %v442
  %v655 = vpack.c.b16 %v447, %v443
  %v656 = vpack.c.b16 %v448, %v444
  %v657 = vpack.c.b16 %v449, %v445
  %v658 = vpack.c.b16 %v454, %v450
  %v659 = vpack.c.b16 %v455, %v451
  %v660 = vpack.c.b16 %v456, %v452
  %v661 = vpack.c.b16 %v457, %v453
  %v662 = vpack.c.b16 %v462, %v458
  %v663 = vpack.c.b16 %v463, %v459
  %v664 = vpack.c.b16 %v464, %v460
  %v665 = vpack.c.b16 %v465, %v461
  %v666 = vpack.c.b16 %v470, %v466
  %v667 = vpack.c.b16 %v471, %v467
  %v668 = vpack.c.b16 %v472, %v468
  %v669 = vpack.c.b16 %v473, %v469
  %v670 = vpack.c.b16 %v478, %v474
  %v671 = vpack.c.b16 %v479, %v475
  %v672 = vpack.c.b16 %v480, %v476
  %v673 = vpack.c.b16 %v481, %v477
  %v674 = vpack.c.b16 %v486, %v482
  %v675 = vpack.c.b16 %v487, %v483
  %v676 = vpack.c.b16 %v488, %v484
  %v677 = vpack.c.b16 %v489, %v485
  %v678 = vpack.c.b16 %v494, %v490
  %v679 = vpack.c.b16 %v495, %v491
  %v680 = vpack.c.b16 %v496, %v492
  %v681 = vpack.c.b16 %v497, %v493
  %v682 = vpack.c.b16 %v502, %v498
  %v683 = vpack.c.b16 %v503, %v499
  %v684 = vpack.c.b16 %v504, %v500
  %v685 = vpack.c.b16 %v505, %v501
  %v686 = vpack.c.b16 %v510, %v506
  %v687 = vpack.c.b16 %v511, %v507
  %v688 = vpack.c.b16 %v512, %v508
  %v689 = vpack.c.b16 %v513, %v509
  %v690 = vpack.c.b16 %v518, %v514
  %v691 = vpack.c.b16 %v519, %v515
  %v692 = vpack.c.b16 %v520, %v516
  %v693 = vpack.c.b16 %v521, %v517
  %v694 = vpack.c.b16 %v526, %v522
  %v695 = vpack.c.b16 %v527, %v523
  %v696 = vpack.c.b16 %v528, %v524
  %v697 = vpack.c.b16 %v529, %v525
  %v698 = vpack.c.b16 %v534, %v530
  %v699 = vpack.c.b16 %v535, %v531
  %v700 = vpack.c.b16 %v536, %v532
  %v701 = vpack.c.b16 %v537, %v533
  %v702 = vpack.c.b16 %v542, %v538
  %v703 = vpack.c.b16 %v543, %v539
  %v704 = vpack.c.b16 %v544, %v540
  %v705 = vpack.c.b16 %v545, %v541
  %v706 = vpack.c.b16 %v550, %v546
  %v707 = vpack.c.b16 %v551, %v547
  %v708 = vpack.c.b16 %v552, %v548
  %v709 = vpack.c.b16 %v553, %v549
  %v710 = vpack.c.b16 %v558, %v554
  %v711 = vpack.c.b16 %v559, %v555
  %v712 = vpack.c.b16 %v560, %v556
  %v713 = vpack.c.b16 %v561, %v557
  %v714 = vpack.c.b16 %v566, %v562
  %v715 = vpack.c.b16 %v567, %v563
  %v716 = vpack.c.b16 %v568, %v564
  %v717 = vpack.c.b16 %v569, %v565
  %v718 = vpack.c.b16 %v574, %v570
  %v719 = vpack.c.b16 %v575, %v571
  %v720 = vpack.c.b16 %v576, %v572
  %v721 = vpack.c.b16 %v577, %v573
  %v722 = vpack.c.b16 %v582, %v578
  %v723 = vpack.c.b16 %v583, %v579
  %v724 = vpack.c.b16 %v584, %v580
  %v725 = vpack.c.b16 %v585, %v581
  %v726 = vpack.c.b16 %v590, %v586
  %v727 = vpack.c.b16 %v591, %v587
  %v728 = vpack.c.b16 %v592, %v588
  %v729 = vpack.c.b16 %v593, %v589
  %v730 = vpack.c.b16 %v598, %v594
  %v731 = vpack.c.b16 %v599, %v595
  %v732 = vpack.c.b16 %v600, %v596
  %v733 = vpack.c.b16 %v601, %v597
  %v734 = vpack.c.b16 %v606, %v602
  %v735 = vpack.c.b16 %v607, %v603
  %v736 = vpack.c.b16 %v608, %v604
  %v737 = vpack.c.b16 %v609, %v605
  %866 = vmatpush.bf16.msra.mxu0 %v638
  %867 = vmatpush.bf16.msra.mxu0 %v634
  %868 = vmatpush.bf16.msra.mxu0 %v630
  %869 = vmatpush.bf16.msra.mxu0 %v626
  %870 = vmatpush.bf16.msra.mxu0 %v622
  %871 = vmatpush.bf16.msra.mxu0 %v618
  %872 = vmatpush.bf16.msra.mxu0 %v614
  %873 = vmatpush.bf16.msra.mxu0 %v610
  %874 = vmatmul.bf16.gmra.mxu0 %v210
  %v875 = vpop.f32.mrf.mxu0
  %v876 = vadd.f32 0.0, %v875
  %v877 = vpop.f32.mrf.mxu0
  %v878 = vadd.f32 0.0, %v877
  %879 = vmatmul.bf16.gmra.mxu0 %v214
  %v880 = vpop.f32.mrf.mxu0
  %v881 = vadd.f32 0.0, %v880
  %v882 = vpop.f32.mrf.mxu0
  %v883 = vadd.f32 0.0, %v882
  %884 = vdwg.mxu0
  %885 = vmatpush.bf16.msra.mxu0 %v670
  %886 = vmatpush.bf16.msra.mxu0 %v666
  %887 = vmatpush.bf16.msra.mxu0 %v662
  %888 = vmatpush.bf16.msra.mxu0 %v658
  %889 = vmatpush.bf16.msra.mxu0 %v654
  %890 = vmatpush.bf16.msra.mxu0 %v650
  %891 = vmatpush.bf16.msra.mxu0 %v646
  %892 = vmatpush.bf16.msra.mxu0 %v642
  %893 = vmatmul.bf16.gmra.mxu0 %v211
  %v894 = vpop.f32.mrf.mxu0
  %v895 = vadd.f32 %v876, %v894
  %v896 = vpop.f32.mrf.mxu0
  %v897 = vadd.f32 %v878, %v896
  %898 = vmatmul.bf16.gmra.mxu0 %v215
  %v899 = vpop.f32.mrf.mxu0
  %v900 = vadd.f32 %v881, %v899
  %v901 = vpop.f32.mrf.mxu0
  %v902 = vadd.f32 %v883, %v901
  %903 = vdwg.mxu0
  %904 = vmatpush.bf16.msra.mxu0 %v702
  %905 = vmatpush.bf16.msra.mxu0 %v698
  %906 = vmatpush.bf16.msra.mxu0 %v694
  %907 = vmatpush.bf16.msra.mxu0 %v690
  %908 = vmatpush.bf16.msra.mxu0 %v686
  %909 = vmatpush.bf16.msra.mxu0 %v682
  %910 = vmatpush.bf16.msra.mxu0 %v678
  %911 = vmatpush.bf16.msra.mxu0 %v674
  %912 = vmatmul.bf16.gmra.mxu0 %v212
  %v913 = vpop.f32.mrf.mxu0
  %v914 = vadd.f32 %v895, %v913
  %v915 = vpop.f32.mrf.mxu0
  %v916 = vadd.f32 %v897, %v915
  %917 = vmatmul.bf16.gmra.mxu0 %v216
  %v918 = vpop.f32.mrf.mxu0
  %v919 = vadd.f32 %v900, %v918
  %v920 = vpop.f32.mrf.mxu0
  %v921 = vadd.f32 %v902, %v920
  %922 = vdwg.mxu0
  %923 = vmatpush.bf16.msra.mxu0 %v734
  %924 = vmatpush.bf16.msra.mxu0 %v730
  %925 = vmatpush.bf16.msra.mxu0 %v726
  %926 = vmatpush.bf16.msra.mxu0 %v722
  %927 = vmatpush.bf16.msra.mxu0 %v718
  %928 = vmatpush.bf16.msra.mxu0 %v714
  %929 = vmatpush.bf16.msra.mxu0 %v710
  %930 = vmatpush.bf16.msra.mxu0 %v706
  %931 = vmatmul.bf16.gmra.mxu0 %v213
  %v932 = vpop.f32.mrf.mxu0
  %v933 = vadd.f32 %v914, %v932
  %v934 = vpop.f32.mrf.mxu0
  %v935 = vadd.f32 %v916, %v934
  %936 = vmatmul.bf16.gmra.mxu0 %v217
  %v937 = vpop.f32.mrf.mxu0
  %v938 = vadd.f32 %v919, %v937
  %v939 = vpop.f32.mrf.mxu0
  %v940 = vadd.f32 %v921, %v939
  %941 = vdwg.mxu0
  %942 = vmatpush.bf16.msra.mxu0 %v639
  %943 = vmatpush.bf16.msra.mxu0 %v635
  %944 = vmatpush.bf16.msra.mxu0 %v631
  %945 = vmatpush.bf16.msra.mxu0 %v627
  %946 = vmatpush.bf16.msra.mxu0 %v623
  %947 = vmatpush.bf16.msra.mxu0 %v619
  %948 = vmatpush.bf16.msra.mxu0 %v615
  %949 = vmatpush.bf16.msra.mxu0 %v611
  %950 = vmatmul.bf16.gmra.mxu0 %v210
  %v951 = vpop.f32.mrf.mxu0
  %v952 = vadd.f32 0.0, %v951
  %v953 = vpop.f32.mrf.mxu0
  %v954 = vadd.f32 0.0, %v953
  %955 = vmatmul.bf16.gmra.mxu0 %v214
  %v956 = vpop.f32.mrf.mxu0
  %v957 = vadd.f32 0.0, %v956
  %v958 = vpop.f32.mrf.mxu0
  %v959 = vadd.f32 0.0, %v958
  %960 = vdwg.mxu0
  %961 = vmatpush.bf16.msra.mxu0 %v671
  %962 = vmatpush.bf16.msra.mxu0 %v667
  %963 = vmatpush.bf16.msra.mxu0 %v663
  %964 = vmatpush.bf16.msra.mxu0 %v659
  %965 = vmatpush.bf16.msra.mxu0 %v655
  %966 = vmatpush.bf16.msra.mxu0 %v651
  %967 = vmatpush.bf16.msra.mxu0 %v647
  %968 = vmatpush.bf16.msra.mxu0 %v643
  %969 = vmatmul.bf16.gmra.mxu0 %v211
  %v970 = vpop.f32.mrf.mxu0
  %v971 = vadd.f32 %v952, %v970
  %v972 = vpop.f32.mrf.mxu0
  %v973 = vadd.f32 %v954, %v972
  %974 = vmatmul.bf16.gmra.mxu0 %v215
  %v975 = vpop.f32.mrf.mxu0
  %v976 = vadd.f32 %v957, %v975
  %v977 = vpop.f32.mrf.mxu0
  %v978 = vadd.f32 %v959, %v977
  %979 = vdwg.mxu0
  %980 = vmatpush.bf16.msra.mxu0 %v703
  %981 = vmatpush.bf16.msra.mxu0 %v699
  %982 = vmatpush.bf16.msra.mxu0 %v695
  %983 = vmatpush.bf16.msra.mxu0 %v691
  %984 = vmatpush.bf16.msra.mxu0 %v687
  %985 = vmatpush.bf16.msra.mxu0 %v683
  %986 = vmatpush.bf16.msra.mxu0 %v679
  %987 = vmatpush.bf16.msra.mxu0 %v675
  %988 = vmatmul.bf16.gmra.mxu0 %v212
  %v989 = vpop.f32.mrf.mxu0
  %v990 = vadd.f32 %v971, %v989
  %v991 = vpop.f32.mrf.mxu0
  %v992 = vadd.f32 %v973, %v991
  %993 = vmatmul.bf16.gmra.mxu0 %v216
  %v994 = vpop.f32.mrf.mxu0
  %v995 = vadd.f32 %v976, %v994
  %v996 = vpop.f32.mrf.mxu0
  %v997 = vadd.f32 %v978, %v996
  %998 = vdwg.mxu0
  %999 = vmatpush.bf16.msra.mxu0 %v735
  %1000 = vmatpush.bf16.msra.mxu0 %v731
  %1001 = vmatpush.bf16.msra.mxu0 %v727
  %1002 = vmatpush.bf16.msra.mxu0 %v723
  %1003 = vmatpush.bf16.msra.mxu0 %v719
  %1004 = vmatpush.bf16.msra.mxu0 %v715
  %1005 = vmatpush.bf16.msra.mxu0 %v711
  %1006 = vmatpush.bf16.msra.mxu0 %v707
  %1007 = vmatmul.bf16.gmra.mxu0 %v213
  %v1008 = vpop.f32.mrf.mxu0
  %v1009 = vadd.f32 %v990, %v1008
  %v1010 = vpop.f32.mrf.mxu0
  %v1011 = vadd.f32 %v992, %v1010
  %1012 = vmatmul.bf16.gmra.mxu0 %v217
  %v1013 = vpop.f32.mrf.mxu0
  %v1014 = vadd.f32 %v995, %v1013
  %v1015 = vpop.f32.mrf.mxu0
  %v1016 = vadd.f32 %v997, %v1015
  %1017 = vdwg.mxu0
  %1018 = vmatpush.bf16.msra.mxu0 %v640
  %1019 = vmatpush.bf16.msra.mxu0 %v636
  %1020 = vmatpush.bf16.msra.mxu0 %v632
  %1021 = vmatpush.bf16.msra.mxu0 %v628
  %1022 = vmatpush.bf16.msra.mxu0 %v624
  %1023 = vmatpush.bf16.msra.mxu0 %v620
  %1024 = vmatpush.bf16.msra.mxu0 %v616
  %1025 = vmatpush.bf16.msra.mxu0 %v612
  %1026 = vmatmul.bf16.gmra.mxu0 %v210
  %v1027 = vpop.f32.mrf.mxu0
  %v1028 = vadd.f32 0.0, %v1027
  %v1029 = vpop.f32.mrf.mxu0
  %v1030 = vadd.f32 0.0, %v1029
  %1031 = vmatmul.bf16.gmra.mxu0 %v214
  %v1032 = vpop.f32.mrf.mxu0
  %v1033 = vadd.f32 0.0, %v1032
  %v1034 = vpop.f32.mrf.mxu0
  %v1035 = vadd.f32 0.0, %v1034
  %1036 = vdwg.mxu0
  %1037 = vmatpush.bf16.msra.mxu0 %v672
  %1038 = vmatpush.bf16.msra.mxu0 %v668
  %1039 = vmatpush.bf16.msra.mxu0 %v664
  %1040 = vmatpush.bf16.msra.mxu0 %v660
  %1041 = vmatpush.bf16.msra.mxu0 %v656
  %1042 = vmatpush.bf16.msra.mxu0 %v652
  %1043 = vmatpush.bf16.msra.mxu0 %v648
  %1044 = vmatpush.bf16.msra.mxu0 %v644
  %1045 = vmatmul.bf16.gmra.mxu0 %v211
  %v1046 = vpop.f32.mrf.mxu0
  %v1047 = vadd.f32 %v1028, %v1046
  %v1048 = vpop.f32.mrf.mxu0
  %v1049 = vadd.f32 %v1030, %v1048
  %1050 = vmatmul.bf16.gmra.mxu0 %v215
  %v1051 = vpop.f32.mrf.mxu0
  %v1052 = vadd.f32 %v1033, %v1051
  %v1053 = vpop.f32.mrf.mxu0
  %v1054 = vadd.f32 %v1035, %v1053
  %1055 = vdwg.mxu0
  %1056 = vmatpush.bf16.msra.mxu0 %v704
  %1057 = vmatpush.bf16.msra.mxu0 %v700
  %1058 = vmatpush.bf16.msra.mxu0 %v696
  %1059 = vmatpush.bf16.msra.mxu0 %v692
  %1060 = vmatpush.bf16.msra.mxu0 %v688
  %1061 = vmatpush.bf16.msra.mxu0 %v684
  %1062 = vmatpush.bf16.msra.mxu0 %v680
  %1063 = vmatpush.bf16.msra.mxu0 %v676
  %1064 = vmatmul.bf16.gmra.mxu0 %v212
  %v1065 = vpop.f32.mrf.mxu0
  %v1066 = vadd.f32 %v1047, %v1065
  %v1067 = vpop.f32.mrf.mxu0
  %v1068 = vadd.f32 %v1049, %v1067
  %1069 = vmatmul.bf16.gmra.mxu0 %v216
  %v1070 = vpop.f32.mrf.mxu0
  %v1071 = vadd.f32 %v1052, %v1070
  %v1072 = vpop.f32.mrf.mxu0
  %v1073 = vadd.f32 %v1054, %v1072
  %1074 = vdwg.mxu0
  %1075 = vmatpush.bf16.msra.mxu0 %v736
  %1076 = vmatpush.bf16.msra.mxu0 %v732
  %1077 = vmatpush.bf16.msra.mxu0 %v728
  %1078 = vmatpush.bf16.msra.mxu0 %v724
  %1079 = vmatpush.bf16.msra.mxu0 %v720
  %1080 = vmatpush.bf16.msra.mxu0 %v716
  %1081 = vmatpush.bf16.msra.mxu0 %v712
  %1082 = vmatpush.bf16.msra.mxu0 %v708
  %1083 = vmatmul.bf16.gmra.mxu0 %v213
  %v1084 = vpop.f32.mrf.mxu0
  %v1085 = vadd.f32 %v1066, %v1084
  %v1086 = vpop.f32.mrf.mxu0
  %v1087 = vadd.f32 %v1068, %v1086
  %1088 = vmatmul.bf16.gmra.mxu0 %v217
  %v1089 = vpop.f32.mrf.mxu0
  %v1090 = vadd.f32 %v1071, %v1089
  %v1091 = vpop.f32.mrf.mxu0
  %v1092 = vadd.f32 %v1073, %v1091
  %1093 = vdwg.mxu0
  %1094 = vmatpush.bf16.msra.mxu0 %v641
  %1095 = vmatpush.bf16.msra.mxu0 %v637
  %1096 = vmatpush.bf16.msra.mxu0 %v633
  %1097 = vmatpush.bf16.msra.mxu0 %v629
  %1098 = vmatpush.bf16.msra.mxu0 %v625
  %1099 = vmatpush.bf16.msra.mxu0 %v621
  %1100 = vmatpush.bf16.msra.mxu0 %v617
  %1101 = vmatpush.bf16.msra.mxu0 %v613
  %1102 = vmatmul.bf16.gmra.mxu0 %v210
  %v1103 = vpop.f32.mrf.mxu0
  %v1104 = vadd.f32 0.0, %v1103
  %v1105 = vpop.f32.mrf.mxu0
  %v1106 = vadd.f32 0.0, %v1105
  %1107 = vmatmul.bf16.gmra.mxu0 %v214
  %v1108 = vpop.f32.mrf.mxu0
  %v1109 = vadd.f32 0.0, %v1108
  %v1110 = vpop.f32.mrf.mxu0
  %v1111 = vadd.f32 0.0, %v1110
  %1112 = vdwg.mxu0
  %1113 = vmatpush.bf16.msra.mxu0 %v673
  %1114 = vmatpush.bf16.msra.mxu0 %v669
  %1115 = vmatpush.bf16.msra.mxu0 %v665
  %1116 = vmatpush.bf16.msra.mxu0 %v661
  %1117 = vmatpush.bf16.msra.mxu0 %v657
  %1118 = vmatpush.bf16.msra.mxu0 %v653
  %1119 = vmatpush.bf16.msra.mxu0 %v649
  %1120 = vmatpush.bf16.msra.mxu0 %v645
  %1121 = vmatmul.bf16.gmra.mxu0 %v211
  %v1122 = vpop.f32.mrf.mxu0
  %v1123 = vadd.f32 %v1104, %v1122
  %v1124 = vpop.f32.mrf.mxu0
  %v1125 = vadd.f32 %v1106, %v1124
  %1126 = vmatmul.bf16.gmra.mxu0 %v215
  %v1127 = vpop.f32.mrf.mxu0
  %v1128 = vadd.f32 %v1109, %v1127
  %v1129 = vpop.f32.mrf.mxu0
  %v1130 = vadd.f32 %v1111, %v1129
  %1131 = vdwg.mxu0
  %1132 = vmatpush.bf16.msra.mxu0 %v705
  %1133 = vmatpush.bf16.msra.mxu0 %v701
  %1134 = vmatpush.bf16.msra.mxu0 %v697
  %1135 = vmatpush.bf16.msra.mxu0 %v693
  %1136 = vmatpush.bf16.msra.mxu0 %v689
  %1137 = vmatpush.bf16.msra.mxu0 %v685
  %1138 = vmatpush.bf16.msra.mxu0 %v681
  %1139 = vmatpush.bf16.msra.mxu0 %v677
  %1140 = vmatmul.bf16.gmra.mxu0 %v212
  %v1141 = vpop.f32.mrf.mxu0
  %v1142 = vadd.f32 %v1123, %v1141
  %v1143 = vpop.f32.mrf.mxu0
  %v1144 = vadd.f32 %v1125, %v1143
  %1145 = vmatmul.bf16.gmra.mxu0 %v216
  %v1146 = vpop.f32.mrf.mxu0
  %v1147 = vadd.f32 %v1128, %v1146
  %v1148 = vpop.f32.mrf.mxu0
  %v1149 = vadd.f32 %v1130, %v1148
  %1150 = vdwg.mxu0
  %1151 = vmatpush.bf16.msra.mxu0 %v737
  %1152 = vmatpush.bf16.msra.mxu0 %v733
  %1153 = vmatpush.bf16.msra.mxu0 %v729
  %1154 = vmatpush.bf16.msra.mxu0 %v725
  %1155 = vmatpush.bf16.msra.mxu0 %v721
  %1156 = vmatpush.bf16.msra.mxu0 %v717
  %1157 = vmatpush.bf16.msra.mxu0 %v713
  %1158 = vmatpush.bf16.msra.mxu0 %v709
  %1159 = vmatmul.bf16.gmra.mxu0 %v213
  %v1160 = vpop.f32.mrf.mxu0
  %v1161 = vadd.f32 %v1142, %v1160
  %v1162 = vpop.f32.mrf.mxu0
  %v1163 = vadd.f32 %v1144, %v1162
  %1164 = vmatmul.bf16.gmra.mxu0 %v217
  %v1165 = vpop.f32.mrf.mxu0
  %v1166 = vadd.f32 %v1147, %v1165
  %v1167 = vpop.f32.mrf.mxu0
  %v1168 = vadd.f32 %v1149, %v1167
  %1169 = vdwg.mxu0
  %v1170 = vadd.f32 %v34, %v933
  %v1171 = vadd.f32 %v35, %v1009
  %v1172 = vadd.f32 %v36, %v1085
  %v1173 = vadd.f32 %v37, %v1161
  %v1174 = vadd.f32 %v38, %v935
  %v1175 = vadd.f32 %v39, %v1011
  %v1176 = vadd.f32 %v40, %v1087
  %v1177 = vadd.f32 %v41, %v1163
  %v1178 = vadd.f32 %v42, %v938
  %v1179 = vadd.f32 %v43, %v1014
  %v1180 = vadd.f32 %v44, %v1090
  %v1181 = vadd.f32 %v45, %v1166
  %v1182 = vadd.f32 %v46, %v940
  %v1183 = vadd.f32 %v47, %v1016
  %v1184 = vadd.f32 %v48, %v1092
  %v1185 = vadd.f32 %v49, %v1168
  %1186 = vst [vmem:[#allocation2] sm:$0xff] %v1170
  %1187 = vst [vmem:[#allocation2 + $0x8] sm:$0xff] %v1171
  %1188 = vst [vmem:[#allocation2 + $0x10] sm:$0xff] %v1172
  %1189 = vst [vmem:[#allocation2 + $0x18] sm:$0xff] %v1173
  %1190 = vst [vmem:[#allocation2 + $0x20] sm:$0xff] %v1174
  %1191 = vst [vmem:[#allocation2 + $0x28] sm:$0xff] %v1175
  %1192 = vst [vmem:[#allocation2 + $0x30] sm:$0xff] %v1176
  %1193 = vst [vmem:[#allocation2 + $0x38] sm:$0xff] %v1177
  %1194 = vst [vmem:[#allocation2 + $0x40] sm:$0xff] %v1178
  %1195 = vst [vmem:[#allocation2 + $0x48] sm:$0xff] %v1179
  %1196 = vst [vmem:[#allocation2 + $0x50] sm:$0xff] %v1180
  %1197 = vst [vmem:[#allocation2 + $0x58] sm:$0xff] %v1181
  %1198 = vst [vmem:[#allocation2 + $0x60] sm:$0xff] %v1182
  %1199 = vst [vmem:[#allocation2 + $0x68] sm:$0xff] %v1183
  %1200 = vst [vmem:[#allocation2 + $0x70] sm:$0xff] %v1184
  %1201 = vst [vmem:[#allocation2 + $0x78] sm:$0xff] %v1185
  // Predicated region
  $region18: #{vae_forward.11} parent=0 // pred_check
    %p1202 = pneg %p14
  $region19: #{vae_forward.11} parent=0 // pred_check_branch
    %1204 = sbr.rel (%p1202) target = $region21
  $region20: #{vae_forward.11} parent=0 // pred_region
    %v1205 = vld [vmem:[#allocation2] sm:$0xff]
    %v1206 = vld [vmem:[#allocation2 + $0x8] sm:$0xff]
    %v1207 = vld [vmem:[#allocation2 + $0x10] sm:$0xff]
    %v1208 = vld [vmem:[#allocation2 + $0x18] sm:$0xff]
    %v1209 = vld [vmem:[#allocation2 + $0x20] sm:$0xff]
    %v1210 = vld [vmem:[#allocation2 + $0x28] sm:$0xff]
    %v1211 = vld [vmem:[#allocation2 + $0x30] sm:$0xff]
    %v1212 = vld [vmem:[#allocation2 + $0x38] sm:$0xff]
    %v1213 = vld [vmem:[#allocation2 + $0x40] sm:$0xff]
    %v1214 = vld [vmem:[#allocation2 + $0x48] sm:$0xff]
    %v1215 = vld [vmem:[#allocation2 + $0x50] sm:$0xff]
    %v1216 = vld [vmem:[#allocation2 + $0x58] sm:$0xff]
    %v1217 = vld [vmem:[#allocation2 + $0x60] sm:$0xff]
    %v1218 = vld [vmem:[#allocation2 + $0x68] sm:$0xff]
    %v1219 = vld [vmem:[#allocation2 + $0x70] sm:$0xff]
    %v1220 = vld [vmem:[#allocation2 + $0x78] sm:$0xff]
    %v1221 = vld [vmem:[%s2] sm:$0xf]
    %v1223 = vperm.slane %v1221, 0
    %v1224 = vperm.slane %v1221, 1
    %v1225 = vperm.slane %v1221, 2
    %v1226 = vperm.slane %v1221, 3
    %v1231 = vadd.f32 %v1205, %v1223
    %v1232 = vadd.f32 %v1206, %v1224
    %v1233 = vadd.f32 %v1207, %v1225
    %v1234 = vadd.f32 %v1208, %v1226
    %v1235 = vadd.f32 %v1209, %v1223
    %v1236 = vadd.f32 %v1210, %v1224
    %v1237 = vadd.f32 %v1211, %v1225
    %v1238 = vadd.f32 %v1212, %v1226
    %v1239 = vadd.f32 %v1213, %v1223
    %v1240 = vadd.f32 %v1214, %v1224
    %v1241 = vadd.f32 %v1215, %v1225
    %v1242 = vadd.f32 %v1216, %v1226
    %v1243 = vadd.f32 %v1217, %v1223
    %v1244 = vadd.f32 %v1218, %v1224
    %v1245 = vadd.f32 %v1219, %v1225
    %v1246 = vadd.f32 %v1220, %v1226
    %vm1247 = vcmp.gt.f32.partialorder %v1231, 0.0
    %vm1248 = vcmp.gt.f32.partialorder %v1232, 0.0
    %vm1249 = vcmp.gt.f32.partialorder %v1233, 0.0
    %vm1250 = vcmp.gt.f32.partialorder %v1234, 0.0
    %vm1251 = vcmp.gt.f32.partialorder %v1235, 0.0
    %vm1252 = vcmp.gt.f32.partialorder %v1236, 0.0
    %vm1253 = vcmp.gt.f32.partialorder %v1237, 0.0
    %vm1254 = vcmp.gt.f32.partialorder %v1238, 0.0
    %vm1255 = vcmp.gt.f32.partialorder %v1239, 0.0
    %vm1256 = vcmp.gt.f32.partialorder %v1240, 0.0
    %vm1257 = vcmp.gt.f32.partialorder %v1241, 0.0
    %vm1258 = vcmp.gt.f32.partialorder %v1242, 0.0
    %vm1259 = vcmp.gt.f32.partialorder %v1243, 0.0
    %vm1260 = vcmp.gt.f32.partialorder %v1244, 0.0
    %vm1261 = vcmp.gt.f32.partialorder %v1245, 0.0
    %vm1262 = vcmp.gt.f32.partialorder %v1246, 0.0
    %v1263 = vmul.f32 %v1231, 0.01
    %v1264 = vmul.f32 %v1232, 0.01
    %v1265 = vmul.f32 %v1233, 0.01
    %v1266 = vmul.f32 %v1234, 0.01
    %v1267 = vmul.f32 %v1235, 0.01
    %v1268 = vmul.f32 %v1236, 0.01
    %v1269 = vmul.f32 %v1237, 0.01
    %v1270 = vmul.f32 %v1238, 0.01
    %v1271 = vmul.f32 %v1239, 0.01
    %v1272 = vmul.f32 %v1240, 0.01
    %v1273 = vmul.f32 %v1241, 0.01
    %v1274 = vmul.f32 %v1242, 0.01
    %v1275 = vmul.f32 %v1243, 0.01
    %v1276 = vmul.f32 %v1244, 0.01
    %v1277 = vmul.f32 %v1245, 0.01
    %v1278 = vmul.f32 %v1246, 0.01
    %v1279 = vsel %vm1247, %v1231, %v1263
    %v1280 = vsel %vm1248, %v1232, %v1264
    %v1281 = vsel %vm1249, %v1233, %v1265
    %v1282 = vsel %vm1250, %v1234, %v1266
    %v1283 = vsel %vm1251, %v1235, %v1267
    %v1284 = vsel %vm1252, %v1236, %v1268
    %v1285 = vsel %vm1253, %v1237, %v1269
    %v1286 = vsel %vm1254, %v1238, %v1270
    %v1287 = vsel %vm1255, %v1239, %v1271
    %v1288 = vsel %vm1256, %v1240, %v1272
    %v1289 = vsel %vm1257, %v1241, %v1273
    %v1290 = vsel %vm1258, %v1242, %v1274
    %v1291 = vsel %vm1259, %v1243, %v1275
    %v1292 = vsel %vm1260, %v1244, %v1276
    %v1293 = vsel %vm1261, %v1245, %v1277
    %v1294 = vsel %vm1262, %v1246, %v1278
    %v1295 = vpack.c.bf16 %v1280, %v1279
    %v1296 = vpack.c.bf16 %v1282, %v1281
    %v1297 = vpack.c.bf16 %v1284, %v1283
    %v1298 = vpack.c.bf16 %v1286, %v1285
    %v1299 = vpack.c.bf16 %v1288, %v1287
    %v1300 = vpack.c.bf16 %v1290, %v1289
    %v1301 = vpack.c.bf16 %v1292, %v1291
    %v1302 = vpack.c.bf16 %v1294, %v1293
    %1303 = vst [vmem:[%s3] sm:$0xff] %v1295
    %1304 = vst [vmem:[%s3 + $0x8] sm:$0xff] %v1296
    %1305 = vst [vmem:[%s3 + $0x10] sm:$0xff] %v1297
    %1306 = vst [vmem:[%s3 + $0x18] sm:$0xff] %v1298
    %1307 = vst [vmem:[%s3 + $0x20] sm:$0xff] %v1299
    %1308 = vst [vmem:[%s3 + $0x28] sm:$0xff] %v1300
    %1309 = vst [vmem:[%s3 + $0x30] sm:$0xff] %v1301
    %1310 = vst [vmem:[%s3 + $0x38] sm:$0xff] %v1302
  $region21: #{vae_forward.11} parent=0 // pred_fallthru
    _
  // Predicated region
  $region22: #{vae_forward.11} parent=0 // pred_check
    _
  $region23: #{vae_forward.11} parent=0 // pred_check_branch
    %1312 = sbr.rel (0) target = $region25
  $region24: #{vae_forward.11} parent=0 // pred_region
    _
  $region25: #{vae_forward.11} parent=0 // pred_fallthru
    _
  // Predicated region
  $region26: #{vae_forward.11} parent=0 // pred_check
    _
  $region27: #{vae_forward.11} parent=0 // pred_check_branch
    %1314 = sbr.rel (0) target = $region29
  $region28: #{vae_forward.11} parent=0 // pred_region
    _
  $region29: #{vae_forward.11} parent=0 // pred_fallthru
    _

// kernel: vae_forward.12
$region0: #{vae_forward.12}
  #allocation0 [shape = 'u32[]', space=smem, size = 0x4, offset = 0x4, fixed_abs, tag = 'smem constant byte address 0x4 - core index']
  #allocation1 [shape = 'u32[72,128]{1,0:T(1,128)}', space=vmem, size = 0x9000, scoped, tag = 'internal scratch']
  #allocation2 [shape = 'f32[128,512]{1,0:T(8,128)}', space=vmem, size = 0x40000, scoped, tag = 'scratch operand']
  %s0 = inlined_call_operand.vmem [shape: bf16[128,512], index: 0, kind: input, shape index: {}]
  %s1 = inlined_call_operand.vmem [shape: bf16[512,512], index: 1, kind: input, shape index: {}]
  %s2 = inlined_call_operand.vmem [shape: f32[1,512], index: 2, kind: input, shape index: {}]
  %s3 = inlined_call_operand.vmem [shape: bf16[128,512], index: 3, kind: output, shape index: {}]
  %s4 = sld [smem:[#allocation0]]
  $region30: #{vae_forward.12} parent=0
    _
  %s6 = ssub.s32 1, %s4
  %s7 = scalar_select 0, %s6, %s4
  // Predicated region
  $region2: #{vae_forward.12} parent=0 // pred_check
    _
  $region3: #{vae_forward.12} parent=0 // pred_check_branch
    %9 = sbr.rel (0) target = $region5
  $region4: #{vae_forward.12} parent=0 // pred_region
    _
  $region5: #{vae_forward.12} parent=0 // pred_fallthru
    _
  // Predicated region
  $region6: #{vae_forward.12} parent=0 // pred_check
    _
  $region7: #{vae_forward.12} parent=0 // pred_check_branch
    %11 = sbr.rel (0) target = $region9
  $region8: #{vae_forward.12} parent=0 // pred_region
    _
  $region9: #{vae_forward.12} parent=0 // pred_fallthru
    _
  // Predicated region
  $region10: #{vae_forward.12} parent=0 // pred_check
    _
  $region11: #{vae_forward.12} parent=0 // pred_check_branch
    %13 = sbr.rel (0) target = $region13
  $region12: #{vae_forward.12} parent=0 // pred_region
    _
  $region13: #{vae_forward.12} parent=0 // pred_fallthru
    _
  %p14 = scmp.eq.s32.totalorder 0, 0
  // Predicated region
  $region14: #{vae_forward.12} parent=0 // pred_check
    %p15 = pneg %p14
  $region15: #{vae_forward.12} parent=0 // pred_check_branch
    %17 = sbr.rel (%p15) target = $region17
  $region16: #{vae_forward.12} parent=0 // pred_region
    %18 = vst [vmem:[#allocation2] sm:$0xff] 0.0
    %19 = vst [vmem:[#allocation2 + $0x8] sm:$0xff] 0.0
    %20 = vst [vmem:[#allocation2 + $0x10] sm:$0xff] 0.0
    %21 = vst [vmem:[#allocation2 + $0x18] sm:$0xff] 0.0
    %22 = vst [vmem:[#allocation2 + $0x20] sm:$0xff] 0.0
    %23 = vst [vmem:[#allocation2 + $0x28] sm:$0xff] 0.0
    %24 = vst [vmem:[#allocation2 + $0x30] sm:$0xff] 0.0
    %25 = vst [vmem:[#allocation2 + $0x38] sm:$0xff] 0.0
    %26 = vst [vmem:[#allocation2 + $0x40] sm:$0xff] 0.0
    %27 = vst [vmem:[#allocation2 + $0x48] sm:$0xff] 0.0
    %28 = vst [vmem:[#allocation2 + $0x50] sm:$0xff] 0.0
    %29 = vst [vmem:[#allocation2 + $0x58] sm:$0xff] 0.0
    %30 = vst [vmem:[#allocation2 + $0x60] sm:$0xff] 0.0
    %31 = vst [vmem:[#allocation2 + $0x68] sm:$0xff] 0.0
    %32 = vst [vmem:[#allocation2 + $0x70] sm:$0xff] 0.0
    %33 = vst [vmem:[#allocation2 + $0x78] sm:$0xff] 0.0
    %34 = vst [vmem:[#allocation2 + $0x80] sm:$0xff] 0.0
    %35 = vst [vmem:[#allocation2 + $0x88] sm:$0xff] 0.0
    %36 = vst [vmem:[#allocation2 + $0x90] sm:$0xff] 0.0
    %37 = vst [vmem:[#allocation2 + $0x98] sm:$0xff] 0.0
    %38 = vst [vmem:[#allocation2 + $0xa0] sm:$0xff] 0.0
    %39 = vst [vmem:[#allocation2 + $0xa8] sm:$0xff] 0.0
    %40 = vst [vmem:[#allocation2 + $0xb0] sm:$0xff] 0.0
    %41 = vst [vmem:[#allocation2 + $0xb8] sm:$0xff] 0.0
    %42 = vst [vmem:[#allocation2 + $0xc0] sm:$0xff] 0.0
    %43 = vst [vmem:[#allocation2 + $0xc8] sm:$0xff] 0.0
    %44 = vst [vmem:[#allocation2 + $0xd0] sm:$0xff] 0.0
    %45 = vst [vmem:[#allocation2 + $0xd8] sm:$0xff] 0.0
    %46 = vst [vmem:[#allocation2 + $0xe0] sm:$0xff] 0.0
    %47 = vst [vmem:[#allocation2 + $0xe8] sm:$0xff] 0.0
    %48 = vst [vmem:[#allocation2 + $0xf0] sm:$0xff] 0.0
    %49 = vst [vmem:[#allocation2 + $0xf8] sm:$0xff] 0.0
    %50 = vst [vmem:[#allocation2 + $0x100] sm:$0xff] 0.0
    %51 = vst [vmem:[#allocation2 + $0x108] sm:$0xff] 0.0
    %52 = vst [vmem:[#allocation2 + $0x110] sm:$0xff] 0.0
    %53 = vst [vmem:[#allocation2 + $0x118] sm:$0xff] 0.0
    %54 = vst [vmem:[#allocation2 + $0x120] sm:$0xff] 0.0
    %55 = vst [vmem:[#allocation2 + $0x128] sm:$0xff] 0.0
    %56 = vst [vmem:[#allocation2 + $0x130] sm:$0xff] 0.0
    %57 = vst [vmem:[#allocation2 + $0x138] sm:$0xff] 0.0
    %58 = vst [vmem:[#allocation2 + $0x140] sm:$0xff] 0.0
    %59 = vst [vmem:[#allocation2 + $0x148] sm:$0xff] 0.0
    %60 = vst [vmem:[#allocation2 + $0x150] sm:$0xff] 0.0
    %61 = vst [vmem:[#allocation2 + $0x158] sm:$0xff] 0.0
    %62 = vst [vmem:[#allocation2 + $0x160] sm:$0xff] 0.0
    %63 = vst [vmem:[#allocation2 + $0x168] sm:$0xff] 0.0
    %64 = vst [vmem:[#allocation2 + $0x170] sm:$0xff] 0.0
    %65 = vst [vmem:[#allocation2 + $0x178] sm:$0xff] 0.0
    %66 = vst [vmem:[#allocation2 + $0x180] sm:$0xff] 0.0
    %67 = vst [vmem:[#allocation2 + $0x188] sm:$0xff] 0.0
    %68 = vst [vmem:[#allocation2 + $0x190] sm:$0xff] 0.0
    %69 = vst [vmem:[#allocation2 + $0x198] sm:$0xff] 0.0
    %70 = vst [vmem:[#allocation2 + $0x1a0] sm:$0xff] 0.0
    %71 = vst [vmem:[#allocation2 + $0x1a8] sm:$0xff] 0.0
    %72 = vst [vmem:[#allocation2 + $0x1b0] sm:$0xff] 0.0
    %73 = vst [vmem:[#allocation2 + $0x1b8] sm:$0xff] 0.0
    %74 = vst [vmem:[#allocation2 + $0x1c0] sm:$0xff] 0.0
    %75 = vst [vmem:[#allocation2 + $0x1c8] sm:$0xff] 0.0
    %76 = vst [vmem:[#allocation2 + $0x1d0] sm:$0xff] 0.0
    %77 = vst [vmem:[#allocation2 + $0x1d8] sm:$0xff] 0.0
    %78 = vst [vmem:[#allocation2 + $0x1e0] sm:$0xff] 0.0
    %79 = vst [vmem:[#allocation2 + $0x1e8] sm:$0xff] 0.0
    %80 = vst [vmem:[#allocation2 + $0x1f0] sm:$0xff] 0.0
    %81 = vst [vmem:[#allocation2 + $0x1f8] sm:$0xff] 0.0
  $region17: #{vae_forward.12} parent=0 // pred_fallthru
    _
  %v82 = vld [vmem:[#allocation2] sm:$0xff]
  %v83 = vld [vmem:[#allocation2 + $0x8] sm:$0xff]
  %v84 = vld [vmem:[#allocation2 + $0x10] sm:$0xff]
  %v85 = vld [vmem:[#allocation2 + $0x18] sm:$0xff]
  %v86 = vld [vmem:[#allocation2 + $0x20] sm:$0xff]
  %v87 = vld [vmem:[#allocation2 + $0x28] sm:$0xff]
  %v88 = vld [vmem:[#allocation2 + $0x30] sm:$0xff]
  %v89 = vld [vmem:[#allocation2 + $0x38] sm:$0xff]
  %v90 = vld [vmem:[#allocation2 + $0x40] sm:$0xff]
  %v91 = vld [vmem:[#allocation2 + $0x48] sm:$0xff]
  %v92 = vld [vmem:[#allocation2 + $0x50] sm:$0xff]
  %v93 = vld [vmem:[#allocation2 + $0x58] sm:$0xff]
  %v94 = vld [vmem:[#allocation2 + $0x60] sm:$0xff]
  %v95 = vld [vmem:[#allocation2 + $0x68] sm:$0xff]
  %v96 = vld [vmem:[#allocation2 + $0x70] sm:$0xff]
  %v97 = vld [vmem:[#allocation2 + $0x78] sm:$0xff]
  %v98 = vld [vmem:[#allocation2 + $0x80] sm:$0xff]
  %v99 = vld [vmem:[#allocation2 + $0x88] sm:$0xff]
  %v100 = vld [vmem:[#allocation2 + $0x90] sm:$0xff]
  %v101 = vld [vmem:[#allocation2 + $0x98] sm:$0xff]
  %v102 = vld [vmem:[#allocation2 + $0xa0] sm:$0xff]
  %v103 = vld [vmem:[#allocation2 + $0xa8] sm:$0xff]
  %v104 = vld [vmem:[#allocation2 + $0xb0] sm:$0xff]
  %v105 = vld [vmem:[#allocation2 + $0xb8] sm:$0xff]
  %v106 = vld [vmem:[#allocation2 + $0xc0] sm:$0xff]
  %v107 = vld [vmem:[#allocation2 + $0xc8] sm:$0xff]
  %v108 = vld [vmem:[#allocation2 + $0xd0] sm:$0xff]
  %v109 = vld [vmem:[#allocation2 + $0xd8] sm:$0xff]
  %v110 = vld [vmem:[#allocation2 + $0xe0] sm:$0xff]
  %v111 = vld [vmem:[#allocation2 + $0xe8] sm:$0xff]
  %v112 = vld [vmem:[#allocation2 + $0xf0] sm:$0xff]
  %v113 = vld [vmem:[#allocation2 + $0xf8] sm:$0xff]
  %v114 = vld [vmem:[#allocation2 + $0x100] sm:$0xff]
  %v115 = vld [vmem:[#allocation2 + $0x108] sm:$0xff]
  %v116 = vld [vmem:[#allocation2 + $0x110] sm:$0xff]
  %v117 = vld [vmem:[#allocation2 + $0x118] sm:$0xff]
  %v118 = vld [vmem:[#allocation2 + $0x120] sm:$0xff]
  %v119 = vld [vmem:[#allocation2 + $0x128] sm:$0xff]
  %v120 = vld [vmem:[#allocation2 + $0x130] sm:$0xff]
  %v121 = vld [vmem:[#allocation2 + $0x138] sm:$0xff]
  %v122 = vld [vmem:[#allocation2 + $0x140] sm:$0xff]
  %v123 = vld [vmem:[#allocation2 + $0x148] sm:$0xff]
  %v124 = vld [vmem:[#allocation2 + $0x150] sm:$0xff]
  %v125 = vld [vmem:[#allocation2 + $0x158] sm:$0xff]
  %v126 = vld [vmem:[#allocation2 + $0x160] sm:$0xff]
  %v127 = vld [vmem:[#allocation2 + $0x168] sm:$0xff]
  %v128 = vld [vmem:[#allocation2 + $0x170] sm:$0xff]
  %v129 = vld [vmem:[#allocation2 + $0x178] sm:$0xff]
  %v130 = vld [vmem:[#allocation2 + $0x180] sm:$0xff]
  %v131 = vld [vmem:[#allocation2 + $0x188] sm:$0xff]
  %v132 = vld [vmem:[#allocation2 + $0x190] sm:$0xff]
  %v133 = vld [vmem:[#allocation2 + $0x198] sm:$0xff]
  %v134 = vld [vmem:[#allocation2 + $0x1a0] sm:$0xff]
  %v135 = vld [vmem:[#allocation2 + $0x1a8] sm:$0xff]
  %v136 = vld [vmem:[#allocation2 + $0x1b0] sm:$0xff]
  %v137 = vld [vmem:[#allocation2 + $0x1b8] sm:$0xff]
  %v138 = vld [vmem:[#allocation2 + $0x1c0] sm:$0xff]
  %v139 = vld [vmem:[#allocation2 + $0x1c8] sm:$0xff]
  %v140 = vld [vmem:[#allocation2 + $0x1d0] sm:$0xff]
  %v141 = vld [vmem:[#allocation2 + $0x1d8] sm:$0xff]
  %v142 = vld [vmem:[#allocation2 + $0x1e0] sm:$0xff]
  %v143 = vld [vmem:[#allocation2 + $0x1e8] sm:$0xff]
  %v144 = vld [vmem:[#allocation2 + $0x1f0] sm:$0xff]
  %v145 = vld [vmem:[#allocation2 + $0x1f8] sm:$0xff]
  %v146 = vld [vmem:[%s0] sm:$0xff]
  %v147 = vld [vmem:[%s0 + $0x8] sm:$0xff]
  %v148 = vld [vmem:[%s0 + $0x10] sm:$0xff]
  %v149 = vld [vmem:[%s0 + $0x18] sm:$0xff]
  %v150 = vld [vmem:[%s0 + $0x20] sm:$0xff]
  %v151 = vld [vmem:[%s0 + $0x28] sm:$0xff]
  %v152 = vld [vmem:[%s0 + $0x30] sm:$0xff]
  %v153 = vld [vmem:[%s0 + $0x38] sm:$0xff]
  %v154 = vld [vmem:[%s0 + $0x40] sm:$0xff]
  %v155 = vld [vmem:[%s0 + $0x48] sm:$0xff]
  %v156 = vld [vmem:[%s0 + $0x50] sm:$0xff]
  %v157 = vld [vmem:[%s0 + $0x58] sm:$0xff]
  %v158 = vld [vmem:[%s0 + $0x60] sm:$0xff]
  %v159 = vld [vmem:[%s0 + $0x68] sm:$0xff]
  %v160 = vld [vmem:[%s0 + $0x70] sm:$0xff]
  %v161 = vld [vmem:[%s0 + $0x78] sm:$0xff]
  %v162 = vld [vmem:[%s0 + $0x80] sm:$0xff]
  %v163 = vld [vmem:[%s0 + $0x88] sm:$0xff]
  %v164 = vld [vmem:[%s0 + $0x90] sm:$0xff]
  %v165 = vld [vmem:[%s0 + $0x98] sm:$0xff]
  %v166 = vld [vmem:[%s0 + $0xa0] sm:$0xff]
  %v167 = vld [vmem:[%s0 + $0xa8] sm:$0xff]
  %v168 = vld [vmem:[%s0 + $0xb0] sm:$0xff]
  %v169 = vld [vmem:[%s0 + $0xb8] sm:$0xff]
  %v170 = vld [vmem:[%s0 + $0xc0] sm:$0xff]
  %v171 = vld [vmem:[%s0 + $0xc8] sm:$0xff]
  %v172 = vld [vmem:[%s0 + $0xd0] sm:$0xff]
  %v173 = vld [vmem:[%s0 + $0xd8] sm:$0xff]
  %v174 = vld [vmem:[%s0 + $0xe0] sm:$0xff]
  %v175 = vld [vmem:[%s0 + $0xe8] sm:$0xff]
  %v176 = vld [vmem:[%s0 + $0xf0] sm:$0xff]
  %v177 = vld [vmem:[%s0 + $0xf8] sm:$0xff]
  %v178 = vld [vmem:[%s1] sm:$0xff]
  %v179 = vld [vmem:[%s1 + $0x8] sm:$0xff]
  %v180 = vld [vmem:[%s1 + $0x10] sm:$0xff]
  %v181 = vld [vmem:[%s1 + $0x18] sm:$0xff]
  %v182 = vld [vmem:[%s1 + $0x20] sm:$0xff]
  %v183 = vld [vmem:[%s1 + $0x28] sm:$0xff]
  %v184 = vld [vmem:[%s1 + $0x30] sm:$0xff]
  %v185 = vld [vmem:[%s1 + $0x38] sm:$0xff]
  %v186 = vld [vmem:[%s1 + $0x40] sm:$0xff]
  %v187 = vld [vmem:[%s1 + $0x48] sm:$0xff]
  %v188 = vld [vmem:[%s1 + $0x50] sm:$0xff]
  %v189 = vld [vmem:[%s1 + $0x58] sm:$0xff]
  %v190 = vld [vmem:[%s1 + $0x60] sm:$0xff]
  %v191 = vld [vmem:[%s1 + $0x68] sm:$0xff]
  %v192 = vld [vmem:[%s1 + $0x70] sm:$0xff]
  %v193 = vld [vmem:[%s1 + $0x78] sm:$0xff]
  %v194 = vld [vmem:[%s1 + $0x80] sm:$0xff]
  %v195 = vld [vmem:[%s1 + $0x88] sm:$0xff]
  %v196 = vld [vmem:[%s1 + $0x90] sm:$0xff]
  %v197 = vld [vmem:[%s1 + $0x98] sm:$0xff]
  %v198 = vld [vmem:[%s1 + $0xa0] sm:$0xff]
  %v199 = vld [vmem:[%s1 + $0xa8] sm:$0xff]
  %v200 = vld [vmem:[%s1 + $0xb0] sm:$0xff]
  %v201 = vld [vmem:[%s1 + $0xb8] sm:$0xff]
  %v202 = vld [vmem:[%s1 + $0xc0] sm:$0xff]
  %v203 = vld [vmem:[%s1 + $0xc8] sm:$0xff]
  %v204 = vld [vmem:[%s1 + $0xd0] sm:$0xff]
  %v205 = vld [vmem:[%s1 + $0xd8] sm:$0xff]
  %v206 = vld [vmem:[%s1 + $0xe0] sm:$0xff]
  %v207 = vld [vmem:[%s1 + $0xe8] sm:$0xff]
  %v208 = vld [vmem:[%s1 + $0xf0] sm:$0xff]
  %v209 = vld [vmem:[%s1 + $0xf8] sm:$0xff]
  %v210 = vld [vmem:[%s1 + $0x100] sm:$0xff]
  %v211 = vld [vmem:[%s1 + $0x108] sm:$0xff]
  %v212 = vld [vmem:[%s1 + $0x110] sm:$0xff]
  %v213 = vld [vmem:[%s1 + $0x118] sm:$0xff]
  %v214 = vld [vmem:[%s1 + $0x120] sm:$0xff]
  %v215 = vld [vmem:[%s1 + $0x128] sm:$0xff]
  %v216 = vld [vmem:[%s1 + $0x130] sm:$0xff]
  %v217 = vld [vmem:[%s1 + $0x138] sm:$0xff]
  %v218 = vld [vmem:[%s1 + $0x140] sm:$0xff]
  %v219 = vld [vmem:[%s1 + $0x148] sm:$0xff]
  %v220 = vld [vmem:[%s1 + $0x150] sm:$0xff]
  %v221 = vld [vmem:[%s1 + $0x158] sm:$0xff]
  %v222 = vld [vmem:[%s1 + $0x160] sm:$0xff]
  %v223 = vld [vmem:[%s1 + $0x168] sm:$0xff]
  %v224 = vld [vmem:[%s1 + $0x170] sm:$0xff]
  %v225 = vld [vmem:[%s1 + $0x178] sm:$0xff]
  %v226 = vld [vmem:[%s1 + $0x180] sm:$0xff]
  %v227 = vld [vmem:[%s1 + $0x188] sm:$0xff]
  %v228 = vld [vmem:[%s1 + $0x190] sm:$0xff]
  %v229 = vld [vmem:[%s1 + $0x198] sm:$0xff]
  %v230 = vld [vmem:[%s1 + $0x1a0] sm:$0xff]
  %v231 = vld [vmem:[%s1 + $0x1a8] sm:$0xff]
  %v232 = vld [vmem:[%s1 + $0x1b0] sm:$0xff]
  %v233 = vld [vmem:[%s1 + $0x1b8] sm:$0xff]
  %v234 = vld [vmem:[%s1 + $0x1c0] sm:$0xff]
  %v235 = vld [vmem:[%s1 + $0x1c8] sm:$0xff]
  %v236 = vld [vmem:[%s1 + $0x1d0] sm:$0xff]
  %v237 = vld [vmem:[%s1 + $0x1d8] sm:$0xff]
  %v238 = vld [vmem:[%s1 + $0x1e0] sm:$0xff]
  %v239 = vld [vmem:[%s1 + $0x1e8] sm:$0xff]
  %v240 = vld [vmem:[%s1 + $0x1f0] sm:$0xff]
  %v241 = vld [vmem:[%s1 + $0x1f8] sm:$0xff]
  %v242 = vld [vmem:[%s1 + $0x200] sm:$0xff]
  %v243 = vld [vmem:[%s1 + $0x208] sm:$0xff]
  %v244 = vld [vmem:[%s1 + $0x210] sm:$0xff]
  %v245 = vld [vmem:[%s1 + $0x218] sm:$0xff]
  %v246 = vld [vmem:[%s1 + $0x220] sm:$0xff]
  %v247 = vld [vmem:[%s1 + $0x228] sm:$0xff]
  %v248 = vld [vmem:[%s1 + $0x230] sm:$0xff]
  %v249 = vld [vmem:[%s1 + $0x238] sm:$0xff]
  %v250 = vld [vmem:[%s1 + $0x240] sm:$0xff]
  %v251 = vld [vmem:[%s1 + $0x248] sm:$0xff]
  %v252 = vld [vmem:[%s1 + $0x250] sm:$0xff]
  %v253 = vld [vmem:[%s1 + $0x258] sm:$0xff]
  %v254 = vld [vmem:[%s1 + $0x260] sm:$0xff]
  %v255 = vld [vmem:[%s1 + $0x268] sm:$0xff]
  %v256 = vld [vmem:[%s1 + $0x270] sm:$0xff]
  %v257 = vld [vmem:[%s1 + $0x278] sm:$0xff]
  %v258 = vld [vmem:[%s1 + $0x280] sm:$0xff]
  %v259 = vld [vmem:[%s1 + $0x288] sm:$0xff]
  %v260 = vld [vmem:[%s1 + $0x290] sm:$0xff]
  %v261 = vld [vmem:[%s1 + $0x298] sm:$0xff]
  %v262 = vld [vmem:[%s1 + $0x2a0] sm:$0xff]
  %v263 = vld [vmem:[%s1 + $0x2a8] sm:$0xff]
  %v264 = vld [vmem:[%s1 + $0x2b0] sm:$0xff]
  %v265 = vld [vmem:[%s1 + $0x2b8] sm:$0xff]
  %v266 = vld [vmem:[%s1 + $0x2c0] sm:$0xff]
  %v267 = vld [vmem:[%s1 + $0x2c8] sm:$0xff]
  %v268 = vld [vmem:[%s1 + $0x2d0] sm:$0xff]
  %v269 = vld [vmem:[%s1 + $0x2d8] sm:$0xff]
  %v270 = vld [vmem:[%s1 + $0x2e0] sm:$0xff]
  %v271 = vld [vmem:[%s1 + $0x2e8] sm:$0xff]
  %v272 = vld [vmem:[%s1 + $0x2f0] sm:$0xff]
  %v273 = vld [vmem:[%s1 + $0x2f8] sm:$0xff]
  %v274 = vld [vmem:[%s1 + $0x300] sm:$0xff]
  %v275 = vld [vmem:[%s1 + $0x308] sm:$0xff]
  %v276 = vld [vmem:[%s1 + $0x310] sm:$0xff]
  %v277 = vld [vmem:[%s1 + $0x318] sm:$0xff]
  %v278 = vld [vmem:[%s1 + $0x320] sm:$0xff]
  %v279 = vld [vmem:[%s1 + $0x328] sm:$0xff]
  %v280 = vld [vmem:[%s1 + $0x330] sm:$0xff]
  %v281 = vld [vmem:[%s1 + $0x338] sm:$0xff]
  %v282 = vld [vmem:[%s1 + $0x340] sm:$0xff]
  %v283 = vld [vmem:[%s1 + $0x348] sm:$0xff]
  %v284 = vld [vmem:[%s1 + $0x350] sm:$0xff]
  %v285 = vld [vmem:[%s1 + $0x358] sm:$0xff]
  %v286 = vld [vmem:[%s1 + $0x360] sm:$0xff]
  %v287 = vld [vmem:[%s1 + $0x368] sm:$0xff]
  %v288 = vld [vmem:[%s1 + $0x370] sm:$0xff]
  %v289 = vld [vmem:[%s1 + $0x378] sm:$0xff]
  %v290 = vld [vmem:[%s1 + $0x380] sm:$0xff]
  %v291 = vld [vmem:[%s1 + $0x388] sm:$0xff]
  %v292 = vld [vmem:[%s1 + $0x390] sm:$0xff]
  %v293 = vld [vmem:[%s1 + $0x398] sm:$0xff]
  %v294 = vld [vmem:[%s1 + $0x3a0] sm:$0xff]
  %v295 = vld [vmem:[%s1 + $0x3a8] sm:$0xff]
  %v296 = vld [vmem:[%s1 + $0x3b0] sm:$0xff]
  %v297 = vld [vmem:[%s1 + $0x3b8] sm:$0xff]
  %v298 = vld [vmem:[%s1 + $0x3c0] sm:$0xff]
  %v299 = vld [vmem:[%s1 + $0x3c8] sm:$0xff]
  %v300 = vld [vmem:[%s1 + $0x3d0] sm:$0xff]
  %v301 = vld [vmem:[%s1 + $0x3d8] sm:$0xff]
  %v302 = vld [vmem:[%s1 + $0x3e0] sm:$0xff]
  %v303 = vld [vmem:[%s1 + $0x3e8] sm:$0xff]
  %v304 = vld [vmem:[%s1 + $0x3f0] sm:$0xff]
  %v305 = vld [vmem:[%s1 + $0x3f8] sm:$0xff]
  %v338 = vunpack.c.l.b16 %v146
  %v339 = vunpack.c.h.b16 %v146
  %v340 = vunpack.c.l.b16 %v147
  %v341 = vunpack.c.h.b16 %v147
  %v342 = vunpack.c.l.b16 %v148
  %v343 = vunpack.c.h.b16 %v148
  %v344 = vunpack.c.l.b16 %v149
  %v345 = vunpack.c.h.b16 %v149
  %v346 = vunpack.c.l.b16 %v150
  %v347 = vunpack.c.h.b16 %v150
  %v348 = vunpack.c.l.b16 %v151
  %v349 = vunpack.c.h.b16 %v151
  %v350 = vunpack.c.l.b16 %v152
  %v351 = vunpack.c.h.b16 %v152
  %v352 = vunpack.c.l.b16 %v153
  %v353 = vunpack.c.h.b16 %v153
  %v354 = vunpack.c.l.b16 %v154
  %v355 = vunpack.c.h.b16 %v154
  %v356 = vunpack.c.l.b16 %v155
  %v357 = vunpack.c.h.b16 %v155
  %v358 = vunpack.c.l.b16 %v156
  %v359 = vunpack.c.h.b16 %v156
  %v360 = vunpack.c.l.b16 %v157
  %v361 = vunpack.c.h.b16 %v157
  %v362 = vunpack.c.l.b16 %v158
  %v363 = vunpack.c.h.b16 %v158
  %v364 = vunpack.c.l.b16 %v159
  %v365 = vunpack.c.h.b16 %v159
  %v366 = vunpack.c.l.b16 %v160
  %v367 = vunpack.c.h.b16 %v160
  %v368 = vunpack.c.l.b16 %v161
  %v369 = vunpack.c.h.b16 %v161
  %v370 = vunpack.c.l.b16 %v162
  %v371 = vunpack.c.h.b16 %v162
  %v372 = vunpack.c.l.b16 %v163
  %v373 = vunpack.c.h.b16 %v163
  %v374 = vunpack.c.l.b16 %v164
  %v375 = vunpack.c.h.b16 %v164
  %v376 = vunpack.c.l.b16 %v165
  %v377 = vunpack.c.h.b16 %v165
  %v378 = vunpack.c.l.b16 %v166
  %v379 = vunpack.c.h.b16 %v166
  %v380 = vunpack.c.l.b16 %v167
  %v381 = vunpack.c.h.b16 %v167
  %v382 = vunpack.c.l.b16 %v168
  %v383 = vunpack.c.h.b16 %v168
  %v384 = vunpack.c.l.b16 %v169
  %v385 = vunpack.c.h.b16 %v169
  %v386 = vunpack.c.l.b16 %v170
  %v387 = vunpack.c.h.b16 %v170
  %v388 = vunpack.c.l.b16 %v171
  %v389 = vunpack.c.h.b16 %v171
  %v390 = vunpack.c.l.b16 %v172
  %v391 = vunpack.c.h.b16 %v172
  %v392 = vunpack.c.l.b16 %v173
  %v393 = vunpack.c.h.b16 %v173
  %v394 = vunpack.c.l.b16 %v174
  %v395 = vunpack.c.h.b16 %v174
  %v396 = vunpack.c.l.b16 %v175
  %v397 = vunpack.c.h.b16 %v175
  %v398 = vunpack.c.l.b16 %v176
  %v399 = vunpack.c.h.b16 %v176
  %v400 = vunpack.c.l.b16 %v177
  %v401 = vunpack.c.h.b16 %v177
  %v402 = vpack.c.b16 %v342, %v338
  %v403 = vpack.c.b16 %v343, %v339
  %v404 = vpack.c.b16 %v344, %v340
  %v405 = vpack.c.b16 %v345, %v341
  %v406 = vpack.c.b16 %v350, %v346
  %v407 = vpack.c.b16 %v351, %v347
  %v408 = vpack.c.b16 %v352, %v348
  %v409 = vpack.c.b16 %v353, %v349
  %v410 = vpack.c.b16 %v358, %v354
  %v411 = vpack.c.b16 %v359, %v355
  %v412 = vpack.c.b16 %v360, %v356
  %v413 = vpack.c.b16 %v361, %v357
  %v414 = vpack.c.b16 %v366, %v362
  %v415 = vpack.c.b16 %v367, %v363
  %v416 = vpack.c.b16 %v368, %v364
  %v417 = vpack.c.b16 %v369, %v365
  %v418 = vpack.c.b16 %v374, %v370
  %v419 = vpack.c.b16 %v375, %v371
  %v420 = vpack.c.b16 %v376, %v372
  %v421 = vpack.c.b16 %v377, %v373
  %v422 = vpack.c.b16 %v382, %v378
  %v423 = vpack.c.b16 %v383, %v379
  %v424 = vpack.c.b16 %v384, %v380
  %v425 = vpack.c.b16 %v385, %v381
  %v426 = vpack.c.b16 %v390, %v386
  %v427 = vpack.c.b16 %v391, %v387
  %v428 = vpack.c.b16 %v392, %v388
  %v429 = vpack.c.b16 %v393, %v389
  %v430 = vpack.c.b16 %v398, %v394
  %v431 = vpack.c.b16 %v399, %v395
  %v432 = vpack.c.b16 %v400, %v396
  %v433 = vpack.c.b16 %v401, %v397
  %v594 = vunpack.c.l.b16 %v178
  %v595 = vunpack.c.h.b16 %v178
  %v596 = vunpack.c.l.b16 %v179
  %v597 = vunpack.c.h.b16 %v179
  %v598 = vunpack.c.l.b16 %v180
  %v599 = vunpack.c.h.b16 %v180
  %v600 = vunpack.c.l.b16 %v181
  %v601 = vunpack.c.h.b16 %v181
  %v602 = vunpack.c.l.b16 %v182
  %v603 = vunpack.c.h.b16 %v182
  %v604 = vunpack.c.l.b16 %v183
  %v605 = vunpack.c.h.b16 %v183
  %v606 = vunpack.c.l.b16 %v184
  %v607 = vunpack.c.h.b16 %v184
  %v608 = vunpack.c.l.b16 %v185
  %v609 = vunpack.c.h.b16 %v185
  %v610 = vunpack.c.l.b16 %v186
  %v611 = vunpack.c.h.b16 %v186
  %v612 = vunpack.c.l.b16 %v187
  %v613 = vunpack.c.h.b16 %v187
  %v614 = vunpack.c.l.b16 %v188
  %v615 = vunpack.c.h.b16 %v188
  %v616 = vunpack.c.l.b16 %v189
  %v617 = vunpack.c.h.b16 %v189
  %v618 = vunpack.c.l.b16 %v190
  %v619 = vunpack.c.h.b16 %v190
  %v620 = vunpack.c.l.b16 %v191
  %v621 = vunpack.c.h.b16 %v191
  %v622 = vunpack.c.l.b16 %v192
  %v623 = vunpack.c.h.b16 %v192
  %v624 = vunpack.c.l.b16 %v193
  %v625 = vunpack.c.h.b16 %v193
  %v626 = vunpack.c.l.b16 %v194
  %v627 = vunpack.c.h.b16 %v194
  %v628 = vunpack.c.l.b16 %v195
  %v629 = vunpack.c.h.b16 %v195
  %v630 = vunpack.c.l.b16 %v196
  %v631 = vunpack.c.h.b16 %v196
  %v632 = vunpack.c.l.b16 %v197
  %v633 = vunpack.c.h.b16 %v197
  %v634 = vunpack.c.l.b16 %v198
  %v635 = vunpack.c.h.b16 %v198
  %v636 = vunpack.c.l.b16 %v199
  %v637 = vunpack.c.h.b16 %v199
  %v638 = vunpack.c.l.b16 %v200
  %v639 = vunpack.c.h.b16 %v200
  %v640 = vunpack.c.l.b16 %v201
  %v641 = vunpack.c.h.b16 %v201
  %v642 = vunpack.c.l.b16 %v202
  %v643 = vunpack.c.h.b16 %v202
  %v644 = vunpack.c.l.b16 %v203
  %v645 = vunpack.c.h.b16 %v203
  %v646 = vunpack.c.l.b16 %v204
  %v647 = vunpack.c.h.b16 %v204
  %v648 = vunpack.c.l.b16 %v205
  %v649 = vunpack.c.h.b16 %v205
  %v650 = vunpack.c.l.b16 %v206
  %v651 = vunpack.c.h.b16 %v206
  %v652 = vunpack.c.l.b16 %v207
  %v653 = vunpack.c.h.b16 %v207
  %v654 = vunpack.c.l.b16 %v208
  %v655 = vunpack.c.h.b16 %v208
  %v656 = vunpack.c.l.b16 %v209
  %v657 = vunpack.c.h.b16 %v209
  %v658 = vunpack.c.l.b16 %v210
  %v659 = vunpack.c.h.b16 %v210
  %v660 = vunpack.c.l.b16 %v211
  %v661 = vunpack.c.h.b16 %v211
  %v662 = vunpack.c.l.b16 %v212
  %v663 = vunpack.c.h.b16 %v212
  %v664 = vunpack.c.l.b16 %v213
  %v665 = vunpack.c.h.b16 %v213
  %v666 = vunpack.c.l.b16 %v214
  %v667 = vunpack.c.h.b16 %v214
  %v668 = vunpack.c.l.b16 %v215
  %v669 = vunpack.c.h.b16 %v215
  %v670 = vunpack.c.l.b16 %v216
  %v671 = vunpack.c.h.b16 %v216
  %v672 = vunpack.c.l.b16 %v217
  %v673 = vunpack.c.h.b16 %v217
  %v674 = vunpack.c.l.b16 %v218
  %v675 = vunpack.c.h.b16 %v218
  %v676 = vunpack.c.l.b16 %v219
  %v677 = vunpack.c.h.b16 %v219
  %v678 = vunpack.c.l.b16 %v220
  %v679 = vunpack.c.h.b16 %v220
  %v680 = vunpack.c.l.b16 %v221
  %v681 = vunpack.c.h.b16 %v221
  %v682 = vunpack.c.l.b16 %v222
  %v683 = vunpack.c.h.b16 %v222
  %v684 = vunpack.c.l.b16 %v223
  %v685 = vunpack.c.h.b16 %v223
  %v686 = vunpack.c.l.b16 %v224
  %v687 = vunpack.c.h.b16 %v224
  %v688 = vunpack.c.l.b16 %v225
  %v689 = vunpack.c.h.b16 %v225
  %v690 = vunpack.c.l.b16 %v226
  %v691 = vunpack.c.h.b16 %v226
  %v692 = vunpack.c.l.b16 %v227
  %v693 = vunpack.c.h.b16 %v227
  %v694 = vunpack.c.l.b16 %v228
  %v695 = vunpack.c.h.b16 %v228
  %v696 = vunpack.c.l.b16 %v229
  %v697 = vunpack.c.h.b16 %v229
  %v698 = vunpack.c.l.b16 %v230
  %v699 = vunpack.c.h.b16 %v230
  %v700 = vunpack.c.l.b16 %v231
  %v701 = vunpack.c.h.b16 %v231
  %v702 = vunpack.c.l.b16 %v232
  %v703 = vunpack.c.h.b16 %v232
  %v704 = vunpack.c.l.b16 %v233
  %v705 = vunpack.c.h.b16 %v233
  %v706 = vunpack.c.l.b16 %v234
  %v707 = vunpack.c.h.b16 %v234
  %v708 = vunpack.c.l.b16 %v235
  %v709 = vunpack.c.h.b16 %v235
  %v710 = vunpack.c.l.b16 %v236
  %v711 = vunpack.c.h.b16 %v236
  %v712 = vunpack.c.l.b16 %v237
  %v713 = vunpack.c.h.b16 %v237
  %v714 = vunpack.c.l.b16 %v238
  %v715 = vunpack.c.h.b16 %v238
  %v716 = vunpack.c.l.b16 %v239
  %v717 = vunpack.c.h.b16 %v239
  %v718 = vunpack.c.l.b16 %v240
  %v719 = vunpack.c.h.b16 %v240
  %v720 = vunpack.c.l.b16 %v241
  %v721 = vunpack.c.h.b16 %v241
  %v722 = vunpack.c.l.b16 %v242
  %v723 = vunpack.c.h.b16 %v242
  %v724 = vunpack.c.l.b16 %v243
  %v725 = vunpack.c.h.b16 %v243
  %v726 = vunpack.c.l.b16 %v244
  %v727 = vunpack.c.h.b16 %v244
  %v728 = vunpack.c.l.b16 %v245
  %v729 = vunpack.c.h.b16 %v245
  %v730 = vunpack.c.l.b16 %v246
  %v731 = vunpack.c.h.b16 %v246
  %v732 = vunpack.c.l.b16 %v247
  %v733 = vunpack.c.h.b16 %v247
  %v734 = vunpack.c.l.b16 %v248
  %v735 = vunpack.c.h.b16 %v248
  %v736 = vunpack.c.l.b16 %v249
  %v737 = vunpack.c.h.b16 %v249
  %v738 = vunpack.c.l.b16 %v250
  %v739 = vunpack.c.h.b16 %v250
  %v740 = vunpack.c.l.b16 %v251
  %v741 = vunpack.c.h.b16 %v251
  %v742 = vunpack.c.l.b16 %v252
  %v743 = vunpack.c.h.b16 %v252
  %v744 = vunpack.c.l.b16 %v253
  %v745 = vunpack.c.h.b16 %v253
  %v746 = vunpack.c.l.b16 %v254
  %v747 = vunpack.c.h.b16 %v254
  %v748 = vunpack.c.l.b16 %v255
  %v749 = vunpack.c.h.b16 %v255
  %v750 = vunpack.c.l.b16 %v256
  %v751 = vunpack.c.h.b16 %v256
  %v752 = vunpack.c.l.b16 %v257
  %v753 = vunpack.c.h.b16 %v257
  %v754 = vunpack.c.l.b16 %v258
  %v755 = vunpack.c.h.b16 %v258
  %v756 = vunpack.c.l.b16 %v259
  %v757 = vunpack.c.h.b16 %v259
  %v758 = vunpack.c.l.b16 %v260
  %v759 = vunpack.c.h.b16 %v260
  %v760 = vunpack.c.l.b16 %v261
  %v761 = vunpack.c.h.b16 %v261
  %v762 = vunpack.c.l.b16 %v262
  %v763 = vunpack.c.h.b16 %v262
  %v764 = vunpack.c.l.b16 %v263
  %v765 = vunpack.c.h.b16 %v263
  %v766 = vunpack.c.l.b16 %v264
  %v767 = vunpack.c.h.b16 %v264
  %v768 = vunpack.c.l.b16 %v265
  %v769 = vunpack.c.h.b16 %v265
  %v770 = vunpack.c.l.b16 %v266
  %v771 = vunpack.c.h.b16 %v266
  %v772 = vunpack.c.l.b16 %v267
  %v773 = vunpack.c.h.b16 %v267
  %v774 = vunpack.c.l.b16 %v268
  %v775 = vunpack.c.h.b16 %v268
  %v776 = vunpack.c.l.b16 %v269
  %v777 = vunpack.c.h.b16 %v269
  %v778 = vunpack.c.l.b16 %v270
  %v779 = vunpack.c.h.b16 %v270
  %v780 = vunpack.c.l.b16 %v271
  %v781 = vunpack.c.h.b16 %v271
  %v782 = vunpack.c.l.b16 %v272
  %v783 = vunpack.c.h.b16 %v272
  %v784 = vunpack.c.l.b16 %v273
  %v785 = vunpack.c.h.b16 %v273
  %v786 = vunpack.c.l.b16 %v274
  %v787 = vunpack.c.h.b16 %v274
  %v788 = vunpack.c.l.b16 %v275
  %v789 = vunpack.c.h.b16 %v275
  %v790 = vunpack.c.l.b16 %v276
  %v791 = vunpack.c.h.b16 %v276
  %v792 = vunpack.c.l.b16 %v277
  %v793 = vunpack.c.h.b16 %v277
  %v794 = vunpack.c.l.b16 %v278
  %v795 = vunpack.c.h.b16 %v278
  %v796 = vunpack.c.l.b16 %v279
  %v797 = vunpack.c.h.b16 %v279
  %v798 = vunpack.c.l.b16 %v280
  %v799 = vunpack.c.h.b16 %v280
  %v800 = vunpack.c.l.b16 %v281
  %v801 = vunpack.c.h.b16 %v281
  %v802 = vunpack.c.l.b16 %v282
  %v803 = vunpack.c.h.b16 %v282
  %v804 = vunpack.c.l.b16 %v283
  %v805 = vunpack.c.h.b16 %v283
  %v806 = vunpack.c.l.b16 %v284
  %v807 = vunpack.c.h.b16 %v284
  %v808 = vunpack.c.l.b16 %v285
  %v809 = vunpack.c.h.b16 %v285
  %v810 = vunpack.c.l.b16 %v286
  %v811 = vunpack.c.h.b16 %v286
  %v812 = vunpack.c.l.b16 %v287
  %v813 = vunpack.c.h.b16 %v287
  %v814 = vunpack.c.l.b16 %v288
  %v815 = vunpack.c.h.b16 %v288
  %v816 = vunpack.c.l.b16 %v289
  %v817 = vunpack.c.h.b16 %v289
  %v818 = vunpack.c.l.b16 %v290
  %v819 = vunpack.c.h.b16 %v290
  %v820 = vunpack.c.l.b16 %v291
  %v821 = vunpack.c.h.b16 %v291
  %v822 = vunpack.c.l.b16 %v292
  %v823 = vunpack.c.h.b16 %v292
  %v824 = vunpack.c.l.b16 %v293
  %v825 = vunpack.c.h.b16 %v293
  %v826 = vunpack.c.l.b16 %v294
  %v827 = vunpack.c.h.b16 %v294
  %v828 = vunpack.c.l.b16 %v295
  %v829 = vunpack.c.h.b16 %v295
  %v830 = vunpack.c.l.b16 %v296
  %v831 = vunpack.c.h.b16 %v296
  %v832 = vunpack.c.l.b16 %v297
  %v833 = vunpack.c.h.b16 %v297
  %v834 = vunpack.c.l.b16 %v298
  %v835 = vunpack.c.h.b16 %v298
  %v836 = vunpack.c.l.b16 %v299
  %v837 = vunpack.c.h.b16 %v299
  %v838 = vunpack.c.l.b16 %v300
  %v839 = vunpack.c.h.b16 %v300
  %v840 = vunpack.c.l.b16 %v301
  %v841 = vunpack.c.h.b16 %v301
  %v842 = vunpack.c.l.b16 %v302
  %v843 = vunpack.c.h.b16 %v302
  %v844 = vunpack.c.l.b16 %v303
  %v845 = vunpack.c.h.b16 %v303
  %v846 = vunpack.c.l.b16 %v304
  %v847 = vunpack.c.h.b16 %v304
  %v848 = vunpack.c.l.b16 %v305
  %v849 = vunpack.c.h.b16 %v305
  %v850 = vpack.c.b16 %v598, %v594
  %v851 = vpack.c.b16 %v599, %v595
  %v852 = vpack.c.b16 %v600, %v596
  %v853 = vpack.c.b16 %v601, %v597
  %v854 = vpack.c.b16 %v606, %v602
  %v855 = vpack.c.b16 %v607, %v603
  %v856 = vpack.c.b16 %v608, %v604
  %v857 = vpack.c.b16 %v609, %v605
  %v858 = vpack.c.b16 %v614, %v610
  %v859 = vpack.c.b16 %v615, %v611
  %v860 = vpack.c.b16 %v616, %v612
  %v861 = vpack.c.b16 %v617, %v613
  %v862 = vpack.c.b16 %v622, %v618
  %v863 = vpack.c.b16 %v623, %v619
  %v864 = vpack.c.b16 %v624, %v620
  %v865 = vpack.c.b16 %v625, %v621
  %v866 = vpack.c.b16 %v630, %v626
  %v867 = vpack.c.b16 %v631, %v627
  %v868 = vpack.c.b16 %v632, %v628
  %v869 = vpack.c.b16 %v633, %v629
  %v870 = vpack.c.b16 %v638, %v634
  %v871 = vpack.c.b16 %v639, %v635
  %v872 = vpack.c.b16 %v640, %v636
  %v873 = vpack.c.b16 %v641, %v637
  %v874 = vpack.c.b16 %v646, %v642
  %v875 = vpack.c.b16 %v647, %v643
  %v876 = vpack.c.b16 %v648, %v644
  %v877 = vpack.c.b16 %v649, %v645
  %v878 = vpack.c.b16 %v654, %v650
  %v879 = vpack.c.b16 %v655, %v651
  %v880 = vpack.c.b16 %v656, %v652
  %v881 = vpack.c.b16 %v657, %v653
  %v882 = vpack.c.b16 %v662, %v658
  %v883 = vpack.c.b16 %v663, %v659
  %v884 = vpack.c.b16 %v664, %v660
  %v885 = vpack.c.b16 %v665, %v661
  %v886 = vpack.c.b16 %v670, %v666
  %v887 = vpack.c.b16 %v671, %v667
  %v888 = vpack.c.b16 %v672, %v668
  %v889 = vpack.c.b16 %v673, %v669
  %v890 = vpack.c.b16 %v678, %v674
  %v891 = vpack.c.b16 %v679, %v675
  %v892 = vpack.c.b16 %v680, %v676
  %v893 = vpack.c.b16 %v681, %v677
  %v894 = vpack.c.b16 %v686, %v682
  %v895 = vpack.c.b16 %v687, %v683
  %v896 = vpack.c.b16 %v688, %v684
  %v897 = vpack.c.b16 %v689, %v685
  %v898 = vpack.c.b16 %v694, %v690
  %v899 = vpack.c.b16 %v695, %v691
  %v900 = vpack.c.b16 %v696, %v692
  %v901 = vpack.c.b16 %v697, %v693
  %v902 = vpack.c.b16 %v702, %v698
  %v903 = vpack.c.b16 %v703, %v699
  %v904 = vpack.c.b16 %v704, %v700
  %v905 = vpack.c.b16 %v705, %v701
  %v906 = vpack.c.b16 %v710, %v706
  %v907 = vpack.c.b16 %v711, %v707
  %v908 = vpack.c.b16 %v712, %v708
  %v909 = vpack.c.b16 %v713, %v709
  %v910 = vpack.c.b16 %v718, %v714
  %v911 = vpack.c.b16 %v719, %v715
  %v912 = vpack.c.b16 %v720, %v716
  %v913 = vpack.c.b16 %v721, %v717
  %v914 = vpack.c.b16 %v726, %v722
  %v915 = vpack.c.b16 %v727, %v723
  %v916 = vpack.c.b16 %v728, %v724
  %v917 = vpack.c.b16 %v729, %v725
  %v918 = vpack.c.b16 %v734, %v730
  %v919 = vpack.c.b16 %v735, %v731
  %v920 = vpack.c.b16 %v736, %v732
  %v921 = vpack.c.b16 %v737, %v733
  %v922 = vpack.c.b16 %v742, %v738
  %v923 = vpack.c.b16 %v743, %v739
  %v924 = vpack.c.b16 %v744, %v740
  %v925 = vpack.c.b16 %v745, %v741
  %v926 = vpack.c.b16 %v750, %v746
  %v927 = vpack.c.b16 %v751, %v747
  %v928 = vpack.c.b16 %v752, %v748
  %v929 = vpack.c.b16 %v753, %v749
  %v930 = vpack.c.b16 %v758, %v754
  %v931 = vpack.c.b16 %v759, %v755
  %v932 = vpack.c.b16 %v760, %v756
  %v933 = vpack.c.b16 %v761, %v757
  %v934 = vpack.c.b16 %v766, %v762
  %v935 = vpack.c.b16 %v767, %v763
  %v936 = vpack.c.b16 %v768, %v764
  %v937 = vpack.c.b16 %v769, %v765
  %v938 = vpack.c.b16 %v774, %v770
  %v939 = vpack.c.b16 %v775, %v771
  %v940 = vpack.c.b16 %v776, %v772
  %v941 = vpack.c.b16 %v777, %v773
  %v942 = vpack.c.b16 %v782, %v778
  %v943 = vpack.c.b16 %v783, %v779
  %v944 = vpack.c.b16 %v784, %v780
  %v945 = vpack.c.b16 %v785, %v781
  %v946 = vpack.c.b16 %v790, %v786
  %v947 = vpack.c.b16 %v791, %v787
  %v948 = vpack.c.b16 %v792, %v788
  %v949 = vpack.c.b16 %v793, %v789
  %v950 = vpack.c.b16 %v798, %v794
  %v951 = vpack.c.b16 %v799, %v795
  %v952 = vpack.c.b16 %v800, %v796
  %v953 = vpack.c.b16 %v801, %v797
  %v954 = vpack.c.b16 %v806, %v802
  %v955 = vpack.c.b16 %v807, %v803
  %v956 = vpack.c.b16 %v808, %v804
  %v957 = vpack.c.b16 %v809, %v805
  %v958 = vpack.c.b16 %v814, %v810
  %v959 = vpack.c.b16 %v815, %v811
  %v960 = vpack.c.b16 %v816, %v812
  %v961 = vpack.c.b16 %v817, %v813
  %v962 = vpack.c.b16 %v822, %v818
  %v963 = vpack.c.b16 %v823, %v819
  %v964 = vpack.c.b16 %v824, %v820
  %v965 = vpack.c.b16 %v825, %v821
  %v966 = vpack.c.b16 %v830, %v826
  %v967 = vpack.c.b16 %v831, %v827
  %v968 = vpack.c.b16 %v832, %v828
  %v969 = vpack.c.b16 %v833, %v829
  %v970 = vpack.c.b16 %v838, %v834
  %v971 = vpack.c.b16 %v839, %v835
  %v972 = vpack.c.b16 %v840, %v836
  %v973 = vpack.c.b16 %v841, %v837
  %v974 = vpack.c.b16 %v846, %v842
  %v975 = vpack.c.b16 %v847, %v843
  %v976 = vpack.c.b16 %v848, %v844
  %v977 = vpack.c.b16 %v849, %v845
  %1106 = vmatpush.bf16.msra.mxu0 %v878
  %1107 = vmatpush.bf16.msra.mxu0 %v874
  %1108 = vmatpush.bf16.msra.mxu0 %v870
  %1109 = vmatpush.bf16.msra.mxu0 %v866
  %1110 = vmatpush.bf16.msra.mxu0 %v862
  %1111 = vmatpush.bf16.msra.mxu0 %v858
  %1112 = vmatpush.bf16.msra.mxu0 %v854
  %1113 = vmatpush.bf16.msra.mxu0 %v850
  %1114 = vmatmul.bf16.gmra.mxu0 %v402
  %v1115 = vpop.f32.mrf.mxu0
  %v1116 = vadd.f32 0.0, %v1115
  %v1117 = vpop.f32.mrf.mxu0
  %v1118 = vadd.f32 0.0, %v1117
  %1119 = vmatmul.bf16.gmra.mxu0 %v406
  %v1120 = vpop.f32.mrf.mxu0
  %v1121 = vadd.f32 0.0, %v1120
  %v1122 = vpop.f32.mrf.mxu0
  %v1123 = vadd.f32 0.0, %v1122
  %1124 = vmatmul.bf16.gmra.mxu0 %v410
  %v1125 = vpop.f32.mrf.mxu0
  %v1126 = vadd.f32 0.0, %v1125
  %v1127 = vpop.f32.mrf.mxu0
  %v1128 = vadd.f32 0.0, %v1127
  %1129 = vmatmul.bf16.gmra.mxu0 %v414
  %v1130 = vpop.f32.mrf.mxu0
  %v1131 = vadd.f32 0.0, %v1130
  %v1132 = vpop.f32.mrf.mxu0
  %v1133 = vadd.f32 0.0, %v1132
  %1134 = vmatmul.bf16.gmra.mxu0 %v418
  %v1135 = vpop.f32.mrf.mxu0
  %v1136 = vadd.f32 0.0, %v1135
  %v1137 = vpop.f32.mrf.mxu0
  %v1138 = vadd.f32 0.0, %v1137
  %1139 = vmatmul.bf16.gmra.mxu0 %v422
  %v1140 = vpop.f32.mrf.mxu0
  %v1141 = vadd.f32 0.0, %v1140
  %v1142 = vpop.f32.mrf.mxu0
  %v1143 = vadd.f32 0.0, %v1142
  %1144 = vmatmul.bf16.gmra.mxu0 %v426
  %v1145 = vpop.f32.mrf.mxu0
  %v1146 = vadd.f32 0.0, %v1145
  %v1147 = vpop.f32.mrf.mxu0
  %v1148 = vadd.f32 0.0, %v1147
  %1149 = vmatmul.bf16.gmra.mxu0 %v430
  %v1150 = vpop.f32.mrf.mxu0
  %v1151 = vadd.f32 0.0, %v1150
  %v1152 = vpop.f32.mrf.mxu0
  %v1153 = vadd.f32 0.0, %v1152
  %1154 = vdwg.mxu0
  %1155 = vmatpush.bf16.msra.mxu0 %v910
  %1156 = vmatpush.bf16.msra.mxu0 %v906
  %1157 = vmatpush.bf16.msra.mxu0 %v902
  %1158 = vmatpush.bf16.msra.mxu0 %v898
  %1159 = vmatpush.bf16.msra.mxu0 %v894
  %1160 = vmatpush.bf16.msra.mxu0 %v890
  %1161 = vmatpush.bf16.msra.mxu0 %v886
  %1162 = vmatpush.bf16.msra.mxu0 %v882
  %1163 = vmatmul.bf16.gmra.mxu0 %v403
  %v1164 = vpop.f32.mrf.mxu0
  %v1165 = vadd.f32 %v1116, %v1164
  %v1166 = vpop.f32.mrf.mxu0
  %v1167 = vadd.f32 %v1118, %v1166
  %1168 = vmatmul.bf16.gmra.mxu0 %v407
  %v1169 = vpop.f32.mrf.mxu0
  %v1170 = vadd.f32 %v1121, %v1169
  %v1171 = vpop.f32.mrf.mxu0
  %v1172 = vadd.f32 %v1123, %v1171
  %1173 = vmatmul.bf16.gmra.mxu0 %v411
  %v1174 = vpop.f32.mrf.mxu0
  %v1175 = vadd.f32 %v1126, %v1174
  %v1176 = vpop.f32.mrf.mxu0
  %v1177 = vadd.f32 %v1128, %v1176
  %1178 = vmatmul.bf16.gmra.mxu0 %v415
  %v1179 = vpop.f32.mrf.mxu0
  %v1180 = vadd.f32 %v1131, %v1179
  %v1181 = vpop.f32.mrf.mxu0
  %v1182 = vadd.f32 %v1133, %v1181
  %1183 = vmatmul.bf16.gmra.mxu0 %v419
  %v1184 = vpop.f32.mrf.mxu0
  %v1185 = vadd.f32 %v1136, %v1184
  %v1186 = vpop.f32.mrf.mxu0
  %v1187 = vadd.f32 %v1138, %v1186
  %1188 = vmatmul.bf16.gmra.mxu0 %v423
  %v1189 = vpop.f32.mrf.mxu0
  %v1190 = vadd.f32 %v1141, %v1189
  %v1191 = vpop.f32.mrf.mxu0
  %v1192 = vadd.f32 %v1143, %v1191
  %1193 = vmatmul.bf16.gmra.mxu0 %v427
  %v1194 = vpop.f32.mrf.mxu0
  %v1195 = vadd.f32 %v1146, %v1194
  %v1196 = vpop.f32.mrf.mxu0
  %v1197 = vadd.f32 %v1148, %v1196
  %1198 = vmatmul.bf16.gmra.mxu0 %v431
  %v1199 = vpop.f32.mrf.mxu0
  %v1200 = vadd.f32 %v1151, %v1199
  %v1201 = vpop.f32.mrf.mxu0
  %v1202 = vadd.f32 %v1153, %v1201
  %1203 = vdwg.mxu0
  %1204 = vmatpush.bf16.msra.mxu0 %v942
  %1205 = vmatpush.bf16.msra.mxu0 %v938
  %1206 = vmatpush.bf16.msra.mxu0 %v934
  %1207 = vmatpush.bf16.msra.mxu0 %v930
  %1208 = vmatpush.bf16.msra.mxu0 %v926
  %1209 = vmatpush.bf16.msra.mxu0 %v922
  %1210 = vmatpush.bf16.msra.mxu0 %v918
  %1211 = vmatpush.bf16.msra.mxu0 %v914
  %1212 = vmatmul.bf16.gmra.mxu0 %v404
  %v1213 = vpop.f32.mrf.mxu0
  %v1214 = vadd.f32 %v1165, %v1213
  %v1215 = vpop.f32.mrf.mxu0
  %v1216 = vadd.f32 %v1167, %v1215
  %1217 = vmatmul.bf16.gmra.mxu0 %v408
  %v1218 = vpop.f32.mrf.mxu0
  %v1219 = vadd.f32 %v1170, %v1218
  %v1220 = vpop.f32.mrf.mxu0
  %v1221 = vadd.f32 %v1172, %v1220
  %1222 = vmatmul.bf16.gmra.mxu0 %v412
  %v1223 = vpop.f32.mrf.mxu0
  %v1224 = vadd.f32 %v1175, %v1223
  %v1225 = vpop.f32.mrf.mxu0
  %v1226 = vadd.f32 %v1177, %v1225
  %1227 = vmatmul.bf16.gmra.mxu0 %v416
  %v1228 = vpop.f32.mrf.mxu0
  %v1229 = vadd.f32 %v1180, %v1228
  %v1230 = vpop.f32.mrf.mxu0
  %v1231 = vadd.f32 %v1182, %v1230
  %1232 = vmatmul.bf16.gmra.mxu0 %v420
  %v1233 = vpop.f32.mrf.mxu0
  %v1234 = vadd.f32 %v1185, %v1233
  %v1235 = vpop.f32.mrf.mxu0
  %v1236 = vadd.f32 %v1187, %v1235
  %1237 = vmatmul.bf16.gmra.mxu0 %v424
  %v1238 = vpop.f32.mrf.mxu0
  %v1239 = vadd.f32 %v1190, %v1238
  %v1240 = vpop.f32.mrf.mxu0
  %v1241 = vadd.f32 %v1192, %v1240
  %1242 = vmatmul.bf16.gmra.mxu0 %v428
  %v1243 = vpop.f32.mrf.mxu0
  %v1244 = vadd.f32 %v1195, %v1243
  %v1245 = vpop.f32.mrf.mxu0
  %v1246 = vadd.f32 %v1197, %v1245
  %1247 = vmatmul.bf16.gmra.mxu0 %v432
  %v1248 = vpop.f32.mrf.mxu0
  %v1249 = vadd.f32 %v1200, %v1248
  %v1250 = vpop.f32.mrf.mxu0
  %v1251 = vadd.f32 %v1202, %v1250
  %1252 = vdwg.mxu0
  %1253 = vmatpush.bf16.msra.mxu0 %v974
  %1254 = vmatpush.bf16.msra.mxu0 %v970
  %1255 = vmatpush.bf16.msra.mxu0 %v966
  %1256 = vmatpush.bf16.msra.mxu0 %v962
  %1257 = vmatpush.bf16.msra.mxu0 %v958
  %1258 = vmatpush.bf16.msra.mxu0 %v954
  %1259 = vmatpush.bf16.msra.mxu0 %v950
  %1260 = vmatpush.bf16.msra.mxu0 %v946
  %1261 = vmatmul.bf16.gmra.mxu0 %v405
  %v1262 = vpop.f32.mrf.mxu0
  %v1263 = vadd.f32 %v1214, %v1262
  %v1264 = vpop.f32.mrf.mxu0
  %v1265 = vadd.f32 %v1216, %v1264
  %1266 = vmatmul.bf16.gmra.mxu0 %v409
  %v1267 = vpop.f32.mrf.mxu0
  %v1268 = vadd.f32 %v1219, %v1267
  %v1269 = vpop.f32.mrf.mxu0
  %v1270 = vadd.f32 %v1221, %v1269
  %1271 = vmatmul.bf16.gmra.mxu0 %v413
  %v1272 = vpop.f32.mrf.mxu0
  %v1273 = vadd.f32 %v1224, %v1272
  %v1274 = vpop.f32.mrf.mxu0
  %v1275 = vadd.f32 %v1226, %v1274
  %1276 = vmatmul.bf16.gmra.mxu0 %v417
  %v1277 = vpop.f32.mrf.mxu0
  %v1278 = vadd.f32 %v1229, %v1277
  %v1279 = vpop.f32.mrf.mxu0
  %v1280 = vadd.f32 %v1231, %v1279
  %1281 = vmatmul.bf16.gmra.mxu0 %v421
  %v1282 = vpop.f32.mrf.mxu0
  %v1283 = vadd.f32 %v1234, %v1282
  %v1284 = vpop.f32.mrf.mxu0
  %v1285 = vadd.f32 %v1236, %v1284
  %1286 = vmatmul.bf16.gmra.mxu0 %v425
  %v1287 = vpop.f32.mrf.mxu0
  %v1288 = vadd.f32 %v1239, %v1287
  %v1289 = vpop.f32.mrf.mxu0
  %v1290 = vadd.f32 %v1241, %v1289
  %1291 = vmatmul.bf16.gmra.mxu0 %v429
  %v1292 = vpop.f32.mrf.mxu0
  %v1293 = vadd.f32 %v1244, %v1292
  %v1294 = vpop.f32.mrf.mxu0
  %v1295 = vadd.f32 %v1246, %v1294
  %1296 = vmatmul.bf16.gmra.mxu0 %v433
  %v1297 = vpop.f32.mrf.mxu0
  %v1298 = vadd.f32 %v1249, %v1297
  %v1299 = vpop.f32.mrf.mxu0
  %v1300 = vadd.f32 %v1251, %v1299
  %1301 = vdwg.mxu0
  %1302 = vmatpush.bf16.msra.mxu0 %v879
  %1303 = vmatpush.bf16.msra.mxu0 %v875
  %1304 = vmatpush.bf16.msra.mxu0 %v871
  %1305 = vmatpush.bf16.msra.mxu0 %v867
  %1306 = vmatpush.bf16.msra.mxu0 %v863
  %1307 = vmatpush.bf16.msra.mxu0 %v859
  %1308 = vmatpush.bf16.msra.mxu0 %v855
  %1309 = vmatpush.bf16.msra.mxu0 %v851
  %1310 = vmatmul.bf16.gmra.mxu0 %v402
  %v1311 = vpop.f32.mrf.mxu0
  %v1312 = vadd.f32 0.0, %v1311
  %v1313 = vpop.f32.mrf.mxu0
  %v1314 = vadd.f32 0.0, %v1313
  %1315 = vmatmul.bf16.gmra.mxu0 %v406
  %v1316 = vpop.f32.mrf.mxu0
  %v1317 = vadd.f32 0.0, %v1316
  %v1318 = vpop.f32.mrf.mxu0
  %v1319 = vadd.f32 0.0, %v1318
  %1320 = vmatmul.bf16.gmra.mxu0 %v410
  %v1321 = vpop.f32.mrf.mxu0
  %v1322 = vadd.f32 0.0, %v1321
  %v1323 = vpop.f32.mrf.mxu0
  %v1324 = vadd.f32 0.0, %v1323
  %1325 = vmatmul.bf16.gmra.mxu0 %v414
  %v1326 = vpop.f32.mrf.mxu0
  %v1327 = vadd.f32 0.0, %v1326
  %v1328 = vpop.f32.mrf.mxu0
  %v1329 = vadd.f32 0.0, %v1328
  %1330 = vmatmul.bf16.gmra.mxu0 %v418
  %v1331 = vpop.f32.mrf.mxu0
  %v1332 = vadd.f32 0.0, %v1331
  %v1333 = vpop.f32.mrf.mxu0
  %v1334 = vadd.f32 0.0, %v1333
  %1335 = vmatmul.bf16.gmra.mxu0 %v422
  %v1336 = vpop.f32.mrf.mxu0
  %v1337 = vadd.f32 0.0, %v1336
  %v1338 = vpop.f32.mrf.mxu0
  %v1339 = vadd.f32 0.0, %v1338
  %1340 = vmatmul.bf16.gmra.mxu0 %v426
  %v1341 = vpop.f32.mrf.mxu0
  %v1342 = vadd.f32 0.0, %v1341
  %v1343 = vpop.f32.mrf.mxu0
  %v1344 = vadd.f32 0.0, %v1343
  %1345 = vmatmul.bf16.gmra.mxu0 %v430
  %v1346 = vpop.f32.mrf.mxu0
  %v1347 = vadd.f32 0.0, %v1346
  %v1348 = vpop.f32.mrf.mxu0
  %v1349 = vadd.f32 0.0, %v1348
  %1350 = vdwg.mxu0
  %1351 = vmatpush.bf16.msra.mxu0 %v911
  %1352 = vmatpush.bf16.msra.mxu0 %v907
  %1353 = vmatpush.bf16.msra.mxu0 %v903
  %1354 = vmatpush.bf16.msra.mxu0 %v899
  %1355 = vmatpush.bf16.msra.mxu0 %v895
  %1356 = vmatpush.bf16.msra.mxu0 %v891
  %1357 = vmatpush.bf16.msra.mxu0 %v887
  %1358 = vmatpush.bf16.msra.mxu0 %v883
  %1359 = vmatmul.bf16.gmra.mxu0 %v403
  %v1360 = vpop.f32.mrf.mxu0
  %v1361 = vadd.f32 %v1312, %v1360
  %v1362 = vpop.f32.mrf.mxu0
  %v1363 = vadd.f32 %v1314, %v1362
  %1364 = vmatmul.bf16.gmra.mxu0 %v407
  %v1365 = vpop.f32.mrf.mxu0
  %v1366 = vadd.f32 %v1317, %v1365
  %v1367 = vpop.f32.mrf.mxu0
  %v1368 = vadd.f32 %v1319, %v1367
  %1369 = vmatmul.bf16.gmra.mxu0 %v411
  %v1370 = vpop.f32.mrf.mxu0
  %v1371 = vadd.f32 %v1322, %v1370
  %v1372 = vpop.f32.mrf.mxu0
  %v1373 = vadd.f32 %v1324, %v1372
  %1374 = vmatmul.bf16.gmra.mxu0 %v415
  %v1375 = vpop.f32.mrf.mxu0
  %v1376 = vadd.f32 %v1327, %v1375
  %v1377 = vpop.f32.mrf.mxu0
  %v1378 = vadd.f32 %v1329, %v1377
  %1379 = vmatmul.bf16.gmra.mxu0 %v419
  %v1380 = vpop.f32.mrf.mxu0
  %v1381 = vadd.f32 %v1332, %v1380
  %v1382 = vpop.f32.mrf.mxu0
  %v1383 = vadd.f32 %v1334, %v1382
  %1384 = vmatmul.bf16.gmra.mxu0 %v423
  %v1385 = vpop.f32.mrf.mxu0
  %v1386 = vadd.f32 %v1337, %v1385
  %v1387 = vpop.f32.mrf.mxu0
  %v1388 = vadd.f32 %v1339, %v1387
  %1389 = vmatmul.bf16.gmra.mxu0 %v427
  %v1390 = vpop.f32.mrf.mxu0
  %v1391 = vadd.f32 %v1342, %v1390
  %v1392 = vpop.f32.mrf.mxu0
  %v1393 = vadd.f32 %v1344, %v1392
  %1394 = vmatmul.bf16.gmra.mxu0 %v431
  %v1395 = vpop.f32.mrf.mxu0
  %v1396 = vadd.f32 %v1347, %v1395
  %v1397 = vpop.f32.mrf.mxu0
  %v1398 = vadd.f32 %v1349, %v1397
  %1399 = vdwg.mxu0
  %1400 = vmatpush.bf16.msra.mxu0 %v943
  %1401 = vmatpush.bf16.msra.mxu0 %v939
  %1402 = vmatpush.bf16.msra.mxu0 %v935
  %1403 = vmatpush.bf16.msra.mxu0 %v931
  %1404 = vmatpush.bf16.msra.mxu0 %v927
  %1405 = vmatpush.bf16.msra.mxu0 %v923
  %1406 = vmatpush.bf16.msra.mxu0 %v919
  %1407 = vmatpush.bf16.msra.mxu0 %v915
  %1408 = vmatmul.bf16.gmra.mxu0 %v404
  %v1409 = vpop.f32.mrf.mxu0
  %v1410 = vadd.f32 %v1361, %v1409
  %v1411 = vpop.f32.mrf.mxu0
  %v1412 = vadd.f32 %v1363, %v1411
  %1413 = vmatmul.bf16.gmra.mxu0 %v408
  %v1414 = vpop.f32.mrf.mxu0
  %v1415 = vadd.f32 %v1366, %v1414
  %v1416 = vpop.f32.mrf.mxu0
  %v1417 = vadd.f32 %v1368, %v1416
  %1418 = vmatmul.bf16.gmra.mxu0 %v412
  %v1419 = vpop.f32.mrf.mxu0
  %v1420 = vadd.f32 %v1371, %v1419
  %v1421 = vpop.f32.mrf.mxu0
  %v1422 = vadd.f32 %v1373, %v1421
  %1423 = vmatmul.bf16.gmra.mxu0 %v416
  %v1424 = vpop.f32.mrf.mxu0
  %v1425 = vadd.f32 %v1376, %v1424
  %v1426 = vpop.f32.mrf.mxu0
  %v1427 = vadd.f32 %v1378, %v1426
  %1428 = vmatmul.bf16.gmra.mxu0 %v420
  %v1429 = vpop.f32.mrf.mxu0
  %v1430 = vadd.f32 %v1381, %v1429
  %v1431 = vpop.f32.mrf.mxu0
  %v1432 = vadd.f32 %v1383, %v1431
  %1433 = vmatmul.bf16.gmra.mxu0 %v424
  %v1434 = vpop.f32.mrf.mxu0
  %v1435 = vadd.f32 %v1386, %v1434
  %v1436 = vpop.f32.mrf.mxu0
  %v1437 = vadd.f32 %v1388, %v1436
  %1438 = vmatmul.bf16.gmra.mxu0 %v428
  %v1439 = vpop.f32.mrf.mxu0
  %v1440 = vadd.f32 %v1391, %v1439
  %v1441 = vpop.f32.mrf.mxu0
  %v1442 = vadd.f32 %v1393, %v1441
  %1443 = vmatmul.bf16.gmra.mxu0 %v432
  %v1444 = vpop.f32.mrf.mxu0
  %v1445 = vadd.f32 %v1396, %v1444
  %v1446 = vpop.f32.mrf.mxu0
  %v1447 = vadd.f32 %v1398, %v1446
  %1448 = vdwg.mxu0
  %1449 = vmatpush.bf16.msra.mxu0 %v975
  %1450 = vmatpush.bf16.msra.mxu0 %v971
  %1451 = vmatpush.bf16.msra.mxu0 %v967
  %1452 = vmatpush.bf16.msra.mxu0 %v963
  %1453 = vmatpush.bf16.msra.mxu0 %v959
  %1454 = vmatpush.bf16.msra.mxu0 %v955
  %1455 = vmatpush.bf16.msra.mxu0 %v951
  %1456 = vmatpush.bf16.msra.mxu0 %v947
  %1457 = vmatmul.bf16.gmra.mxu0 %v405
  %v1458 = vpop.f32.mrf.mxu0
  %v1459 = vadd.f32 %v1410, %v1458
  %v1460 = vpop.f32.mrf.mxu0
  %v1461 = vadd.f32 %v1412, %v1460
  %1462 = vmatmul.bf16.gmra.mxu0 %v409
  %v1463 = vpop.f32.mrf.mxu0
  %v1464 = vadd.f32 %v1415, %v1463
  %v1465 = vpop.f32.mrf.mxu0
  %v1466 = vadd.f32 %v1417, %v1465
  %1467 = vmatmul.bf16.gmra.mxu0 %v413
  %v1468 = vpop.f32.mrf.mxu0
  %v1469 = vadd.f32 %v1420, %v1468
  %v1470 = vpop.f32.mrf.mxu0
  %v1471 = vadd.f32 %v1422, %v1470
  %1472 = vmatmul.bf16.gmra.mxu0 %v417
  %v1473 = vpop.f32.mrf.mxu0
  %v1474 = vadd.f32 %v1425, %v1473
  %v1475 = vpop.f32.mrf.mxu0
  %v1476 = vadd.f32 %v1427, %v1475
  %1477 = vmatmul.bf16.gmra.mxu0 %v421
  %v1478 = vpop.f32.mrf.mxu0
  %v1479 = vadd.f32 %v1430, %v1478
  %v1480 = vpop.f32.mrf.mxu0
  %v1481 = vadd.f32 %v1432, %v1480
  %1482 = vmatmul.bf16.gmra.mxu0 %v425
  %v1483 = vpop.f32.mrf.mxu0
  %v1484 = vadd.f32 %v1435, %v1483
  %v1485 = vpop.f32.mrf.mxu0
  %v1486 = vadd.f32 %v1437, %v1485
  %1487 = vmatmul.bf16.gmra.mxu0 %v429
  %v1488 = vpop.f32.mrf.mxu0
  %v1489 = vadd.f32 %v1440, %v1488
  %v1490 = vpop.f32.mrf.mxu0
  %v1491 = vadd.f32 %v1442, %v1490
  %1492 = vmatmul.bf16.gmra.mxu0 %v433
  %v1493 = vpop.f32.mrf.mxu0
  %v1494 = vadd.f32 %v1445, %v1493
  %v1495 = vpop.f32.mrf.mxu0
  %v1496 = vadd.f32 %v1447, %v1495
  %1497 = vdwg.mxu0
  %1498 = vmatpush.bf16.msra.mxu0 %v880
  %1499 = vmatpush.bf16.msra.mxu0 %v876
  %1500 = vmatpush.bf16.msra.mxu0 %v872
  %1501 = vmatpush.bf16.msra.mxu0 %v868
  %1502 = vmatpush.bf16.msra.mxu0 %v864
  %1503 = vmatpush.bf16.msra.mxu0 %v860
  %1504 = vmatpush.bf16.msra.mxu0 %v856
  %1505 = vmatpush.bf16.msra.mxu0 %v852
  %1506 = vmatmul.bf16.gmra.mxu0 %v402
  %v1507 = vpop.f32.mrf.mxu0
  %v1508 = vadd.f32 0.0, %v1507
  %v1509 = vpop.f32.mrf.mxu0
  %v1510 = vadd.f32 0.0, %v1509
  %1511 = vmatmul.bf16.gmra.mxu0 %v406
  %v1512 = vpop.f32.mrf.mxu0
  %v1513 = vadd.f32 0.0, %v1512
  %v1514 = vpop.f32.mrf.mxu0
  %v1515 = vadd.f32 0.0, %v1514
  %1516 = vmatmul.bf16.gmra.mxu0 %v410
  %v1517 = vpop.f32.mrf.mxu0
  %v1518 = vadd.f32 0.0, %v1517
  %v1519 = vpop.f32.mrf.mxu0
  %v1520 = vadd.f32 0.0, %v1519
  %1521 = vmatmul.bf16.gmra.mxu0 %v414
  %v1522 = vpop.f32.mrf.mxu0
  %v1523 = vadd.f32 0.0, %v1522
  %v1524 = vpop.f32.mrf.mxu0
  %v1525 = vadd.f32 0.0, %v1524
  %1526 = vmatmul.bf16.gmra.mxu0 %v418
  %v1527 = vpop.f32.mrf.mxu0
  %v1528 = vadd.f32 0.0, %v1527
  %v1529 = vpop.f32.mrf.mxu0
  %v1530 = vadd.f32 0.0, %v1529
  %1531 = vmatmul.bf16.gmra.mxu0 %v422
  %v1532 = vpop.f32.mrf.mxu0
  %v1533 = vadd.f32 0.0, %v1532
  %v1534 = vpop.f32.mrf.mxu0
  %v1535 = vadd.f32 0.0, %v1534
  %1536 = vmatmul.bf16.gmra.mxu0 %v426
  %v1537 = vpop.f32.mrf.mxu0
  %v1538 = vadd.f32 0.0, %v1537
  %v1539 = vpop.f32.mrf.mxu0
  %v1540 = vadd.f32 0.0, %v1539
  %1541 = vmatmul.bf16.gmra.mxu0 %v430
  %v1542 = vpop.f32.mrf.mxu0
  %v1543 = vadd.f32 0.0, %v1542
  %v1544 = vpop.f32.mrf.mxu0
  %v1545 = vadd.f32 0.0, %v1544
  %1546 = vdwg.mxu0
  %1547 = vmatpush.bf16.msra.mxu0 %v912
  %1548 = vmatpush.bf16.msra.mxu0 %v908
  %1549 = vmatpush.bf16.msra.mxu0 %v904
  %1550 = vmatpush.bf16.msra.mxu0 %v900
  %1551 = vmatpush.bf16.msra.mxu0 %v896
  %1552 = vmatpush.bf16.msra.mxu0 %v892
  %1553 = vmatpush.bf16.msra.mxu0 %v888
  %1554 = vmatpush.bf16.msra.mxu0 %v884
  %1555 = vmatmul.bf16.gmra.mxu0 %v403
  %v1556 = vpop.f32.mrf.mxu0
  %v1557 = vadd.f32 %v1508, %v1556
  %v1558 = vpop.f32.mrf.mxu0
  %v1559 = vadd.f32 %v1510, %v1558
  %1560 = vmatmul.bf16.gmra.mxu0 %v407
  %v1561 = vpop.f32.mrf.mxu0
  %v1562 = vadd.f32 %v1513, %v1561
  %v1563 = vpop.f32.mrf.mxu0
  %v1564 = vadd.f32 %v1515, %v1563
  %1565 = vmatmul.bf16.gmra.mxu0 %v411
  %v1566 = vpop.f32.mrf.mxu0
  %v1567 = vadd.f32 %v1518, %v1566
  %v1568 = vpop.f32.mrf.mxu0
  %v1569 = vadd.f32 %v1520, %v1568
  %1570 = vmatmul.bf16.gmra.mxu0 %v415
  %v1571 = vpop.f32.mrf.mxu0
  %v1572 = vadd.f32 %v1523, %v1571
  %v1573 = vpop.f32.mrf.mxu0
  %v1574 = vadd.f32 %v1525, %v1573
  %1575 = vmatmul.bf16.gmra.mxu0 %v419
  %v1576 = vpop.f32.mrf.mxu0
  %v1577 = vadd.f32 %v1528, %v1576
  %v1578 = vpop.f32.mrf.mxu0
  %v1579 = vadd.f32 %v1530, %v1578
  %1580 = vmatmul.bf16.gmra.mxu0 %v423
  %v1581 = vpop.f32.mrf.mxu0
  %v1582 = vadd.f32 %v1533, %v1581
  %v1583 = vpop.f32.mrf.mxu0
  %v1584 = vadd.f32 %v1535, %v1583
  %1585 = vmatmul.bf16.gmra.mxu0 %v427
  %v1586 = vpop.f32.mrf.mxu0
  %v1587 = vadd.f32 %v1538, %v1586
  %v1588 = vpop.f32.mrf.mxu0
  %v1589 = vadd.f32 %v1540, %v1588
  %1590 = vmatmul.bf16.gmra.mxu0 %v431
  %v1591 = vpop.f32.mrf.mxu0
  %v1592 = vadd.f32 %v1543, %v1591
  %v1593 = vpop.f32.mrf.mxu0
  %v1594 = vadd.f32 %v1545, %v1593
  %1595 = vdwg.mxu0
  %1596 = vmatpush.bf16.msra.mxu0 %v944
  %1597 = vmatpush.bf16.msra.mxu0 %v940
  %1598 = vmatpush.bf16.msra.mxu0 %v936
  %1599 = vmatpush.bf16.msra.mxu0 %v932
  %1600 = vmatpush.bf16.msra.mxu0 %v928
  %1601 = vmatpush.bf16.msra.mxu0 %v924
  %1602 = vmatpush.bf16.msra.mxu0 %v920
  %1603 = vmatpush.bf16.msra.mxu0 %v916
  %1604 = vmatmul.bf16.gmra.mxu0 %v404
  %v1605 = vpop.f32.mrf.mxu0
  %v1606 = vadd.f32 %v1557, %v1605
  %v1607 = vpop.f32.mrf.mxu0
  %v1608 = vadd.f32 %v1559, %v1607
  %1609 = vmatmul.bf16.gmra.mxu0 %v408
  %v1610 = vpop.f32.mrf.mxu0
  %v1611 = vadd.f32 %v1562, %v1610
  %v1612 = vpop.f32.mrf.mxu0
  %v1613 = vadd.f32 %v1564, %v1612
  %1614 = vmatmul.bf16.gmra.mxu0 %v412
  %v1615 = vpop.f32.mrf.mxu0
  %v1616 = vadd.f32 %v1567, %v1615
  %v1617 = vpop.f32.mrf.mxu0
  %v1618 = vadd.f32 %v1569, %v1617
  %1619 = vmatmul.bf16.gmra.mxu0 %v416
  %v1620 = vpop.f32.mrf.mxu0
  %v1621 = vadd.f32 %v1572, %v1620
  %v1622 = vpop.f32.mrf.mxu0
  %v1623 = vadd.f32 %v1574, %v1622
  %1624 = vmatmul.bf16.gmra.mxu0 %v420
  %v1625 = vpop.f32.mrf.mxu0
  %v1626 = vadd.f32 %v1577, %v1625
  %v1627 = vpop.f32.mrf.mxu0
  %v1628 = vadd.f32 %v1579, %v1627
  %1629 = vmatmul.bf16.gmra.mxu0 %v424
  %v1630 = vpop.f32.mrf.mxu0
  %v1631 = vadd.f32 %v1582, %v1630
  %v1632 = vpop.f32.mrf.mxu0
  %v1633 = vadd.f32 %v1584, %v1632
  %1634 = vmatmul.bf16.gmra.mxu0 %v428
  %v1635 = vpop.f32.mrf.mxu0
  %v1636 = vadd.f32 %v1587, %v1635
  %v1637 = vpop.f32.mrf.mxu0
  %v1638 = vadd.f32 %v1589, %v1637
  %1639 = vmatmul.bf16.gmra.mxu0 %v432
  %v1640 = vpop.f32.mrf.mxu0
  %v1641 = vadd.f32 %v1592, %v1640
  %v1642 = vpop.f32.mrf.mxu0
  %v1643 = vadd.f32 %v1594, %v1642
  %1644 = vdwg.mxu0
  %1645 = vmatpush.bf16.msra.mxu0 %v976
  %1646 = vmatpush.bf16.msra.mxu0 %v972
  %1647 = vmatpush.bf16.msra.mxu0 %v968
  %1648 = vmatpush.bf16.msra.mxu0 %v964
  %1649 = vmatpush.bf16.msra.mxu0 %v960
  %1650 = vmatpush.bf16.msra.mxu0 %v956
  %1651 = vmatpush.bf16.msra.mxu0 %v952
  %1652 = vmatpush.bf16.msra.mxu0 %v948
  %1653 = vmatmul.bf16.gmra.mxu0 %v405
  %v1654 = vpop.f32.mrf.mxu0
  %v1655 = vadd.f32 %v1606, %v1654
  %v1656 = vpop.f32.mrf.mxu0
  %v1657 = vadd.f32 %v1608, %v1656
  %1658 = vmatmul.bf16.gmra.mxu0 %v409
  %v1659 = vpop.f32.mrf.mxu0
  %v1660 = vadd.f32 %v1611, %v1659
  %v1661 = vpop.f32.mrf.mxu0
  %v1662 = vadd.f32 %v1613, %v1661
  %1663 = vmatmul.bf16.gmra.mxu0 %v413
  %v1664 = vpop.f32.mrf.mxu0
  %v1665 = vadd.f32 %v1616, %v1664
  %v1666 = vpop.f32.mrf.mxu0
  %v1667 = vadd.f32 %v1618, %v1666
  %1668 = vmatmul.bf16.gmra.mxu0 %v417
  %v1669 = vpop.f32.mrf.mxu0
  %v1670 = vadd.f32 %v1621, %v1669
  %v1671 = vpop.f32.mrf.mxu0
  %v1672 = vadd.f32 %v1623, %v1671
  %1673 = vmatmul.bf16.gmra.mxu0 %v421
  %v1674 = vpop.f32.mrf.mxu0
  %v1675 = vadd.f32 %v1626, %v1674
  %v1676 = vpop.f32.mrf.mxu0
  %v1677 = vadd.f32 %v1628, %v1676
  %1678 = vmatmul.bf16.gmra.mxu0 %v425
  %v1679 = vpop.f32.mrf.mxu0
  %v1680 = vadd.f32 %v1631, %v1679
  %v1681 = vpop.f32.mrf.mxu0
  %v1682 = vadd.f32 %v1633, %v1681
  %1683 = vmatmul.bf16.gmra.mxu0 %v429
  %v1684 = vpop.f32.mrf.mxu0
  %v1685 = vadd.f32 %v1636, %v1684
  %v1686 = vpop.f32.mrf.mxu0
  %v1687 = vadd.f32 %v1638, %v1686
  %1688 = vmatmul.bf16.gmra.mxu0 %v433
  %v1689 = vpop.f32.mrf.mxu0
  %v1690 = vadd.f32 %v1641, %v1689
  %v1691 = vpop.f32.mrf.mxu0
  %v1692 = vadd.f32 %v1643, %v1691
  %1693 = vdwg.mxu0
  %1694 = vmatpush.bf16.msra.mxu0 %v881
  %1695 = vmatpush.bf16.msra.mxu0 %v877
  %1696 = vmatpush.bf16.msra.mxu0 %v873
  %1697 = vmatpush.bf16.msra.mxu0 %v869
  %1698 = vmatpush.bf16.msra.mxu0 %v865
  %1699 = vmatpush.bf16.msra.mxu0 %v861
  %1700 = vmatpush.bf16.msra.mxu0 %v857
  %1701 = vmatpush.bf16.msra.mxu0 %v853
  %1702 = vmatmul.bf16.gmra.mxu0 %v402
  %v1703 = vpop.f32.mrf.mxu0
  %v1704 = vadd.f32 0.0, %v1703
  %v1705 = vpop.f32.mrf.mxu0
  %v1706 = vadd.f32 0.0, %v1705
  %1707 = vmatmul.bf16.gmra.mxu0 %v406
  %v1708 = vpop.f32.mrf.mxu0
  %v1709 = vadd.f32 0.0, %v1708
  %v1710 = vpop.f32.mrf.mxu0
  %v1711 = vadd.f32 0.0, %v1710
  %1712 = vmatmul.bf16.gmra.mxu0 %v410
  %v1713 = vpop.f32.mrf.mxu0
  %v1714 = vadd.f32 0.0, %v1713
  %v1715 = vpop.f32.mrf.mxu0
  %v1716 = vadd.f32 0.0, %v1715
  %1717 = vmatmul.bf16.gmra.mxu0 %v414
  %v1718 = vpop.f32.mrf.mxu0
  %v1719 = vadd.f32 0.0, %v1718
  %v1720 = vpop.f32.mrf.mxu0
  %v1721 = vadd.f32 0.0, %v1720
  %1722 = vmatmul.bf16.gmra.mxu0 %v418
  %v1723 = vpop.f32.mrf.mxu0
  %v1724 = vadd.f32 0.0, %v1723
  %v1725 = vpop.f32.mrf.mxu0
  %v1726 = vadd.f32 0.0, %v1725
  %1727 = vmatmul.bf16.gmra.mxu0 %v422
  %v1728 = vpop.f32.mrf.mxu0
  %v1729 = vadd.f32 0.0, %v1728
  %v1730 = vpop.f32.mrf.mxu0
  %v1731 = vadd.f32 0.0, %v1730
  %1732 = vmatmul.bf16.gmra.mxu0 %v426
  %v1733 = vpop.f32.mrf.mxu0
  %v1734 = vadd.f32 0.0, %v1733
  %v1735 = vpop.f32.mrf.mxu0
  %v1736 = vadd.f32 0.0, %v1735
  %1737 = vmatmul.bf16.gmra.mxu0 %v430
  %v1738 = vpop.f32.mrf.mxu0
  %v1739 = vadd.f32 0.0, %v1738
  %v1740 = vpop.f32.mrf.mxu0
  %v1741 = vadd.f32 0.0, %v1740
  %1742 = vdwg.mxu0
  %1743 = vmatpush.bf16.msra.mxu0 %v913
  %1744 = vmatpush.bf16.msra.mxu0 %v909
  %1745 = vmatpush.bf16.msra.mxu0 %v905
  %1746 = vmatpush.bf16.msra.mxu0 %v901
  %1747 = vmatpush.bf16.msra.mxu0 %v897
  %1748 = vmatpush.bf16.msra.mxu0 %v893
  %1749 = vmatpush.bf16.msra.mxu0 %v889
  %1750 = vmatpush.bf16.msra.mxu0 %v885
  %1751 = vmatmul.bf16.gmra.mxu0 %v403
  %v1752 = vpop.f32.mrf.mxu0
  %v1753 = vadd.f32 %v1704, %v1752
  %v1754 = vpop.f32.mrf.mxu0
  %v1755 = vadd.f32 %v1706, %v1754
  %1756 = vmatmul.bf16.gmra.mxu0 %v407
  %v1757 = vpop.f32.mrf.mxu0
  %v1758 = vadd.f32 %v1709, %v1757
  %v1759 = vpop.f32.mrf.mxu0
  %v1760 = vadd.f32 %v1711, %v1759
  %1761 = vmatmul.bf16.gmra.mxu0 %v411
  %v1762 = vpop.f32.mrf.mxu0
  %v1763 = vadd.f32 %v1714, %v1762
  %v1764 = vpop.f32.mrf.mxu0
  %v1765 = vadd.f32 %v1716, %v1764
  %1766 = vmatmul.bf16.gmra.mxu0 %v415
  %v1767 = vpop.f32.mrf.mxu0
  %v1768 = vadd.f32 %v1719, %v1767
  %v1769 = vpop.f32.mrf.mxu0
  %v1770 = vadd.f32 %v1721, %v1769
  %1771 = vmatmul.bf16.gmra.mxu0 %v419
  %v1772 = vpop.f32.mrf.mxu0
  %v1773 = vadd.f32 %v1724, %v1772
  %v1774 = vpop.f32.mrf.mxu0
  %v1775 = vadd.f32 %v1726, %v1774
  %1776 = vmatmul.bf16.gmra.mxu0 %v423
  %v1777 = vpop.f32.mrf.mxu0
  %v1778 = vadd.f32 %v1729, %v1777
  %v1779 = vpop.f32.mrf.mxu0
  %v1780 = vadd.f32 %v1731, %v1779
  %1781 = vmatmul.bf16.gmra.mxu0 %v427
  %v1782 = vpop.f32.mrf.mxu0
  %v1783 = vadd.f32 %v1734, %v1782
  %v1784 = vpop.f32.mrf.mxu0
  %v1785 = vadd.f32 %v1736, %v1784
  %1786 = vmatmul.bf16.gmra.mxu0 %v431
  %v1787 = vpop.f32.mrf.mxu0
  %v1788 = vadd.f32 %v1739, %v1787
  %v1789 = vpop.f32.mrf.mxu0
  %v1790 = vadd.f32 %v1741, %v1789
  %1791 = vdwg.mxu0
  %1792 = vmatpush.bf16.msra.mxu0 %v945
  %1793 = vmatpush.bf16.msra.mxu0 %v941
  %1794 = vmatpush.bf16.msra.mxu0 %v937
  %1795 = vmatpush.bf16.msra.mxu0 %v933
  %1796 = vmatpush.bf16.msra.mxu0 %v929
  %1797 = vmatpush.bf16.msra.mxu0 %v925
  %1798 = vmatpush.bf16.msra.mxu0 %v921
  %1799 = vmatpush.bf16.msra.mxu0 %v917
  %1800 = vmatmul.bf16.gmra.mxu0 %v404
  %v1801 = vpop.f32.mrf.mxu0
  %v1802 = vadd.f32 %v1753, %v1801
  %v1803 = vpop.f32.mrf.mxu0
  %v1804 = vadd.f32 %v1755, %v1803
  %1805 = vmatmul.bf16.gmra.mxu0 %v408
  %v1806 = vpop.f32.mrf.mxu0
  %v1807 = vadd.f32 %v1758, %v1806
  %v1808 = vpop.f32.mrf.mxu0
  %v1809 = vadd.f32 %v1760, %v1808
  %1810 = vmatmul.bf16.gmra.mxu0 %v412
  %v1811 = vpop.f32.mrf.mxu0
  %v1812 = vadd.f32 %v1763, %v1811
  %v1813 = vpop.f32.mrf.mxu0
  %v1814 = vadd.f32 %v1765, %v1813
  %1815 = vmatmul.bf16.gmra.mxu0 %v416
  %v1816 = vpop.f32.mrf.mxu0
  %v1817 = vadd.f32 %v1768, %v1816
  %v1818 = vpop.f32.mrf.mxu0
  %v1819 = vadd.f32 %v1770, %v1818
  %1820 = vmatmul.bf16.gmra.mxu0 %v420
  %v1821 = vpop.f32.mrf.mxu0
  %v1822 = vadd.f32 %v1773, %v1821
  %v1823 = vpop.f32.mrf.mxu0
  %v1824 = vadd.f32 %v1775, %v1823
  %1825 = vmatmul.bf16.gmra.mxu0 %v424
  %v1826 = vpop.f32.mrf.mxu0
  %v1827 = vadd.f32 %v1778, %v1826
  %v1828 = vpop.f32.mrf.mxu0
  %v1829 = vadd.f32 %v1780, %v1828
  %1830 = vmatmul.bf16.gmra.mxu0 %v428
  %v1831 = vpop.f32.mrf.mxu0
  %v1832 = vadd.f32 %v1783, %v1831
  %v1833 = vpop.f32.mrf.mxu0
  %v1834 = vadd.f32 %v1785, %v1833
  %1835 = vmatmul.bf16.gmra.mxu0 %v432
  %v1836 = vpop.f32.mrf.mxu0
  %v1837 = vadd.f32 %v1788, %v1836
  %v1838 = vpop.f32.mrf.mxu0
  %v1839 = vadd.f32 %v1790, %v1838
  %1840 = vdwg.mxu0
  %1841 = vmatpush.bf16.msra.mxu0 %v977
  %1842 = vmatpush.bf16.msra.mxu0 %v973
  %1843 = vmatpush.bf16.msra.mxu0 %v969
  %1844 = vmatpush.bf16.msra.mxu0 %v965
  %1845 = vmatpush.bf16.msra.mxu0 %v961
  %1846 = vmatpush.bf16.msra.mxu0 %v957
  %1847 = vmatpush.bf16.msra.mxu0 %v953
  %1848 = vmatpush.bf16.msra.mxu0 %v949
  %1849 = vmatmul.bf16.gmra.mxu0 %v405
  %v1850 = vpop.f32.mrf.mxu0
  %v1851 = vadd.f32 %v1802, %v1850
  %v1852 = vpop.f32.mrf.mxu0
  %v1853 = vadd.f32 %v1804, %v1852
  %1854 = vmatmul.bf16.gmra.mxu0 %v409
  %v1855 = vpop.f32.mrf.mxu0
  %v1856 = vadd.f32 %v1807, %v1855
  %v1857 = vpop.f32.mrf.mxu0
  %v1858 = vadd.f32 %v1809, %v1857
  %1859 = vmatmul.bf16.gmra.mxu0 %v413
  %v1860 = vpop.f32.mrf.mxu0
  %v1861 = vadd.f32 %v1812, %v1860
  %v1862 = vpop.f32.mrf.mxu0
  %v1863 = vadd.f32 %v1814, %v1862
  %1864 = vmatmul.bf16.gmra.mxu0 %v417
  %v1865 = vpop.f32.mrf.mxu0
  %v1866 = vadd.f32 %v1817, %v1865
  %v1867 = vpop.f32.mrf.mxu0
  %v1868 = vadd.f32 %v1819, %v1867
  %1869 = vmatmul.bf16.gmra.mxu0 %v421
  %v1870 = vpop.f32.mrf.mxu0
  %v1871 = vadd.f32 %v1822, %v1870
  %v1872 = vpop.f32.mrf.mxu0
  %v1873 = vadd.f32 %v1824, %v1872
  %1874 = vmatmul.bf16.gmra.mxu0 %v425
  %v1875 = vpop.f32.mrf.mxu0
  %v1876 = vadd.f32 %v1827, %v1875
  %v1877 = vpop.f32.mrf.mxu0
  %v1878 = vadd.f32 %v1829, %v1877
  %1879 = vmatmul.bf16.gmra.mxu0 %v429
  %v1880 = vpop.f32.mrf.mxu0
  %v1881 = vadd.f32 %v1832, %v1880
  %v1882 = vpop.f32.mrf.mxu0
  %v1883 = vadd.f32 %v1834, %v1882
  %1884 = vmatmul.bf16.gmra.mxu0 %v433
  %v1885 = vpop.f32.mrf.mxu0
  %v1886 = vadd.f32 %v1837, %v1885
  %v1887 = vpop.f32.mrf.mxu0
  %v1888 = vadd.f32 %v1839, %v1887
  %1889 = vdwg.mxu0
  %v1890 = vadd.f32 %v82, %v1263
  %v1891 = vadd.f32 %v83, %v1459
  %v1892 = vadd.f32 %v84, %v1655
  %v1893 = vadd.f32 %v85, %v1851
  %v1894 = vadd.f32 %v86, %v1265
  %v1895 = vadd.f32 %v87, %v1461
  %v1896 = vadd.f32 %v88, %v1657
  %v1897 = vadd.f32 %v89, %v1853
  %v1898 = vadd.f32 %v90, %v1268
  %v1899 = vadd.f32 %v91, %v1464
  %v1900 = vadd.f32 %v92, %v1660
  %v1901 = vadd.f32 %v93, %v1856
  %v1902 = vadd.f32 %v94, %v1270
  %v1903 = vadd.f32 %v95, %v1466
  %v1904 = vadd.f32 %v96, %v1662
  %v1905 = vadd.f32 %v97, %v1858
  %v1906 = vadd.f32 %v98, %v1273
  %v1907 = vadd.f32 %v99, %v1469
  %v1908 = vadd.f32 %v100, %v1665
  %v1909 = vadd.f32 %v101, %v1861
  %v1910 = vadd.f32 %v102, %v1275
  %v1911 = vadd.f32 %v103, %v1471
  %v1912 = vadd.f32 %v104, %v1667
  %v1913 = vadd.f32 %v105, %v1863
  %v1914 = vadd.f32 %v106, %v1278
  %v1915 = vadd.f32 %v107, %v1474
  %v1916 = vadd.f32 %v108, %v1670
  %v1917 = vadd.f32 %v109, %v1866
  %v1918 = vadd.f32 %v110, %v1280
  %v1919 = vadd.f32 %v111, %v1476
  %v1920 = vadd.f32 %v112, %v1672
  %v1921 = vadd.f32 %v113, %v1868
  %v1922 = vadd.f32 %v114, %v1283
  %v1923 = vadd.f32 %v115, %v1479
  %v1924 = vadd.f32 %v116, %v1675
  %v1925 = vadd.f32 %v117, %v1871
  %v1926 = vadd.f32 %v118, %v1285
  %v1927 = vadd.f32 %v119, %v1481
  %v1928 = vadd.f32 %v120, %v1677
  %v1929 = vadd.f32 %v121, %v1873
  %v1930 = vadd.f32 %v122, %v1288
  %v1931 = vadd.f32 %v123, %v1484
  %v1932 = vadd.f32 %v124, %v1680
  %v1933 = vadd.f32 %v125, %v1876
  %v1934 = vadd.f32 %v126, %v1290
  %v1935 = vadd.f32 %v127, %v1486
  %v1936 = vadd.f32 %v128, %v1682
  %v1937 = vadd.f32 %v129, %v1878
  %v1938 = vadd.f32 %v130, %v1293
  %v1939 = vadd.f32 %v131, %v1489
  %v1940 = vadd.f32 %v132, %v1685
  %v1941 = vadd.f32 %v133, %v1881
  %v1942 = vadd.f32 %v134, %v1295
  %v1943 = vadd.f32 %v135, %v1491
  %v1944 = vadd.f32 %v136, %v1687
  %v1945 = vadd.f32 %v137, %v1883
  %v1946 = vadd.f32 %v138, %v1298
  %v1947 = vadd.f32 %v139, %v1494
  %v1948 = vadd.f32 %v140, %v1690
  %v1949 = vadd.f32 %v141, %v1886
  %v1950 = vadd.f32 %v142, %v1300
  %v1951 = vadd.f32 %v143, %v1496
  %v1952 = vadd.f32 %v144, %v1692
  %v1953 = vadd.f32 %v145, %v1888
  %1954 = vst [vmem:[#allocation2] sm:$0xff] %v1890
  %1955 = vst [vmem:[#allocation2 + $0x8] sm:$0xff] %v1891
  %1956 = vst [vmem:[#allocation2 + $0x10] sm:$0xff] %v1892
  %1957 = vst [vmem:[#allocation2 + $0x18] sm:$0xff] %v1893
  %1958 = vst [vmem:[#allocation2 + $0x20] sm:$0xff] %v1894
  %1959 = vst [vmem:[#allocation2 + $0x28] sm:$0xff] %v1895
  %1960 = vst [vmem:[#allocation2 + $0x30] sm:$0xff] %v1896
  %1961 = vst [vmem:[#allocation2 + $0x38] sm:$0xff] %v1897
  %1962 = vst [vmem:[#allocation2 + $0x40] sm:$0xff] %v1898
  %1963 = vst [vmem:[#allocation2 + $0x48] sm:$0xff] %v1899
  %1964 = vst [vmem:[#allocation2 + $0x50] sm:$0xff] %v1900
  %1965 = vst [vmem:[#allocation2 + $0x58] sm:$0xff] %v1901
  %1966 = vst [vmem:[#allocation2 + $0x60] sm:$0xff] %v1902
  %1967 = vst [vmem:[#allocation2 + $0x68] sm:$0xff] %v1903
  %1968 = vst [vmem:[#allocation2 + $0x70] sm:$0xff] %v1904
  %1969 = vst [vmem:[#allocation2 + $0x78] sm:$0xff] %v1905
  %1970 = vst [vmem:[#allocation2 + $0x80] sm:$0xff] %v1906
  %1971 = vst [vmem:[#allocation2 + $0x88] sm:$0xff] %v1907
  %1972 = vst [vmem:[#allocation2 + $0x90] sm:$0xff] %v1908
  %1973 = vst [vmem:[#allocation2 + $0x98] sm:$0xff] %v1909
  %1974 = vst [vmem:[#allocation2 + $0xa0] sm:$0xff] %v1910
  %1975 = vst [vmem:[#allocation2 + $0xa8] sm:$0xff] %v1911
  %1976 = vst [vmem:[#allocation2 + $0xb0] sm:$0xff] %v1912
  %1977 = vst [vmem:[#allocation2 + $0xb8] sm:$0xff] %v1913
  %1978 = vst [vmem:[#allocation2 + $0xc0] sm:$0xff] %v1914
  %1979 = vst [vmem:[#allocation2 + $0xc8] sm:$0xff] %v1915
  %1980 = vst [vmem:[#allocation2 + $0xd0] sm:$0xff] %v1916
  %1981 = vst [vmem:[#allocation2 + $0xd8] sm:$0xff] %v1917
  %1982 = vst [vmem:[#allocation2 + $0xe0] sm:$0xff] %v1918
  %1983 = vst [vmem:[#allocation2 + $0xe8] sm:$0xff] %v1919
  %1984 = vst [vmem:[#allocation2 + $0xf0] sm:$0xff] %v1920
  %1985 = vst [vmem:[#allocation2 + $0xf8] sm:$0xff] %v1921
  %1986 = vst [vmem:[#allocation2 + $0x100] sm:$0xff] %v1922
  %1987 = vst [vmem:[#allocation2 + $0x108] sm:$0xff] %v1923
  %1988 = vst [vmem:[#allocation2 + $0x110] sm:$0xff] %v1924
  %1989 = vst [vmem:[#allocation2 + $0x118] sm:$0xff] %v1925
  %1990 = vst [vmem:[#allocation2 + $0x120] sm:$0xff] %v1926
  %1991 = vst [vmem:[#allocation2 + $0x128] sm:$0xff] %v1927
  %1992 = vst [vmem:[#allocation2 + $0x130] sm:$0xff] %v1928
  %1993 = vst [vmem:[#allocation2 + $0x138] sm:$0xff] %v1929
  %1994 = vst [vmem:[#allocation2 + $0x140] sm:$0xff] %v1930
  %1995 = vst [vmem:[#allocation2 + $0x148] sm:$0xff] %v1931
  %1996 = vst [vmem:[#allocation2 + $0x150] sm:$0xff] %v1932
  %1997 = vst [vmem:[#allocation2 + $0x158] sm:$0xff] %v1933
  %1998 = vst [vmem:[#allocation2 + $0x160] sm:$0xff] %v1934
  %1999 = vst [vmem:[#allocation2 + $0x168] sm:$0xff] %v1935
  %2000 = vst [vmem:[#allocation2 + $0x170] sm:$0xff] %v1936
  %2001 = vst [vmem:[#allocation2 + $0x178] sm:$0xff] %v1937
  %2002 = vst [vmem:[#allocation2 + $0x180] sm:$0xff] %v1938
  %2003 = vst [vmem:[#allocation2 + $0x188] sm:$0xff] %v1939
  %2004 = vst [vmem:[#allocation2 + $0x190] sm:$0xff] %v1940
  %2005 = vst [vmem:[#allocation2 + $0x198] sm:$0xff] %v1941
  %2006 = vst [vmem:[#allocation2 + $0x1a0] sm:$0xff] %v1942
  %2007 = vst [vmem:[#allocation2 + $0x1a8] sm:$0xff] %v1943
  %2008 = vst [vmem:[#allocation2 + $0x1b0] sm:$0xff] %v1944
  %2009 = vst [vmem:[#allocation2 + $0x1b8] sm:$0xff] %v1945
  %2010 = vst [vmem:[#allocation2 + $0x1c0] sm:$0xff] %v1946
  %2011 = vst [vmem:[#allocation2 + $0x1c8] sm:$0xff] %v1947
  %2012 = vst [vmem:[#allocation2 + $0x1d0] sm:$0xff] %v1948
  %2013 = vst [vmem:[#allocation2 + $0x1d8] sm:$0xff] %v1949
  %2014 = vst [vmem:[#allocation2 + $0x1e0] sm:$0xff] %v1950
  %2015 = vst [vmem:[#allocation2 + $0x1e8] sm:$0xff] %v1951
  %2016 = vst [vmem:[#allocation2 + $0x1f0] sm:$0xff] %v1952
  %2017 = vst [vmem:[#allocation2 + $0x1f8] sm:$0xff] %v1953
  // Predicated region
  $region18: #{vae_forward.12} parent=0 // pred_check
    %p2018 = pneg %p14
  $region19: #{vae_forward.12} parent=0 // pred_check_branch
    %2020 = sbr.rel (%p2018) target = $region21
  $region20: #{vae_forward.12} parent=0 // pred_region
    %v2021 = vld [vmem:[#allocation2] sm:$0xff]
    %v2022 = vld [vmem:[#allocation2 + $0x8] sm:$0xff]
    %v2023 = vld [vmem:[#allocation2 + $0x10] sm:$0xff]
    %v2024 = vld [vmem:[#allocation2 + $0x18] sm:$0xff]
    %v2025 = vld [vmem:[#allocation2 + $0x20] sm:$0xff]
    %v2026 = vld [vmem:[#allocation2 + $0x28] sm:$0xff]
    %v2027 = vld [vmem:[#allocation2 + $0x30] sm:$0xff]
    %v2028 = vld [vmem:[#allocation2 + $0x38] sm:$0xff]
    %v2029 = vld [vmem:[#allocation2 + $0x40] sm:$0xff]
    %v2030 = vld [vmem:[#allocation2 + $0x48] sm:$0xff]
    %v2031 = vld [vmem:[#allocation2 + $0x50] sm:$0xff]
    %v2032 = vld [vmem:[#allocation2 + $0x58] sm:$0xff]
    %v2033 = vld [vmem:[#allocation2 + $0x60] sm:$0xff]
    %v2034 = vld [vmem:[#allocation2 + $0x68] sm:$0xff]
    %v2035 = vld [vmem:[#allocation2 + $0x70] sm:$0xff]
    %v2036 = vld [vmem:[#allocation2 + $0x78] sm:$0xff]
    %v2037 = vld [vmem:[#allocation2 + $0x80] sm:$0xff]
    %v2038 = vld [vmem:[#allocation2 + $0x88] sm:$0xff]
    %v2039 = vld [vmem:[#allocation2 + $0x90] sm:$0xff]
    %v2040 = vld [vmem:[#allocation2 + $0x98] sm:$0xff]
    %v2041 = vld [vmem:[#allocation2 + $0xa0] sm:$0xff]
    %v2042 = vld [vmem:[#allocation2 + $0xa8] sm:$0xff]
    %v2043 = vld [vmem:[#allocation2 + $0xb0] sm:$0xff]
    %v2044 = vld [vmem:[#allocation2 + $0xb8] sm:$0xff]
    %v2045 = vld [vmem:[#allocation2 + $0xc0] sm:$0xff]
    %v2046 = vld [vmem:[#allocation2 + $0xc8] sm:$0xff]
    %v2047 = vld [vmem:[#allocation2 + $0xd0] sm:$0xff]
    %v2048 = vld [vmem:[#allocation2 + $0xd8] sm:$0xff]
    %v2049 = vld [vmem:[#allocation2 + $0xe0] sm:$0xff]
    %v2050 = vld [vmem:[#allocation2 + $0xe8] sm:$0xff]
    %v2051 = vld [vmem:[#allocation2 + $0xf0] sm:$0xff]
    %v2052 = vld [vmem:[#allocation2 + $0xf8] sm:$0xff]
    %v2053 = vld [vmem:[#allocation2 + $0x100] sm:$0xff]
    %v2054 = vld [vmem:[#allocation2 + $0x108] sm:$0xff]
    %v2055 = vld [vmem:[#allocation2 + $0x110] sm:$0xff]
    %v2056 = vld [vmem:[#allocation2 + $0x118] sm:$0xff]
    %v2057 = vld [vmem:[#allocation2 + $0x120] sm:$0xff]
    %v2058 = vld [vmem:[#allocation2 + $0x128] sm:$0xff]
    %v2059 = vld [vmem:[#allocation2 + $0x130] sm:$0xff]
    %v2060 = vld [vmem:[#allocation2 + $0x138] sm:$0xff]
    %v2061 = vld [vmem:[#allocation2 + $0x140] sm:$0xff]
    %v2062 = vld [vmem:[#allocation2 + $0x148] sm:$0xff]
    %v2063 = vld [vmem:[#allocation2 + $0x150] sm:$0xff]
    %v2064 = vld [vmem:[#allocation2 + $0x158] sm:$0xff]
    %v2065 = vld [vmem:[#allocation2 + $0x160] sm:$0xff]
    %v2066 = vld [vmem:[#allocation2 + $0x168] sm:$0xff]
    %v2067 = vld [vmem:[#allocation2 + $0x170] sm:$0xff]
    %v2068 = vld [vmem:[#allocation2 + $0x178] sm:$0xff]
    %v2069 = vld [vmem:[#allocation2 + $0x180] sm:$0xff]
    %v2070 = vld [vmem:[#allocation2 + $0x188] sm:$0xff]
    %v2071 = vld [vmem:[#allocation2 + $0x190] sm:$0xff]
    %v2072 = vld [vmem:[#allocation2 + $0x198] sm:$0xff]
    %v2073 = vld [vmem:[#allocation2 + $0x1a0] sm:$0xff]
    %v2074 = vld [vmem:[#allocation2 + $0x1a8] sm:$0xff]
    %v2075 = vld [vmem:[#allocation2 + $0x1b0] sm:$0xff]
    %v2076 = vld [vmem:[#allocation2 + $0x1b8] sm:$0xff]
    %v2077 = vld [vmem:[#allocation2 + $0x1c0] sm:$0xff]
    %v2078 = vld [vmem:[#allocation2 + $0x1c8] sm:$0xff]
    %v2079 = vld [vmem:[#allocation2 + $0x1d0] sm:$0xff]
    %v2080 = vld [vmem:[#allocation2 + $0x1d8] sm:$0xff]
    %v2081 = vld [vmem:[#allocation2 + $0x1e0] sm:$0xff]
    %v2082 = vld [vmem:[#allocation2 + $0x1e8] sm:$0xff]
    %v2083 = vld [vmem:[#allocation2 + $0x1f0] sm:$0xff]
    %v2084 = vld [vmem:[#allocation2 + $0x1f8] sm:$0xff]
    %v2085 = vld [vmem:[%s2] sm:$0xf]
    %v2087 = vperm.slane %v2085, 0
    %v2088 = vperm.slane %v2085, 1
    %v2089 = vperm.slane %v2085, 2
    %v2090 = vperm.slane %v2085, 3
    %v2095 = vadd.f32 %v2021, %v2087
    %v2096 = vadd.f32 %v2022, %v2088
    %v2097 = vadd.f32 %v2023, %v2089
    %v2098 = vadd.f32 %v2024, %v2090
    %v2099 = vadd.f32 %v2025, %v2087
    %v2100 = vadd.f32 %v2026, %v2088
    %v2101 = vadd.f32 %v2027, %v2089
    %v2102 = vadd.f32 %v2028, %v2090
    %v2103 = vadd.f32 %v2029, %v2087
    %v2104 = vadd.f32 %v2030, %v2088
    %v2105 = vadd.f32 %v2031, %v2089
    %v2106 = vadd.f32 %v2032, %v2090
    %v2107 = vadd.f32 %v2033, %v2087
    %v2108 = vadd.f32 %v2034, %v2088
    %v2109 = vadd.f32 %v2035, %v2089
    %v2110 = vadd.f32 %v2036, %v2090
    %v2111 = vadd.f32 %v2037, %v2087
    %v2112 = vadd.f32 %v2038, %v2088
    %v2113 = vadd.f32 %v2039, %v2089
    %v2114 = vadd.f32 %v2040, %v2090
    %v2115 = vadd.f32 %v2041, %v2087
    %v2116 = vadd.f32 %v2042, %v2088
    %v2117 = vadd.f32 %v2043, %v2089
    %v2118 = vadd.f32 %v2044, %v2090
    %v2119 = vadd.f32 %v2045, %v2087
    %v2120 = vadd.f32 %v2046, %v2088
    %v2121 = vadd.f32 %v2047, %v2089
    %v2122 = vadd.f32 %v2048, %v2090
    %v2123 = vadd.f32 %v2049, %v2087
    %v2124 = vadd.f32 %v2050, %v2088
    %v2125 = vadd.f32 %v2051, %v2089
    %v2126 = vadd.f32 %v2052, %v2090
    %v2127 = vadd.f32 %v2053, %v2087
    %v2128 = vadd.f32 %v2054, %v2088
    %v2129 = vadd.f32 %v2055, %v2089
    %v2130 = vadd.f32 %v2056, %v2090
    %v2131 = vadd.f32 %v2057, %v2087
    %v2132 = vadd.f32 %v2058, %v2088
    %v2133 = vadd.f32 %v2059, %v2089
    %v2134 = vadd.f32 %v2060, %v2090
    %v2135 = vadd.f32 %v2061, %v2087
    %v2136 = vadd.f32 %v2062, %v2088
    %v2137 = vadd.f32 %v2063, %v2089
    %v2138 = vadd.f32 %v2064, %v2090
    %v2139 = vadd.f32 %v2065, %v2087
    %v2140 = vadd.f32 %v2066, %v2088
    %v2141 = vadd.f32 %v2067, %v2089
    %v2142 = vadd.f32 %v2068, %v2090
    %v2143 = vadd.f32 %v2069, %v2087
    %v2144 = vadd.f32 %v2070, %v2088
    %v2145 = vadd.f32 %v2071, %v2089
    %v2146 = vadd.f32 %v2072, %v2090
    %v2147 = vadd.f32 %v2073, %v2087
    %v2148 = vadd.f32 %v2074, %v2088
    %v2149 = vadd.f32 %v2075, %v2089
    %v2150 = vadd.f32 %v2076, %v2090
    %v2151 = vadd.f32 %v2077, %v2087
    %v2152 = vadd.f32 %v2078, %v2088
    %v2153 = vadd.f32 %v2079, %v2089
    %v2154 = vadd.f32 %v2080, %v2090
    %v2155 = vadd.f32 %v2081, %v2087
    %v2156 = vadd.f32 %v2082, %v2088
    %v2157 = vadd.f32 %v2083, %v2089
    %v2158 = vadd.f32 %v2084, %v2090
    %vm2159 = vcmp.gt.f32.partialorder %v2095, 0.0
    %vm2160 = vcmp.gt.f32.partialorder %v2096, 0.0
    %vm2161 = vcmp.gt.f32.partialorder %v2097, 0.0
    %vm2162 = vcmp.gt.f32.partialorder %v2098, 0.0
    %vm2163 = vcmp.gt.f32.partialorder %v2099, 0.0
    %vm2164 = vcmp.gt.f32.partialorder %v2100, 0.0
    %vm2165 = vcmp.gt.f32.partialorder %v2101, 0.0
    %vm2166 = vcmp.gt.f32.partialorder %v2102, 0.0
    %vm2167 = vcmp.gt.f32.partialorder %v2103, 0.0
    %vm2168 = vcmp.gt.f32.partialorder %v2104, 0.0
    %vm2169 = vcmp.gt.f32.partialorder %v2105, 0.0
    %vm2170 = vcmp.gt.f32.partialorder %v2106, 0.0
    %vm2171 = vcmp.gt.f32.partialorder %v2107, 0.0
    %vm2172 = vcmp.gt.f32.partialorder %v2108, 0.0
    %vm2173 = vcmp.gt.f32.partialorder %v2109, 0.0
    %vm2174 = vcmp.gt.f32.partialorder %v2110, 0.0
    %vm2175 = vcmp.gt.f32.partialorder %v2111, 0.0
    %vm2176 = vcmp.gt.f32.partialorder %v2112, 0.0
    %vm2177 = vcmp.gt.f32.partialorder %v2113, 0.0
    %vm2178 = vcmp.gt.f32.partialorder %v2114, 0.0
    %vm2179 = vcmp.gt.f32.partialorder %v2115, 0.0
    %vm2180 = vcmp.gt.f32.partialorder %v2116, 0.0
    %vm2181 = vcmp.gt.f32.partialorder %v2117, 0.0
    %vm2182 = vcmp.gt.f32.partialorder %v2118, 0.0
    %vm2183 = vcmp.gt.f32.partialorder %v2119, 0.0
    %vm2184 = vcmp.gt.f32.partialorder %v2120, 0.0
    %vm2185 = vcmp.gt.f32.partialorder %v2121, 0.0
    %vm2186 = vcmp.gt.f32.partialorder %v2122, 0.0
    %vm2187 = vcmp.gt.f32.partialorder %v2123, 0.0
    %vm2188 = vcmp.gt.f32.partialorder %v2124, 0.0
    %vm2189 = vcmp.gt.f32.partialorder %v2125, 0.0
    %vm2190 = vcmp.gt.f32.partialorder %v2126, 0.0
    %vm2191 = vcmp.gt.f32.partialorder %v2127, 0.0
    %vm2192 = vcmp.gt.f32.partialorder %v2128, 0.0
    %vm2193 = vcmp.gt.f32.partialorder %v2129, 0.0
    %vm2194 = vcmp.gt.f32.partialorder %v2130, 0.0
    %vm2195 = vcmp.gt.f32.partialorder %v2131, 0.0
    %vm2196 = vcmp.gt.f32.partialorder %v2132, 0.0
    %vm2197 = vcmp.gt.f32.partialorder %v2133, 0.0
    %vm2198 = vcmp.gt.f32.partialorder %v2134, 0.0
    %vm2199 = vcmp.gt.f32.partialorder %v2135, 0.0
    %vm2200 = vcmp.gt.f32.partialorder %v2136, 0.0
    %vm2201 = vcmp.gt.f32.partialorder %v2137, 0.0
    %vm2202 = vcmp.gt.f32.partialorder %v2138, 0.0
    %vm2203 = vcmp.gt.f32.partialorder %v2139, 0.0
    %vm2204 = vcmp.gt.f32.partialorder %v2140, 0.0
    %vm2205 = vcmp.gt.f32.partialorder %v2141, 0.0
    %vm2206 = vcmp.gt.f32.partialorder %v2142, 0.0
    %vm2207 = vcmp.gt.f32.partialorder %v2143, 0.0
    %vm2208 = vcmp.gt.f32.partialorder %v2144, 0.0
    %vm2209 = vcmp.gt.f32.partialorder %v2145, 0.0
    %vm2210 = vcmp.gt.f32.partialorder %v2146, 0.0
    %vm2211 = vcmp.gt.f32.partialorder %v2147, 0.0
    %vm2212 = vcmp.gt.f32.partialorder %v2148, 0.0
    %vm2213 = vcmp.gt.f32.partialorder %v2149, 0.0
    %vm2214 = vcmp.gt.f32.partialorder %v2150, 0.0
    %vm2215 = vcmp.gt.f32.partialorder %v2151, 0.0
    %vm2216 = vcmp.gt.f32.partialorder %v2152, 0.0
    %vm2217 = vcmp.gt.f32.partialorder %v2153, 0.0
    %vm2218 = vcmp.gt.f32.partialorder %v2154, 0.0
    %vm2219 = vcmp.gt.f32.partialorder %v2155, 0.0
    %vm2220 = vcmp.gt.f32.partialorder %v2156, 0.0
    %vm2221 = vcmp.gt.f32.partialorder %v2157, 0.0
    %vm2222 = vcmp.gt.f32.partialorder %v2158, 0.0
    %v2223 = vmul.f32 %v2095, 0.01
    %v2224 = vmul.f32 %v2096, 0.01
    %v2225 = vmul.f32 %v2097, 0.01
    %v2226 = vmul.f32 %v2098, 0.01
    %v2227 = vmul.f32 %v2099, 0.01
    %v2228 = vmul.f32 %v2100, 0.01
    %v2229 = vmul.f32 %v2101, 0.01
    %v2230 = vmul.f32 %v2102, 0.01
    %v2231 = vmul.f32 %v2103, 0.01
    %v2232 = vmul.f32 %v2104, 0.01
    %v2233 = vmul.f32 %v2105, 0.01
    %v2234 = vmul.f32 %v2106, 0.01
    %v2235 = vmul.f32 %v2107, 0.01
    %v2236 = vmul.f32 %v2108, 0.01
    %v2237 = vmul.f32 %v2109, 0.01
    %v2238 = vmul.f32 %v2110, 0.01
    %v2239 = vmul.f32 %v2111, 0.01
    %v2240 = vmul.f32 %v2112, 0.01
    %v2241 = vmul.f32 %v2113, 0.01
    %v2242 = vmul.f32 %v2114, 0.01
    %v2243 = vmul.f32 %v2115, 0.01
    %v2244 = vmul.f32 %v2116, 0.01
    %v2245 = vmul.f32 %v2117, 0.01
    %v2246 = vmul.f32 %v2118, 0.01
    %v2247 = vmul.f32 %v2119, 0.01
    %v2248 = vmul.f32 %v2120, 0.01
    %v2249 = vmul.f32 %v2121, 0.01
    %v2250 = vmul.f32 %v2122, 0.01
    %v2251 = vmul.f32 %v2123, 0.01
    %v2252 = vmul.f32 %v2124, 0.01
    %v2253 = vmul.f32 %v2125, 0.01
    %v2254 = vmul.f32 %v2126, 0.01
    %v2255 = vmul.f32 %v2127, 0.01
    %v2256 = vmul.f32 %v2128, 0.01
    %v2257 = vmul.f32 %v2129, 0.01
    %v2258 = vmul.f32 %v2130, 0.01
    %v2259 = vmul.f32 %v2131, 0.01
    %v2260 = vmul.f32 %v2132, 0.01
    %v2261 = vmul.f32 %v2133, 0.01
    %v2262 = vmul.f32 %v2134, 0.01
    %v2263 = vmul.f32 %v2135, 0.01
    %v2264 = vmul.f32 %v2136, 0.01
    %v2265 = vmul.f32 %v2137, 0.01
    %v2266 = vmul.f32 %v2138, 0.01
    %v2267 = vmul.f32 %v2139, 0.01
    %v2268 = vmul.f32 %v2140, 0.01
    %v2269 = vmul.f32 %v2141, 0.01
    %v2270 = vmul.f32 %v2142, 0.01
    %v2271 = vmul.f32 %v2143, 0.01
    %v2272 = vmul.f32 %v2144, 0.01
    %v2273 = vmul.f32 %v2145, 0.01
    %v2274 = vmul.f32 %v2146, 0.01
    %v2275 = vmul.f32 %v2147, 0.01
    %v2276 = vmul.f32 %v2148, 0.01
    %v2277 = vmul.f32 %v2149, 0.01
    %v2278 = vmul.f32 %v2150, 0.01
    %v2279 = vmul.f32 %v2151, 0.01
    %v2280 = vmul.f32 %v2152, 0.01
    %v2281 = vmul.f32 %v2153, 0.01
    %v2282 = vmul.f32 %v2154, 0.01
    %v2283 = vmul.f32 %v2155, 0.01
    %v2284 = vmul.f32 %v2156, 0.01
    %v2285 = vmul.f32 %v2157, 0.01
    %v2286 = vmul.f32 %v2158, 0.01
    %v2287 = vsel %vm2159, %v2095, %v2223
    %v2288 = vsel %vm2160, %v2096, %v2224
    %v2289 = vsel %vm2161, %v2097, %v2225
    %v2290 = vsel %vm2162, %v2098, %v2226
    %v2291 = vsel %vm2163, %v2099, %v2227
    %v2292 = vsel %vm2164, %v2100, %v2228
    %v2293 = vsel %vm2165, %v2101, %v2229
    %v2294 = vsel %vm2166, %v2102, %v2230
    %v2295 = vsel %vm2167, %v2103, %v2231
    %v2296 = vsel %vm2168, %v2104, %v2232
    %v2297 = vsel %vm2169, %v2105, %v2233
    %v2298 = vsel %vm2170, %v2106, %v2234
    %v2299 = vsel %vm2171, %v2107, %v2235
    %v2300 = vsel %vm2172, %v2108, %v2236
    %v2301 = vsel %vm2173, %v2109, %v2237
    %v2302 = vsel %vm2174, %v2110, %v2238
    %v2303 = vsel %vm2175, %v2111, %v2239
    %v2304 = vsel %vm2176, %v2112, %v2240
    %v2305 = vsel %vm2177, %v2113, %v2241
    %v2306 = vsel %vm2178, %v2114, %v2242
    %v2307 = vsel %vm2179, %v2115, %v2243
    %v2308 = vsel %vm2180, %v2116, %v2244
    %v2309 = vsel %vm2181, %v2117, %v2245
    %v2310 = vsel %vm2182, %v2118, %v2246
    %v2311 = vsel %vm2183, %v2119, %v2247
    %v2312 = vsel %vm2184, %v2120, %v2248
    %v2313 = vsel %vm2185, %v2121, %v2249
    %v2314 = vsel %vm2186, %v2122, %v2250
    %v2315 = vsel %vm2187, %v2123, %v2251
    %v2316 = vsel %vm2188, %v2124, %v2252
    %v2317 = vsel %vm2189, %v2125, %v2253
    %v2318 = vsel %vm2190, %v2126, %v2254
    %v2319 = vsel %vm2191, %v2127, %v2255
    %v2320 = vsel %vm2192, %v2128, %v2256
    %v2321 = vsel %vm2193, %v2129, %v2257
    %v2322 = vsel %vm2194, %v2130, %v2258
    %v2323 = vsel %vm2195, %v2131, %v2259
    %v2324 = vsel %vm2196, %v2132, %v2260
    %v2325 = vsel %vm2197, %v2133, %v2261
    %v2326 = vsel %vm2198, %v2134, %v2262
    %v2327 = vsel %vm2199, %v2135, %v2263
    %v2328 = vsel %vm2200, %v2136, %v2264
    %v2329 = vsel %vm2201, %v2137, %v2265
    %v2330 = vsel %vm2202, %v2138, %v2266
    %v2331 = vsel %vm2203, %v2139, %v2267
    %v2332 = vsel %vm2204, %v2140, %v2268
    %v2333 = vsel %vm2205, %v2141, %v2269
    %v2334 = vsel %vm2206, %v2142, %v2270
    %v2335 = vsel %vm2207, %v2143, %v2271
    %v2336 = vsel %vm2208, %v2144, %v2272
    %v2337 = vsel %vm2209, %v2145, %v2273
    %v2338 = vsel %vm2210, %v2146, %v2274
    %v2339 = vsel %vm2211, %v2147, %v2275
    %v2340 = vsel %vm2212, %v2148, %v2276
    %v2341 = vsel %vm2213, %v2149, %v2277
    %v2342 = vsel %vm2214, %v2150, %v2278
    %v2343 = vsel %vm2215, %v2151, %v2279
    %v2344 = vsel %vm2216, %v2152, %v2280
    %v2345 = vsel %vm2217, %v2153, %v2281
    %v2346 = vsel %vm2218, %v2154, %v2282
    %v2347 = vsel %vm2219, %v2155, %v2283
    %v2348 = vsel %vm2220, %v2156, %v2284
    %v2349 = vsel %vm2221, %v2157, %v2285
    %v2350 = vsel %vm2222, %v2158, %v2286
    %v2351 = vpack.c.bf16 %v2288, %v2287
    %v2352 = vpack.c.bf16 %v2290, %v2289
    %v2353 = vpack.c.bf16 %v2292, %v2291
    %v2354 = vpack.c.bf16 %v2294, %v2293
    %v2355 = vpack.c.bf16 %v2296, %v2295
    %v2356 = vpack.c.bf16 %v2298, %v2297
    %v2357 = vpack.c.bf16 %v2300, %v2299
    %v2358 = vpack.c.bf16 %v2302, %v2301
    %v2359 = vpack.c.bf16 %v2304, %v2303
    %v2360 = vpack.c.bf16 %v2306, %v2305
    %v2361 = vpack.c.bf16 %v2308, %v2307
    %v2362 = vpack.c.bf16 %v2310, %v2309
    %v2363 = vpack.c.bf16 %v2312, %v2311
    %v2364 = vpack.c.bf16 %v2314, %v2313
    %v2365 = vpack.c.bf16 %v2316, %v2315
    %v2366 = vpack.c.bf16 %v2318, %v2317
    %v2367 = vpack.c.bf16 %v2320, %v2319
    %v2368 = vpack.c.bf16 %v2322, %v2321
    %v2369 = vpack.c.bf16 %v2324, %v2323
    %v2370 = vpack.c.bf16 %v2326, %v2325
    %v2371 = vpack.c.bf16 %v2328, %v2327
    %v2372 = vpack.c.bf16 %v2330, %v2329
    %v2373 = vpack.c.bf16 %v2332, %v2331
    %v2374 = vpack.c.bf16 %v2334, %v2333
    %v2375 = vpack.c.bf16 %v2336, %v2335
    %v2376 = vpack.c.bf16 %v2338, %v2337
    %v2377 = vpack.c.bf16 %v2340, %v2339
    %v2378 = vpack.c.bf16 %v2342, %v2341
    %v2379 = vpack.c.bf16 %v2344, %v2343
    %v2380 = vpack.c.bf16 %v2346, %v2345
    %v2381 = vpack.c.bf16 %v2348, %v2347
    %v2382 = vpack.c.bf16 %v2350, %v2349
    %2383 = vst [vmem:[%s3] sm:$0xff] %v2351
    %2384 = vst [vmem:[%s3 + $0x8] sm:$0xff] %v2352
    %2385 = vst [vmem:[%s3 + $0x10] sm:$0xff] %v2353
    %2386 = vst [vmem:[%s3 + $0x18] sm:$0xff] %v2354
    %2387 = vst [vmem:[%s3 + $0x20] sm:$0xff] %v2355
    %2388 = vst [vmem:[%s3 + $0x28] sm:$0xff] %v2356
    %2389 = vst [vmem:[%s3 + $0x30] sm:$0xff] %v2357
    %2390 = vst [vmem:[%s3 + $0x38] sm:$0xff] %v2358
    %2391 = vst [vmem:[%s3 + $0x40] sm:$0xff] %v2359
    %2392 = vst [vmem:[%s3 + $0x48] sm:$0xff] %v2360
    %2393 = vst [vmem:[%s3 + $0x50] sm:$0xff] %v2361
    %2394 = vst [vmem:[%s3 + $0x58] sm:$0xff] %v2362
    %2395 = vst [vmem:[%s3 + $0x60] sm:$0xff] %v2363
    %2396 = vst [vmem:[%s3 + $0x68] sm:$0xff] %v2364
    %2397 = vst [vmem:[%s3 + $0x70] sm:$0xff] %v2365
    %2398 = vst [vmem:[%s3 + $0x78] sm:$0xff] %v2366
    %2399 = vst [vmem:[%s3 + $0x80] sm:$0xff] %v2367
    %2400 = vst [vmem:[%s3 + $0x88] sm:$0xff] %v2368
    %2401 = vst [vmem:[%s3 + $0x90] sm:$0xff] %v2369
    %2402 = vst [vmem:[%s3 + $0x98] sm:$0xff] %v2370
    %2403 = vst [vmem:[%s3 + $0xa0] sm:$0xff] %v2371
    %2404 = vst [vmem:[%s3 + $0xa8] sm:$0xff] %v2372
    %2405 = vst [vmem:[%s3 + $0xb0] sm:$0xff] %v2373
    %2406 = vst [vmem:[%s3 + $0xb8] sm:$0xff] %v2374
    %2407 = vst [vmem:[%s3 + $0xc0] sm:$0xff] %v2375
    %2408 = vst [vmem:[%s3 + $0xc8] sm:$0xff] %v2376
    %2409 = vst [vmem:[%s3 + $0xd0] sm:$0xff] %v2377
    %2410 = vst [vmem:[%s3 + $0xd8] sm:$0xff] %v2378
    %2411 = vst [vmem:[%s3 + $0xe0] sm:$0xff] %v2379
    %2412 = vst [vmem:[%s3 + $0xe8] sm:$0xff] %v2380
    %2413 = vst [vmem:[%s3 + $0xf0] sm:$0xff] %v2381
    %2414 = vst [vmem:[%s3 + $0xf8] sm:$0xff] %v2382
  $region21: #{vae_forward.12} parent=0 // pred_fallthru
    _
  // Predicated region
  $region22: #{vae_forward.12} parent=0 // pred_check
    _
  $region23: #{vae_forward.12} parent=0 // pred_check_branch
    %2416 = sbr.rel (0) target = $region25
  $region24: #{vae_forward.12} parent=0 // pred_region
    _
  $region25: #{vae_forward.12} parent=0 // pred_fallthru
    _
  // Predicated region
  $region26: #{vae_forward.12} parent=0 // pred_check
    _
  $region27: #{vae_forward.12} parent=0 // pred_check_branch
    %2418 = sbr.rel (0) target = $region29
  $region28: #{vae_forward.12} parent=0 // pred_region
    _
  $region29: #{vae_forward.12} parent=0 // pred_fallthru
    _

// kernel: vae_forward.13
$region0: #{vae_forward.13}
  #allocation0 [shape = 'u32[]', space=smem, size = 0x4, offset = 0x4, fixed_abs, tag = 'smem constant byte address 0x4 - core index']
  #allocation1 [shape = 'u32[72,128]{1,0:T(1,128)}', space=vmem, size = 0x9000, scoped, tag = 'internal scratch']
  #allocation2 [shape = 'f32[512,128]{1,0:T(8,128)}', space=vmem, size = 0x40000, scoped, tag = 'scratch operand']
  %s0 = inlined_call_operand.vmem [shape: bf16[512,1152], index: 0, kind: input, shape index: {}]
  %s1 = inlined_call_operand.vmem [shape: bf16[1152,128], index: 1, kind: input, shape index: {}]
  %s2 = inlined_call_operand.vmem [shape: f32[1,128], index: 2, kind: input, shape index: {}]
  %s3 = inlined_call_operand.vmem [shape: f32[512,128], index: 3, kind: output, shape index: {}]
  %s4 = sld [smem:[#allocation0]]
  $region79: #{vae_forward.13} parent=0
    _
  %s6 = ssub.s32 1, %s4
  %s7 = scalar_select 0, %s6, %s4
  $region1: #{vae_forward.13} parent=0
    #allocation3 [shape = 'u8[786432]{0}', space=vmem, size = 0xc0000, scoped, tag = 'input window, operand 0']
    loop: start=0, step=1, limit=5
    $region2: #{vae_forward.13} parent=1 // loop_pre_header
      _
    $region3: #{vae_forward.13} parent=1 // loop_header
      %s9 = sphi 0, %s13
      %p10 = scmp.ge.s32.totalorder %s9, 5
      %s16 = sphi 0, %s35
      %s17 = sphi 0, %s31
      %s18 = sphi 0, %s27
      %s19 = sphi 0, %s16
      %s20 = sphi 0, %s17
      %s21 = sphi 0, %s18
      %s22 = sphi 0, %s19
      %s23 = sphi 0, %s20
      %s24 = sphi 0, %s21
      %s40 = sphi 0, %s42
      %s43 = sphi 0, %s40
      %s44 = sphi 0, %s43
      %s60 = sphi 0, %s44
      %s68 = sphi 0, %s70
      %s71 = sphi 0, %s68
      %s72 = sphi 0, %s71
      %s88 = sphi 0, %s72
      %s94 = sphi 0, %s96
      %s97 = sphi 0, %s94
      %s98 = sphi 0, %s97
      %s114 = sphi 0, %s98
      %s122 = sphi 0, %s124
      %s125 = sphi 0, %s122
      %s126 = sphi 0, %s125
      %s142 = sphi 0, %s126
    $region4: #{vae_forward.13} parent=1 // loop_header_branch
      %12 = sbr.rel (%p10) target = $region8
    $region5: #{vae_forward.13} parent=1 // loop_body
      %s14 = ssub.s32 %s9, 1
      %s15 = ssub.s32 %s9, 2
      %s25 = sadd.s32 1, %s18
      %p26 = scmp.ge.s32.totalorder %s25, 3
      %s27 = scalar_select %p26, 0, %s25
      %s28 = sadd.s32 1, %s17
      %s29 = scalar_select %p26, %s28, %s17
      %p30 = scmp.ge.s32.totalorder %s29, 1
      %s31 = scalar_select %p30, 0, %s29
      %s32 = sadd.s32 1, %s16
      %s33 = scalar_select %p30, %s32, %s16
      %p34 = scmp.ge.s32.totalorder %s33, 1
      %s35 = scalar_select %p34, 0, %s33
      %s36 = ssub.s32 %s16, %s35
      %s37 = ssub.s32 %s18, %s27
      %s38 = sor.u32 %s36, %s37
      %p39 = scmp.eq.s32.totalorder %s38, 0
      %s41 = sadd.s32 %s40, 1
      %s42 = scalar_select %p39, %s40, %s41
      %p45 = pneg %p39
      %p46 = scmp.eq.s32.totalorder %s9, 2
      %p47 = por %p45, %p46
      %p48 = scmp.ne.s32.totalorder %s40, %s43
      %p49 = scmp.eq.s32.totalorder %s9, 0
      %p50 = por %p48, %p49
      %p51 = scmp.ne.s32.totalorder %s40, %s43
      %p52 = scmp.eq.s32.totalorder %s14, 2
      %p53 = por %p51, %p52
      %p54 = scmp.ne.s32.totalorder %s43, %s44
      %p55 = scmp.eq.s32.totalorder %s14, 0
      %p56 = por %p54, %p55
      %p57 = scmp.ne.s32.totalorder %s43, %s44
      %p58 = scmp.eq.s32.totalorder %s15, 2
      %p59 = por %p57, %p58
      %p61 = scmp.ne.s32.totalorder %s44, %s60
      %p62 = scmp.eq.s32.totalorder %s15, 0
      %p63 = por %p61, %p62
      %s64 = ssub.s32 %s18, %s27
      %s65 = ssub.s32 %s17, %s31
      %s66 = sor.u32 %s64, %s65
      %p67 = scmp.eq.s32.totalorder %s66, 0
      %s69 = sadd.s32 %s68, 1
      %s70 = scalar_select %p67, %s68, %s69
      %p73 = pneg %p67
      %p74 = scmp.eq.s32.totalorder %s9, 2
      %p75 = por %p73, %p74
      %p76 = scmp.ne.s32.totalorder %s68, %s71
      %p77 = scmp.eq.s32.totalorder %s9, 0
      %p78 = por %p76, %p77
      %p79 = scmp.ne.s32.totalorder %s68, %s71
      %p80 = scmp.eq.s32.totalorder %s14, 2
      %p81 = por %p79, %p80
      %p82 = scmp.ne.s32.totalorder %s71, %s72
      %p83 = scmp.eq.s32.totalorder %s14, 0
      %p84 = por %p82, %p83
      %p85 = scmp.ne.s32.totalorder %s71, %s72
      %p86 = scmp.eq.s32.totalorder %s15, 2
      %p87 = por %p85, %p86
      %p89 = scmp.ne.s32.totalorder %s72, %s88
      %p90 = scmp.eq.s32.totalorder %s15, 0
      %p91 = por %p89, %p90
      %s92 = ssub.s32 %s17, %s31
      %p93 = scmp.eq.s32.totalorder %s92, 0
      %s95 = sadd.s32 %s94, 1
      %s96 = scalar_select %p93, %s94, %s95
      %p99 = pneg %p93
      %p100 = scmp.eq.s32.totalorder %s9, 2
      %p101 = por %p99, %p100
      %p102 = scmp.ne.s32.totalorder %s94, %s97
      %p103 = scmp.eq.s32.totalorder %s9, 0
      %p104 = por %p102, %p103
      %p105 = scmp.ne.s32.totalorder %s94, %s97
      %p106 = scmp.eq.s32.totalorder %s14, 2
      %p107 = por %p105, %p106
      %p108 = scmp.ne.s32.totalorder %s97, %s98
      %p109 = scmp.eq.s32.totalorder %s14, 0
      %p110 = por %p108, %p109
      %p111 = scmp.ne.s32.totalorder %s97, %s98
      %p112 = scmp.eq.s32.totalorder %s15, 2
      %p113 = por %p111, %p112
      %p115 = scmp.ne.s32.totalorder %s98, %s114
      %p116 = scmp.eq.s32.totalorder %s15, 0
      %p117 = por %p115, %p116
      %s118 = ssub.s32 %s16, %s35
      %s119 = ssub.s32 %s17, %s31
      %s120 = sor.u32 %s118, %s119
      %p121 = scmp.eq.s32.totalorder %s120, 0
      %s123 = sadd.s32 %s122, 1
      %s124 = scalar_select %p121, %s122, %s123
      %p127 = pneg %p121
      %p128 = scmp.eq.s32.totalorder %s9, 2
      %p129 = por %p127, %p128
      %p130 = scmp.ne.s32.totalorder %s122, %s125
      %p131 = scmp.eq.s32.totalorder %s9, 0
      %p132 = por %p130, %p131
      %p133 = scmp.ne.s32.totalorder %s122, %s125
      %p134 = scmp.eq.s32.totalorder %s14, 2
      %p135 = por %p133, %p134
      %p136 = scmp.ne.s32.totalorder %s125, %s126
      %p137 = scmp.eq.s32.totalorder %s14, 0
      %p138 = por %p136, %p137
      %p139 = scmp.ne.s32.totalorder %s125, %s126
      %p140 = scmp.eq.s32.totalorder %s15, 2
      %p141 = por %p139, %p140
      %p143 = scmp.ne.s32.totalorder %s126, %s142
      %p144 = scmp.eq.s32.totalorder %s15, 0
      %p145 = por %p143, %p144
      %p146 = scmp.le.s32.totalorder 1, %s9
      %p147 = scmp.lt.s32.totalorder %s9, 4
      %p148 = pnand %p146, %p147
      %p149 = pneg %p148
      // Predicated region
      $region9: #{vae_forward.13} parent=5 // pred_check
        _
      $region10: #{vae_forward.13} parent=5 // pred_check_branch
        %151 = sbr.rel (%p148) target = $region12
      $region11: #{vae_forward.13} parent=5 // pred_region
        %s152 = ssub.s32 %s9, 1
        // Predicated region
        $region13: #{vae_forward.13} parent=11 // pred_check
          %p153 = pneg %p110
        $region14: #{vae_forward.13} parent=11 // pred_check_branch
          %155 = sbr.rel (%p153) target = $region16
        $region15: #{vae_forward.13} parent=11 // pred_region
          %p156 = scmp.lt.s32.totalorder %s20, 0
          %s157 = scalar_select %p156, %s20, 0
          %s158 = scalar_lea.vmem %s2, %s157
        $region16: #{vae_forward.13} parent=11 // pred_fallthru
          _
      $region12: #{vae_forward.13} parent=5 // pred_fallthru
        _
      %p159 = scmp.lt.s32.totalorder %s9, 3
      // Predicated region
      $region17: #{vae_forward.13} parent=5 // pred_check
        %p160 = pneg %p159
      $region18: #{vae_forward.13} parent=5 // pred_check_branch
        %162 = sbr.rel (%p160) target = $region20
      $region19: #{vae_forward.13} parent=5 // pred_region
        // Predicated region
        $region21: #{vae_forward.13} parent=19 // pred_check
          %p163 = pneg %p50
        $region22: #{vae_forward.13} parent=19 // pred_check_branch
          %165 = sbr.rel (%p163) target = $region24
        $region23: #{vae_forward.13} parent=19 // pred_region
          %s166 = sand.u32 %s40, 1
          %s167 = sand.u32 %s40, 1
          %s168 = smul.addr %s167, 768
          %s169 = scalar_lea.vmem [#allocation3], %s168
          %s170 = smul.u32 64, %s16
          %s171 = smul.u32 3, %s18
          %s172 = smul.addr %s170, 9
          %s173 = sadd.s32 %s171, %s172
          %s174 = smul.addr %s173, 4
          %s175 = scalar_lea.vmem %s0, %s174
          // Predicated region
          $region25: #{vae_forward.13} parent=23 // pred_check
            _
          $region26: #{vae_forward.13} parent=23 // pred_check_branch
            %177 = sbr.rel (0) target = $region28
          $region27: #{vae_forward.13} parent=23 // pred_region
            // Predicated region
            $region29: #{vae_forward.13} parent=27 // pred_check
              _
            $region30: #{vae_forward.13} parent=27 // pred_check_branch
              %179 = sbr.rel (0) target = $region32
            $region31: #{vae_forward.13} parent=27 // pred_region
              %s180 = scalar_lea.vmem %s175, 8
              %s181 = scalar_lea.vmem %s169, 8 [#allocation3]
              loop: start=0, step=1, limit=1
              $region33: #{vae_forward.13} parent=31 // loop_pre_header
                _
              $region34: #{vae_forward.13} parent=31 // loop_header
                %s183 = sphi 0, %s187
                %p184 = scmp.ge.s32.totalorder %s183, 1
                %s188 = sphi %s175, %s175
                %s189 = sphi %s169, %s169
              $region35: #{vae_forward.13} parent=31 // loop_header_branch
                %186 = sbr.rel (%p184) target = $region39
              $region36: #{vae_forward.13} parent=31 // loop_body
                %v190 = vld [vmem:[%s188] sm:$0xff]
                %191 = vst [vmem:[%s189] sm:$0xff] %v190
                %v192 = vld [vmem:[%s188 + $0x24] sm:$0xff]
                %193 = vst [vmem:[%s189 + $0xc] sm:$0xff] %v192
                %v194 = vld [vmem:[%s188 + $0x48] sm:$0xff]
                %195 = vst [vmem:[%s189 + $0x18] sm:$0xff] %v194
                %v196 = vld [vmem:[%s188 + $0x6c] sm:$0xff]
                %197 = vst [vmem:[%s189 + $0x24] sm:$0xff] %v196
                %v198 = vld [vmem:[%s188 + $0x90] sm:$0xff]
                %199 = vst [vmem:[%s189 + $0x30] sm:$0xff] %v198
                %v200 = vld [vmem:[%s188 + $0xb4] sm:$0xff]
                %201 = vst [vmem:[%s189 + $0x3c] sm:$0xff] %v200
                %v202 = vld [vmem:[%s188 + $0xd8] sm:$0xff]
                %203 = vst [vmem:[%s189 + $0x48] sm:$0xff] %v202
                %v204 = vld [vmem:[%s188 + $0xfc] sm:$0xff]
                %205 = vst [vmem:[%s189 + $0x54] sm:$0xff] %v204
                %v206 = vld [vmem:[%s188 + $0x120] sm:$0xff]
                %207 = vst [vmem:[%s189 + $0x60] sm:$0xff] %v206
                %v208 = vld [vmem:[%s188 + $0x144] sm:$0xff]
                %209 = vst [vmem:[%s189 + $0x6c] sm:$0xff] %v208
                %v210 = vld [vmem:[%s188 + $0x168] sm:$0xff]
                %211 = vst [vmem:[%s189 + $0x78] sm:$0xff] %v210
                %v212 = vld [vmem:[%s188 + $0x18c] sm:$0xff]
                %213 = vst [vmem:[%s189 + $0x84] sm:$0xff] %v212
                %v214 = vld [vmem:[%s188 + $0x1b0] sm:$0xff]
                %215 = vst [vmem:[%s189 + $0x90] sm:$0xff] %v214
                %v216 = vld [vmem:[%s188 + $0x1d4] sm:$0xff]
                %217 = vst [vmem:[%s189 + $0x9c] sm:$0xff] %v216
                %v218 = vld [vmem:[%s188 + $0x1f8] sm:$0xff]
                %219 = vst [vmem:[%s189 + $0xa8] sm:$0xff] %v218
                %v220 = vld [vmem:[%s188 + $0x21c] sm:$0xff]
                %221 = vst [vmem:[%s189 + $0xb4] sm:$0xff] %v220
                %v222 = vld [vmem:[%s188 + $0x240] sm:$0xff]
                %223 = vst [vmem:[%s189 + $0xc0] sm:$0xff] %v222
                %v224 = vld [vmem:[%s188 + $0x264] sm:$0xff]
                %225 = vst [vmem:[%s189 + $0xcc] sm:$0xff] %v224
                %v226 = vld [vmem:[%s188 + $0x288] sm:$0xff]
                %227 = vst [vmem:[%s189 + $0xd8] sm:$0xff] %v226
                %v228 = vld [vmem:[%s188 + $0x2ac] sm:$0xff]
                %229 = vst [vmem:[%s189 + $0xe4] sm:$0xff] %v228
                %v230 = vld [vmem:[%s188 + $0x2d0] sm:$0xff]
                %231 = vst [vmem:[%s189 + $0xf0] sm:$0xff] %v230
                %v232 = vld [vmem:[%s188 + $0x2f4] sm:$0xff]
                %233 = vst [vmem:[%s189 + $0xfc] sm:$0xff] %v232
                %v234 = vld [vmem:[%s188 + $0x318] sm:$0xff]
                %235 = vst [vmem:[%s189 + $0x108] sm:$0xff] %v234
                %v236 = vld [vmem:[%s188 + $0x33c] sm:$0xff]
                %237 = vst [vmem:[%s189 + $0x114] sm:$0xff] %v236
                %v238 = vld [vmem:[%s188 + $0x360] sm:$0xff]
                %239 = vst [vmem:[%s189 + $0x120] sm:$0xff] %v238
                %v240 = vld [vmem:[%s188 + $0x384] sm:$0xff]
                %241 = vst [vmem:[%s189 + $0x12c] sm:$0xff] %v240
                %v242 = vld [vmem:[%s188 + $0x3a8] sm:$0xff]
                %243 = vst [vmem:[%s189 + $0x138] sm:$0xff] %v242
                %v244 = vld [vmem:[%s188 + $0x3cc] sm:$0xff]
                %245 = vst [vmem:[%s189 + $0x144] sm:$0xff] %v244
                %v246 = vld [vmem:[%s188 + $0x3f0] sm:$0xff]
                %247 = vst [vmem:[%s189 + $0x150] sm:$0xff] %v246
                %v248 = vld [vmem:[%s188 + $0x414] sm:$0xff]
                %249 = vst [vmem:[%s189 + $0x15c] sm:$0xff] %v248
                %v250 = vld [vmem:[%s188 + $0x438] sm:$0xff]
                %251 = vst [vmem:[%s189 + $0x168] sm:$0xff] %v250
                %v252 = vld [vmem:[%s188 + $0x45c] sm:$0xff]
                %253 = vst [vmem:[%s189 + $0x174] sm:$0xff] %v252
                %v254 = vld [vmem:[%s188 + $0x480] sm:$0xff]
                %255 = vst [vmem:[%s189 + $0x180] sm:$0xff] %v254
                %v256 = vld [vmem:[%s188 + $0x4a4] sm:$0xff]
                %257 = vst [vmem:[%s189 + $0x18c] sm:$0xff] %v256
                %v258 = vld [vmem:[%s188 + $0x4c8] sm:$0xff]
                %259 = vst [vmem:[%s189 + $0x198] sm:$0xff] %v258
                %v260 = vld [vmem:[%s188 + $0x4ec] sm:$0xff]
                %261 = vst [vmem:[%s189 + $0x1a4] sm:$0xff] %v260
                %v262 = vld [vmem:[%s188 + $0x510] sm:$0xff]
                %263 = vst [vmem:[%s189 + $0x1b0] sm:$0xff] %v262
                %v264 = vld [vmem:[%s188 + $0x534] sm:$0xff]
                %265 = vst [vmem:[%s189 + $0x1bc] sm:$0xff] %v264
                %v266 = vld [vmem:[%s188 + $0x558] sm:$0xff]
                %267 = vst [vmem:[%s189 + $0x1c8] sm:$0xff] %v266
                %v268 = vld [vmem:[%s188 + $0x57c] sm:$0xff]
                %269 = vst [vmem:[%s189 + $0x1d4] sm:$0xff] %v268
                %v270 = vld [vmem:[%s188 + $0x5a0] sm:$0xff]
                %271 = vst [vmem:[%s189 + $0x1e0] sm:$0xff] %v270
                %v272 = vld [vmem:[%s188 + $0x5c4] sm:$0xff]
                %273 = vst [vmem:[%s189 + $0x1ec] sm:$0xff] %v272
                %v274 = vld [vmem:[%s188 + $0x5e8] sm:$0xff]
                %275 = vst [vmem:[%s189 + $0x1f8] sm:$0xff] %v274
                %v276 = vld [vmem:[%s188 + $0x60c] sm:$0xff]
                %277 = vst [vmem:[%s189 + $0x204] sm:$0xff] %v276
                %v278 = vld [vmem:[%s188 + $0x630] sm:$0xff]
                %279 = vst [vmem:[%s189 + $0x210] sm:$0xff] %v278
                %v280 = vld [vmem:[%s188 + $0x654] sm:$0xff]
                %281 = vst [vmem:[%s189 + $0x21c] sm:$0xff] %v280
                %v282 = vld [vmem:[%s188 + $0x678] sm:$0xff]
                %283 = vst [vmem:[%s189 + $0x228] sm:$0xff] %v282
                %v284 = vld [vmem:[%s188 + $0x69c] sm:$0xff]
                %285 = vst [vmem:[%s189 + $0x234] sm:$0xff] %v284
                %v286 = vld [vmem:[%s188 + $0x6c0] sm:$0xff]
                %287 = vst [vmem:[%s189 + $0x240] sm:$0xff] %v286
                %v288 = vld [vmem:[%s188 + $0x6e4] sm:$0xff]
                %289 = vst [vmem:[%s189 + $0x24c] sm:$0xff] %v288
                %v290 = vld [vmem:[%s188 + $0x708] sm:$0xff]
                %291 = vst [vmem:[%s189 + $0x258] sm:$0xff] %v290
                %v292 = vld [vmem:[%s188 + $0x72c] sm:$0xff]
                %293 = vst [vmem:[%s189 + $0x264] sm:$0xff] %v292
                %v294 = vld [vmem:[%s188 + $0x750] sm:$0xff]
                %295 = vst [vmem:[%s189 + $0x270] sm:$0xff] %v294
                %v296 = vld [vmem:[%s188 + $0x774] sm:$0xff]
                %297 = vst [vmem:[%s189 + $0x27c] sm:$0xff] %v296
                %v298 = vld [vmem:[%s188 + $0x798] sm:$0xff]
                %299 = vst [vmem:[%s189 + $0x288] sm:$0xff] %v298
                %v300 = vld [vmem:[%s188 + $0x7bc] sm:$0xff]
                %301 = vst [vmem:[%s189 + $0x294] sm:$0xff] %v300
                %v302 = vld [vmem:[%s188 + $0x7e0] sm:$0xff]
                %303 = vst [vmem:[%s189 + $0x2a0] sm:$0xff] %v302
                %v304 = vld [vmem:[%s188 + $0x804] sm:$0xff]
                %305 = vst [vmem:[%s189 + $0x2ac] sm:$0xff] %v304
                %v306 = vld [vmem:[%s188 + $0x828] sm:$0xff]
                %307 = vst [vmem:[%s189 + $0x2b8] sm:$0xff] %v306
                %v308 = vld [vmem:[%s188 + $0x84c] sm:$0xff]
                %309 = vst [vmem:[%s189 + $0x2c4] sm:$0xff] %v308
                %v310 = vld [vmem:[%s188 + $0x870] sm:$0xff]
                %311 = vst [vmem:[%s189 + $0x2d0] sm:$0xff] %v310
                %v312 = vld [vmem:[%s188 + $0x894] sm:$0xff]
                %313 = vst [vmem:[%s189 + $0x2dc] sm:$0xff] %v312
                %v314 = vld [vmem:[%s188 + $0x8b8] sm:$0xff]
                %315 = vst [vmem:[%s189 + $0x2e8] sm:$0xff] %v314
                %v316 = vld [vmem:[%s188 + $0x8dc] sm:$0xff]
                %317 = vst [vmem:[%s189 + $0x2f4] sm:$0xff] %v316
              $region37: #{vae_forward.13} parent=31 // loop_footer
                %s187 = sadd.s32 1, %s183
              $region38: #{vae_forward.13} parent=31 // loop_footer_branch
                %182 = sbr.rel target = $region34
              $region39: #{vae_forward.13} parent=31 // loop_exit
                _
              %s319 = ssub.s32 16, 1
              loop: start=0, step=1, limit=1
              $region40: #{vae_forward.13} parent=31 // loop_pre_header
                _
              $region41: #{vae_forward.13} parent=31 // loop_header
                %s321 = sphi 0, %s325
                %p322 = scmp.ge.s32.totalorder %s321, 1
                %s326 = sphi %s180, %s180
                %s327 = sphi %s181, %s181
              $region42: #{vae_forward.13} parent=31 // loop_header_branch
                %324 = sbr.rel (%p322) target = $region46
              $region43: #{vae_forward.13} parent=31 // loop_body
                %v328 = vld [vmem:[%s326] sm:%s319]
                %329 = vst [vmem:[%s327] sm:%s319] %v328
                %v330 = vld [vmem:[%s326 + $0x24] sm:%s319]
                %331 = vst [vmem:[%s327 + $0xc] sm:%s319] %v330
                %v332 = vld [vmem:[%s326 + $0x48] sm:%s319]
                %333 = vst [vmem:[%s327 + $0x18] sm:%s319] %v332
                %v334 = vld [vmem:[%s326 + $0x6c] sm:%s319]
                %335 = vst [vmem:[%s327 + $0x24] sm:%s319] %v334
                %v336 = vld [vmem:[%s326 + $0x90] sm:%s319]
                %337 = vst [vmem:[%s327 + $0x30] sm:%s319] %v336
                %v338 = vld [vmem:[%s326 + $0xb4] sm:%s319]
                %339 = vst [vmem:[%s327 + $0x3c] sm:%s319] %v338
                %v340 = vld [vmem:[%s326 + $0xd8] sm:%s319]
                %341 = vst [vmem:[%s327 + $0x48] sm:%s319] %v340
                %v342 = vld [vmem:[%s326 + $0xfc] sm:%s319]
                %343 = vst [vmem:[%s327 + $0x54] sm:%s319] %v342
                %v344 = vld [vmem:[%s326 + $0x120] sm:%s319]
                %345 = vst [vmem:[%s327 + $0x60] sm:%s319] %v344
                %v346 = vld [vmem:[%s326 + $0x144] sm:%s319]
                %347 = vst [vmem:[%s327 + $0x6c] sm:%s319] %v346
                %v348 = vld [vmem:[%s326 + $0x168] sm:%s319]
                %349 = vst [vmem:[%s327 + $0x78] sm:%s319] %v348
                %v350 = vld [vmem:[%s326 + $0x18c] sm:%s319]
                %351 = vst [vmem:[%s327 + $0x84] sm:%s319] %v350
                %v352 = vld [vmem:[%s326 + $0x1b0] sm:%s319]
                %353 = vst [vmem:[%s327 + $0x90] sm:%s319] %v352
                %v354 = vld [vmem:[%s326 + $0x1d4] sm:%s319]
                %355 = vst [vmem:[%s327 + $0x9c] sm:%s319] %v354
                %v356 = vld [vmem:[%s326 + $0x1f8] sm:%s319]
                %357 = vst [vmem:[%s327 + $0xa8] sm:%s319] %v356
                %v358 = vld [vmem:[%s326 + $0x21c] sm:%s319]
                %359 = vst [vmem:[%s327 + $0xb4] sm:%s319] %v358
                %v360 = vld [vmem:[%s326 + $0x240] sm:%s319]
                %361 = vst [vmem:[%s327 + $0xc0] sm:%s319] %v360
                %v362 = vld [vmem:[%s326 + $0x264] sm:%s319]
                %363 = vst [vmem:[%s327 + $0xcc] sm:%s319] %v362
                %v364 = vld [vmem:[%s326 + $0x288] sm:%s319]
                %365 = vst [vmem:[%s327 + $0xd8] sm:%s319] %v364
                %v366 = vld [vmem:[%s326 + $0x2ac] sm:%s319]
                %367 = vst [vmem:[%s327 + $0xe4] sm:%s319] %v366
                %v368 = vld [vmem:[%s326 + $0x2d0] sm:%s319]
                %369 = vst [vmem:[%s327 + $0xf0] sm:%s319] %v368
                %v370 = vld [vmem:[%s326 + $0x2f4] sm:%s319]
                %371 = vst [vmem:[%s327 + $0xfc] sm:%s319] %v370
                %v372 = vld [vmem:[%s326 + $0x318] sm:%s319]
                %373 = vst [vmem:[%s327 + $0x108] sm:%s319] %v372
                %v374 = vld [vmem:[%s326 + $0x33c] sm:%s319]
                %375 = vst [vmem:[%s327 + $0x114] sm:%s319] %v374
                %v376 = vld [vmem:[%s326 + $0x360] sm:%s319]
                %377 = vst [vmem:[%s327 + $0x120] sm:%s319] %v376
                %v378 = vld [vmem:[%s326 + $0x384] sm:%s319]
                %379 = vst [vmem:[%s327 + $0x12c] sm:%s319] %v378
                %v380 = vld [vmem:[%s326 + $0x3a8] sm:%s319]
                %381 = vst [vmem:[%s327 + $0x138] sm:%s319] %v380
                %v382 = vld [vmem:[%s326 + $0x3cc] sm:%s319]
                %383 = vst [vmem:[%s327 + $0x144] sm:%s319] %v382
                %v384 = vld [vmem:[%s326 + $0x3f0] sm:%s319]
                %385 = vst [vmem:[%s327 + $0x150] sm:%s319] %v384
                %v386 = vld [vmem:[%s326 + $0x414] sm:%s319]
                %387 = vst [vmem:[%s327 + $0x15c] sm:%s319] %v386
                %v388 = vld [vmem:[%s326 + $0x438] sm:%s319]
                %389 = vst [vmem:[%s327 + $0x168] sm:%s319] %v388
                %v390 = vld [vmem:[%s326 + $0x45c] sm:%s319]
                %391 = vst [vmem:[%s327 + $0x174] sm:%s319] %v390
                %v392 = vld [vmem:[%s326 + $0x480] sm:%s319]
                %393 = vst [vmem:[%s327 + $0x180] sm:%s319] %v392
                %v394 = vld [vmem:[%s326 + $0x4a4] sm:%s319]
                %395 = vst [vmem:[%s327 + $0x18c] sm:%s319] %v394
                %v396 = vld [vmem:[%s326 + $0x4c8] sm:%s319]
                %397 = vst [vmem:[%s327 + $0x198] sm:%s319] %v396
                %v398 = vld [vmem:[%s326 + $0x4ec] sm:%s319]
                %399 = vst [vmem:[%s327 + $0x1a4] sm:%s319] %v398
                %v400 = vld [vmem:[%s326 + $0x510] sm:%s319]
                %401 = vst [vmem:[%s327 + $0x1b0] sm:%s319] %v400
                %v402 = vld [vmem:[%s326 + $0x534] sm:%s319]
                %403 = vst [vmem:[%s327 + $0x1bc] sm:%s319] %v402
                %v404 = vld [vmem:[%s326 + $0x558] sm:%s319]
                %405 = vst [vmem:[%s327 + $0x1c8] sm:%s319] %v404
                %v406 = vld [vmem:[%s326 + $0x57c] sm:%s319]
                %407 = vst [vmem:[%s327 + $0x1d4] sm:%s319] %v406
                %v408 = vld [vmem:[%s326 + $0x5a0] sm:%s319]
                %409 = vst [vmem:[%s327 + $0x1e0] sm:%s319] %v408
                %v410 = vld [vmem:[%s326 + $0x5c4] sm:%s319]
                %411 = vst [vmem:[%s327 + $0x1ec] sm:%s319] %v410
                %v412 = vld [vmem:[%s326 + $0x5e8] sm:%s319]
                %413 = vst [vmem:[%s327 + $0x1f8] sm:%s319] %v412
                %v414 = vld [vmem:[%s326 + $0x60c] sm:%s319]
                %415 = vst [vmem:[%s327 + $0x204] sm:%s319] %v414
                %v416 = vld [vmem:[%s326 + $0x630] sm:%s319]
                %417 = vst [vmem:[%s327 + $0x210] sm:%s319] %v416
                %v418 = vld [vmem:[%s326 + $0x654] sm:%s319]
                %419 = vst [vmem:[%s327 + $0x21c] sm:%s319] %v418
                %v420 = vld [vmem:[%s326 + $0x678] sm:%s319]
                %421 = vst [vmem:[%s327 + $0x228] sm:%s319] %v420
                %v422 = vld [vmem:[%s326 + $0x69c] sm:%s319]
                %423 = vst [vmem:[%s327 + $0x234] sm:%s319] %v422
                %v424 = vld [vmem:[%s326 + $0x6c0] sm:%s319]
                %425 = vst [vmem:[%s327 + $0x240] sm:%s319] %v424
                %v426 = vld [vmem:[%s326 + $0x6e4] sm:%s319]
                %427 = vst [vmem:[%s327 + $0x24c] sm:%s319] %v426
                %v428 = vld [vmem:[%s326 + $0x708] sm:%s319]
                %429 = vst [vmem:[%s327 + $0x258] sm:%s319] %v428
                %v430 = vld [vmem:[%s326 + $0x72c] sm:%s319]
                %431 = vst [vmem:[%s327 + $0x264] sm:%s319] %v430
                %v432 = vld [vmem:[%s326 + $0x750] sm:%s319]
                %433 = vst [vmem:[%s327 + $0x270] sm:%s319] %v432
                %v434 = vld [vmem:[%s326 + $0x774] sm:%s319]
                %435 = vst [vmem:[%s327 + $0x27c] sm:%s319] %v434
                %v436 = vld [vmem:[%s326 + $0x798] sm:%s319]
                %437 = vst [vmem:[%s327 + $0x288] sm:%s319] %v436
                %v438 = vld [vmem:[%s326 + $0x7bc] sm:%s319]
                %439 = vst [vmem:[%s327 + $0x294] sm:%s319] %v438
                %v440 = vld [vmem:[%s326 + $0x7e0] sm:%s319]
                %441 = vst [vmem:[%s327 + $0x2a0] sm:%s319] %v440
                %v442 = vld [vmem:[%s326 + $0x804] sm:%s319]
                %443 = vst [vmem:[%s327 + $0x2ac] sm:%s319] %v442
                %v444 = vld [vmem:[%s326 + $0x828] sm:%s319]
                %445 = vst [vmem:[%s327 + $0x2b8] sm:%s319] %v444
                %v446 = vld [vmem:[%s326 + $0x84c] sm:%s319]
                %447 = vst [vmem:[%s327 + $0x2c4] sm:%s319] %v446
                %v448 = vld [vmem:[%s326 + $0x870] sm:%s319]
                %449 = vst [vmem:[%s327 + $0x2d0] sm:%s319] %v448
                %v450 = vld [vmem:[%s326 + $0x894] sm:%s319]
                %451 = vst [vmem:[%s327 + $0x2dc] sm:%s319] %v450
                %v452 = vld [vmem:[%s326 + $0x8b8] sm:%s319]
                %453 = vst [vmem:[%s327 + $0x2e8] sm:%s319] %v452
                %v454 = vld [vmem:[%s326 + $0x8dc] sm:%s319]
                %455 = vst [vmem:[%s327 + $0x2f4] sm:%s319] %v454
              $region44: #{vae_forward.13} parent=31 // loop_footer
                %s325 = sadd.s32 1, %s321
              $region45: #{vae_forward.13} parent=31 // loop_footer_branch
                %320 = sbr.rel target = $region41
              $region46: #{vae_forward.13} parent=31 // loop_exit
                _
            $region32: #{vae_forward.13} parent=27 // pred_fallthru
              _
          $region28: #{vae_forward.13} parent=23 // pred_fallthru
            _
          %456 = vnop
        $region24: #{vae_forward.13} parent=19 // pred_fallthru
          _
        // Predicated region
        $region47: #{vae_forward.13} parent=19 // pred_check
          %p457 = pneg %p78
        $region48: #{vae_forward.13} parent=19 // pred_check_branch
          %459 = sbr.rel (%p457) target = $region50
        $region49: #{vae_forward.13} parent=19 // pred_region
          %s460 = smul.u32 48, %s18
          %p461 = scmp.lt.s32.totalorder %s460, 143
          %s462 = scalar_select %p461, %s460, 143
          %p463 = scmp.lt.s32.totalorder %s17, 0
          %s464 = scalar_select %p463, %s17, 0
          %s465 = sadd.s32 %s464, %s462
          %s466 = smul.addr %s465, 4
          %s467 = scalar_lea.vmem %s1, %s466
          %s468 = smul.u32 48, %s18
        $region50: #{vae_forward.13} parent=19 // pred_fallthru
          _
      $region20: #{vae_forward.13} parent=5 // pred_fallthru
        _
      %p469 = scmp.le.s32.totalorder 1, %s9
      %p470 = scmp.lt.s32.totalorder %s9, 4
      %p471 = pnand %p469, %p470
      %p472 = pneg %p471
      // Predicated region
      $region51: #{vae_forward.13} parent=5 // pred_check
        _
      $region52: #{vae_forward.13} parent=5 // pred_check_branch
        %474 = sbr.rel (%p471) target = $region54
      $region53: #{vae_forward.13} parent=5 // pred_region
        %s475 = ssub.s32 %s9, 1
        %s476 = sand.u32 %s43, 1
        %s477 = sand.u32 %s43, 1
        %s478 = smul.addr %s477, 768
        %s479 = scalar_lea.vmem [#allocation3], %s478
        // Predicated region
        $region55: #{vae_forward.13} parent=53 // pred_check
          %p480 = pneg %p56
        $region56: #{vae_forward.13} parent=53 // pred_check_branch
          %482 = sbr.rel (%p480) target = $region58
        $region57: #{vae_forward.13} parent=53 // pred_region
          _
        $region58: #{vae_forward.13} parent=53 // pred_fallthru
          _
        %s483 = sand.u32 %s43, 1
        %s484 = sand.u32 %s43, 1
        %s485 = smul.addr %s484, 768
        %s486 = scalar_lea.vmem [#allocation3], %s485
        %p487 = pneg %p56
        %p488 = pneg %p53
        %s489 = smul.u32 48, %s21
        %p490 = scmp.lt.s32.totalorder %s489, 143
        %s491 = scalar_select %p490, %s489, 143
        %p492 = scmp.lt.s32.totalorder %s20, 0
        %s493 = scalar_select %p492, %s20, 0
        %s494 = sadd.s32 %s493, %s491
        %s495 = smul.addr %s494, 4
        %s496 = scalar_lea.vmem %s1, %s495
        %p497 = pneg %p84
        %p498 = pneg %p81
        %p499 = scmp.lt.s32.totalorder %s20, 0
        %s500 = scalar_select %p499, %s20, 0
        %s501 = scalar_lea.vmem %s2, %s500
        %p502 = pneg %p110
        %p503 = pneg %p107
        %p504 = pneg %p138
        %p505 = pneg %p135
        %s506 = smul.u32 64, %s19
        %p507 = scmp.lt.s32.totalorder %s506, 63
        %s508 = scalar_select %p507, %s506, 63
        %p509 = scmp.lt.s32.totalorder %s20, 0
        %s510 = scalar_select %p509, %s20, 0
        %s511 = sadd.s32 %s510, %s508
        %s512 = smul.addr %s511, 8
        %s513 = scalar_lea.vmem %s3, %s512
        %s514 = smul.u32 64, %s19
        %s515 = smul.u32 3, %s21
        %s516 = smul.u32 48, %s21
        %p517 = scmp.lt.s32.totalorder %s516, 143
        %s518 = scalar_select %p517, %s516, 143
        %p519 = scmp.lt.s32.totalorder %s20, 0
        %s520 = scalar_select %p519, %s20, 0
        %s521 = sadd.s32 %s520, %s518
        %s522 = smul.addr %s521, 4
        %s523 = scalar_lea.vmem %s1, %s522
        %s524 = smul.u32 48, %s21
        %p525 = scmp.lt.s32.totalorder %s20, 0
        %s526 = scalar_select %p525, %s20, 0
        %s527 = scalar_lea.vmem %s2, %s526
        %s528 = smul.u32 64, %s19
        %p529 = scmp.lt.s32.totalorder %s528, 63
        %s530 = scalar_select %p529, %s528, 63
        %p531 = scmp.lt.s32.totalorder %s20, 0
        %s532 = scalar_select %p531, %s20, 0
        %s533 = sadd.s32 %s532, %s530
        %s534 = smul.addr %s533, 8
        %s535 = scalar_lea.vmem %s3, %s534
        %s536 = smul.u32 64, %s19
        %p537 = scmp.eq.s32.totalorder %s21, 0
        // Predicated region
        $region59: #{vae_forward.13} parent=53 // pred_check
          %p538 = pneg %p537
        $region60: #{vae_forward.13} parent=53 // pred_check_branch
          %540 = sbr.rel (%p538) target = $region62
        $region61: #{vae_forward.13} parent=53 // pred_region
          %541 = vst [vmem:[#allocation2] sm:$0xff] 0.0
          %542 = vst [vmem:[#allocation2 + $0x8] sm:$0xff] 0.0
          %543 = vst [vmem:[#allocation2 + $0x10] sm:$0xff] 0.0
          %544 = vst [vmem:[#allocation2 + $0x18] sm:$0xff] 0.0
          %545 = vst [vmem:[#allocation2 + $0x20] sm:$0xff] 0.0
          %546 = vst [vmem:[#allocation2 + $0x28] sm:$0xff] 0.0
          %547 = vst [vmem:[#allocation2 + $0x30] sm:$0xff] 0.0
          %548 = vst [vmem:[#allocation2 + $0x38] sm:$0xff] 0.0
          %549 = vst [vmem:[#allocation2 + $0x40] sm:$0xff] 0.0
          %550 = vst [vmem:[#allocation2 + $0x48] sm:$0xff] 0.0
          %551 = vst [vmem:[#allocation2 + $0x50] sm:$0xff] 0.0
          %552 = vst [vmem:[#allocation2 + $0x58] sm:$0xff] 0.0
          %553 = vst [vmem:[#allocation2 + $0x60] sm:$0xff] 0.0
          %554 = vst [vmem:[#allocation2 + $0x68] sm:$0xff] 0.0
          %555 = vst [vmem:[#allocation2 + $0x70] sm:$0xff] 0.0
          %556 = vst [vmem:[#allocation2 + $0x78] sm:$0xff] 0.0
          %557 = vst [vmem:[#allocation2 + $0x80] sm:$0xff] 0.0
          %558 = vst [vmem:[#allocation2 + $0x88] sm:$0xff] 0.0
          %559 = vst [vmem:[#allocation2 + $0x90] sm:$0xff] 0.0
          %560 = vst [vmem:[#allocation2 + $0x98] sm:$0xff] 0.0
          %561 = vst [vmem:[#allocation2 + $0xa0] sm:$0xff] 0.0
          %562 = vst [vmem:[#allocation2 + $0xa8] sm:$0xff] 0.0
          %563 = vst [vmem:[#allocation2 + $0xb0] sm:$0xff] 0.0
          %564 = vst [vmem:[#allocation2 + $0xb8] sm:$0xff] 0.0
          %565 = vst [vmem:[#allocation2 + $0xc0] sm:$0xff] 0.0
          %566 = vst [vmem:[#allocation2 + $0xc8] sm:$0xff] 0.0
          %567 = vst [vmem:[#allocation2 + $0xd0] sm:$0xff] 0.0
          %568 = vst [vmem:[#allocation2 + $0xd8] sm:$0xff] 0.0
          %569 = vst [vmem:[#allocation2 + $0xe0] sm:$0xff] 0.0
          %570 = vst [vmem:[#allocation2 + $0xe8] sm:$0xff] 0.0
          %571 = vst [vmem:[#allocation2 + $0xf0] sm:$0xff] 0.0
          %572 = vst [vmem:[#allocation2 + $0xf8] sm:$0xff] 0.0
          %573 = vst [vmem:[#allocation2 + $0x100] sm:$0xff] 0.0
          %574 = vst [vmem:[#allocation2 + $0x108] sm:$0xff] 0.0
          %575 = vst [vmem:[#allocation2 + $0x110] sm:$0xff] 0.0
          %576 = vst [vmem:[#allocation2 + $0x118] sm:$0xff] 0.0
          %577 = vst [vmem:[#allocation2 + $0x120] sm:$0xff] 0.0
          %578 = vst [vmem:[#allocation2 + $0x128] sm:$0xff] 0.0
          %579 = vst [vmem:[#allocation2 + $0x130] sm:$0xff] 0.0
          %580 = vst [vmem:[#allocation2 + $0x138] sm:$0xff] 0.0
          %581 = vst [vmem:[#allocation2 + $0x140] sm:$0xff] 0.0
          %582 = vst [vmem:[#allocation2 + $0x148] sm:$0xff] 0.0
          %583 = vst [vmem:[#allocation2 + $0x150] sm:$0xff] 0.0
          %584 = vst [vmem:[#allocation2 + $0x158] sm:$0xff] 0.0
          %585 = vst [vmem:[#allocation2 + $0x160] sm:$0xff] 0.0
          %586 = vst [vmem:[#allocation2 + $0x168] sm:$0xff] 0.0
          %587 = vst [vmem:[#allocation2 + $0x170] sm:$0xff] 0.0
          %588 = vst [vmem:[#allocation2 + $0x178] sm:$0xff] 0.0
          %589 = vst [vmem:[#allocation2 + $0x180] sm:$0xff] 0.0
          %590 = vst [vmem:[#allocation2 + $0x188] sm:$0xff] 0.0
          %591 = vst [vmem:[#allocation2 + $0x190] sm:$0xff] 0.0
          %592 = vst [vmem:[#allocation2 + $0x198] sm:$0xff] 0.0
          %593 = vst [vmem:[#allocation2 + $0x1a0] sm:$0xff] 0.0
          %594 = vst [vmem:[#allocation2 + $0x1a8] sm:$0xff] 0.0
          %595 = vst [vmem:[#allocation2 + $0x1b0] sm:$0xff] 0.0
          %596 = vst [vmem:[#allocation2 + $0x1b8] sm:$0xff] 0.0
          %597 = vst [vmem:[#allocation2 + $0x1c0] sm:$0xff] 0.0
          %598 = vst [vmem:[#allocation2 + $0x1c8] sm:$0xff] 0.0
          %599 = vst [vmem:[#allocation2 + $0x1d0] sm:$0xff] 0.0
          %600 = vst [vmem:[#allocation2 + $0x1d8] sm:$0xff] 0.0
          %601 = vst [vmem:[#allocation2 + $0x1e0] sm:$0xff] 0.0
          %602 = vst [vmem:[#allocation2 + $0x1e8] sm:$0xff] 0.0
          %603 = vst [vmem:[#allocation2 + $0x1f0] sm:$0xff] 0.0
          %604 = vst [vmem:[#allocation2 + $0x1f8] sm:$0xff] 0.0
        $region62: #{vae_forward.13} parent=53 // pred_fallthru
          _
        %v605 = vld [vmem:[#allocation2] sm:$0xff]
        %v606 = vld [vmem:[#allocation2 + $0x8] sm:$0xff]
        %v607 = vld [vmem:[#allocation2 + $0x10] sm:$0xff]
        %v608 = vld [vmem:[#allocation2 + $0x18] sm:$0xff]
        %v609 = vld [vmem:[#allocation2 + $0x20] sm:$0xff]
        %v610 = vld [vmem:[#allocation2 + $0x28] sm:$0xff]
        %v611 = vld [vmem:[#allocation2 + $0x30] sm:$0xff]
        %v612 = vld [vmem:[#allocation2 + $0x38] sm:$0xff]
        %v613 = vld [vmem:[#allocation2 + $0x40] sm:$0xff]
        %v614 = vld [vmem:[#allocation2 + $0x48] sm:$0xff]
        %v615 = vld [vmem:[#allocation2 + $0x50] sm:$0xff]
        %v616 = vld [vmem:[#allocation2 + $0x58] sm:$0xff]
        %v617 = vld [vmem:[#allocation2 + $0x60] sm:$0xff]
        %v618 = vld [vmem:[#allocation2 + $0x68] sm:$0xff]
        %v619 = vld [vmem:[#allocation2 + $0x70] sm:$0xff]
        %v620 = vld [vmem:[#allocation2 + $0x78] sm:$0xff]
        %v621 = vld [vmem:[#allocation2 + $0x80] sm:$0xff]
        %v622 = vld [vmem:[#allocation2 + $0x88] sm:$0xff]
        %v623 = vld [vmem:[#allocation2 + $0x90] sm:$0xff]
        %v624 = vld [vmem:[#allocation2 + $0x98] sm:$0xff]
        %v625 = vld [vmem:[#allocation2 + $0xa0] sm:$0xff]
        %v626 = vld [vmem:[#allocation2 + $0xa8] sm:$0xff]
        %v627 = vld [vmem:[#allocation2 + $0xb0] sm:$0xff]
        %v628 = vld [vmem:[#allocation2 + $0xb8] sm:$0xff]
        %v629 = vld [vmem:[#allocation2 + $0xc0] sm:$0xff]
        %v630 = vld [vmem:[#allocation2 + $0xc8] sm:$0xff]
        %v631 = vld [vmem:[#allocation2 + $0xd0] sm:$0xff]
        %v632 = vld [vmem:[#allocation2 + $0xd8] sm:$0xff]
        %v633 = vld [vmem:[#allocation2 + $0xe0] sm:$0xff]
        %v634 = vld [vmem:[#allocation2 + $0xe8] sm:$0xff]
        %v635 = vld [vmem:[#allocation2 + $0xf0] sm:$0xff]
        %v636 = vld [vmem:[#allocation2 + $0xf8] sm:$0xff]
        %v637 = vld [vmem:[#allocation2 + $0x100] sm:$0xff]
        %v638 = vld [vmem:[#allocation2 + $0x108] sm:$0xff]
        %v639 = vld [vmem:[#allocation2 + $0x110] sm:$0xff]
        %v640 = vld [vmem:[#allocation2 + $0x118] sm:$0xff]
        %v641 = vld [vmem:[#allocation2 + $0x120] sm:$0xff]
        %v642 = vld [vmem:[#allocation2 + $0x128] sm:$0xff]
        %v643 = vld [vmem:[#allocation2 + $0x130] sm:$0xff]
        %v644 = vld [vmem:[#allocation2 + $0x138] sm:$0xff]
        %v645 = vld [vmem:[#allocation2 + $0x140] sm:$0xff]
        %v646 = vld [vmem:[#allocation2 + $0x148] sm:$0xff]
        %v647 = vld [vmem:[#allocation2 + $0x150] sm:$0xff]
        %v648 = vld [vmem:[#allocation2 + $0x158] sm:$0xff]
        %v649 = vld [vmem:[#allocation2 + $0x160] sm:$0xff]
        %v650 = vld [vmem:[#allocation2 + $0x168] sm:$0xff]
        %v651 = vld [vmem:[#allocation2 + $0x170] sm:$0xff]
        %v652 = vld [vmem:[#allocation2 + $0x178] sm:$0xff]
        %v653 = vld [vmem:[#allocation2 + $0x180] sm:$0xff]
        %v654 = vld [vmem:[#allocation2 + $0x188] sm:$0xff]
        %v655 = vld [vmem:[#allocation2 + $0x190] sm:$0xff]
        %v656 = vld [vmem:[#allocation2 + $0x198] sm:$0xff]
        %v657 = vld [vmem:[#allocation2 + $0x1a0] sm:$0xff]
        %v658 = vld [vmem:[#allocation2 + $0x1a8] sm:$0xff]
        %v659 = vld [vmem:[#allocation2 + $0x1b0] sm:$0xff]
        %v660 = vld [vmem:[#allocation2 + $0x1b8] sm:$0xff]
        %v661 = vld [vmem:[#allocation2 + $0x1c0] sm:$0xff]
        %v662 = vld [vmem:[#allocation2 + $0x1c8] sm:$0xff]
        %v663 = vld [vmem:[#allocation2 + $0x1d0] sm:$0xff]
        %v664 = vld [vmem:[#allocation2 + $0x1d8] sm:$0xff]
        %v665 = vld [vmem:[#allocation2 + $0x1e0] sm:$0xff]
        %v666 = vld [vmem:[#allocation2 + $0x1e8] sm:$0xff]
        %v667 = vld [vmem:[#allocation2 + $0x1f0] sm:$0xff]
        %v668 = vld [vmem:[#allocation2 + $0x1f8] sm:$0xff]
        %v669 = vld [vmem:[%s479] sm:$0xff]
        %v670 = vld [vmem:[%s479 + $0x8] sm:$0xf]
        %v671 = vld [vmem:[%s479 + $0xc] sm:$0xff]
        %v672 = vld [vmem:[%s479 + $0x14] sm:$0xf]
        %v673 = vld [vmem:[%s479 + $0x18] sm:$0xff]
        %v674 = vld [vmem:[%s479 + $0x20] sm:$0xf]
        %v675 = vld [vmem:[%s479 + $0x24] sm:$0xff]
        %v676 = vld [vmem:[%s479 + $0x2c] sm:$0xf]
        %v677 = vld [vmem:[%s479 + $0x30] sm:$0xff]
        %v678 = vld [vmem:[%s479 + $0x38] sm:$0xf]
        %v679 = vld [vmem:[%s479 + $0x3c] sm:$0xff]
        %v680 = vld [vmem:[%s479 + $0x44] sm:$0xf]
        %v681 = vld [vmem:[%s479 + $0x48] sm:$0xff]
        %v682 = vld [vmem:[%s479 + $0x50] sm:$0xf]
        %v683 = vld [vmem:[%s479 + $0x54] sm:$0xff]
        %v684 = vld [vmem:[%s479 + $0x5c] sm:$0xf]
        %v685 = vld [vmem:[%s479 + $0x60] sm:$0xff]
        %v686 = vld [vmem:[%s479 + $0x68] sm:$0xf]
        %v687 = vld [vmem:[%s479 + $0x6c] sm:$0xff]
        %v688 = vld [vmem:[%s479 + $0x74] sm:$0xf]
        %v689 = vld [vmem:[%s479 + $0x78] sm:$0xff]
        %v690 = vld [vmem:[%s479 + $0x80] sm:$0xf]
        %v691 = vld [vmem:[%s479 + $0x84] sm:$0xff]
        %v692 = vld [vmem:[%s479 + $0x8c] sm:$0xf]
        %v693 = vld [vmem:[%s479 + $0x90] sm:$0xff]
        %v694 = vld [vmem:[%s479 + $0x98] sm:$0xf]
        %v695 = vld [vmem:[%s479 + $0x9c] sm:$0xff]
        %v696 = vld [vmem:[%s479 + $0xa4] sm:$0xf]
        %v697 = vld [vmem:[%s479 + $0xa8] sm:$0xff]
        %v698 = vld [vmem:[%s479 + $0xb0] sm:$0xf]
        %v699 = vld [vmem:[%s479 + $0xb4] sm:$0xff]
        %v700 = vld [vmem:[%s479 + $0xbc] sm:$0xf]
        %v701 = vld [vmem:[%s479 + $0xc0] sm:$0xff]
        %v702 = vld [vmem:[%s479 + $0xc8] sm:$0xf]
        %v703 = vld [vmem:[%s479 + $0xcc] sm:$0xff]
        %v704 = vld [vmem:[%s479 + $0xd4] sm:$0xf]
        %v705 = vld [vmem:[%s479 + $0xd8] sm:$0xff]
        %v706 = vld [vmem:[%s479 + $0xe0] sm:$0xf]
        %v707 = vld [vmem:[%s479 + $0xe4] sm:$0xff]
        %v708 = vld [vmem:[%s479 + $0xec] sm:$0xf]
        %v709 = vld [vmem:[%s479 + $0xf0] sm:$0xff]
        %v710 = vld [vmem:[%s479 + $0xf8] sm:$0xf]
        %v711 = vld [vmem:[%s479 + $0xfc] sm:$0xff]
        %v712 = vld [vmem:[%s479 + $0x104] sm:$0xf]
        %v713 = vld [vmem:[%s479 + $0x108] sm:$0xff]
        %v714 = vld [vmem:[%s479 + $0x110] sm:$0xf]
        %v715 = vld [vmem:[%s479 + $0x114] sm:$0xff]
        %v716 = vld [vmem:[%s479 + $0x11c] sm:$0xf]
        %v717 = vld [vmem:[%s479 + $0x120] sm:$0xff]
        %v718 = vld [vmem:[%s479 + $0x128] sm:$0xf]
        %v719 = vld [vmem:[%s479 + $0x12c] sm:$0xff]
        %v720 = vld [vmem:[%s479 + $0x134] sm:$0xf]
        %v721 = vld [vmem:[%s479 + $0x138] sm:$0xff]
        %v722 = vld [vmem:[%s479 + $0x140] sm:$0xf]
        %v723 = vld [vmem:[%s479 + $0x144] sm:$0xff]
        %v724 = vld [vmem:[%s479 + $0x14c] sm:$0xf]
        %v725 = vld [vmem:[%s479 + $0x150] sm:$0xff]
        %v726 = vld [vmem:[%s479 + $0x158] sm:$0xf]
        %v727 = vld [vmem:[%s479 + $0x15c] sm:$0xff]
        %v728 = vld [vmem:[%s479 + $0x164] sm:$0xf]
        %v729 = vld [vmem:[%s479 + $0x168] sm:$0xff]
        %v730 = vld [vmem:[%s479 + $0x170] sm:$0xf]
        %v731 = vld [vmem:[%s479 + $0x174] sm:$0xff]
        %v732 = vld [vmem:[%s479 + $0x17c] sm:$0xf]
        %v733 = vld [vmem:[%s479 + $0x180] sm:$0xff]
        %v734 = vld [vmem:[%s479 + $0x188] sm:$0xf]
        %v735 = vld [vmem:[%s479 + $0x18c] sm:$0xff]
        %v736 = vld [vmem:[%s479 + $0x194] sm:$0xf]
        %v737 = vld [vmem:[%s479 + $0x198] sm:$0xff]
        %v738 = vld [vmem:[%s479 + $0x1a0] sm:$0xf]
        %v739 = vld [vmem:[%s479 + $0x1a4] sm:$0xff]
        %v740 = vld [vmem:[%s479 + $0x1ac] sm:$0xf]
        %v741 = vld [vmem:[%s479 + $0x1b0] sm:$0xff]
        %v742 = vld [vmem:[%s479 + $0x1b8] sm:$0xf]
        %v743 = vld [vmem:[%s479 + $0x1bc] sm:$0xff]
        %v744 = vld [vmem:[%s479 + $0x1c4] sm:$0xf]
        %v745 = vld [vmem:[%s479 + $0x1c8] sm:$0xff]
        %v746 = vld [vmem:[%s479 + $0x1d0] sm:$0xf]
        %v747 = vld [vmem:[%s479 + $0x1d4] sm:$0xff]
        %v748 = vld [vmem:[%s479 + $0x1dc] sm:$0xf]
        %v749 = vld [vmem:[%s479 + $0x1e0] sm:$0xff]
        %v750 = vld [vmem:[%s479 + $0x1e8] sm:$0xf]
        %v751 = vld [vmem:[%s479 + $0x1ec] sm:$0xff]
        %v752 = vld [vmem:[%s479 + $0x1f4] sm:$0xf]
        %v753 = vld [vmem:[%s479 + $0x1f8] sm:$0xff]
        %v754 = vld [vmem:[%s479 + $0x200] sm:$0xf]
        %v755 = vld [vmem:[%s479 + $0x204] sm:$0xff]
        %v756 = vld [vmem:[%s479 + $0x20c] sm:$0xf]
        %v757 = vld [vmem:[%s479 + $0x210] sm:$0xff]
        %v758 = vld [vmem:[%s479 + $0x218] sm:$0xf]
        %v759 = vld [vmem:[%s479 + $0x21c] sm:$0xff]
        %v760 = vld [vmem:[%s479 + $0x224] sm:$0xf]
        %v761 = vld [vmem:[%s479 + $0x228] sm:$0xff]
        %v762 = vld [vmem:[%s479 + $0x230] sm:$0xf]
        %v763 = vld [vmem:[%s479 + $0x234] sm:$0xff]
        %v764 = vld [vmem:[%s479 + $0x23c] sm:$0xf]
        %v765 = vld [vmem:[%s479 + $0x240] sm:$0xff]
        %v766 = vld [vmem:[%s479 + $0x248] sm:$0xf]
        %v767 = vld [vmem:[%s479 + $0x24c] sm:$0xff]
        %v768 = vld [vmem:[%s479 + $0x254] sm:$0xf]
        %v769 = vld [vmem:[%s479 + $0x258] sm:$0xff]
        %v770 = vld [vmem:[%s479 + $0x260] sm:$0xf]
        %v771 = vld [vmem:[%s479 + $0x264] sm:$0xff]
        %v772 = vld [vmem:[%s479 + $0x26c] sm:$0xf]
        %v773 = vld [vmem:[%s479 + $0x270] sm:$0xff]
        %v774 = vld [vmem:[%s479 + $0x278] sm:$0xf]
        %v775 = vld [vmem:[%s479 + $0x27c] sm:$0xff]
        %v776 = vld [vmem:[%s479 + $0x284] sm:$0xf]
        %v777 = vld [vmem:[%s479 + $0x288] sm:$0xff]
        %v778 = vld [vmem:[%s479 + $0x290] sm:$0xf]
        %v779 = vld [vmem:[%s479 + $0x294] sm:$0xff]
        %v780 = vld [vmem:[%s479 + $0x29c] sm:$0xf]
        %v781 = vld [vmem:[%s479 + $0x2a0] sm:$0xff]
        %v782 = vld [vmem:[%s479 + $0x2a8] sm:$0xf]
        %v783 = vld [vmem:[%s479 + $0x2ac] sm:$0xff]
        %v784 = vld [vmem:[%s479 + $0x2b4] sm:$0xf]
        %v785 = vld [vmem:[%s479 + $0x2b8] sm:$0xff]
        %v786 = vld [vmem:[%s479 + $0x2c0] sm:$0xf]
        %v787 = vld [vmem:[%s479 + $0x2c4] sm:$0xff]
        %v788 = vld [vmem:[%s479 + $0x2cc] sm:$0xf]
        %v789 = vld [vmem:[%s479 + $0x2d0] sm:$0xff]
        %v790 = vld [vmem:[%s479 + $0x2d8] sm:$0xf]
        %v791 = vld [vmem:[%s479 + $0x2dc] sm:$0xff]
        %v792 = vld [vmem:[%s479 + $0x2e4] sm:$0xf]
        %v793 = vld [vmem:[%s479 + $0x2e8] sm:$0xff]
        %v794 = vld [vmem:[%s479 + $0x2f0] sm:$0xf]
        %v795 = vld [vmem:[%s479 + $0x2f4] sm:$0xff]
        %v796 = vld [vmem:[%s479 + $0x2fc] sm:$0xf]
        %v797 = vld [vmem:[%s523] sm:$0xf]
        %v798 = vld [vmem:[%s523 + $0x4] sm:$0xf]
        %v799 = vld [vmem:[%s523 + $0x8] sm:$0xf]
        %v800 = vld [vmem:[%s523 + $0xc] sm:$0xf]
        %v801 = vld [vmem:[%s523 + $0x10] sm:$0xf]
        %v802 = vld [vmem:[%s523 + $0x14] sm:$0xf]
        %v803 = vld [vmem:[%s523 + $0x18] sm:$0xf]
        %v804 = vld [vmem:[%s523 + $0x1c] sm:$0xf]
        %v805 = vld [vmem:[%s523 + $0x20] sm:$0xf]
        %v806 = vld [vmem:[%s523 + $0x24] sm:$0xf]
        %v807 = vld [vmem:[%s523 + $0x28] sm:$0xf]
        %v808 = vld [vmem:[%s523 + $0x2c] sm:$0xf]
        %v809 = vld [vmem:[%s523 + $0x30] sm:$0xf]
        %v810 = vld [vmem:[%s523 + $0x34] sm:$0xf]
        %v811 = vld [vmem:[%s523 + $0x38] sm:$0xf]
        %v812 = vld [vmem:[%s523 + $0x3c] sm:$0xf]
        %v813 = vld [vmem:[%s523 + $0x40] sm:$0xf]
        %v814 = vld [vmem:[%s523 + $0x44] sm:$0xf]
        %v815 = vld [vmem:[%s523 + $0x48] sm:$0xf]
        %v816 = vld [vmem:[%s523 + $0x4c] sm:$0xf]
        %v817 = vld [vmem:[%s523 + $0x50] sm:$0xf]
        %v818 = vld [vmem:[%s523 + $0x54] sm:$0xf]
        %v819 = vld [vmem:[%s523 + $0x58] sm:$0xf]
        %v820 = vld [vmem:[%s523 + $0x5c] sm:$0xf]
        %v821 = vld [vmem:[%s523 + $0x60] sm:$0xf]
        %v822 = vld [vmem:[%s523 + $0x64] sm:$0xf]
        %v823 = vld [vmem:[%s523 + $0x68] sm:$0xf]
        %v824 = vld [vmem:[%s523 + $0x6c] sm:$0xf]
        %v825 = vld [vmem:[%s523 + $0x70] sm:$0xf]
        %v826 = vld [vmem:[%s523 + $0x74] sm:$0xf]
        %v827 = vld [vmem:[%s523 + $0x78] sm:$0xf]
        %v828 = vld [vmem:[%s523 + $0x7c] sm:$0xf]
        %v829 = vld [vmem:[%s523 + $0x80] sm:$0xf]
        %v830 = vld [vmem:[%s523 + $0x84] sm:$0xf]
        %v831 = vld [vmem:[%s523 + $0x88] sm:$0xf]
        %v832 = vld [vmem:[%s523 + $0x8c] sm:$0xf]
        %v833 = vld [vmem:[%s523 + $0x90] sm:$0xf]
        %v834 = vld [vmem:[%s523 + $0x94] sm:$0xf]
        %v835 = vld [vmem:[%s523 + $0x98] sm:$0xf]
        %v836 = vld [vmem:[%s523 + $0x9c] sm:$0xf]
        %v837 = vld [vmem:[%s523 + $0xa0] sm:$0xf]
        %v838 = vld [vmem:[%s523 + $0xa4] sm:$0xf]
        %v839 = vld [vmem:[%s523 + $0xa8] sm:$0xf]
        %v840 = vld [vmem:[%s523 + $0xac] sm:$0xf]
        %v841 = vld [vmem:[%s523 + $0xb0] sm:$0xf]
        %v842 = vld [vmem:[%s523 + $0xb4] sm:$0xf]
        %v843 = vld [vmem:[%s523 + $0xb8] sm:$0xf]
        %v844 = vld [vmem:[%s523 + $0xbc] sm:$0xf]
        %v973 = vunpack.c.l.b16 %v669
        %v974 = vunpack.c.h.b16 %v669
        %v975 = vunpack.c.l.b16 %v670
        %v976 = vunpack.c.l.b16 %v671
        %v977 = vunpack.c.h.b16 %v671
        %v978 = vunpack.c.l.b16 %v672
        %v979 = vunpack.c.l.b16 %v673
        %v980 = vunpack.c.h.b16 %v673
        %v981 = vunpack.c.l.b16 %v674
        %v982 = vunpack.c.l.b16 %v675
        %v983 = vunpack.c.h.b16 %v675
        %v984 = vunpack.c.l.b16 %v676
        %v985 = vunpack.c.l.b16 %v677
        %v986 = vunpack.c.h.b16 %v677
        %v987 = vunpack.c.l.b16 %v678
        %v988 = vunpack.c.l.b16 %v679
        %v989 = vunpack.c.h.b16 %v679
        %v990 = vunpack.c.l.b16 %v680
        %v991 = vunpack.c.l.b16 %v681
        %v992 = vunpack.c.h.b16 %v681
        %v993 = vunpack.c.l.b16 %v682
        %v994 = vunpack.c.l.b16 %v683
        %v995 = vunpack.c.h.b16 %v683
        %v996 = vunpack.c.l.b16 %v684
        %v997 = vunpack.c.l.b16 %v685
        %v998 = vunpack.c.h.b16 %v685
        %v999 = vunpack.c.l.b16 %v686
        %v1000 = vunpack.c.l.b16 %v687
        %v1001 = vunpack.c.h.b16 %v687
        %v1002 = vunpack.c.l.b16 %v688
        %v1003 = vunpack.c.l.b16 %v689
        %v1004 = vunpack.c.h.b16 %v689
        %v1005 = vunpack.c.l.b16 %v690
        %v1006 = vunpack.c.l.b16 %v691
        %v1007 = vunpack.c.h.b16 %v691
        %v1008 = vunpack.c.l.b16 %v692
        %v1009 = vunpack.c.l.b16 %v693
        %v1010 = vunpack.c.h.b16 %v693
        %v1011 = vunpack.c.l.b16 %v694
        %v1012 = vunpack.c.l.b16 %v695
        %v1013 = vunpack.c.h.b16 %v695
        %v1014 = vunpack.c.l.b16 %v696
        %v1015 = vunpack.c.l.b16 %v697
        %v1016 = vunpack.c.h.b16 %v697
        %v1017 = vunpack.c.l.b16 %v698
        %v1018 = vunpack.c.l.b16 %v699
        %v1019 = vunpack.c.h.b16 %v699
        %v1020 = vunpack.c.l.b16 %v700
        %v1021 = vunpack.c.l.b16 %v701
        %v1022 = vunpack.c.h.b16 %v701
        %v1023 = vunpack.c.l.b16 %v702
        %v1024 = vunpack.c.l.b16 %v703
        %v1025 = vunpack.c.h.b16 %v703
        %v1026 = vunpack.c.l.b16 %v704
        %v1027 = vunpack.c.l.b16 %v705
        %v1028 = vunpack.c.h.b16 %v705
        %v1029 = vunpack.c.l.b16 %v706
        %v1030 = vunpack.c.l.b16 %v707
        %v1031 = vunpack.c.h.b16 %v707
        %v1032 = vunpack.c.l.b16 %v708
        %v1033 = vunpack.c.l.b16 %v709
        %v1034 = vunpack.c.h.b16 %v709
        %v1035 = vunpack.c.l.b16 %v710
        %v1036 = vunpack.c.l.b16 %v711
        %v1037 = vunpack.c.h.b16 %v711
        %v1038 = vunpack.c.l.b16 %v712
        %v1039 = vunpack.c.l.b16 %v713
        %v1040 = vunpack.c.h.b16 %v713
        %v1041 = vunpack.c.l.b16 %v714
        %v1042 = vunpack.c.l.b16 %v715
        %v1043 = vunpack.c.h.b16 %v715
        %v1044 = vunpack.c.l.b16 %v716
        %v1045 = vunpack.c.l.b16 %v717
        %v1046 = vunpack.c.h.b16 %v717
        %v1047 = vunpack.c.l.b16 %v718
        %v1048 = vunpack.c.l.b16 %v719
        %v1049 = vunpack.c.h.b16 %v719
        %v1050 = vunpack.c.l.b16 %v720
        %v1051 = vunpack.c.l.b16 %v721
        %v1052 = vunpack.c.h.b16 %v721
        %v1053 = vunpack.c.l.b16 %v722
        %v1054 = vunpack.c.l.b16 %v723
        %v1055 = vunpack.c.h.b16 %v723
        %v1056 = vunpack.c.l.b16 %v724
        %v1057 = vunpack.c.l.b16 %v725
        %v1058 = vunpack.c.h.b16 %v725
        %v1059 = vunpack.c.l.b16 %v726
        %v1060 = vunpack.c.l.b16 %v727
        %v1061 = vunpack.c.h.b16 %v727
        %v1062 = vunpack.c.l.b16 %v728
        %v1063 = vunpack.c.l.b16 %v729
        %v1064 = vunpack.c.h.b16 %v729
        %v1065 = vunpack.c.l.b16 %v730
        %v1066 = vunpack.c.l.b16 %v731
        %v1067 = vunpack.c.h.b16 %v731
        %v1068 = vunpack.c.l.b16 %v732
        %v1069 = vunpack.c.l.b16 %v733
        %v1070 = vunpack.c.h.b16 %v733
        %v1071 = vunpack.c.l.b16 %v734
        %v1072 = vunpack.c.l.b16 %v735
        %v1073 = vunpack.c.h.b16 %v735
        %v1074 = vunpack.c.l.b16 %v736
        %v1075 = vunpack.c.l.b16 %v737
        %v1076 = vunpack.c.h.b16 %v737
        %v1077 = vunpack.c.l.b16 %v738
        %v1078 = vunpack.c.l.b16 %v739
        %v1079 = vunpack.c.h.b16 %v739
        %v1080 = vunpack.c.l.b16 %v740
        %v1081 = vunpack.c.l.b16 %v741
        %v1082 = vunpack.c.h.b16 %v741
        %v1083 = vunpack.c.l.b16 %v742
        %v1084 = vunpack.c.l.b16 %v743
        %v1085 = vunpack.c.h.b16 %v743
        %v1086 = vunpack.c.l.b16 %v744
        %v1087 = vunpack.c.l.b16 %v745
        %v1088 = vunpack.c.h.b16 %v745
        %v1089 = vunpack.c.l.b16 %v746
        %v1090 = vunpack.c.l.b16 %v747
        %v1091 = vunpack.c.h.b16 %v747
        %v1092 = vunpack.c.l.b16 %v748
        %v1093 = vunpack.c.l.b16 %v749
        %v1094 = vunpack.c.h.b16 %v749
        %v1095 = vunpack.c.l.b16 %v750
        %v1096 = vunpack.c.l.b16 %v751
        %v1097 = vunpack.c.h.b16 %v751
        %v1098 = vunpack.c.l.b16 %v752
        %v1099 = vunpack.c.l.b16 %v753
        %v1100 = vunpack.c.h.b16 %v753
        %v1101 = vunpack.c.l.b16 %v754
        %v1102 = vunpack.c.l.b16 %v755
        %v1103 = vunpack.c.h.b16 %v755
        %v1104 = vunpack.c.l.b16 %v756
        %v1105 = vunpack.c.l.b16 %v757
        %v1106 = vunpack.c.h.b16 %v757
        %v1107 = vunpack.c.l.b16 %v758
        %v1108 = vunpack.c.l.b16 %v759
        %v1109 = vunpack.c.h.b16 %v759
        %v1110 = vunpack.c.l.b16 %v760
        %v1111 = vunpack.c.l.b16 %v761
        %v1112 = vunpack.c.h.b16 %v761
        %v1113 = vunpack.c.l.b16 %v762
        %v1114 = vunpack.c.l.b16 %v763
        %v1115 = vunpack.c.h.b16 %v763
        %v1116 = vunpack.c.l.b16 %v764
        %v1117 = vunpack.c.l.b16 %v765
        %v1118 = vunpack.c.h.b16 %v765
        %v1119 = vunpack.c.l.b16 %v766
        %v1120 = vunpack.c.l.b16 %v767
        %v1121 = vunpack.c.h.b16 %v767
        %v1122 = vunpack.c.l.b16 %v768
        %v1123 = vunpack.c.l.b16 %v769
        %v1124 = vunpack.c.h.b16 %v769
        %v1125 = vunpack.c.l.b16 %v770
        %v1126 = vunpack.c.l.b16 %v771
        %v1127 = vunpack.c.h.b16 %v771
        %v1128 = vunpack.c.l.b16 %v772
        %v1129 = vunpack.c.l.b16 %v773
        %v1130 = vunpack.c.h.b16 %v773
        %v1131 = vunpack.c.l.b16 %v774
        %v1132 = vunpack.c.l.b16 %v775
        %v1133 = vunpack.c.h.b16 %v775
        %v1134 = vunpack.c.l.b16 %v776
        %v1135 = vunpack.c.l.b16 %v777
        %v1136 = vunpack.c.h.b16 %v777
        %v1137 = vunpack.c.l.b16 %v778
        %v1138 = vunpack.c.l.b16 %v779
        %v1139 = vunpack.c.h.b16 %v779
        %v1140 = vunpack.c.l.b16 %v780
        %v1141 = vunpack.c.l.b16 %v781
        %v1142 = vunpack.c.h.b16 %v781
        %v1143 = vunpack.c.l.b16 %v782
        %v1144 = vunpack.c.l.b16 %v783
        %v1145 = vunpack.c.h.b16 %v783
        %v1146 = vunpack.c.l.b16 %v784
        %v1147 = vunpack.c.l.b16 %v785
        %v1148 = vunpack.c.h.b16 %v785
        %v1149 = vunpack.c.l.b16 %v786
        %v1150 = vunpack.c.l.b16 %v787
        %v1151 = vunpack.c.h.b16 %v787
        %v1152 = vunpack.c.l.b16 %v788
        %v1153 = vunpack.c.l.b16 %v789
        %v1154 = vunpack.c.h.b16 %v789
        %v1155 = vunpack.c.l.b16 %v790
        %v1156 = vunpack.c.l.b16 %v791
        %v1157 = vunpack.c.h.b16 %v791
        %v1158 = vunpack.c.l.b16 %v792
        %v1159 = vunpack.c.l.b16 %v793
        %v1160 = vunpack.c.h.b16 %v793
        %v1161 = vunpack.c.l.b16 %v794
        %v1162 = vunpack.c.l.b16 %v795
        %v1163 = vunpack.c.h.b16 %v795
        %v1164 = vunpack.c.l.b16 %v796
        %v1165 = vpack.c.b16 %v976, %v973
        %v1166 = vpack.c.b16 %v977, %v974
        %v1167 = vpack.c.b16 %v978, %v975
        %v1168 = vpack.c.b16 %v982, %v979
        %v1169 = vpack.c.b16 %v983, %v980
        %v1170 = vpack.c.b16 %v984, %v981
        %v1171 = vpack.c.b16 %v988, %v985
        %v1172 = vpack.c.b16 %v989, %v986
        %v1173 = vpack.c.b16 %v990, %v987
        %v1174 = vpack.c.b16 %v994, %v991
        %v1175 = vpack.c.b16 %v995, %v992
        %v1176 = vpack.c.b16 %v996, %v993
        %v1177 = vpack.c.b16 %v1000, %v997
        %v1178 = vpack.c.b16 %v1001, %v998
        %v1179 = vpack.c.b16 %v1002, %v999
        %v1180 = vpack.c.b16 %v1006, %v1003
        %v1181 = vpack.c.b16 %v1007, %v1004
        %v1182 = vpack.c.b16 %v1008, %v1005
        %v1183 = vpack.c.b16 %v1012, %v1009
        %v1184 = vpack.c.b16 %v1013, %v1010
        %v1185 = vpack.c.b16 %v1014, %v1011
        %v1186 = vpack.c.b16 %v1018, %v1015
        %v1187 = vpack.c.b16 %v1019, %v1016
        %v1188 = vpack.c.b16 %v1020, %v1017
        %v1189 = vpack.c.b16 %v1024, %v1021
        %v1190 = vpack.c.b16 %v1025, %v1022
        %v1191 = vpack.c.b16 %v1026, %v1023
        %v1192 = vpack.c.b16 %v1030, %v1027
        %v1193 = vpack.c.b16 %v1031, %v1028
        %v1194 = vpack.c.b16 %v1032, %v1029
        %v1195 = vpack.c.b16 %v1036, %v1033
        %v1196 = vpack.c.b16 %v1037, %v1034
        %v1197 = vpack.c.b16 %v1038, %v1035
        %v1198 = vpack.c.b16 %v1042, %v1039
        %v1199 = vpack.c.b16 %v1043, %v1040
        %v1200 = vpack.c.b16 %v1044, %v1041
        %v1201 = vpack.c.b16 %v1048, %v1045
        %v1202 = vpack.c.b16 %v1049, %v1046
        %v1203 = vpack.c.b16 %v1050, %v1047
        %v1204 = vpack.c.b16 %v1054, %v1051
        %v1205 = vpack.c.b16 %v1055, %v1052
        %v1206 = vpack.c.b16 %v1056, %v1053
        %v1207 = vpack.c.b16 %v1060, %v1057
        %v1208 = vpack.c.b16 %v1061, %v1058
        %v1209 = vpack.c.b16 %v1062, %v1059
        %v1210 = vpack.c.b16 %v1066, %v1063
        %v1211 = vpack.c.b16 %v1067, %v1064
        %v1212 = vpack.c.b16 %v1068, %v1065
        %v1213 = vpack.c.b16 %v1072, %v1069
        %v1214 = vpack.c.b16 %v1073, %v1070
        %v1215 = vpack.c.b16 %v1074, %v1071
        %v1216 = vpack.c.b16 %v1078, %v1075
        %v1217 = vpack.c.b16 %v1079, %v1076
        %v1218 = vpack.c.b16 %v1080, %v1077
        %v1219 = vpack.c.b16 %v1084, %v1081
        %v1220 = vpack.c.b16 %v1085, %v1082
        %v1221 = vpack.c.b16 %v1086, %v1083
        %v1222 = vpack.c.b16 %v1090, %v1087
        %v1223 = vpack.c.b16 %v1091, %v1088
        %v1224 = vpack.c.b16 %v1092, %v1089
        %v1225 = vpack.c.b16 %v1096, %v1093
        %v1226 = vpack.c.b16 %v1097, %v1094
        %v1227 = vpack.c.b16 %v1098, %v1095
        %v1228 = vpack.c.b16 %v1102, %v1099
        %v1229 = vpack.c.b16 %v1103, %v1100
        %v1230 = vpack.c.b16 %v1104, %v1101
        %v1231 = vpack.c.b16 %v1108, %v1105
        %v1232 = vpack.c.b16 %v1109, %v1106
        %v1233 = vpack.c.b16 %v1110, %v1107
        %v1234 = vpack.c.b16 %v1114, %v1111
        %v1235 = vpack.c.b16 %v1115, %v1112
        %v1236 = vpack.c.b16 %v1116, %v1113
        %v1237 = vpack.c.b16 %v1120, %v1117
        %v1238 = vpack.c.b16 %v1121, %v1118
        %v1239 = vpack.c.b16 %v1122, %v1119
        %v1240 = vpack.c.b16 %v1126, %v1123
        %v1241 = vpack.c.b16 %v1127, %v1124
        %v1242 = vpack.c.b16 %v1128, %v1125
        %v1243 = vpack.c.b16 %v1132, %v1129
        %v1244 = vpack.c.b16 %v1133, %v1130
        %v1245 = vpack.c.b16 %v1134, %v1131
        %v1246 = vpack.c.b16 %v1138, %v1135
        %v1247 = vpack.c.b16 %v1139, %v1136
        %v1248 = vpack.c.b16 %v1140, %v1137
        %v1249 = vpack.c.b16 %v1144, %v1141
        %v1250 = vpack.c.b16 %v1145, %v1142
        %v1251 = vpack.c.b16 %v1146, %v1143
        %v1252 = vpack.c.b16 %v1150, %v1147
        %v1253 = vpack.c.b16 %v1151, %v1148
        %v1254 = vpack.c.b16 %v1152, %v1149
        %v1255 = vpack.c.b16 %v1156, %v1153
        %v1256 = vpack.c.b16 %v1157, %v1154
        %v1257 = vpack.c.b16 %v1158, %v1155
        %v1258 = vpack.c.b16 %v1162, %v1159
        %v1259 = vpack.c.b16 %v1163, %v1160
        %v1260 = vpack.c.b16 %v1164, %v1161
        %v1405 = vunpack.c.l.b16 %v797
        %v1406 = vunpack.c.l.b16 %v798
        %v1407 = vunpack.c.l.b16 %v799
        %v1408 = vunpack.c.l.b16 %v800
        %v1409 = vunpack.c.l.b16 %v801
        %v1410 = vunpack.c.l.b16 %v802
        %v1411 = vunpack.c.l.b16 %v803
        %v1412 = vunpack.c.l.b16 %v804
        %v1413 = vunpack.c.l.b16 %v805
        %v1414 = vunpack.c.l.b16 %v806
        %v1415 = vunpack.c.l.b16 %v807
        %v1416 = vunpack.c.l.b16 %v808
        %v1417 = vunpack.c.l.b16 %v809
        %v1418 = vunpack.c.l.b16 %v810
        %v1419 = vunpack.c.l.b16 %v811
        %v1420 = vunpack.c.l.b16 %v812
        %v1421 = vunpack.c.l.b16 %v813
        %v1422 = vunpack.c.l.b16 %v814
        %v1423 = vunpack.c.l.b16 %v815
        %v1424 = vunpack.c.l.b16 %v816
        %v1425 = vunpack.c.l.b16 %v817
        %v1426 = vunpack.c.l.b16 %v818
        %v1427 = vunpack.c.l.b16 %v819
        %v1428 = vunpack.c.l.b16 %v820
        %v1429 = vunpack.c.l.b16 %v821
        %v1430 = vunpack.c.l.b16 %v822
        %v1431 = vunpack.c.l.b16 %v823
        %v1432 = vunpack.c.l.b16 %v824
        %v1433 = vunpack.c.l.b16 %v825
        %v1434 = vunpack.c.l.b16 %v826
        %v1435 = vunpack.c.l.b16 %v827
        %v1436 = vunpack.c.l.b16 %v828
        %v1437 = vunpack.c.l.b16 %v829
        %v1438 = vunpack.c.l.b16 %v830
        %v1439 = vunpack.c.l.b16 %v831
        %v1440 = vunpack.c.l.b16 %v832
        %v1441 = vunpack.c.l.b16 %v833
        %v1442 = vunpack.c.l.b16 %v834
        %v1443 = vunpack.c.l.b16 %v835
        %v1444 = vunpack.c.l.b16 %v836
        %v1445 = vunpack.c.l.b16 %v837
        %v1446 = vunpack.c.l.b16 %v838
        %v1447 = vunpack.c.l.b16 %v839
        %v1448 = vunpack.c.l.b16 %v840
        %v1449 = vunpack.c.l.b16 %v841
        %v1450 = vunpack.c.l.b16 %v842
        %v1451 = vunpack.c.l.b16 %v843
        %v1452 = vunpack.c.l.b16 %v844
        %v1453 = vpack.c.b16 %v1406, %v1405
        %v1454 = vpack.c.b16 %v1408, %v1407
        %v1455 = vpack.c.b16 %v1410, %v1409
        %v1456 = vpack.c.b16 %v1412, %v1411
        %v1457 = vpack.c.b16 %v1414, %v1413
        %v1458 = vpack.c.b16 %v1416, %v1415
        %v1459 = vpack.c.b16 %v1418, %v1417
        %v1460 = vpack.c.b16 %v1420, %v1419
        %v1461 = vpack.c.b16 %v1422, %v1421
        %v1462 = vpack.c.b16 %v1424, %v1423
        %v1463 = vpack.c.b16 %v1426, %v1425
        %v1464 = vpack.c.b16 %v1428, %v1427
        %v1465 = vpack.c.b16 %v1430, %v1429
        %v1466 = vpack.c.b16 %v1432, %v1431
        %v1467 = vpack.c.b16 %v1434, %v1433
        %v1468 = vpack.c.b16 %v1436, %v1435
        %v1469 = vpack.c.b16 %v1438, %v1437
        %v1470 = vpack.c.b16 %v1440, %v1439
        %v1471 = vpack.c.b16 %v1442, %v1441
        %v1472 = vpack.c.b16 %v1444, %v1443
        %v1473 = vpack.c.b16 %v1446, %v1445
        %v1474 = vpack.c.b16 %v1448, %v1447
        %v1475 = vpack.c.b16 %v1450, %v1449
        %v1476 = vpack.c.b16 %v1452, %v1451
        %1501 = vmatpush.bf16.msra.mxu0 %v1460
        %1502 = vmatpush.bf16.msra.mxu0 %v1459
        %1503 = vmatpush.bf16.msra.mxu0 %v1458
        %1504 = vmatpush.bf16.msra.mxu0 %v1457
        %1505 = vmatpush.bf16.msra.mxu0 %v1456
        %1506 = vmatpush.bf16.msra.mxu0 %v1455
        %1507 = vmatpush.bf16.msra.mxu0 %v1454
        %1508 = vmatpush.bf16.msra.mxu0 %v1453
        %1509 = vmatmul.bf16.gmra.mxu0 %v1165
        %v1510 = vpop.f32.mrf.mxu0
        %v1511 = vadd.f32 0.0, %v1510
        %v1512 = vpop.f32.mrf.mxu0
        %v1513 = vadd.f32 0.0, %v1512
        %1514 = vmatmul.bf16.gmra.mxu0 %v1168
        %v1515 = vpop.f32.mrf.mxu0
        %v1516 = vadd.f32 0.0, %v1515
        %v1517 = vpop.f32.mrf.mxu0
        %v1518 = vadd.f32 0.0, %v1517
        %1519 = vmatmul.bf16.gmra.mxu0 %v1171
        %v1520 = vpop.f32.mrf.mxu0
        %v1521 = vadd.f32 0.0, %v1520
        %v1522 = vpop.f32.mrf.mxu0
        %v1523 = vadd.f32 0.0, %v1522
        %1524 = vmatmul.bf16.gmra.mxu0 %v1174
        %v1525 = vpop.f32.mrf.mxu0
        %v1526 = vadd.f32 0.0, %v1525
        %v1527 = vpop.f32.mrf.mxu0
        %v1528 = vadd.f32 0.0, %v1527
        %1529 = vmatmul.bf16.gmra.mxu0 %v1177
        %v1530 = vpop.f32.mrf.mxu0
        %v1531 = vadd.f32 0.0, %v1530
        %v1532 = vpop.f32.mrf.mxu0
        %v1533 = vadd.f32 0.0, %v1532
        %1534 = vmatmul.bf16.gmra.mxu0 %v1180
        %v1535 = vpop.f32.mrf.mxu0
        %v1536 = vadd.f32 0.0, %v1535
        %v1537 = vpop.f32.mrf.mxu0
        %v1538 = vadd.f32 0.0, %v1537
        %1539 = vmatmul.bf16.gmra.mxu0 %v1183
        %v1540 = vpop.f32.mrf.mxu0
        %v1541 = vadd.f32 0.0, %v1540
        %v1542 = vpop.f32.mrf.mxu0
        %v1543 = vadd.f32 0.0, %v1542
        %1544 = vmatmul.bf16.gmra.mxu0 %v1186
        %v1545 = vpop.f32.mrf.mxu0
        %v1546 = vadd.f32 0.0, %v1545
        %v1547 = vpop.f32.mrf.mxu0
        %v1548 = vadd.f32 0.0, %v1547
        %1549 = vmatmul.bf16.gmra.mxu0 %v1189
        %v1550 = vpop.f32.mrf.mxu0
        %v1551 = vadd.f32 0.0, %v1550
        %v1552 = vpop.f32.mrf.mxu0
        %v1553 = vadd.f32 0.0, %v1552
        %1554 = vmatmul.bf16.gmra.mxu0 %v1192
        %v1555 = vpop.f32.mrf.mxu0
        %v1556 = vadd.f32 0.0, %v1555
        %v1557 = vpop.f32.mrf.mxu0
        %v1558 = vadd.f32 0.0, %v1557
        %1559 = vmatmul.bf16.gmra.mxu0 %v1195
        %v1560 = vpop.f32.mrf.mxu0
        %v1561 = vadd.f32 0.0, %v1560
        %v1562 = vpop.f32.mrf.mxu0
        %v1563 = vadd.f32 0.0, %v1562
        %1564 = vmatmul.bf16.gmra.mxu0 %v1198
        %v1565 = vpop.f32.mrf.mxu0
        %v1566 = vadd.f32 0.0, %v1565
        %v1567 = vpop.f32.mrf.mxu0
        %v1568 = vadd.f32 0.0, %v1567
        %1569 = vmatmul.bf16.gmra.mxu0 %v1201
        %v1570 = vpop.f32.mrf.mxu0
        %v1571 = vadd.f32 0.0, %v1570
        %v1572 = vpop.f32.mrf.mxu0
        %v1573 = vadd.f32 0.0, %v1572
        %1574 = vmatmul.bf16.gmra.mxu0 %v1204
        %v1575 = vpop.f32.mrf.mxu0
        %v1576 = vadd.f32 0.0, %v1575
        %v1577 = vpop.f32.mrf.mxu0
        %v1578 = vadd.f32 0.0, %v1577
        %1579 = vmatmul.bf16.gmra.mxu0 %v1207
        %v1580 = vpop.f32.mrf.mxu0
        %v1581 = vadd.f32 0.0, %v1580
        %v1582 = vpop.f32.mrf.mxu0
        %v1583 = vadd.f32 0.0, %v1582
        %1584 = vmatmul.bf16.gmra.mxu0 %v1210
        %v1585 = vpop.f32.mrf.mxu0
        %v1586 = vadd.f32 0.0, %v1585
        %v1587 = vpop.f32.mrf.mxu0
        %v1588 = vadd.f32 0.0, %v1587
        %1589 = vmatmul.bf16.gmra.mxu0 %v1213
        %v1590 = vpop.f32.mrf.mxu0
        %v1591 = vadd.f32 0.0, %v1590
        %v1592 = vpop.f32.mrf.mxu0
        %v1593 = vadd.f32 0.0, %v1592
        %1594 = vmatmul.bf16.gmra.mxu0 %v1216
        %v1595 = vpop.f32.mrf.mxu0
        %v1596 = vadd.f32 0.0, %v1595
        %v1597 = vpop.f32.mrf.mxu0
        %v1598 = vadd.f32 0.0, %v1597
        %1599 = vmatmul.bf16.gmra.mxu0 %v1219
        %v1600 = vpop.f32.mrf.mxu0
        %v1601 = vadd.f32 0.0, %v1600
        %v1602 = vpop.f32.mrf.mxu0
        %v1603 = vadd.f32 0.0, %v1602
        %1604 = vmatmul.bf16.gmra.mxu0 %v1222
        %v1605 = vpop.f32.mrf.mxu0
        %v1606 = vadd.f32 0.0, %v1605
        %v1607 = vpop.f32.mrf.mxu0
        %v1608 = vadd.f32 0.0, %v1607
        %1609 = vmatmul.bf16.gmra.mxu0 %v1225
        %v1610 = vpop.f32.mrf.mxu0
        %v1611 = vadd.f32 0.0, %v1610
        %v1612 = vpop.f32.mrf.mxu0
        %v1613 = vadd.f32 0.0, %v1612
        %1614 = vmatmul.bf16.gmra.mxu0 %v1228
        %v1615 = vpop.f32.mrf.mxu0
        %v1616 = vadd.f32 0.0, %v1615
        %v1617 = vpop.f32.mrf.mxu0
        %v1618 = vadd.f32 0.0, %v1617
        %1619 = vmatmul.bf16.gmra.mxu0 %v1231
        %v1620 = vpop.f32.mrf.mxu0
        %v1621 = vadd.f32 0.0, %v1620
        %v1622 = vpop.f32.mrf.mxu0
        %v1623 = vadd.f32 0.0, %v1622
        %1624 = vmatmul.bf16.gmra.mxu0 %v1234
        %v1625 = vpop.f32.mrf.mxu0
        %v1626 = vadd.f32 0.0, %v1625
        %v1627 = vpop.f32.mrf.mxu0
        %v1628 = vadd.f32 0.0, %v1627
        %1629 = vmatmul.bf16.gmra.mxu0 %v1237
        %v1630 = vpop.f32.mrf.mxu0
        %v1631 = vadd.f32 0.0, %v1630
        %v1632 = vpop.f32.mrf.mxu0
        %v1633 = vadd.f32 0.0, %v1632
        %1634 = vmatmul.bf16.gmra.mxu0 %v1240
        %v1635 = vpop.f32.mrf.mxu0
        %v1636 = vadd.f32 0.0, %v1635
        %v1637 = vpop.f32.mrf.mxu0
        %v1638 = vadd.f32 0.0, %v1637
        %1639 = vmatmul.bf16.gmra.mxu0 %v1243
        %v1640 = vpop.f32.mrf.mxu0
        %v1641 = vadd.f32 0.0, %v1640
        %v1642 = vpop.f32.mrf.mxu0
        %v1643 = vadd.f32 0.0, %v1642
        %1644 = vmatmul.bf16.gmra.mxu0 %v1246
        %v1645 = vpop.f32.mrf.mxu0
        %v1646 = vadd.f32 0.0, %v1645
        %v1647 = vpop.f32.mrf.mxu0
        %v1648 = vadd.f32 0.0, %v1647
        %1649 = vmatmul.bf16.gmra.mxu0 %v1249
        %v1650 = vpop.f32.mrf.mxu0
        %v1651 = vadd.f32 0.0, %v1650
        %v1652 = vpop.f32.mrf.mxu0
        %v1653 = vadd.f32 0.0, %v1652
        %1654 = vmatmul.bf16.gmra.mxu0 %v1252
        %v1655 = vpop.f32.mrf.mxu0
        %v1656 = vadd.f32 0.0, %v1655
        %v1657 = vpop.f32.mrf.mxu0
        %v1658 = vadd.f32 0.0, %v1657
        %1659 = vmatmul.bf16.gmra.mxu0 %v1255
        %v1660 = vpop.f32.mrf.mxu0
        %v1661 = vadd.f32 0.0, %v1660
        %v1662 = vpop.f32.mrf.mxu0
        %v1663 = vadd.f32 0.0, %v1662
        %1664 = vmatmul.bf16.gmra.mxu0 %v1258
        %v1665 = vpop.f32.mrf.mxu0
        %v1666 = vadd.f32 0.0, %v1665
        %v1667 = vpop.f32.mrf.mxu0
        %v1668 = vadd.f32 0.0, %v1667
        %1669 = vdwg.mxu0
        %1670 = vmatpush.bf16.msra.mxu0 %v1468
        %1671 = vmatpush.bf16.msra.mxu0 %v1467
        %1672 = vmatpush.bf16.msra.mxu0 %v1466
        %1673 = vmatpush.bf16.msra.mxu0 %v1465
        %1674 = vmatpush.bf16.msra.mxu0 %v1464
        %1675 = vmatpush.bf16.msra.mxu0 %v1463
        %1676 = vmatpush.bf16.msra.mxu0 %v1462
        %1677 = vmatpush.bf16.msra.mxu0 %v1461
        %1678 = vmatmul.bf16.gmra.mxu0 %v1166
        %v1679 = vpop.f32.mrf.mxu0
        %v1680 = vadd.f32 %v1511, %v1679
        %v1681 = vpop.f32.mrf.mxu0
        %v1682 = vadd.f32 %v1513, %v1681
        %1683 = vmatmul.bf16.gmra.mxu0 %v1169
        %v1684 = vpop.f32.mrf.mxu0
        %v1685 = vadd.f32 %v1516, %v1684
        %v1686 = vpop.f32.mrf.mxu0
        %v1687 = vadd.f32 %v1518, %v1686
        %1688 = vmatmul.bf16.gmra.mxu0 %v1172
        %v1689 = vpop.f32.mrf.mxu0
        %v1690 = vadd.f32 %v1521, %v1689
        %v1691 = vpop.f32.mrf.mxu0
        %v1692 = vadd.f32 %v1523, %v1691
        %1693 = vmatmul.bf16.gmra.mxu0 %v1175
        %v1694 = vpop.f32.mrf.mxu0
        %v1695 = vadd.f32 %v1526, %v1694
        %v1696 = vpop.f32.mrf.mxu0
        %v1697 = vadd.f32 %v1528, %v1696
        %1698 = vmatmul.bf16.gmra.mxu0 %v1178
        %v1699 = vpop.f32.mrf.mxu0
        %v1700 = vadd.f32 %v1531, %v1699
        %v1701 = vpop.f32.mrf.mxu0
        %v1702 = vadd.f32 %v1533, %v1701
        %1703 = vmatmul.bf16.gmra.mxu0 %v1181
        %v1704 = vpop.f32.mrf.mxu0
        %v1705 = vadd.f32 %v1536, %v1704
        %v1706 = vpop.f32.mrf.mxu0
        %v1707 = vadd.f32 %v1538, %v1706
        %1708 = vmatmul.bf16.gmra.mxu0 %v1184
        %v1709 = vpop.f32.mrf.mxu0
        %v1710 = vadd.f32 %v1541, %v1709
        %v1711 = vpop.f32.mrf.mxu0
        %v1712 = vadd.f32 %v1543, %v1711
        %1713 = vmatmul.bf16.gmra.mxu0 %v1187
        %v1714 = vpop.f32.mrf.mxu0
        %v1715 = vadd.f32 %v1546, %v1714
        %v1716 = vpop.f32.mrf.mxu0
        %v1717 = vadd.f32 %v1548, %v1716
        %1718 = vmatmul.bf16.gmra.mxu0 %v1190
        %v1719 = vpop.f32.mrf.mxu0
        %v1720 = vadd.f32 %v1551, %v1719
        %v1721 = vpop.f32.mrf.mxu0
        %v1722 = vadd.f32 %v1553, %v1721
        %1723 = vmatmul.bf16.gmra.mxu0 %v1193
        %v1724 = vpop.f32.mrf.mxu0
        %v1725 = vadd.f32 %v1556, %v1724
        %v1726 = vpop.f32.mrf.mxu0
        %v1727 = vadd.f32 %v1558, %v1726
        %1728 = vmatmul.bf16.gmra.mxu0 %v1196
        %v1729 = vpop.f32.mrf.mxu0
        %v1730 = vadd.f32 %v1561, %v1729
        %v1731 = vpop.f32.mrf.mxu0
        %v1732 = vadd.f32 %v1563, %v1731
        %1733 = vmatmul.bf16.gmra.mxu0 %v1199
        %v1734 = vpop.f32.mrf.mxu0
        %v1735 = vadd.f32 %v1566, %v1734
        %v1736 = vpop.f32.mrf.mxu0
        %v1737 = vadd.f32 %v1568, %v1736
        %1738 = vmatmul.bf16.gmra.mxu0 %v1202
        %v1739 = vpop.f32.mrf.mxu0
        %v1740 = vadd.f32 %v1571, %v1739
        %v1741 = vpop.f32.mrf.mxu0
        %v1742 = vadd.f32 %v1573, %v1741
        %1743 = vmatmul.bf16.gmra.mxu0 %v1205
        %v1744 = vpop.f32.mrf.mxu0
        %v1745 = vadd.f32 %v1576, %v1744
        %v1746 = vpop.f32.mrf.mxu0
        %v1747 = vadd.f32 %v1578, %v1746
        %1748 = vmatmul.bf16.gmra.mxu0 %v1208
        %v1749 = vpop.f32.mrf.mxu0
        %v1750 = vadd.f32 %v1581, %v1749
        %v1751 = vpop.f32.mrf.mxu0
        %v1752 = vadd.f32 %v1583, %v1751
        %1753 = vmatmul.bf16.gmra.mxu0 %v1211
        %v1754 = vpop.f32.mrf.mxu0
        %v1755 = vadd.f32 %v1586, %v1754
        %v1756 = vpop.f32.mrf.mxu0
        %v1757 = vadd.f32 %v1588, %v1756
        %1758 = vmatmul.bf16.gmra.mxu0 %v1214
        %v1759 = vpop.f32.mrf.mxu0
        %v1760 = vadd.f32 %v1591, %v1759
        %v1761 = vpop.f32.mrf.mxu0
        %v1762 = vadd.f32 %v1593, %v1761
        %1763 = vmatmul.bf16.gmra.mxu0 %v1217
        %v1764 = vpop.f32.mrf.mxu0
        %v1765 = vadd.f32 %v1596, %v1764
        %v1766 = vpop.f32.mrf.mxu0
        %v1767 = vadd.f32 %v1598, %v1766
        %1768 = vmatmul.bf16.gmra.mxu0 %v1220
        %v1769 = vpop.f32.mrf.mxu0
        %v1770 = vadd.f32 %v1601, %v1769
        %v1771 = vpop.f32.mrf.mxu0
        %v1772 = vadd.f32 %v1603, %v1771
        %1773 = vmatmul.bf16.gmra.mxu0 %v1223
        %v1774 = vpop.f32.mrf.mxu0
        %v1775 = vadd.f32 %v1606, %v1774
        %v1776 = vpop.f32.mrf.mxu0
        %v1777 = vadd.f32 %v1608, %v1776
        %1778 = vmatmul.bf16.gmra.mxu0 %v1226
        %v1779 = vpop.f32.mrf.mxu0
        %v1780 = vadd.f32 %v1611, %v1779
        %v1781 = vpop.f32.mrf.mxu0
        %v1782 = vadd.f32 %v1613, %v1781
        %1783 = vmatmul.bf16.gmra.mxu0 %v1229
        %v1784 = vpop.f32.mrf.mxu0
        %v1785 = vadd.f32 %v1616, %v1784
        %v1786 = vpop.f32.mrf.mxu0
        %v1787 = vadd.f32 %v1618, %v1786
        %1788 = vmatmul.bf16.gmra.mxu0 %v1232
        %v1789 = vpop.f32.mrf.mxu0
        %v1790 = vadd.f32 %v1621, %v1789
        %v1791 = vpop.f32.mrf.mxu0
        %v1792 = vadd.f32 %v1623, %v1791
        %1793 = vmatmul.bf16.gmra.mxu0 %v1235
        %v1794 = vpop.f32.mrf.mxu0
        %v1795 = vadd.f32 %v1626, %v1794
        %v1796 = vpop.f32.mrf.mxu0
        %v1797 = vadd.f32 %v1628, %v1796
        %1798 = vmatmul.bf16.gmra.mxu0 %v1238
        %v1799 = vpop.f32.mrf.mxu0
        %v1800 = vadd.f32 %v1631, %v1799
        %v1801 = vpop.f32.mrf.mxu0
        %v1802 = vadd.f32 %v1633, %v1801
        %1803 = vmatmul.bf16.gmra.mxu0 %v1241
        %v1804 = vpop.f32.mrf.mxu0
        %v1805 = vadd.f32 %v1636, %v1804
        %v1806 = vpop.f32.mrf.mxu0
        %v1807 = vadd.f32 %v1638, %v1806
        %1808 = vmatmul.bf16.gmra.mxu0 %v1244
        %v1809 = vpop.f32.mrf.mxu0
        %v1810 = vadd.f32 %v1641, %v1809
        %v1811 = vpop.f32.mrf.mxu0
        %v1812 = vadd.f32 %v1643, %v1811
        %1813 = vmatmul.bf16.gmra.mxu0 %v1247
        %v1814 = vpop.f32.mrf.mxu0
        %v1815 = vadd.f32 %v1646, %v1814
        %v1816 = vpop.f32.mrf.mxu0
        %v1817 = vadd.f32 %v1648, %v1816
        %1818 = vmatmul.bf16.gmra.mxu0 %v1250
        %v1819 = vpop.f32.mrf.mxu0
        %v1820 = vadd.f32 %v1651, %v1819
        %v1821 = vpop.f32.mrf.mxu0
        %v1822 = vadd.f32 %v1653, %v1821
        %1823 = vmatmul.bf16.gmra.mxu0 %v1253
        %v1824 = vpop.f32.mrf.mxu0
        %v1825 = vadd.f32 %v1656, %v1824
        %v1826 = vpop.f32.mrf.mxu0
        %v1827 = vadd.f32 %v1658, %v1826
        %1828 = vmatmul.bf16.gmra.mxu0 %v1256
        %v1829 = vpop.f32.mrf.mxu0
        %v1830 = vadd.f32 %v1661, %v1829
        %v1831 = vpop.f32.mrf.mxu0
        %v1832 = vadd.f32 %v1663, %v1831
        %1833 = vmatmul.bf16.gmra.mxu0 %v1259
        %v1834 = vpop.f32.mrf.mxu0
        %v1835 = vadd.f32 %v1666, %v1834
        %v1836 = vpop.f32.mrf.mxu0
        %v1837 = vadd.f32 %v1668, %v1836
        %1838 = vdwg.mxu0
        %1839 = vmatpush.bf16.msra.mxu0 %v1476
        %1840 = vmatpush.bf16.msra.mxu0 %v1475
        %1841 = vmatpush.bf16.msra.mxu0 %v1474
        %1842 = vmatpush.bf16.msra.mxu0 %v1473
        %1843 = vmatpush.bf16.msra.mxu0 %v1472
        %1844 = vmatpush.bf16.msra.mxu0 %v1471
        %1845 = vmatpush.bf16.msra.mxu0 %v1470
        %1846 = vmatpush.bf16.msra.mxu0 %v1469
        %1847 = vmatmul.bf16.gmra.mxu0 %v1167
        %v1848 = vpop.f32.mrf.mxu0
        %v1849 = vadd.f32 %v1680, %v1848
        %v1850 = vpop.f32.mrf.mxu0
        %v1851 = vadd.f32 %v1682, %v1850
        %1852 = vmatmul.bf16.gmra.mxu0 %v1170
        %v1853 = vpop.f32.mrf.mxu0
        %v1854 = vadd.f32 %v1685, %v1853
        %v1855 = vpop.f32.mrf.mxu0
        %v1856 = vadd.f32 %v1687, %v1855
        %1857 = vmatmul.bf16.gmra.mxu0 %v1173
        %v1858 = vpop.f32.mrf.mxu0
        %v1859 = vadd.f32 %v1690, %v1858
        %v1860 = vpop.f32.mrf.mxu0
        %v1861 = vadd.f32 %v1692, %v1860
        %1862 = vmatmul.bf16.gmra.mxu0 %v1176
        %v1863 = vpop.f32.mrf.mxu0
        %v1864 = vadd.f32 %v1695, %v1863
        %v1865 = vpop.f32.mrf.mxu0
        %v1866 = vadd.f32 %v1697, %v1865
        %1867 = vmatmul.bf16.gmra.mxu0 %v1179
        %v1868 = vpop.f32.mrf.mxu0
        %v1869 = vadd.f32 %v1700, %v1868
        %v1870 = vpop.f32.mrf.mxu0
        %v1871 = vadd.f32 %v1702, %v1870
        %1872 = vmatmul.bf16.gmra.mxu0 %v1182
        %v1873 = vpop.f32.mrf.mxu0
        %v1874 = vadd.f32 %v1705, %v1873
        %v1875 = vpop.f32.mrf.mxu0
        %v1876 = vadd.f32 %v1707, %v1875
        %1877 = vmatmul.bf16.gmra.mxu0 %v1185
        %v1878 = vpop.f32.mrf.mxu0
        %v1879 = vadd.f32 %v1710, %v1878
        %v1880 = vpop.f32.mrf.mxu0
        %v1881 = vadd.f32 %v1712, %v1880
        %1882 = vmatmul.bf16.gmra.mxu0 %v1188
        %v1883 = vpop.f32.mrf.mxu0
        %v1884 = vadd.f32 %v1715, %v1883
        %v1885 = vpop.f32.mrf.mxu0
        %v1886 = vadd.f32 %v1717, %v1885
        %1887 = vmatmul.bf16.gmra.mxu0 %v1191
        %v1888 = vpop.f32.mrf.mxu0
        %v1889 = vadd.f32 %v1720, %v1888
        %v1890 = vpop.f32.mrf.mxu0
        %v1891 = vadd.f32 %v1722, %v1890
        %1892 = vmatmul.bf16.gmra.mxu0 %v1194
        %v1893 = vpop.f32.mrf.mxu0
        %v1894 = vadd.f32 %v1725, %v1893
        %v1895 = vpop.f32.mrf.mxu0
        %v1896 = vadd.f32 %v1727, %v1895
        %1897 = vmatmul.bf16.gmra.mxu0 %v1197
        %v1898 = vpop.f32.mrf.mxu0
        %v1899 = vadd.f32 %v1730, %v1898
        %v1900 = vpop.f32.mrf.mxu0
        %v1901 = vadd.f32 %v1732, %v1900
        %1902 = vmatmul.bf16.gmra.mxu0 %v1200
        %v1903 = vpop.f32.mrf.mxu0
        %v1904 = vadd.f32 %v1735, %v1903
        %v1905 = vpop.f32.mrf.mxu0
        %v1906 = vadd.f32 %v1737, %v1905
        %1907 = vmatmul.bf16.gmra.mxu0 %v1203
        %v1908 = vpop.f32.mrf.mxu0
        %v1909 = vadd.f32 %v1740, %v1908
        %v1910 = vpop.f32.mrf.mxu0
        %v1911 = vadd.f32 %v1742, %v1910
        %1912 = vmatmul.bf16.gmra.mxu0 %v1206
        %v1913 = vpop.f32.mrf.mxu0
        %v1914 = vadd.f32 %v1745, %v1913
        %v1915 = vpop.f32.mrf.mxu0
        %v1916 = vadd.f32 %v1747, %v1915
        %1917 = vmatmul.bf16.gmra.mxu0 %v1209
        %v1918 = vpop.f32.mrf.mxu0
        %v1919 = vadd.f32 %v1750, %v1918
        %v1920 = vpop.f32.mrf.mxu0
        %v1921 = vadd.f32 %v1752, %v1920
        %1922 = vmatmul.bf16.gmra.mxu0 %v1212
        %v1923 = vpop.f32.mrf.mxu0
        %v1924 = vadd.f32 %v1755, %v1923
        %v1925 = vpop.f32.mrf.mxu0
        %v1926 = vadd.f32 %v1757, %v1925
        %1927 = vmatmul.bf16.gmra.mxu0 %v1215
        %v1928 = vpop.f32.mrf.mxu0
        %v1929 = vadd.f32 %v1760, %v1928
        %v1930 = vpop.f32.mrf.mxu0
        %v1931 = vadd.f32 %v1762, %v1930
        %1932 = vmatmul.bf16.gmra.mxu0 %v1218
        %v1933 = vpop.f32.mrf.mxu0
        %v1934 = vadd.f32 %v1765, %v1933
        %v1935 = vpop.f32.mrf.mxu0
        %v1936 = vadd.f32 %v1767, %v1935
        %1937 = vmatmul.bf16.gmra.mxu0 %v1221
        %v1938 = vpop.f32.mrf.mxu0
        %v1939 = vadd.f32 %v1770, %v1938
        %v1940 = vpop.f32.mrf.mxu0
        %v1941 = vadd.f32 %v1772, %v1940
        %1942 = vmatmul.bf16.gmra.mxu0 %v1224
        %v1943 = vpop.f32.mrf.mxu0
        %v1944 = vadd.f32 %v1775, %v1943
        %v1945 = vpop.f32.mrf.mxu0
        %v1946 = vadd.f32 %v1777, %v1945
        %1947 = vmatmul.bf16.gmra.mxu0 %v1227
        %v1948 = vpop.f32.mrf.mxu0
        %v1949 = vadd.f32 %v1780, %v1948
        %v1950 = vpop.f32.mrf.mxu0
        %v1951 = vadd.f32 %v1782, %v1950
        %1952 = vmatmul.bf16.gmra.mxu0 %v1230
        %v1953 = vpop.f32.mrf.mxu0
        %v1954 = vadd.f32 %v1785, %v1953
        %v1955 = vpop.f32.mrf.mxu0
        %v1956 = vadd.f32 %v1787, %v1955
        %1957 = vmatmul.bf16.gmra.mxu0 %v1233
        %v1958 = vpop.f32.mrf.mxu0
        %v1959 = vadd.f32 %v1790, %v1958
        %v1960 = vpop.f32.mrf.mxu0
        %v1961 = vadd.f32 %v1792, %v1960
        %1962 = vmatmul.bf16.gmra.mxu0 %v1236
        %v1963 = vpop.f32.mrf.mxu0
        %v1964 = vadd.f32 %v1795, %v1963
        %v1965 = vpop.f32.mrf.mxu0
        %v1966 = vadd.f32 %v1797, %v1965
        %1967 = vmatmul.bf16.gmra.mxu0 %v1239
        %v1968 = vpop.f32.mrf.mxu0
        %v1969 = vadd.f32 %v1800, %v1968
        %v1970 = vpop.f32.mrf.mxu0
        %v1971 = vadd.f32 %v1802, %v1970
        %1972 = vmatmul.bf16.gmra.mxu0 %v1242
        %v1973 = vpop.f32.mrf.mxu0
        %v1974 = vadd.f32 %v1805, %v1973
        %v1975 = vpop.f32.mrf.mxu0
        %v1976 = vadd.f32 %v1807, %v1975
        %1977 = vmatmul.bf16.gmra.mxu0 %v1245
        %v1978 = vpop.f32.mrf.mxu0
        %v1979 = vadd.f32 %v1810, %v1978
        %v1980 = vpop.f32.mrf.mxu0
        %v1981 = vadd.f32 %v1812, %v1980
        %1982 = vmatmul.bf16.gmra.mxu0 %v1248
        %v1983 = vpop.f32.mrf.mxu0
        %v1984 = vadd.f32 %v1815, %v1983
        %v1985 = vpop.f32.mrf.mxu0
        %v1986 = vadd.f32 %v1817, %v1985
        %1987 = vmatmul.bf16.gmra.mxu0 %v1251
        %v1988 = vpop.f32.mrf.mxu0
        %v1989 = vadd.f32 %v1820, %v1988
        %v1990 = vpop.f32.mrf.mxu0
        %v1991 = vadd.f32 %v1822, %v1990
        %1992 = vmatmul.bf16.gmra.mxu0 %v1254
        %v1993 = vpop.f32.mrf.mxu0
        %v1994 = vadd.f32 %v1825, %v1993
        %v1995 = vpop.f32.mrf.mxu0
        %v1996 = vadd.f32 %v1827, %v1995
        %1997 = vmatmul.bf16.gmra.mxu0 %v1257
        %v1998 = vpop.f32.mrf.mxu0
        %v1999 = vadd.f32 %v1830, %v1998
        %v2000 = vpop.f32.mrf.mxu0
        %v2001 = vadd.f32 %v1832, %v2000
        %2002 = vmatmul.bf16.gmra.mxu0 %v1260
        %v2003 = vpop.f32.mrf.mxu0
        %v2004 = vadd.f32 %v1835, %v2003
        %v2005 = vpop.f32.mrf.mxu0
        %v2006 = vadd.f32 %v1837, %v2005
        %2007 = vdwg.mxu0
        %v2008 = vadd.f32 %v605, %v1849
        %v2009 = vadd.f32 %v606, %v1851
        %v2010 = vadd.f32 %v607, %v1854
        %v2011 = vadd.f32 %v608, %v1856
        %v2012 = vadd.f32 %v609, %v1859
        %v2013 = vadd.f32 %v610, %v1861
        %v2014 = vadd.f32 %v611, %v1864
        %v2015 = vadd.f32 %v612, %v1866
        %v2016 = vadd.f32 %v613, %v1869
        %v2017 = vadd.f32 %v614, %v1871
        %v2018 = vadd.f32 %v615, %v1874
        %v2019 = vadd.f32 %v616, %v1876
        %v2020 = vadd.f32 %v617, %v1879
        %v2021 = vadd.f32 %v618, %v1881
        %v2022 = vadd.f32 %v619, %v1884
        %v2023 = vadd.f32 %v620, %v1886
        %v2024 = vadd.f32 %v621, %v1889
        %v2025 = vadd.f32 %v622, %v1891
        %v2026 = vadd.f32 %v623, %v1894
        %v2027 = vadd.f32 %v624, %v1896
        %v2028 = vadd.f32 %v625, %v1899
        %v2029 = vadd.f32 %v626, %v1901
        %v2030 = vadd.f32 %v627, %v1904
        %v2031 = vadd.f32 %v628, %v1906
        %v2032 = vadd.f32 %v629, %v1909
        %v2033 = vadd.f32 %v630, %v1911
        %v2034 = vadd.f32 %v631, %v1914
        %v2035 = vadd.f32 %v632, %v1916
        %v2036 = vadd.f32 %v633, %v1919
        %v2037 = vadd.f32 %v634, %v1921
        %v2038 = vadd.f32 %v635, %v1924
        %v2039 = vadd.f32 %v636, %v1926
        %v2040 = vadd.f32 %v637, %v1929
        %v2041 = vadd.f32 %v638, %v1931
        %v2042 = vadd.f32 %v639, %v1934
        %v2043 = vadd.f32 %v640, %v1936
        %v2044 = vadd.f32 %v641, %v1939
        %v2045 = vadd.f32 %v642, %v1941
        %v2046 = vadd.f32 %v643, %v1944
        %v2047 = vadd.f32 %v644, %v1946
        %v2048 = vadd.f32 %v645, %v1949
        %v2049 = vadd.f32 %v646, %v1951
        %v2050 = vadd.f32 %v647, %v1954
        %v2051 = vadd.f32 %v648, %v1956
        %v2052 = vadd.f32 %v649, %v1959
        %v2053 = vadd.f32 %v650, %v1961
        %v2054 = vadd.f32 %v651, %v1964
        %v2055 = vadd.f32 %v652, %v1966
        %v2056 = vadd.f32 %v653, %v1969
        %v2057 = vadd.f32 %v654, %v1971
        %v2058 = vadd.f32 %v655, %v1974
        %v2059 = vadd.f32 %v656, %v1976
        %v2060 = vadd.f32 %v657, %v1979
        %v2061 = vadd.f32 %v658, %v1981
        %v2062 = vadd.f32 %v659, %v1984
        %v2063 = vadd.f32 %v660, %v1986
        %v2064 = vadd.f32 %v661, %v1989
        %v2065 = vadd.f32 %v662, %v1991
        %v2066 = vadd.f32 %v663, %v1994
        %v2067 = vadd.f32 %v664, %v1996
        %v2068 = vadd.f32 %v665, %v1999
        %v2069 = vadd.f32 %v666, %v2001
        %v2070 = vadd.f32 %v667, %v2004
        %v2071 = vadd.f32 %v668, %v2006
        %2072 = vst [vmem:[#allocation2] sm:$0xff] %v2008
        %2073 = vst [vmem:[#allocation2 + $0x8] sm:$0xff] %v2009
        %2074 = vst [vmem:[#allocation2 + $0x10] sm:$0xff] %v2010
        %2075 = vst [vmem:[#allocation2 + $0x18] sm:$0xff] %v2011
        %2076 = vst [vmem:[#allocation2 + $0x20] sm:$0xff] %v2012
        %2077 = vst [vmem:[#allocation2 + $0x28] sm:$0xff] %v2013
        %2078 = vst [vmem:[#allocation2 + $0x30] sm:$0xff] %v2014
        %2079 = vst [vmem:[#allocation2 + $0x38] sm:$0xff] %v2015
        %2080 = vst [vmem:[#allocation2 + $0x40] sm:$0xff] %v2016
        %2081 = vst [vmem:[#allocation2 + $0x48] sm:$0xff] %v2017
        %2082 = vst [vmem:[#allocation2 + $0x50] sm:$0xff] %v2018
        %2083 = vst [vmem:[#allocation2 + $0x58] sm:$0xff] %v2019
        %2084 = vst [vmem:[#allocation2 + $0x60] sm:$0xff] %v2020
        %2085 = vst [vmem:[#allocation2 + $0x68] sm:$0xff] %v2021
        %2086 = vst [vmem:[#allocation2 + $0x70] sm:$0xff] %v2022
        %2087 = vst [vmem:[#allocation2 + $0x78] sm:$0xff] %v2023
        %2088 = vst [vmem:[#allocation2 + $0x80] sm:$0xff] %v2024
        %2089 = vst [vmem:[#allocation2 + $0x88] sm:$0xff] %v2025
        %2090 = vst [vmem:[#allocation2 + $0x90] sm:$0xff] %v2026
        %2091 = vst [vmem:[#allocation2 + $0x98] sm:$0xff] %v2027
        %2092 = vst [vmem:[#allocation2 + $0xa0] sm:$0xff] %v2028
        %2093 = vst [vmem:[#allocation2 + $0xa8] sm:$0xff] %v2029
        %2094 = vst [vmem:[#allocation2 + $0xb0] sm:$0xff] %v2030
        %2095 = vst [vmem:[#allocation2 + $0xb8] sm:$0xff] %v2031
        %2096 = vst [vmem:[#allocation2 + $0xc0] sm:$0xff] %v2032
        %2097 = vst [vmem:[#allocation2 + $0xc8] sm:$0xff] %v2033
        %2098 = vst [vmem:[#allocation2 + $0xd0] sm:$0xff] %v2034
        %2099 = vst [vmem:[#allocation2 + $0xd8] sm:$0xff] %v2035
        %2100 = vst [vmem:[#allocation2 + $0xe0] sm:$0xff] %v2036
        %2101 = vst [vmem:[#allocation2 + $0xe8] sm:$0xff] %v2037
        %2102 = vst [vmem:[#allocation2 + $0xf0] sm:$0xff] %v2038
        %2103 = vst [vmem:[#allocation2 + $0xf8] sm:$0xff] %v2039
        %2104 = vst [vmem:[#allocation2 + $0x100] sm:$0xff] %v2040
        %2105 = vst [vmem:[#allocation2 + $0x108] sm:$0xff] %v2041
        %2106 = vst [vmem:[#allocation2 + $0x110] sm:$0xff] %v2042
        %2107 = vst [vmem:[#allocation2 + $0x118] sm:$0xff] %v2043
        %2108 = vst [vmem:[#allocation2 + $0x120] sm:$0xff] %v2044
        %2109 = vst [vmem:[#allocation2 + $0x128] sm:$0xff] %v2045
        %2110 = vst [vmem:[#allocation2 + $0x130] sm:$0xff] %v2046
        %2111 = vst [vmem:[#allocation2 + $0x138] sm:$0xff] %v2047
        %2112 = vst [vmem:[#allocation2 + $0x140] sm:$0xff] %v2048
        %2113 = vst [vmem:[#allocation2 + $0x148] sm:$0xff] %v2049
        %2114 = vst [vmem:[#allocation2 + $0x150] sm:$0xff] %v2050
        %2115 = vst [vmem:[#allocation2 + $0x158] sm:$0xff] %v2051
        %2116 = vst [vmem:[#allocation2 + $0x160] sm:$0xff] %v2052
        %2117 = vst [vmem:[#allocation2 + $0x168] sm:$0xff] %v2053
        %2118 = vst [vmem:[#allocation2 + $0x170] sm:$0xff] %v2054
        %2119 = vst [vmem:[#allocation2 + $0x178] sm:$0xff] %v2055
        %2120 = vst [vmem:[#allocation2 + $0x180] sm:$0xff] %v2056
        %2121 = vst [vmem:[#allocation2 + $0x188] sm:$0xff] %v2057
        %2122 = vst [vmem:[#allocation2 + $0x190] sm:$0xff] %v2058
        %2123 = vst [vmem:[#allocation2 + $0x198] sm:$0xff] %v2059
        %2124 = vst [vmem:[#allocation2 + $0x1a0] sm:$0xff] %v2060
        %2125 = vst [vmem:[#allocation2 + $0x1a8] sm:$0xff] %v2061
        %2126 = vst [vmem:[#allocation2 + $0x1b0] sm:$0xff] %v2062
        %2127 = vst [vmem:[#allocation2 + $0x1b8] sm:$0xff] %v2063
        %2128 = vst [vmem:[#allocation2 + $0x1c0] sm:$0xff] %v2064
        %2129 = vst [vmem:[#allocation2 + $0x1c8] sm:$0xff] %v2065
        %2130 = vst [vmem:[#allocation2 + $0x1d0] sm:$0xff] %v2066
        %2131 = vst [vmem:[#allocation2 + $0x1d8] sm:$0xff] %v2067
        %2132 = vst [vmem:[#allocation2 + $0x1e0] sm:$0xff] %v2068
        %2133 = vst [vmem:[#allocation2 + $0x1e8] sm:$0xff] %v2069
        %2134 = vst [vmem:[#allocation2 + $0x1f0] sm:$0xff] %v2070
        %2135 = vst [vmem:[#allocation2 + $0x1f8] sm:$0xff] %v2071
        %p2136 = scmp.eq.s32.totalorder %s21, 2
        // Predicated region
        $region63: #{vae_forward.13} parent=53 // pred_check
          %p2137 = pneg %p2136
        $region64: #{vae_forward.13} parent=53 // pred_check_branch
          %2139 = sbr.rel (%p2137) target = $region66
        $region65: #{vae_forward.13} parent=53 // pred_region
          %v2140 = vld [vmem:[#allocation2] sm:$0xff]
          %v2141 = vld [vmem:[#allocation2 + $0x8] sm:$0xff]
          %v2142 = vld [vmem:[#allocation2 + $0x10] sm:$0xff]
          %v2143 = vld [vmem:[#allocation2 + $0x18] sm:$0xff]
          %v2144 = vld [vmem:[#allocation2 + $0x20] sm:$0xff]
          %v2145 = vld [vmem:[#allocation2 + $0x28] sm:$0xff]
          %v2146 = vld [vmem:[#allocation2 + $0x30] sm:$0xff]
          %v2147 = vld [vmem:[#allocation2 + $0x38] sm:$0xff]
          %v2148 = vld [vmem:[#allocation2 + $0x40] sm:$0xff]
          %v2149 = vld [vmem:[#allocation2 + $0x48] sm:$0xff]
          %v2150 = vld [vmem:[#allocation2 + $0x50] sm:$0xff]
          %v2151 = vld [vmem:[#allocation2 + $0x58] sm:$0xff]
          %v2152 = vld [vmem:[#allocation2 + $0x60] sm:$0xff]
          %v2153 = vld [vmem:[#allocation2 + $0x68] sm:$0xff]
          %v2154 = vld [vmem:[#allocation2 + $0x70] sm:$0xff]
          %v2155 = vld [vmem:[#allocation2 + $0x78] sm:$0xff]
          %v2156 = vld [vmem:[#allocation2 + $0x80] sm:$0xff]
          %v2157 = vld [vmem:[#allocation2 + $0x88] sm:$0xff]
          %v2158 = vld [vmem:[#allocation2 + $0x90] sm:$0xff]
          %v2159 = vld [vmem:[#allocation2 + $0x98] sm:$0xff]
          %v2160 = vld [vmem:[#allocation2 + $0xa0] sm:$0xff]
          %v2161 = vld [vmem:[#allocation2 + $0xa8] sm:$0xff]
          %v2162 = vld [vmem:[#allocation2 + $0xb0] sm:$0xff]
          %v2163 = vld [vmem:[#allocation2 + $0xb8] sm:$0xff]
          %v2164 = vld [vmem:[#allocation2 + $0xc0] sm:$0xff]
          %v2165 = vld [vmem:[#allocation2 + $0xc8] sm:$0xff]
          %v2166 = vld [vmem:[#allocation2 + $0xd0] sm:$0xff]
          %v2167 = vld [vmem:[#allocation2 + $0xd8] sm:$0xff]
          %v2168 = vld [vmem:[#allocation2 + $0xe0] sm:$0xff]
          %v2169 = vld [vmem:[#allocation2 + $0xe8] sm:$0xff]
          %v2170 = vld [vmem:[#allocation2 + $0xf0] sm:$0xff]
          %v2171 = vld [vmem:[#allocation2 + $0xf8] sm:$0xff]
          %v2172 = vld [vmem:[#allocation2 + $0x100] sm:$0xff]
          %v2173 = vld [vmem:[#allocation2 + $0x108] sm:$0xff]
          %v2174 = vld [vmem:[#allocation2 + $0x110] sm:$0xff]
          %v2175 = vld [vmem:[#allocation2 + $0x118] sm:$0xff]
          %v2176 = vld [vmem:[#allocation2 + $0x120] sm:$0xff]
          %v2177 = vld [vmem:[#allocation2 + $0x128] sm:$0xff]
          %v2178 = vld [vmem:[#allocation2 + $0x130] sm:$0xff]
          %v2179 = vld [vmem:[#allocation2 + $0x138] sm:$0xff]
          %v2180 = vld [vmem:[#allocation2 + $0x140] sm:$0xff]
          %v2181 = vld [vmem:[#allocation2 + $0x148] sm:$0xff]
          %v2182 = vld [vmem:[#allocation2 + $0x150] sm:$0xff]
          %v2183 = vld [vmem:[#allocation2 + $0x158] sm:$0xff]
          %v2184 = vld [vmem:[#allocation2 + $0x160] sm:$0xff]
          %v2185 = vld [vmem:[#allocation2 + $0x168] sm:$0xff]
          %v2186 = vld [vmem:[#allocation2 + $0x170] sm:$0xff]
          %v2187 = vld [vmem:[#allocation2 + $0x178] sm:$0xff]
          %v2188 = vld [vmem:[#allocation2 + $0x180] sm:$0xff]
          %v2189 = vld [vmem:[#allocation2 + $0x188] sm:$0xff]
          %v2190 = vld [vmem:[#allocation2 + $0x190] sm:$0xff]
          %v2191 = vld [vmem:[#allocation2 + $0x198] sm:$0xff]
          %v2192 = vld [vmem:[#allocation2 + $0x1a0] sm:$0xff]
          %v2193 = vld [vmem:[#allocation2 + $0x1a8] sm:$0xff]
          %v2194 = vld [vmem:[#allocation2 + $0x1b0] sm:$0xff]
          %v2195 = vld [vmem:[#allocation2 + $0x1b8] sm:$0xff]
          %v2196 = vld [vmem:[#allocation2 + $0x1c0] sm:$0xff]
          %v2197 = vld [vmem:[#allocation2 + $0x1c8] sm:$0xff]
          %v2198 = vld [vmem:[#allocation2 + $0x1d0] sm:$0xff]
          %v2199 = vld [vmem:[#allocation2 + $0x1d8] sm:$0xff]
          %v2200 = vld [vmem:[#allocation2 + $0x1e0] sm:$0xff]
          %v2201 = vld [vmem:[#allocation2 + $0x1e8] sm:$0xff]
          %v2202 = vld [vmem:[#allocation2 + $0x1f0] sm:$0xff]
          %v2203 = vld [vmem:[#allocation2 + $0x1f8] sm:$0xff]
          %v2204 = vld [vmem:[%s527] sm:$0x1]
          %v2206 = vperm.slane %v2204, 0
          %v2208 = vadd.f32 %v2140, %v2206
          %v2209 = vadd.f32 %v2141, %v2206
          %v2210 = vadd.f32 %v2142, %v2206
          %v2211 = vadd.f32 %v2143, %v2206
          %v2212 = vadd.f32 %v2144, %v2206
          %v2213 = vadd.f32 %v2145, %v2206
          %v2214 = vadd.f32 %v2146, %v2206
          %v2215 = vadd.f32 %v2147, %v2206
          %v2216 = vadd.f32 %v2148, %v2206
          %v2217 = vadd.f32 %v2149, %v2206
          %v2218 = vadd.f32 %v2150, %v2206
          %v2219 = vadd.f32 %v2151, %v2206
          %v2220 = vadd.f32 %v2152, %v2206
          %v2221 = vadd.f32 %v2153, %v2206
          %v2222 = vadd.f32 %v2154, %v2206
          %v2223 = vadd.f32 %v2155, %v2206
          %v2224 = vadd.f32 %v2156, %v2206
          %v2225 = vadd.f32 %v2157, %v2206
          %v2226 = vadd.f32 %v2158, %v2206
          %v2227 = vadd.f32 %v2159, %v2206
          %v2228 = vadd.f32 %v2160, %v2206
          %v2229 = vadd.f32 %v2161, %v2206
          %v2230 = vadd.f32 %v2162, %v2206
          %v2231 = vadd.f32 %v2163, %v2206
          %v2232 = vadd.f32 %v2164, %v2206
          %v2233 = vadd.f32 %v2165, %v2206
          %v2234 = vadd.f32 %v2166, %v2206
          %v2235 = vadd.f32 %v2167, %v2206
          %v2236 = vadd.f32 %v2168, %v2206
          %v2237 = vadd.f32 %v2169, %v2206
          %v2238 = vadd.f32 %v2170, %v2206
          %v2239 = vadd.f32 %v2171, %v2206
          %v2240 = vadd.f32 %v2172, %v2206
          %v2241 = vadd.f32 %v2173, %v2206
          %v2242 = vadd.f32 %v2174, %v2206
          %v2243 = vadd.f32 %v2175, %v2206
          %v2244 = vadd.f32 %v2176, %v2206
          %v2245 = vadd.f32 %v2177, %v2206
          %v2246 = vadd.f32 %v2178, %v2206
          %v2247 = vadd.f32 %v2179, %v2206
          %v2248 = vadd.f32 %v2180, %v2206
          %v2249 = vadd.f32 %v2181, %v2206
          %v2250 = vadd.f32 %v2182, %v2206
          %v2251 = vadd.f32 %v2183, %v2206
          %v2252 = vadd.f32 %v2184, %v2206
          %v2253 = vadd.f32 %v2185, %v2206
          %v2254 = vadd.f32 %v2186, %v2206
          %v2255 = vadd.f32 %v2187, %v2206
          %v2256 = vadd.f32 %v2188, %v2206
          %v2257 = vadd.f32 %v2189, %v2206
          %v2258 = vadd.f32 %v2190, %v2206
          %v2259 = vadd.f32 %v2191, %v2206
          %v2260 = vadd.f32 %v2192, %v2206
          %v2261 = vadd.f32 %v2193, %v2206
          %v2262 = vadd.f32 %v2194, %v2206
          %v2263 = vadd.f32 %v2195, %v2206
          %v2264 = vadd.f32 %v2196, %v2206
          %v2265 = vadd.f32 %v2197, %v2206
          %v2266 = vadd.f32 %v2198, %v2206
          %v2267 = vadd.f32 %v2199, %v2206
          %v2268 = vadd.f32 %v2200, %v2206
          %v2269 = vadd.f32 %v2201, %v2206
          %v2270 = vadd.f32 %v2202, %v2206
          %v2271 = vadd.f32 %v2203, %v2206
          %v2272 = vtanh.pop %v2208
          %v2273 = vtanh.pop %v2209
          %v2274 = vtanh.pop %v2210
          %v2275 = vtanh.pop %v2211
          %v2276 = vtanh.pop %v2212
          %v2277 = vtanh.pop %v2213
          %v2278 = vtanh.pop %v2214
          %v2279 = vtanh.pop %v2215
          %v2280 = vtanh.pop %v2216
          %v2281 = vtanh.pop %v2217
          %v2282 = vtanh.pop %v2218
          %v2283 = vtanh.pop %v2219
          %v2284 = vtanh.pop %v2220
          %v2285 = vtanh.pop %v2221
          %v2286 = vtanh.pop %v2222
          %v2287 = vtanh.pop %v2223
          %v2288 = vtanh.pop %v2224
          %v2289 = vtanh.pop %v2225
          %v2290 = vtanh.pop %v2226
          %v2291 = vtanh.pop %v2227
          %v2292 = vtanh.pop %v2228
          %v2293 = vtanh.pop %v2229
          %v2294 = vtanh.pop %v2230
          %v2295 = vtanh.pop %v2231
          %v2296 = vtanh.pop %v2232
          %v2297 = vtanh.pop %v2233
          %v2298 = vtanh.pop %v2234
          %v2299 = vtanh.pop %v2235
          %v2300 = vtanh.pop %v2236
          %v2301 = vtanh.pop %v2237
          %v2302 = vtanh.pop %v2238
          %v2303 = vtanh.pop %v2239
          %v2304 = vtanh.pop %v2240
          %v2305 = vtanh.pop %v2241
          %v2306 = vtanh.pop %v2242
          %v2307 = vtanh.pop %v2243
          %v2308 = vtanh.pop %v2244
          %v2309 = vtanh.pop %v2245
          %v2310 = vtanh.pop %v2246
          %v2311 = vtanh.pop %v2247
          %v2312 = vtanh.pop %v2248
          %v2313 = vtanh.pop %v2249
          %v2314 = vtanh.pop %v2250
          %v2315 = vtanh.pop %v2251
          %v2316 = vtanh.pop %v2252
          %v2317 = vtanh.pop %v2253
          %v2318 = vtanh.pop %v2254
          %v2319 = vtanh.pop %v2255
          %v2320 = vtanh.pop %v2256
          %v2321 = vtanh.pop %v2257
          %v2322 = vtanh.pop %v2258
          %v2323 = vtanh.pop %v2259
          %v2324 = vtanh.pop %v2260
          %v2325 = vtanh.pop %v2261
          %v2326 = vtanh.pop %v2262
          %v2327 = vtanh.pop %v2263
          %v2328 = vtanh.pop %v2264
          %v2329 = vtanh.pop %v2265
          %v2330 = vtanh.pop %v2266
          %v2331 = vtanh.pop %v2267
          %v2332 = vtanh.pop %v2268
          %v2333 = vtanh.pop %v2269
          %v2334 = vtanh.pop %v2270
          %v2335 = vtanh.pop %v2271
          %2336 = vst [vmem:[%s535] sm:$0xff] %v2272
          %2337 = vst [vmem:[%s535 + $0x8] sm:$0xff] %v2273
          %2338 = vst [vmem:[%s535 + $0x10] sm:$0xff] %v2274
          %2339 = vst [vmem:[%s535 + $0x18] sm:$0xff] %v2275
          %2340 = vst [vmem:[%s535 + $0x20] sm:$0xff] %v2276
          %2341 = vst [vmem:[%s535 + $0x28] sm:$0xff] %v2277
          %2342 = vst [vmem:[%s535 + $0x30] sm:$0xff] %v2278
          %2343 = vst [vmem:[%s535 + $0x38] sm:$0xff] %v2279
          %2344 = vst [vmem:[%s535 + $0x40] sm:$0xff] %v2280
          %2345 = vst [vmem:[%s535 + $0x48] sm:$0xff] %v2281
          %2346 = vst [vmem:[%s535 + $0x50] sm:$0xff] %v2282
          %2347 = vst [vmem:[%s535 + $0x58] sm:$0xff] %v2283
          %2348 = vst [vmem:[%s535 + $0x60] sm:$0xff] %v2284
          %2349 = vst [vmem:[%s535 + $0x68] sm:$0xff] %v2285
          %2350 = vst [vmem:[%s535 + $0x70] sm:$0xff] %v2286
          %2351 = vst [vmem:[%s535 + $0x78] sm:$0xff] %v2287
          %2352 = vst [vmem:[%s535 + $0x80] sm:$0xff] %v2288
          %2353 = vst [vmem:[%s535 + $0x88] sm:$0xff] %v2289
          %2354 = vst [vmem:[%s535 + $0x90] sm:$0xff] %v2290
          %2355 = vst [vmem:[%s535 + $0x98] sm:$0xff] %v2291
          %2356 = vst [vmem:[%s535 + $0xa0] sm:$0xff] %v2292
          %2357 = vst [vmem:[%s535 + $0xa8] sm:$0xff] %v2293
          %2358 = vst [vmem:[%s535 + $0xb0] sm:$0xff] %v2294
          %2359 = vst [vmem:[%s535 + $0xb8] sm:$0xff] %v2295
          %2360 = vst [vmem:[%s535 + $0xc0] sm:$0xff] %v2296
          %2361 = vst [vmem:[%s535 + $0xc8] sm:$0xff] %v2297
          %2362 = vst [vmem:[%s535 + $0xd0] sm:$0xff] %v2298
          %2363 = vst [vmem:[%s535 + $0xd8] sm:$0xff] %v2299
          %2364 = vst [vmem:[%s535 + $0xe0] sm:$0xff] %v2300
          %2365 = vst [vmem:[%s535 + $0xe8] sm:$0xff] %v2301
          %2366 = vst [vmem:[%s535 + $0xf0] sm:$0xff] %v2302
          %2367 = vst [vmem:[%s535 + $0xf8] sm:$0xff] %v2303
          %2368 = vst [vmem:[%s535 + $0x100] sm:$0xff] %v2304
          %2369 = vst [vmem:[%s535 + $0x108] sm:$0xff] %v2305
          %2370 = vst [vmem:[%s535 + $0x110] sm:$0xff] %v2306
          %2371 = vst [vmem:[%s535 + $0x118] sm:$0xff] %v2307
          %2372 = vst [vmem:[%s535 + $0x120] sm:$0xff] %v2308
          %2373 = vst [vmem:[%s535 + $0x128] sm:$0xff] %v2309
          %2374 = vst [vmem:[%s535 + $0x130] sm:$0xff] %v2310
          %2375 = vst [vmem:[%s535 + $0x138] sm:$0xff] %v2311
          %2376 = vst [vmem:[%s535 + $0x140] sm:$0xff] %v2312
          %2377 = vst [vmem:[%s535 + $0x148] sm:$0xff] %v2313
          %2378 = vst [vmem:[%s535 + $0x150] sm:$0xff] %v2314
          %2379 = vst [vmem:[%s535 + $0x158] sm:$0xff] %v2315
          %2380 = vst [vmem:[%s535 + $0x160] sm:$0xff] %v2316
          %2381 = vst [vmem:[%s535 + $0x168] sm:$0xff] %v2317
          %2382 = vst [vmem:[%s535 + $0x170] sm:$0xff] %v2318
          %2383 = vst [vmem:[%s535 + $0x178] sm:$0xff] %v2319
          %2384 = vst [vmem:[%s535 + $0x180] sm:$0xff] %v2320
          %2385 = vst [vmem:[%s535 + $0x188] sm:$0xff] %v2321
          %2386 = vst [vmem:[%s535 + $0x190] sm:$0xff] %v2322
          %2387 = vst [vmem:[%s535 + $0x198] sm:$0xff] %v2323
          %2388 = vst [vmem:[%s535 + $0x1a0] sm:$0xff] %v2324
          %2389 = vst [vmem:[%s535 + $0x1a8] sm:$0xff] %v2325
          %2390 = vst [vmem:[%s535 + $0x1b0] sm:$0xff] %v2326
          %2391 = vst [vmem:[%s535 + $0x1b8] sm:$0xff] %v2327
          %2392 = vst [vmem:[%s535 + $0x1c0] sm:$0xff] %v2328
          %2393 = vst [vmem:[%s535 + $0x1c8] sm:$0xff] %v2329
          %2394 = vst [vmem:[%s535 + $0x1d0] sm:$0xff] %v2330
          %2395 = vst [vmem:[%s535 + $0x1d8] sm:$0xff] %v2331
          %2396 = vst [vmem:[%s535 + $0x1e0] sm:$0xff] %v2332
          %2397 = vst [vmem:[%s535 + $0x1e8] sm:$0xff] %v2333
          %2398 = vst [vmem:[%s535 + $0x1f0] sm:$0xff] %v2334
          %2399 = vst [vmem:[%s535 + $0x1f8] sm:$0xff] %v2335
        $region66: #{vae_forward.13} parent=53 // pred_fallthru
          _
        %s2400 = smul.u32 64, %s19
        %p2401 = scmp.lt.s32.totalorder %s2400, 63
        %s2402 = scalar_select %p2401, %s2400, 63
        %p2403 = scmp.lt.s32.totalorder %s20, 0
        %s2404 = scalar_select %p2403, %s20, 0
        %s2405 = sadd.s32 %s2404, %s2402
        %s2406 = smul.addr %s2405, 8
        %s2407 = scalar_lea.vmem %s3, %s2406
        // Predicated region
        $region67: #{vae_forward.13} parent=53 // pred_check
          %p2408 = pneg %p135
        $region68: #{vae_forward.13} parent=53 // pred_check_branch
          %2410 = sbr.rel (%p2408) target = $region70
        $region69: #{vae_forward.13} parent=53 // pred_region
          %s2411 = smul.u32 64, %s19
        $region70: #{vae_forward.13} parent=53 // pred_fallthru
          _
        // Predicated region
        $region71: #{vae_forward.13} parent=53 // pred_check
          %p2412 = pneg %p135
        $region72: #{vae_forward.13} parent=53 // pred_check_branch
          %2414 = sbr.rel (%p2412) target = $region74
        $region73: #{vae_forward.13} parent=53 // pred_region
          %s2415 = smul.u32 64, %s19
          %p2416 = scmp.lt.s32.totalorder %s2415, 63
          %s2417 = scalar_select %p2416, %s2415, 63
          %p2418 = scmp.lt.s32.totalorder %s20, 0
          %s2419 = scalar_select %p2418, %s20, 0
          %s2420 = sadd.s32 %s2419, %s2417
          %s2421 = smul.addr %s2420, 8
          %s2422 = scalar_lea.vmem %s3, %s2421
        $region74: #{vae_forward.13} parent=53 // pred_fallthru
          _
      $region54: #{vae_forward.13} parent=5 // pred_fallthru
        _
      %p2423 = scmp.le.s32.totalorder 2, %s9
      // Predicated region
      $region75: #{vae_forward.13} parent=5 // pred_check
        %p2424 = pneg %p2423
      $region76: #{vae_forward.13} parent=5 // pred_check_branch
        %2426 = sbr.rel (%p2424) target = $region78
      $region77: #{vae_forward.13} parent=5 // pred_region
        %s2427 = ssub.s32 %s9, 2
      $region78: #{vae_forward.13} parent=5 // pred_fallthru
        _
    $region6: #{vae_forward.13} parent=1 // loop_footer
      %s13 = sadd.s32 1, %s9
    $region7: #{vae_forward.13} parent=1 // loop_footer_branch
      %8 = sbr.rel target = $region3
    $region8: #{vae_forward.13} parent=1 // loop_exit
      _

</llo_original>
